<compile_context>
chip_gen: v7x
topology: tpu7x:2x2x1
jax: 0.10.0
libtpu: 0.0.40
codegen_flags: <defaults>
</compile_context>

<pallas_src>
import jax
import jax.numpy as jnp
from jax import lax
from jax.experimental import pallas as pl
from jax.experimental.pallas import tpu as pltpu

# ----------------------------- model constants ------------------------------
D = 12            # num_in_channels (grammar rule count, synthetic choice)
L = 100           # sequence length; forced by Linear(740, .): 10*(L-8-8-10)=740
LATENT = 16       # params['latent_dim'] (synthetic choice)
SLOPE = 0.01      # nn.LeakyReLU default negative slope

L1 = L - 8        # 92  (conv1, k=9, valid)
L2 = L1 - 8       # 84  (conv2, k=9, valid)
L3 = L2 - 10      # 74  (conv3, k=11, valid)
FLAT = 10 * L3    # 740
HID = 435


def _leaky(x):
    return jnp.where(x > 0, x, SLOPE * x)


def _round_up(n, m):
    return ((n + m - 1) // m) * m


# --------------------------------- kernel -----------------------------------
def encoder_kernel(x_ref, w1_ref, b1_ref, w2_ref, b2_ref, w3_ref, b3_ref,
                   wl_ref, bl_ref, wh_ref, bh_ref, out_ref):
    """One batch tile of TB samples: five dense MXU matmuls.

    Activations flow as 2-D (TB, features) slabs.  Dots use the weights'
    dtype (bf16 by default) with f32 accumulation; bias + LeakyReLU in f32.
    """

    def dense(h, w_ref, b_ref, activate=True):
        y = jnp.dot(h.astype(w_ref.dtype), w_ref[...],
                    preferred_element_type=jnp.float32) + b_ref[...]
        return _leaky(y) if activate else y

    h = x_ref[...]                          # (TB, D*L)      f32
    h = dense(h, w1_ref, b1_ref)            # conv1  -> (TB, 9*L1)
    h = dense(h, w2_ref, b2_ref)            # conv2  -> (TB, 9*L2)
    h = dense(h, w3_ref, b3_ref)            # conv3  -> (TB, 10*L3)
    h = dense(h, wl_ref, bl_ref)            # linear -> (TB, HID)
    out_ref[...] = dense(h, wh_ref, bh_ref, activate=False)   # (TB, 2*LATENT)


# --------------------------- weight preprocessing ----------------------------
def _conv_as_dense(w, l_in, l_out):
    """Fold a valid Conv1d weight (Cout, Cin, K) into a banded dense matrix M
    of shape (Cin*l_in, Cout*l_out) with M[ci*l_in + t + k, co*l_out + t] =
    w[co, ci, k], so that  (x_flat @ M)[b, co*l_out + t] == conv(x)[b, co, t]
    for x_flat[b, ci*l_in + s] = x[b, ci, s]."""
    c_out, c_in, k_w = w.shape
    eye = jnp.eye(l_out, dtype=w.dtype)
    m4 = jnp.zeros((c_in, l_in, c_out, l_out), dtype=w.dtype)
    for k in range(k_w):
        shift = jnp.pad(eye, ((k, l_in - l_out - k), (0, 0)))   # (l_in, l_out)
        m4 = m4 + jnp.einsum("oc,st->csot", w[:, :, k], shift)
    return m4.reshape(c_in * l_in, c_out * l_out)


# -------------------------------- wrapper -----------------------------------
def encoder_forward(x, p, *, block_batch=256, matmul_dtype=jnp.bfloat16):
    n = x.shape[0]
    # Batch tile: multiple of 8 sublanes, up to block_batch (256 fills the
    # v6e/v7x 256-wide MXU rows; also a multiple of v5e's 128).
    tb = min(block_batch, _round_up(n, 8))
    n_pad = _round_up(n, tb)

    # Input stays f32 (keeps (8,128) block tiling legal for any tb); it is
    # cast to the matmul dtype inside the kernel.
    xf = x.reshape(n, D * L)
    if n_pad != n:
        xf = jnp.pad(xf, ((0, n_pad - n), (0, 0)))

    # Conv weights -> banded dense matrices; conv biases broadcast over t.
    w1d = _conv_as_dense(p["w1"], L, L1).astype(matmul_dtype)
    w2d = _conv_as_dense(p["w2"], L1, L2).astype(matmul_dtype)
    w3d = _conv_as_dense(p["w3"], L2, L3).astype(matmul_dtype)
    b1f = jnp.repeat(p["b1"], L1).reshape(1, 9 * L1).astype(jnp.float32)
    b2f = jnp.repeat(p["b2"], L2).reshape(1, 9 * L2).astype(jnp.float32)
    b3f = jnp.repeat(p["b3"], L3).reshape(1, 10 * L3).astype(jnp.float32)

    # Linear(740,435): PyTorch flattens h.transpose(1,2).view -> flat index
    # t*10 + c; the kernel's conv3 output uses c*L3 + t, so permute the weight.
    wlp = (p["wl"].reshape(HID, L3, 10).transpose(2, 1, 0)
           .reshape(FLAT, HID).astype(matmul_dtype))
    blf = p["bl"].reshape(1, HID).astype(jnp.float32)

    # Fused mu/sigma heads: single (HID, 2*LATENT) matmul, lane-denser store.
    wh = jnp.concatenate([p["wmu"].T, p["wsg"].T], axis=1).astype(matmul_dtype)
    bh = jnp.concatenate([p["bmu"], p["bsg"]]).reshape(1, 2 * LATENT)
    bh = bh.astype(jnp.float32)

    args = (xf, w1d, b1f, w2d, b2f, w3d, b3f, wlp, blf, wh, bh)

    def const_spec(a):
        # Whole array, same block every grid step -> fetched once, no re-DMA.
        return pl.BlockSpec(a.shape, lambda i, _nd=a.ndim: (0,) * _nd)

    in_specs = [pl.BlockSpec((tb, D * L), lambda i: (i, 0))]
    in_specs += [const_spec(a) for a in args[1:]]

    out = pl.pallas_call(
        encoder_kernel,
        out_shape=jax.ShapeDtypeStruct((n_pad, 2 * LATENT), jnp.float32),
        grid=(n_pad // tb,),
        in_specs=in_specs,
        out_specs=pl.BlockSpec((tb, 2 * LATENT), lambda i: (i, 0)),
        compiler_params=pltpu.CompilerParams(
            dimension_semantics=("parallel",),        # megacore-shard batch tiles
            vmem_limit_bytes=48 * 1024 * 1024),       # > v5e 16MiB default, < v7x phys
    )(*args)

    out = out[:n]
    return out[:, :LATENT], out[:, LATENT:]


# ------------------------- pure-JAX reference (check) ------------------------
def encoder_reference(x, p):
    def conv1d(h, w, b):
        y = lax.conv_general_dilated(h, w, (1,), "VALID",
                                     dimension_numbers=("NCH", "OIH", "NCH"))
        return y + b[None, :, None]

    h = _leaky(conv1d(x, p["w1"], p["b1"]))
    h = _leaky(conv1d(h, p["w2"], p["b2"]))
    h = _leaky(conv1d(h, p["w3"], p["b3"]))
    h = jnp.transpose(h, (0, 2, 1)).reshape(h.shape[0], -1)      # (N, 740)
    h = _leaky(h @ p["wl"].T + p["bl"])
    mu = h @ p["wmu"].T + p["bmu"]
    sg = h @ p["wsg"].T + p["bsg"]
    return mu, sg


# --------------------------------- main --------------------------------------
def make_params(key):
    ks = jax.random.split(key, 12)
    s = 0.1
    return {
        "w1": s * jax.random.normal(ks[0], (9, D, 9), jnp.float32),
        "b1": s * jax.random.normal(ks[1], (9,), jnp.float32),
        "w2": s * jax.random.normal(ks[2], (9, 9, 9), jnp.float32),
        "b2": s * jax.random.normal(ks[3], (9,), jnp.float32),
        "w3": s * jax.random.normal(ks[4], (10, 9, 11), jnp.float32),
        "b3": s * jax.random.normal(ks[5], (10,), jnp.float32),
        "wl": s * jax.random.normal(ks[6], (HID, FLAT), jnp.float32),
        "bl": s * jax.random.normal(ks[7], (HID,), jnp.float32),
        "wmu": s * jax.random.normal(ks[8], (LATENT, HID), jnp.float32),
        "bmu": s * jax.random.normal(ks[9], (LATENT,), jnp.float32),
        "wsg": s * jax.random.normal(ks[10], (LATENT, HID), jnp.float32),
        "bsg": s * jax.random.normal(ks[11], (LATENT,), jnp.float32),
    }


if __name__ == "__main__":
    key = jax.random.PRNGKey(0)
    kx, kp = jax.random.split(key)
    N = 2
    x = jax.random.normal(kx, (N, D, L), jnp.float32)   # PyTorch NCW input
    params = make_params(kp)

    mu, sigma = jax.block_until_ready(jax.jit(encoder_forward)(x, params))
    mu_ref, sigma_ref = encoder_reference(x, params)

    assert mu.shape == (N, LATENT) and sigma.shape == (N, LATENT)
    # bf16 matmul operands with f32 accumulation: ~0.5-1% relative error.
    assert jnp.allclose(mu, mu_ref, rtol=2e-2, atol=2e-2)
    assert jnp.allclose(sigma, sigma_ref, rtol=2e-2, atol=2e-2)
    print("KERNEL_OK")
</pallas_src>

<mosaic_0001>
module attributes {stable_mosaic.version = 11 : i64} {
  func.func @encoder_kernel(%arg0: i32, %arg1: memref<8x1200xf32, #tpu.memory_space<vmem>>, %arg2: memref<1200x828xbf16, #tpu.memory_space<vmem>>, %arg3: memref<1x828xf32, #tpu.memory_space<vmem>>, %arg4: memref<828x756xbf16, #tpu.memory_space<vmem>>, %arg5: memref<1x756xf32, #tpu.memory_space<vmem>>, %arg6: memref<756x740xbf16, #tpu.memory_space<vmem>>, %arg7: memref<1x740xf32, #tpu.memory_space<vmem>>, %arg8: memref<740x435xbf16, #tpu.memory_space<vmem>>, %arg9: memref<1x435xf32, #tpu.memory_space<vmem>>, %arg10: memref<435x32xbf16, #tpu.memory_space<vmem>>, %arg11: memref<1x32xf32, #tpu.memory_space<vmem>>, %arg12: memref<8x32xf32, #tpu.memory_space<vmem>>) attributes {dimension_semantics = [#tpu.dimension_semantics<parallel>], iteration_bounds = array<i64: 1>, scalar_prefetch = 0 : i64, scratch_operands = 0 : i64, tpu.core_type = #tpu.core_type<tc>, window_params = [{transform_indices = @transform_0, window_bounds = array<i64: 8, 1200>}, {pipeline_mode = #tpu.pipeline_mode<synchronous>, transform_indices = @transform_1, window_bounds = array<i64: 1200, 828>}, {pipeline_mode = #tpu.pipeline_mode<synchronous>, transform_indices = @transform_2, window_bounds = array<i64: 1, 828>}, {pipeline_mode = #tpu.pipeline_mode<synchronous>, transform_indices = @transform_3, window_bounds = array<i64: 828, 756>}, {pipeline_mode = #tpu.pipeline_mode<synchronous>, transform_indices = @transform_4, window_bounds = array<i64: 1, 756>}, {pipeline_mode = #tpu.pipeline_mode<synchronous>, transform_indices = @transform_5, window_bounds = array<i64: 756, 740>}, {pipeline_mode = #tpu.pipeline_mode<synchronous>, transform_indices = @transform_6, window_bounds = array<i64: 1, 740>}, {pipeline_mode = #tpu.pipeline_mode<synchronous>, transform_indices = @transform_7, window_bounds = array<i64: 740, 435>}, {pipeline_mode = #tpu.pipeline_mode<synchronous>, transform_indices = @transform_8, window_bounds = array<i64: 1, 435>}, {pipeline_mode = #tpu.pipeline_mode<synchronous>, transform_indices = @transform_9, window_bounds = array<i64: 435, 32>}, {pipeline_mode = #tpu.pipeline_mode<synchronous>, transform_indices = @transform_10, window_bounds = array<i64: 1, 32>}, {transform_indices = @transform_11, window_bounds = array<i64: 8, 32>}]} {
    %c0 = arith.constant 0 : index
    %c0_0 = arith.constant 0 : index
    %0 = vector.load %arg1[%c0, %c0_0] : memref<8x1200xf32, #tpu.memory_space<vmem>>, vector<8x1200xf32>
    %1 = arith.truncf %0 : vector<8x1200xf32> to vector<8x1200xbf16>
    %c0_1 = arith.constant 0 : index
    %c0_2 = arith.constant 0 : index
    %2 = vector.load %arg2[%c0_1, %c0_2] : memref<1200x828xbf16, #tpu.memory_space<vmem>>, vector<1200x828xbf16>
    %cst = arith.constant dense<0.000000e+00> : vector<8x828xf32>
    %3 = tpu.matmul %1, %2, %cst {dimension_numbers = #tpu.dot_dimension_numbers<[1], [0], [0], [1], [0, 0, 1, 1], [], []>} : vector<8x1200xbf16>, vector<1200x828xbf16>, vector<8x828xf32> -> vector<8x828xf32>
    %c0_3 = arith.constant 0 : index
    %c0_4 = arith.constant 0 : index
    %4 = vector.load %arg3[%c0_3, %c0_4] : memref<1x828xf32, #tpu.memory_space<vmem>>, vector<1x828xf32>
    %5 = vector.broadcast %4 : vector<1x828xf32> to vector<8x828xf32>
    %6 = arith.addf %3, %5 : vector<8x828xf32>
    %cst_5 = arith.constant 0.000000e+00 : f32
    %7 = vector.broadcast %cst_5 : f32 to vector<8x828xf32>
    %8 = arith.cmpf ogt, %6, %7 : vector<8x828xf32>
    %cst_6 = arith.constant 0.00999999977 : f32
    %9 = vector.broadcast %cst_6 : f32 to vector<8x828xf32>
    %10 = arith.mulf %9, %6 : vector<8x828xf32>
    %11 = arith.select %8, %6, %10 : vector<8x828xi1>, vector<8x828xf32>
    %12 = arith.truncf %11 : vector<8x828xf32> to vector<8x828xbf16>
    %c0_7 = arith.constant 0 : index
    %c0_8 = arith.constant 0 : index
    %13 = vector.load %arg4[%c0_7, %c0_8] : memref<828x756xbf16, #tpu.memory_space<vmem>>, vector<828x756xbf16>
    %cst_9 = arith.constant dense<0.000000e+00> : vector<8x756xf32>
    %14 = tpu.matmul %12, %13, %cst_9 {dimension_numbers = #tpu.dot_dimension_numbers<[1], [0], [0], [1], [0, 0, 1, 1], [], []>} : vector<8x828xbf16>, vector<828x756xbf16>, vector<8x756xf32> -> vector<8x756xf32>
    %c0_10 = arith.constant 0 : index
    %c0_11 = arith.constant 0 : index
    %15 = vector.load %arg5[%c0_10, %c0_11] : memref<1x756xf32, #tpu.memory_space<vmem>>, vector<1x756xf32>
    %16 = vector.broadcast %15 : vector<1x756xf32> to vector<8x756xf32>
    %17 = arith.addf %14, %16 : vector<8x756xf32>
    %cst_12 = arith.constant 0.000000e+00 : f32
    %18 = vector.broadcast %cst_12 : f32 to vector<8x756xf32>
    %19 = arith.cmpf ogt, %17, %18 : vector<8x756xf32>
    %cst_13 = arith.constant 0.00999999977 : f32
    %20 = vector.broadcast %cst_13 : f32 to vector<8x756xf32>
    %21 = arith.mulf %20, %17 : vector<8x756xf32>
    %22 = arith.select %19, %17, %21 : vector<8x756xi1>, vector<8x756xf32>
    %23 = arith.truncf %22 : vector<8x756xf32> to vector<8x756xbf16>
    %c0_14 = arith.constant 0 : index
    %c0_15 = arith.constant 0 : index
    %24 = vector.load %arg6[%c0_14, %c0_15] : memref<756x740xbf16, #tpu.memory_space<vmem>>, vector<756x740xbf16>
    %cst_16 = arith.constant dense<0.000000e+00> : vector<8x740xf32>
    %25 = tpu.matmul %23, %24, %cst_16 {dimension_numbers = #tpu.dot_dimension_numbers<[1], [0], [0], [1], [0, 0, 1, 1], [], []>} : vector<8x756xbf16>, vector<756x740xbf16>, vector<8x740xf32> -> vector<8x740xf32>
    %c0_17 = arith.constant 0 : index
    %c0_18 = arith.constant 0 : index
    %26 = vector.load %arg7[%c0_17, %c0_18] : memref<1x740xf32, #tpu.memory_space<vmem>>, vector<1x740xf32>
    %27 = vector.broadcast %26 : vector<1x740xf32> to vector<8x740xf32>
    %28 = arith.addf %25, %27 : vector<8x740xf32>
    %cst_19 = arith.constant 0.000000e+00 : f32
    %29 = vector.broadcast %cst_19 : f32 to vector<8x740xf32>
    %30 = arith.cmpf ogt, %28, %29 : vector<8x740xf32>
    %cst_20 = arith.constant 0.00999999977 : f32
    %31 = vector.broadcast %cst_20 : f32 to vector<8x740xf32>
    %32 = arith.mulf %31, %28 : vector<8x740xf32>
    %33 = arith.select %30, %28, %32 : vector<8x740xi1>, vector<8x740xf32>
    %34 = arith.truncf %33 : vector<8x740xf32> to vector<8x740xbf16>
    %c0_21 = arith.constant 0 : index
    %c0_22 = arith.constant 0 : index
    %35 = vector.load %arg8[%c0_21, %c0_22] : memref<740x435xbf16, #tpu.memory_space<vmem>>, vector<740x435xbf16>
    %cst_23 = arith.constant dense<0.000000e+00> : vector<8x435xf32>
    %36 = tpu.matmul %34, %35, %cst_23 {dimension_numbers = #tpu.dot_dimension_numbers<[1], [0], [0], [1], [0, 0, 1, 1], [], []>} : vector<8x740xbf16>, vector<740x435xbf16>, vector<8x435xf32> -> vector<8x435xf32>
    %c0_24 = arith.constant 0 : index
    %c0_25 = arith.constant 0 : index
    %37 = vector.load %arg9[%c0_24, %c0_25] : memref<1x435xf32, #tpu.memory_space<vmem>>, vector<1x435xf32>
    %38 = vector.broadcast %37 : vector<1x435xf32> to vector<8x435xf32>
    %39 = arith.addf %36, %38 : vector<8x435xf32>
    %cst_26 = arith.constant 0.000000e+00 : f32
    %40 = vector.broadcast %cst_26 : f32 to vector<8x435xf32>
    %41 = arith.cmpf ogt, %39, %40 : vector<8x435xf32>
    %cst_27 = arith.constant 0.00999999977 : f32
    %42 = vector.broadcast %cst_27 : f32 to vector<8x435xf32>
    %43 = arith.mulf %42, %39 : vector<8x435xf32>
    %44 = arith.select %41, %39, %43 : vector<8x435xi1>, vector<8x435xf32>
    %45 = arith.truncf %44 : vector<8x435xf32> to vector<8x435xbf16>
    %c0_28 = arith.constant 0 : index
    %c0_29 = arith.constant 0 : index
    %46 = vector.load %arg10[%c0_28, %c0_29] : memref<435x32xbf16, #tpu.memory_space<vmem>>, vector<435x32xbf16>
    %cst_30 = arith.constant dense<0.000000e+00> : vector<8x32xf32>
    %47 = tpu.matmul %45, %46, %cst_30 {dimension_numbers = #tpu.dot_dimension_numbers<[1], [0], [0], [1], [0, 0, 1, 1], [], []>} : vector<8x435xbf16>, vector<435x32xbf16>, vector<8x32xf32> -> vector<8x32xf32>
    %c0_31 = arith.constant 0 : index
    %c0_32 = arith.constant 0 : index
    %48 = vector.load %arg11[%c0_31, %c0_32] : memref<1x32xf32, #tpu.memory_space<vmem>>, vector<1x32xf32>
    %49 = vector.broadcast %48 : vector<1x32xf32> to vector<8x32xf32>
    %50 = arith.addf %47, %49 : vector<8x32xf32>
    %c0_33 = arith.constant 0 : index
    %c0_34 = arith.constant 0 : index
    %51 = vector.load %arg12[%c0_33, %c0_34] : memref<8x32xf32, #tpu.memory_space<vmem>>, vector<8x32xf32>
    tpu.vector_store %arg12[%c0_33, %c0_34], %50 {strides = array<i32>} : memref<8x32xf32, #tpu.memory_space<vmem>>, vector<8x32xf32>,
    return
  }
  func.func @transform_0(%arg0: i32) -> (i32, i32) {
    %c0_i32 = arith.constant 0 : i32
    %c0_i32_0 = arith.constant 0 : i32
    return %arg0, %c0_i32 : i32, i32
  }
  func.func @transform_1(%arg0: i32) -> (i32, i32) {
    %c0_i32 = arith.constant 0 : i32
    %c0_i32_0 = arith.constant 0 : i32
    %c0_i32_1 = arith.constant 0 : i32
    return %c0_i32, %c0_i32_0 : i32, i32
  }
  func.func @transform_2(%arg0: i32) -> (i32, i32) {
    %c0_i32 = arith.constant 0 : i32
    %c0_i32_0 = arith.constant 0 : i32
    %c0_i32_1 = arith.constant 0 : i32
    return %c0_i32, %c0_i32_0 : i32, i32
  }
  func.func @transform_3(%arg0: i32) -> (i32, i32) {
    %c0_i32 = arith.constant 0 : i32
    %c0_i32_0 = arith.constant 0 : i32
    %c0_i32_1 = arith.constant 0 : i32
    return %c0_i32, %c0_i32_0 : i32, i32
  }
  func.func @transform_4(%arg0: i32) -> (i32, i32) {
    %c0_i32 = arith.constant 0 : i32
    %c0_i32_0 = arith.constant 0 : i32
    %c0_i32_1 = arith.constant 0 : i32
    return %c0_i32, %c0_i32_0 : i32, i32
  }
  func.func @transform_5(%arg0: i32) -> (i32, i32) {
    %c0_i32 = arith.constant 0 : i32
    %c0_i32_0 = arith.constant 0 : i32
    %c0_i32_1 = arith.constant 0 : i32
    return %c0_i32, %c0_i32_0 : i32, i32
  }
  func.func @transform_6(%arg0: i32) -> (i32, i32) {
    %c0_i32 = arith.constant 0 : i32
    %c0_i32_0 = arith.constant 0 : i32
    %c0_i32_1 = arith.constant 0 : i32
    return %c0_i32, %c0_i32_0 : i32, i32
  }
  func.func @transform_7(%arg0: i32) -> (i32, i32) {
    %c0_i32 = arith.constant 0 : i32
    %c0_i32_0 = arith.constant 0 : i32
    %c0_i32_1 = arith.constant 0 : i32
    return %c0_i32, %c0_i32_0 : i32, i32
  }
  func.func @transform_8(%arg0: i32) -> (i32, i32) {
    %c0_i32 = arith.constant 0 : i32
    %c0_i32_0 = arith.constant 0 : i32
    %c0_i32_1 = arith.constant 0 : i32
    return %c0_i32, %c0_i32_0 : i32, i32
  }
  func.func @transform_9(%arg0: i32) -> (i32, i32) {
    %c0_i32 = arith.constant 0 : i32
    %c0_i32_0 = arith.constant 0 : i32
    %c0_i32_1 = arith.constant 0 : i32
    return %c0_i32, %c0_i32_0 : i32, i32
  }
  func.func @transform_10(%arg0: i32) -> (i32, i32) {
    %c0_i32 = arith.constant 0 : i32
    %c0_i32_0 = arith.constant 0 : i32
    %c0_i32_1 = arith.constant 0 : i32
    return %c0_i32, %c0_i32_0 : i32, i32
  }
  func.func @transform_11(%arg0: i32) -> (i32, i32) {
    %c0_i32 = arith.constant 0 : i32
    %c0_i32_0 = arith.constant 0 : i32
    return %arg0, %c0_i32 : i32, i32
  }
}

</mosaic_0001>

<llo_original>
// kernel: encoder_forward.1
$region0: #{encoder_forward.1}
  #allocation0 [shape = 'u32[]', space=smem, size = 0x4, offset = 0x4, fixed_abs, tag = 'smem constant byte address 0x4 - core index']
  #allocation1 [shape = 'u32[144,128]{1,0:T(1,128)}', space=vmem, size = 0x12000, scoped, tag = 'internal scratch']
  %s0 = inlined_call_operand.vmem [shape: f32[8,1200], index: 0, kind: input, shape index: {}]
  %s1 = inlined_call_operand.vmem [shape: bf16[1200,828], index: 1, kind: input, shape index: {}]
  %s2 = inlined_call_operand.vmem [shape: f32[1,828], index: 2, kind: input, shape index: {}]
  %s3 = inlined_call_operand.vmem [shape: bf16[828,756], index: 3, kind: input, shape index: {}]
  %s4 = inlined_call_operand.vmem [shape: f32[1,756], index: 4, kind: input, shape index: {}]
  %s5 = inlined_call_operand.vmem [shape: bf16[756,740], index: 5, kind: input, shape index: {}]
  %s6 = inlined_call_operand.vmem [shape: f32[1,740], index: 6, kind: input, shape index: {}]
  %s7 = inlined_call_operand.vmem [shape: bf16[740,435], index: 7, kind: input, shape index: {}]
  %s8 = inlined_call_operand.vmem [shape: f32[1,435], index: 8, kind: input, shape index: {}]
  %s9 = inlined_call_operand.vmem [shape: bf16[435,32], index: 9, kind: input, shape index: {}]
  %s10 = inlined_call_operand.vmem [shape: f32[1,32], index: 10, kind: input, shape index: {}]
  %s11 = inlined_call_operand.vmem [shape: f32[8,32], index: 11, kind: output, shape index: {}]
  %s12 = sld [smem:[#allocation0]]
  $region54: #{encoder_forward.1} parent=0
    _
  %s14 = ssub.s32 1, %s12
  %s15 = scalar_select 0, %s14, %s12
  // Predicated region
  $region2: #{encoder_forward.1} parent=0 // pred_check
    _
  $region3: #{encoder_forward.1} parent=0 // pred_check_branch
    %17 = sbr.rel (0) target = $region5
  $region4: #{encoder_forward.1} parent=0 // pred_region
    _
  $region5: #{encoder_forward.1} parent=0 // pred_fallthru
    _
  // Predicated region
  $region6: #{encoder_forward.1} parent=0 // pred_check
    _
  $region7: #{encoder_forward.1} parent=0 // pred_check_branch
    %19 = sbr.rel (0) target = $region9
  $region8: #{encoder_forward.1} parent=0 // pred_region
    _
  $region9: #{encoder_forward.1} parent=0 // pred_fallthru
    _
  // Predicated region
  $region10: #{encoder_forward.1} parent=0 // pred_check
    _
  $region11: #{encoder_forward.1} parent=0 // pred_check_branch
    %21 = sbr.rel (0) target = $region13
  $region12: #{encoder_forward.1} parent=0 // pred_region
    _
  $region13: #{encoder_forward.1} parent=0 // pred_fallthru
    _
  // Predicated region
  $region14: #{encoder_forward.1} parent=0 // pred_check
    _
  $region15: #{encoder_forward.1} parent=0 // pred_check_branch
    %23 = sbr.rel (0) target = $region17
  $region16: #{encoder_forward.1} parent=0 // pred_region
    _
  $region17: #{encoder_forward.1} parent=0 // pred_fallthru
    _
  // Predicated region
  $region18: #{encoder_forward.1} parent=0 // pred_check
    _
  $region19: #{encoder_forward.1} parent=0 // pred_check_branch
    %25 = sbr.rel (0) target = $region21
  $region20: #{encoder_forward.1} parent=0 // pred_region
    _
  $region21: #{encoder_forward.1} parent=0 // pred_fallthru
    _
  // Predicated region
  $region22: #{encoder_forward.1} parent=0 // pred_check
    _
  $region23: #{encoder_forward.1} parent=0 // pred_check_branch
    %27 = sbr.rel (0) target = $region25
  $region24: #{encoder_forward.1} parent=0 // pred_region
    _
  $region25: #{encoder_forward.1} parent=0 // pred_fallthru
    _
  // Predicated region
  $region26: #{encoder_forward.1} parent=0 // pred_check
    _
  $region27: #{encoder_forward.1} parent=0 // pred_check_branch
    %29 = sbr.rel (0) target = $region29
  $region28: #{encoder_forward.1} parent=0 // pred_region
    _
  $region29: #{encoder_forward.1} parent=0 // pred_fallthru
    _
  // Predicated region
  $region30: #{encoder_forward.1} parent=0 // pred_check
    _
  $region31: #{encoder_forward.1} parent=0 // pred_check_branch
    %31 = sbr.rel (0) target = $region33
  $region32: #{encoder_forward.1} parent=0 // pred_region
    _
  $region33: #{encoder_forward.1} parent=0 // pred_fallthru
    _
  // Predicated region
  $region34: #{encoder_forward.1} parent=0 // pred_check
    _
  $region35: #{encoder_forward.1} parent=0 // pred_check_branch
    %33 = sbr.rel (0) target = $region37
  $region36: #{encoder_forward.1} parent=0 // pred_region
    _
  $region37: #{encoder_forward.1} parent=0 // pred_fallthru
    _
  // Predicated region
  $region38: #{encoder_forward.1} parent=0 // pred_check
    _
  $region39: #{encoder_forward.1} parent=0 // pred_check_branch
    %35 = sbr.rel (0) target = $region41
  $region40: #{encoder_forward.1} parent=0 // pred_region
    _
  $region41: #{encoder_forward.1} parent=0 // pred_fallthru
    _
  // Predicated region
  $region42: #{encoder_forward.1} parent=0 // pred_check
    _
  $region43: #{encoder_forward.1} parent=0 // pred_check_branch
    %37 = sbr.rel (0) target = $region45
  $region44: #{encoder_forward.1} parent=0 // pred_region
    _
  $region45: #{encoder_forward.1} parent=0 // pred_fallthru
    _
  %v39 = vld [vmem:[%s0] sm:$0xff]
  %v40 = vld [vmem:[%s0 + $0x8] sm:$0xff]
  %v41 = vld [vmem:[%s0 + $0x10] sm:$0xff]
  %v42 = vld [vmem:[%s0 + $0x18] sm:$0xff]
  %v43 = vld [vmem:[%s0 + $0x20] sm:$0xff]
  %v44 = vld [vmem:[%s0 + $0x28] sm:$0xff]
  %v45 = vld [vmem:[%s0 + $0x30] sm:$0xff]
  %v46 = vld [vmem:[%s0 + $0x38] sm:$0xff]
  %v47 = vld [vmem:[%s0 + $0x40] sm:$0xff]
  %v48 = vld [vmem:[%s0 + $0x48] sm:$0xff]
  %v49 = vpack.c.bf16 %v39, %v39
  %v50 = vpack.c.bf16 %v40, %v40
  %v51 = vpack.c.bf16 %v41, %v41
  %v52 = vpack.c.bf16 %v42, %v42
  %v53 = vpack.c.bf16 %v43, %v43
  %v54 = vpack.c.bf16 %v44, %v44
  %v55 = vpack.c.bf16 %v45, %v45
  %v56 = vpack.c.bf16 %v46, %v46
  %v57 = vpack.c.bf16 %v47, %v47
  %v58 = vpack.c.bf16 %v48, %v48
  %v59 = vld [vmem:[%s1] sm:$0xff]
  %v60 = vld [vmem:[%s1 + $0x8] sm:$0xff]
  %v61 = vld [vmem:[%s1 + $0x10] sm:$0xff]
  %v62 = vld [vmem:[%s1 + $0x18] sm:$0xf]
  %v63 = vld [vmem:[%s1 + $0x1c] sm:$0xff]
  %v64 = vld [vmem:[%s1 + $0x24] sm:$0xff]
  %v65 = vld [vmem:[%s1 + $0x2c] sm:$0xff]
  %v66 = vld [vmem:[%s1 + $0x34] sm:$0xf]
  %v67 = vld [vmem:[%s1 + $0x38] sm:$0xff]
  %v68 = vld [vmem:[%s1 + $0x40] sm:$0xff]
  %v69 = vld [vmem:[%s1 + $0x48] sm:$0xff]
  %v70 = vld [vmem:[%s1 + $0x50] sm:$0xf]
  %v71 = vld [vmem:[%s1 + $0x54] sm:$0xff]
  %v72 = vld [vmem:[%s1 + $0x5c] sm:$0xff]
  %v73 = vld [vmem:[%s1 + $0x64] sm:$0xff]
  %v74 = vld [vmem:[%s1 + $0x6c] sm:$0xf]
  %v75 = vld [vmem:[%s1 + $0x70] sm:$0xff]
  %v76 = vld [vmem:[%s1 + $0x78] sm:$0xff]
  %v77 = vld [vmem:[%s1 + $0x80] sm:$0xff]
  %v78 = vld [vmem:[%s1 + $0x88] sm:$0xf]
  %v79 = vld [vmem:[%s1 + $0x8c] sm:$0xff]
  %v80 = vld [vmem:[%s1 + $0x94] sm:$0xff]
  %v81 = vld [vmem:[%s1 + $0x9c] sm:$0xff]
  %v82 = vld [vmem:[%s1 + $0xa4] sm:$0xf]
  %v83 = vld [vmem:[%s1 + $0xa8] sm:$0xff]
  %v84 = vld [vmem:[%s1 + $0xb0] sm:$0xff]
  %v85 = vld [vmem:[%s1 + $0xb8] sm:$0xff]
  %v86 = vld [vmem:[%s1 + $0xc0] sm:$0xf]
  %v87 = vld [vmem:[%s1 + $0xc4] sm:$0xff]
  %v88 = vld [vmem:[%s1 + $0xcc] sm:$0xff]
  %v89 = vld [vmem:[%s1 + $0xd4] sm:$0xff]
  %v90 = vld [vmem:[%s1 + $0xdc] sm:$0xf]
  %v91 = vld [vmem:[%s1 + $0xe0] sm:$0xff]
  %v92 = vld [vmem:[%s1 + $0xe8] sm:$0xff]
  %v93 = vld [vmem:[%s1 + $0xf0] sm:$0xff]
  %v94 = vld [vmem:[%s1 + $0xf8] sm:$0xf]
  %v95 = vld [vmem:[%s1 + $0xfc] sm:$0xff]
  %v96 = vld [vmem:[%s1 + $0x104] sm:$0xff]
  %v97 = vld [vmem:[%s1 + $0x10c] sm:$0xff]
  %v98 = vld [vmem:[%s1 + $0x114] sm:$0xf]
  %v99 = vld [vmem:[%s1 + $0x118] sm:$0xff]
  %v100 = vld [vmem:[%s1 + $0x120] sm:$0xff]
  %v101 = vld [vmem:[%s1 + $0x128] sm:$0xff]
  %v102 = vld [vmem:[%s1 + $0x130] sm:$0xf]
  %v103 = vld [vmem:[%s1 + $0x134] sm:$0xff]
  %v104 = vld [vmem:[%s1 + $0x13c] sm:$0xff]
  %v105 = vld [vmem:[%s1 + $0x144] sm:$0xff]
  %v106 = vld [vmem:[%s1 + $0x14c] sm:$0xf]
  %v107 = vld [vmem:[%s1 + $0x150] sm:$0xff]
  %v108 = vld [vmem:[%s1 + $0x158] sm:$0xff]
  %v109 = vld [vmem:[%s1 + $0x160] sm:$0xff]
  %v110 = vld [vmem:[%s1 + $0x168] sm:$0xf]
  %v111 = vld [vmem:[%s1 + $0x16c] sm:$0xff]
  %v112 = vld [vmem:[%s1 + $0x174] sm:$0xff]
  %v113 = vld [vmem:[%s1 + $0x17c] sm:$0xff]
  %v114 = vld [vmem:[%s1 + $0x184] sm:$0xf]
  %v115 = vld [vmem:[%s1 + $0x188] sm:$0xff]
  %v116 = vld [vmem:[%s1 + $0x190] sm:$0xff]
  %v117 = vld [vmem:[%s1 + $0x198] sm:$0xff]
  %v118 = vld [vmem:[%s1 + $0x1a0] sm:$0xf]
  %v119 = vld [vmem:[%s1 + $0x1a4] sm:$0xff]
  %v120 = vld [vmem:[%s1 + $0x1ac] sm:$0xff]
  %v121 = vld [vmem:[%s1 + $0x1b4] sm:$0xff]
  %v122 = vld [vmem:[%s1 + $0x1bc] sm:$0xf]
  %v123 = vld [vmem:[%s1 + $0x1c0] sm:$0xff]
  %v124 = vld [vmem:[%s1 + $0x1c8] sm:$0xff]
  %v125 = vld [vmem:[%s1 + $0x1d0] sm:$0xff]
  %v126 = vld [vmem:[%s1 + $0x1d8] sm:$0xf]
  %v127 = vld [vmem:[%s1 + $0x1dc] sm:$0xff]
  %v128 = vld [vmem:[%s1 + $0x1e4] sm:$0xff]
  %v129 = vld [vmem:[%s1 + $0x1ec] sm:$0xff]
  %v130 = vld [vmem:[%s1 + $0x1f4] sm:$0xf]
  %v131 = vld [vmem:[%s1 + $0x1f8] sm:$0xff]
  %v132 = vld [vmem:[%s1 + $0x200] sm:$0xff]
  %v133 = vld [vmem:[%s1 + $0x208] sm:$0xff]
  %v134 = vld [vmem:[%s1 + $0x210] sm:$0xf]
  %v135 = vld [vmem:[%s1 + $0x214] sm:$0xff]
  %v136 = vld [vmem:[%s1 + $0x21c] sm:$0xff]
  %v137 = vld [vmem:[%s1 + $0x224] sm:$0xff]
  %v138 = vld [vmem:[%s1 + $0x22c] sm:$0xf]
  %v139 = vld [vmem:[%s1 + $0x230] sm:$0xff]
  %v140 = vld [vmem:[%s1 + $0x238] sm:$0xff]
  %v141 = vld [vmem:[%s1 + $0x240] sm:$0xff]
  %v142 = vld [vmem:[%s1 + $0x248] sm:$0xf]
  %v143 = vld [vmem:[%s1 + $0x24c] sm:$0xff]
  %v144 = vld [vmem:[%s1 + $0x254] sm:$0xff]
  %v145 = vld [vmem:[%s1 + $0x25c] sm:$0xff]
  %v146 = vld [vmem:[%s1 + $0x264] sm:$0xf]
  %v147 = vld [vmem:[%s1 + $0x268] sm:$0xff]
  %v148 = vld [vmem:[%s1 + $0x270] sm:$0xff]
  %v149 = vld [vmem:[%s1 + $0x278] sm:$0xff]
  %v150 = vld [vmem:[%s1 + $0x280] sm:$0xf]
  %v151 = vld [vmem:[%s1 + $0x284] sm:$0xff]
  %v152 = vld [vmem:[%s1 + $0x28c] sm:$0xff]
  %v153 = vld [vmem:[%s1 + $0x294] sm:$0xff]
  %v154 = vld [vmem:[%s1 + $0x29c] sm:$0xf]
  %v155 = vld [vmem:[%s1 + $0x2a0] sm:$0xff]
  %v156 = vld [vmem:[%s1 + $0x2a8] sm:$0xff]
  %v157 = vld [vmem:[%s1 + $0x2b0] sm:$0xff]
  %v158 = vld [vmem:[%s1 + $0x2b8] sm:$0xf]
  %v159 = vld [vmem:[%s1 + $0x2bc] sm:$0xff]
  %v160 = vld [vmem:[%s1 + $0x2c4] sm:$0xff]
  %v161 = vld [vmem:[%s1 + $0x2cc] sm:$0xff]
  %v162 = vld [vmem:[%s1 + $0x2d4] sm:$0xf]
  %v163 = vld [vmem:[%s1 + $0x2d8] sm:$0xff]
  %v164 = vld [vmem:[%s1 + $0x2e0] sm:$0xff]
  %v165 = vld [vmem:[%s1 + $0x2e8] sm:$0xff]
  %v166 = vld [vmem:[%s1 + $0x2f0] sm:$0xf]
  %v167 = vld [vmem:[%s1 + $0x2f4] sm:$0xff]
  %v168 = vld [vmem:[%s1 + $0x2fc] sm:$0xff]
  %v169 = vld [vmem:[%s1 + $0x304] sm:$0xff]
  %v170 = vld [vmem:[%s1 + $0x30c] sm:$0xf]
  %v171 = vld [vmem:[%s1 + $0x310] sm:$0xff]
  %v172 = vld [vmem:[%s1 + $0x318] sm:$0xff]
  %v173 = vld [vmem:[%s1 + $0x320] sm:$0xff]
  %v174 = vld [vmem:[%s1 + $0x328] sm:$0xf]
  %v175 = vld [vmem:[%s1 + $0x32c] sm:$0xff]
  %v176 = vld [vmem:[%s1 + $0x334] sm:$0xff]
  %v177 = vld [vmem:[%s1 + $0x33c] sm:$0xff]
  %v178 = vld [vmem:[%s1 + $0x344] sm:$0xf]
  %v179 = vld [vmem:[%s1 + $0x348] sm:$0xff]
  %v180 = vld [vmem:[%s1 + $0x350] sm:$0xff]
  %v181 = vld [vmem:[%s1 + $0x358] sm:$0xff]
  %v182 = vld [vmem:[%s1 + $0x360] sm:$0xf]
  %v183 = vld [vmem:[%s1 + $0x364] sm:$0xff]
  %v184 = vld [vmem:[%s1 + $0x36c] sm:$0xff]
  %v185 = vld [vmem:[%s1 + $0x374] sm:$0xff]
  %v186 = vld [vmem:[%s1 + $0x37c] sm:$0xf]
  %v187 = vld [vmem:[%s1 + $0x380] sm:$0xff]
  %v188 = vld [vmem:[%s1 + $0x388] sm:$0xff]
  %v189 = vld [vmem:[%s1 + $0x390] sm:$0xff]
  %v190 = vld [vmem:[%s1 + $0x398] sm:$0xf]
  %v191 = vld [vmem:[%s1 + $0x39c] sm:$0xff]
  %v192 = vld [vmem:[%s1 + $0x3a4] sm:$0xff]
  %v193 = vld [vmem:[%s1 + $0x3ac] sm:$0xff]
  %v194 = vld [vmem:[%s1 + $0x3b4] sm:$0xf]
  %v195 = vld [vmem:[%s1 + $0x3b8] sm:$0xff]
  %v196 = vld [vmem:[%s1 + $0x3c0] sm:$0xff]
  %v197 = vld [vmem:[%s1 + $0x3c8] sm:$0xff]
  %v198 = vld [vmem:[%s1 + $0x3d0] sm:$0xf]
  %v199 = vld [vmem:[%s1 + $0x3d4] sm:$0xff]
  %v200 = vld [vmem:[%s1 + $0x3dc] sm:$0xff]
  %v201 = vld [vmem:[%s1 + $0x3e4] sm:$0xff]
  %v202 = vld [vmem:[%s1 + $0x3ec] sm:$0xf]
  %v203 = vld [vmem:[%s1 + $0x3f0] sm:$0xff]
  %v204 = vld [vmem:[%s1 + $0x3f8] sm:$0xff]
  %v205 = vld [vmem:[%s1 + $0x400] sm:$0xff]
  %v206 = vld [vmem:[%s1 + $0x408] sm:$0xf]
  %v207 = vld [vmem:[%s1 + $0x40c] sm:$0xff]
  %v208 = vld [vmem:[%s1 + $0x414] sm:$0xff]
  %v209 = vld [vmem:[%s1 + $0x41c] sm:$0xff]
  %v210 = vld [vmem:[%s1 + $0x424] sm:$0xf]
  %v211 = vld [vmem:[%s1 + $0x428] sm:$0xff]
  %v212 = vld [vmem:[%s1 + $0x430] sm:$0xff]
  %v213 = vld [vmem:[%s1 + $0x438] sm:$0xff]
  %v214 = vld [vmem:[%s1 + $0x440] sm:$0xf]
  %v215 = vld [vmem:[%s1 + $0x444] sm:$0xff]
  %v216 = vld [vmem:[%s1 + $0x44c] sm:$0xff]
  %v217 = vld [vmem:[%s1 + $0x454] sm:$0xff]
  %v218 = vld [vmem:[%s1 + $0x45c] sm:$0xf]
  %v219 = vld [vmem:[%s1 + $0x460] sm:$0xff]
  %v220 = vld [vmem:[%s1 + $0x468] sm:$0xff]
  %v221 = vld [vmem:[%s1 + $0x470] sm:$0xff]
  %v222 = vld [vmem:[%s1 + $0x478] sm:$0xf]
  %v223 = vld [vmem:[%s1 + $0x47c] sm:$0xff]
  %v224 = vld [vmem:[%s1 + $0x484] sm:$0xff]
  %v225 = vld [vmem:[%s1 + $0x48c] sm:$0xff]
  %v226 = vld [vmem:[%s1 + $0x494] sm:$0xf]
  %v227 = vld [vmem:[%s1 + $0x498] sm:$0xff]
  %v228 = vld [vmem:[%s1 + $0x4a0] sm:$0xff]
  %v229 = vld [vmem:[%s1 + $0x4a8] sm:$0xff]
  %v230 = vld [vmem:[%s1 + $0x4b0] sm:$0xf]
  %v231 = vld [vmem:[%s1 + $0x4b4] sm:$0xff]
  %v232 = vld [vmem:[%s1 + $0x4bc] sm:$0xff]
  %v233 = vld [vmem:[%s1 + $0x4c4] sm:$0xff]
  %v234 = vld [vmem:[%s1 + $0x4cc] sm:$0xf]
  %v235 = vld [vmem:[%s1 + $0x4d0] sm:$0xff]
  %v236 = vld [vmem:[%s1 + $0x4d8] sm:$0xff]
  %v237 = vld [vmem:[%s1 + $0x4e0] sm:$0xff]
  %v238 = vld [vmem:[%s1 + $0x4e8] sm:$0xf]
  %v239 = vld [vmem:[%s1 + $0x4ec] sm:$0xff]
  %v240 = vld [vmem:[%s1 + $0x4f4] sm:$0xff]
  %v241 = vld [vmem:[%s1 + $0x4fc] sm:$0xff]
  %v242 = vld [vmem:[%s1 + $0x504] sm:$0xf]
  %v243 = vld [vmem:[%s1 + $0x508] sm:$0xff]
  %v244 = vld [vmem:[%s1 + $0x510] sm:$0xff]
  %v245 = vld [vmem:[%s1 + $0x518] sm:$0xff]
  %v246 = vld [vmem:[%s1 + $0x520] sm:$0xf]
  %v247 = vld [vmem:[%s1 + $0x524] sm:$0xff]
  %v248 = vld [vmem:[%s1 + $0x52c] sm:$0xff]
  %v249 = vld [vmem:[%s1 + $0x534] sm:$0xff]
  %v250 = vld [vmem:[%s1 + $0x53c] sm:$0xf]
  %v251 = vld [vmem:[%s1 + $0x540] sm:$0xff]
  %v252 = vld [vmem:[%s1 + $0x548] sm:$0xff]
  %v253 = vld [vmem:[%s1 + $0x550] sm:$0xff]
  %v254 = vld [vmem:[%s1 + $0x558] sm:$0xf]
  %v255 = vld [vmem:[%s1 + $0x55c] sm:$0xff]
  %v256 = vld [vmem:[%s1 + $0x564] sm:$0xff]
  %v257 = vld [vmem:[%s1 + $0x56c] sm:$0xff]
  %v258 = vld [vmem:[%s1 + $0x574] sm:$0xf]
  %v259 = vld [vmem:[%s1 + $0x578] sm:$0xff]
  %v260 = vld [vmem:[%s1 + $0x580] sm:$0xff]
  %v261 = vld [vmem:[%s1 + $0x588] sm:$0xff]
  %v262 = vld [vmem:[%s1 + $0x590] sm:$0xf]
  %v263 = vld [vmem:[%s1 + $0x594] sm:$0xff]
  %v264 = vld [vmem:[%s1 + $0x59c] sm:$0xff]
  %v265 = vld [vmem:[%s1 + $0x5a4] sm:$0xff]
  %v266 = vld [vmem:[%s1 + $0x5ac] sm:$0xf]
  %v267 = vld [vmem:[%s1 + $0x5b0] sm:$0xff]
  %v268 = vld [vmem:[%s1 + $0x5b8] sm:$0xff]
  %v269 = vld [vmem:[%s1 + $0x5c0] sm:$0xff]
  %v270 = vld [vmem:[%s1 + $0x5c8] sm:$0xf]
  %v271 = vld [vmem:[%s1 + $0x5cc] sm:$0xff]
  %v272 = vld [vmem:[%s1 + $0x5d4] sm:$0xff]
  %v273 = vld [vmem:[%s1 + $0x5dc] sm:$0xff]
  %v274 = vld [vmem:[%s1 + $0x5e4] sm:$0xf]
  %v275 = vld [vmem:[%s1 + $0x5e8] sm:$0xff]
  %v276 = vld [vmem:[%s1 + $0x5f0] sm:$0xff]
  %v277 = vld [vmem:[%s1 + $0x5f8] sm:$0xff]
  %v278 = vld [vmem:[%s1 + $0x600] sm:$0xf]
  %v279 = vld [vmem:[%s1 + $0x604] sm:$0xff]
  %v280 = vld [vmem:[%s1 + $0x60c] sm:$0xff]
  %v281 = vld [vmem:[%s1 + $0x614] sm:$0xff]
  %v282 = vld [vmem:[%s1 + $0x61c] sm:$0xf]
  %v283 = vld [vmem:[%s1 + $0x620] sm:$0xff]
  %v284 = vld [vmem:[%s1 + $0x628] sm:$0xff]
  %v285 = vld [vmem:[%s1 + $0x630] sm:$0xff]
  %v286 = vld [vmem:[%s1 + $0x638] sm:$0xf]
  %v287 = vld [vmem:[%s1 + $0x63c] sm:$0xff]
  %v288 = vld [vmem:[%s1 + $0x644] sm:$0xff]
  %v289 = vld [vmem:[%s1 + $0x64c] sm:$0xff]
  %v290 = vld [vmem:[%s1 + $0x654] sm:$0xf]
  %v291 = vld [vmem:[%s1 + $0x658] sm:$0xff]
  %v292 = vld [vmem:[%s1 + $0x660] sm:$0xff]
  %v293 = vld [vmem:[%s1 + $0x668] sm:$0xff]
  %v294 = vld [vmem:[%s1 + $0x670] sm:$0xf]
  %v295 = vld [vmem:[%s1 + $0x674] sm:$0xff]
  %v296 = vld [vmem:[%s1 + $0x67c] sm:$0xff]
  %v297 = vld [vmem:[%s1 + $0x684] sm:$0xff]
  %v298 = vld [vmem:[%s1 + $0x68c] sm:$0xf]
  %v299 = vld [vmem:[%s1 + $0x690] sm:$0xff]
  %v300 = vld [vmem:[%s1 + $0x698] sm:$0xff]
  %v301 = vld [vmem:[%s1 + $0x6a0] sm:$0xff]
  %v302 = vld [vmem:[%s1 + $0x6a8] sm:$0xf]
  %v303 = vld [vmem:[%s1 + $0x6ac] sm:$0xff]
  %v304 = vld [vmem:[%s1 + $0x6b4] sm:$0xff]
  %v305 = vld [vmem:[%s1 + $0x6bc] sm:$0xff]
  %v306 = vld [vmem:[%s1 + $0x6c4] sm:$0xf]
  %v307 = vld [vmem:[%s1 + $0x6c8] sm:$0xff]
  %v308 = vld [vmem:[%s1 + $0x6d0] sm:$0xff]
  %v309 = vld [vmem:[%s1 + $0x6d8] sm:$0xff]
  %v310 = vld [vmem:[%s1 + $0x6e0] sm:$0xf]
  %v311 = vld [vmem:[%s1 + $0x6e4] sm:$0xff]
  %v312 = vld [vmem:[%s1 + $0x6ec] sm:$0xff]
  %v313 = vld [vmem:[%s1 + $0x6f4] sm:$0xff]
  %v314 = vld [vmem:[%s1 + $0x6fc] sm:$0xf]
  %v315 = vld [vmem:[%s1 + $0x700] sm:$0xff]
  %v316 = vld [vmem:[%s1 + $0x708] sm:$0xff]
  %v317 = vld [vmem:[%s1 + $0x710] sm:$0xff]
  %v318 = vld [vmem:[%s1 + $0x718] sm:$0xf]
  %v319 = vld [vmem:[%s1 + $0x71c] sm:$0xff]
  %v320 = vld [vmem:[%s1 + $0x724] sm:$0xff]
  %v321 = vld [vmem:[%s1 + $0x72c] sm:$0xff]
  %v322 = vld [vmem:[%s1 + $0x734] sm:$0xf]
  %v323 = vld [vmem:[%s1 + $0x738] sm:$0xff]
  %v324 = vld [vmem:[%s1 + $0x740] sm:$0xff]
  %v325 = vld [vmem:[%s1 + $0x748] sm:$0xff]
  %v326 = vld [vmem:[%s1 + $0x750] sm:$0xf]
  %v327 = vld [vmem:[%s1 + $0x754] sm:$0xff]
  %v328 = vld [vmem:[%s1 + $0x75c] sm:$0xff]
  %v329 = vld [vmem:[%s1 + $0x764] sm:$0xff]
  %v330 = vld [vmem:[%s1 + $0x76c] sm:$0xf]
  %v331 = vld [vmem:[%s1 + $0x770] sm:$0xff]
  %v332 = vld [vmem:[%s1 + $0x778] sm:$0xff]
  %v333 = vld [vmem:[%s1 + $0x780] sm:$0xff]
  %v334 = vld [vmem:[%s1 + $0x788] sm:$0xf]
  %v335 = vld [vmem:[%s1 + $0x78c] sm:$0xff]
  %v336 = vld [vmem:[%s1 + $0x794] sm:$0xff]
  %v337 = vld [vmem:[%s1 + $0x79c] sm:$0xff]
  %v338 = vld [vmem:[%s1 + $0x7a4] sm:$0xf]
  %v339 = vld [vmem:[%s1 + $0x7a8] sm:$0xff]
  %v340 = vld [vmem:[%s1 + $0x7b0] sm:$0xff]
  %v341 = vld [vmem:[%s1 + $0x7b8] sm:$0xff]
  %v342 = vld [vmem:[%s1 + $0x7c0] sm:$0xf]
  %v343 = vld [vmem:[%s1 + $0x7c4] sm:$0xff]
  %v344 = vld [vmem:[%s1 + $0x7cc] sm:$0xff]
  %v345 = vld [vmem:[%s1 + $0x7d4] sm:$0xff]
  %v346 = vld [vmem:[%s1 + $0x7dc] sm:$0xf]
  %v347 = vld [vmem:[%s1 + $0x7e0] sm:$0xff]
  %v348 = vld [vmem:[%s1 + $0x7e8] sm:$0xff]
  %v349 = vld [vmem:[%s1 + $0x7f0] sm:$0xff]
  %v350 = vld [vmem:[%s1 + $0x7f8] sm:$0xf]
  %v351 = vld [vmem:[%s1 + $0x7fc] sm:$0xff]
  %v352 = vld [vmem:[%s1 + $0x804] sm:$0xff]
  %v353 = vld [vmem:[%s1 + $0x80c] sm:$0xff]
  %v354 = vld [vmem:[%s1 + $0x814] sm:$0xf]
  %v355 = vld [vmem:[%s1 + $0x818] sm:$0xff]
  %v356 = vld [vmem:[%s1 + $0x820] sm:$0xff]
  %v357 = vld [vmem:[%s1 + $0x828] sm:$0xff]
  %v358 = vld [vmem:[%s1 + $0x830] sm:$0xf]
  %v359 = vld [vmem:[%s1 + $0x834] sm:$0xff]
  %v360 = vld [vmem:[%s1 + $0x83c] sm:$0xff]
  %v361 = vld [vmem:[%s1 + $0x844] sm:$0xff]
  %v362 = vld [vmem:[%s1 + $0x84c] sm:$0xf]
  %v363 = vld [vmem:[%s1 + $0x850] sm:$0xff]
  %v364 = vld [vmem:[%s1 + $0x858] sm:$0xff]
  %v365 = vld [vmem:[%s1 + $0x860] sm:$0xff]
  %v366 = vld [vmem:[%s1 + $0x868] sm:$0xf]
  %v367 = vld [vmem:[%s1 + $0x86c] sm:$0xff]
  %v368 = vld [vmem:[%s1 + $0x874] sm:$0xff]
  %v369 = vld [vmem:[%s1 + $0x87c] sm:$0xff]
  %v370 = vld [vmem:[%s1 + $0x884] sm:$0xf]
  %v371 = vld [vmem:[%s1 + $0x888] sm:$0xff]
  %v372 = vld [vmem:[%s1 + $0x890] sm:$0xff]
  %v373 = vld [vmem:[%s1 + $0x898] sm:$0xff]
  %v374 = vld [vmem:[%s1 + $0x8a0] sm:$0xf]
  %v375 = vld [vmem:[%s1 + $0x8a4] sm:$0xff]
  %v376 = vld [vmem:[%s1 + $0x8ac] sm:$0xff]
  %v377 = vld [vmem:[%s1 + $0x8b4] sm:$0xff]
  %v378 = vld [vmem:[%s1 + $0x8bc] sm:$0xf]
  %v379 = vld [vmem:[%s1 + $0x8c0] sm:$0xff]
  %v380 = vld [vmem:[%s1 + $0x8c8] sm:$0xff]
  %v381 = vld [vmem:[%s1 + $0x8d0] sm:$0xff]
  %v382 = vld [vmem:[%s1 + $0x8d8] sm:$0xf]
  %v383 = vld [vmem:[%s1 + $0x8dc] sm:$0xff]
  %v384 = vld [vmem:[%s1 + $0x8e4] sm:$0xff]
  %v385 = vld [vmem:[%s1 + $0x8ec] sm:$0xff]
  %v386 = vld [vmem:[%s1 + $0x8f4] sm:$0xf]
  %v387 = vld [vmem:[%s1 + $0x8f8] sm:$0xff]
  %v388 = vld [vmem:[%s1 + $0x900] sm:$0xff]
  %v389 = vld [vmem:[%s1 + $0x908] sm:$0xff]
  %v390 = vld [vmem:[%s1 + $0x910] sm:$0xf]
  %v391 = vld [vmem:[%s1 + $0x914] sm:$0xff]
  %v392 = vld [vmem:[%s1 + $0x91c] sm:$0xff]
  %v393 = vld [vmem:[%s1 + $0x924] sm:$0xff]
  %v394 = vld [vmem:[%s1 + $0x92c] sm:$0xf]
  %v395 = vld [vmem:[%s1 + $0x930] sm:$0xff]
  %v396 = vld [vmem:[%s1 + $0x938] sm:$0xff]
  %v397 = vld [vmem:[%s1 + $0x940] sm:$0xff]
  %v398 = vld [vmem:[%s1 + $0x948] sm:$0xf]
  %v399 = vld [vmem:[%s1 + $0x94c] sm:$0xff]
  %v400 = vld [vmem:[%s1 + $0x954] sm:$0xff]
  %v401 = vld [vmem:[%s1 + $0x95c] sm:$0xff]
  %v402 = vld [vmem:[%s1 + $0x964] sm:$0xf]
  %v403 = vld [vmem:[%s1 + $0x968] sm:$0xff]
  %v404 = vld [vmem:[%s1 + $0x970] sm:$0xff]
  %v405 = vld [vmem:[%s1 + $0x978] sm:$0xff]
  %v406 = vld [vmem:[%s1 + $0x980] sm:$0xf]
  %v407 = vld [vmem:[%s1 + $0x984] sm:$0xff]
  %v408 = vld [vmem:[%s1 + $0x98c] sm:$0xff]
  %v409 = vld [vmem:[%s1 + $0x994] sm:$0xff]
  %v410 = vld [vmem:[%s1 + $0x99c] sm:$0xf]
  %v411 = vld [vmem:[%s1 + $0x9a0] sm:$0xff]
  %v412 = vld [vmem:[%s1 + $0x9a8] sm:$0xff]
  %v413 = vld [vmem:[%s1 + $0x9b0] sm:$0xff]
  %v414 = vld [vmem:[%s1 + $0x9b8] sm:$0xf]
  %v415 = vld [vmem:[%s1 + $0x9bc] sm:$0xff]
  %v416 = vld [vmem:[%s1 + $0x9c4] sm:$0xff]
  %v417 = vld [vmem:[%s1 + $0x9cc] sm:$0xff]
  %v418 = vld [vmem:[%s1 + $0x9d4] sm:$0xf]
  %v419 = vld [vmem:[%s1 + $0x9d8] sm:$0xff]
  %v420 = vld [vmem:[%s1 + $0x9e0] sm:$0xff]
  %v421 = vld [vmem:[%s1 + $0x9e8] sm:$0xff]
  %v422 = vld [vmem:[%s1 + $0x9f0] sm:$0xf]
  %v423 = vld [vmem:[%s1 + $0x9f4] sm:$0xff]
  %v424 = vld [vmem:[%s1 + $0x9fc] sm:$0xff]
  %v425 = vld [vmem:[%s1 + $0xa04] sm:$0xff]
  %v426 = vld [vmem:[%s1 + $0xa0c] sm:$0xf]
  %v427 = vld [vmem:[%s1 + $0xa10] sm:$0xff]
  %v428 = vld [vmem:[%s1 + $0xa18] sm:$0xff]
  %v429 = vld [vmem:[%s1 + $0xa20] sm:$0xff]
  %v430 = vld [vmem:[%s1 + $0xa28] sm:$0xf]
  %v431 = vld [vmem:[%s1 + $0xa2c] sm:$0xff]
  %v432 = vld [vmem:[%s1 + $0xa34] sm:$0xff]
  %v433 = vld [vmem:[%s1 + $0xa3c] sm:$0xff]
  %v434 = vld [vmem:[%s1 + $0xa44] sm:$0xf]
  %v435 = vld [vmem:[%s1 + $0xa48] sm:$0xff]
  %v436 = vld [vmem:[%s1 + $0xa50] sm:$0xff]
  %v437 = vld [vmem:[%s1 + $0xa58] sm:$0xff]
  %v438 = vld [vmem:[%s1 + $0xa60] sm:$0xf]
  %v439 = vld [vmem:[%s1 + $0xa64] sm:$0xff]
  %v440 = vld [vmem:[%s1 + $0xa6c] sm:$0xff]
  %v441 = vld [vmem:[%s1 + $0xa74] sm:$0xff]
  %v442 = vld [vmem:[%s1 + $0xa7c] sm:$0xf]
  %v443 = vld [vmem:[%s1 + $0xa80] sm:$0xff]
  %v444 = vld [vmem:[%s1 + $0xa88] sm:$0xff]
  %v445 = vld [vmem:[%s1 + $0xa90] sm:$0xff]
  %v446 = vld [vmem:[%s1 + $0xa98] sm:$0xf]
  %v447 = vld [vmem:[%s1 + $0xa9c] sm:$0xff]
  %v448 = vld [vmem:[%s1 + $0xaa4] sm:$0xff]
  %v449 = vld [vmem:[%s1 + $0xaac] sm:$0xff]
  %v450 = vld [vmem:[%s1 + $0xab4] sm:$0xf]
  %v451 = vld [vmem:[%s1 + $0xab8] sm:$0xff]
  %v452 = vld [vmem:[%s1 + $0xac0] sm:$0xff]
  %v453 = vld [vmem:[%s1 + $0xac8] sm:$0xff]
  %v454 = vld [vmem:[%s1 + $0xad0] sm:$0xf]
  %v455 = vld [vmem:[%s1 + $0xad4] sm:$0xff]
  %v456 = vld [vmem:[%s1 + $0xadc] sm:$0xff]
  %v457 = vld [vmem:[%s1 + $0xae4] sm:$0xff]
  %v458 = vld [vmem:[%s1 + $0xaec] sm:$0xf]
  %v459 = vld [vmem:[%s1 + $0xaf0] sm:$0xff]
  %v460 = vld [vmem:[%s1 + $0xaf8] sm:$0xff]
  %v461 = vld [vmem:[%s1 + $0xb00] sm:$0xff]
  %v462 = vld [vmem:[%s1 + $0xb08] sm:$0xf]
  %v463 = vld [vmem:[%s1 + $0xb0c] sm:$0xff]
  %v464 = vld [vmem:[%s1 + $0xb14] sm:$0xff]
  %v465 = vld [vmem:[%s1 + $0xb1c] sm:$0xff]
  %v466 = vld [vmem:[%s1 + $0xb24] sm:$0xf]
  %v467 = vld [vmem:[%s1 + $0xb28] sm:$0xff]
  %v468 = vld [vmem:[%s1 + $0xb30] sm:$0xff]
  %v469 = vld [vmem:[%s1 + $0xb38] sm:$0xff]
  %v470 = vld [vmem:[%s1 + $0xb40] sm:$0xf]
  %v471 = vld [vmem:[%s1 + $0xb44] sm:$0xff]
  %v472 = vld [vmem:[%s1 + $0xb4c] sm:$0xff]
  %v473 = vld [vmem:[%s1 + $0xb54] sm:$0xff]
  %v474 = vld [vmem:[%s1 + $0xb5c] sm:$0xf]
  %v475 = vld [vmem:[%s1 + $0xb60] sm:$0xff]
  %v476 = vld [vmem:[%s1 + $0xb68] sm:$0xff]
  %v477 = vld [vmem:[%s1 + $0xb70] sm:$0xff]
  %v478 = vld [vmem:[%s1 + $0xb78] sm:$0xf]
  %v479 = vld [vmem:[%s1 + $0xb7c] sm:$0xff]
  %v480 = vld [vmem:[%s1 + $0xb84] sm:$0xff]
  %v481 = vld [vmem:[%s1 + $0xb8c] sm:$0xff]
  %v482 = vld [vmem:[%s1 + $0xb94] sm:$0xf]
  %v483 = vld [vmem:[%s1 + $0xb98] sm:$0xff]
  %v484 = vld [vmem:[%s1 + $0xba0] sm:$0xff]
  %v485 = vld [vmem:[%s1 + $0xba8] sm:$0xff]
  %v486 = vld [vmem:[%s1 + $0xbb0] sm:$0xf]
  %v487 = vld [vmem:[%s1 + $0xbb4] sm:$0xff]
  %v488 = vld [vmem:[%s1 + $0xbbc] sm:$0xff]
  %v489 = vld [vmem:[%s1 + $0xbc4] sm:$0xff]
  %v490 = vld [vmem:[%s1 + $0xbcc] sm:$0xf]
  %v491 = vld [vmem:[%s1 + $0xbd0] sm:$0xff]
  %v492 = vld [vmem:[%s1 + $0xbd8] sm:$0xff]
  %v493 = vld [vmem:[%s1 + $0xbe0] sm:$0xff]
  %v494 = vld [vmem:[%s1 + $0xbe8] sm:$0xf]
  %v495 = vld [vmem:[%s1 + $0xbec] sm:$0xff]
  %v496 = vld [vmem:[%s1 + $0xbf4] sm:$0xff]
  %v497 = vld [vmem:[%s1 + $0xbfc] sm:$0xff]
  %v498 = vld [vmem:[%s1 + $0xc04] sm:$0xf]
  %v499 = vld [vmem:[%s1 + $0xc08] sm:$0xff]
  %v500 = vld [vmem:[%s1 + $0xc10] sm:$0xff]
  %v501 = vld [vmem:[%s1 + $0xc18] sm:$0xff]
  %v502 = vld [vmem:[%s1 + $0xc20] sm:$0xf]
  %v503 = vld [vmem:[%s1 + $0xc24] sm:$0xff]
  %v504 = vld [vmem:[%s1 + $0xc2c] sm:$0xff]
  %v505 = vld [vmem:[%s1 + $0xc34] sm:$0xff]
  %v506 = vld [vmem:[%s1 + $0xc3c] sm:$0xf]
  %v507 = vld [vmem:[%s1 + $0xc40] sm:$0xff]
  %v508 = vld [vmem:[%s1 + $0xc48] sm:$0xff]
  %v509 = vld [vmem:[%s1 + $0xc50] sm:$0xff]
  %v510 = vld [vmem:[%s1 + $0xc58] sm:$0xf]
  %v511 = vld [vmem:[%s1 + $0xc5c] sm:$0xff]
  %v512 = vld [vmem:[%s1 + $0xc64] sm:$0xff]
  %v513 = vld [vmem:[%s1 + $0xc6c] sm:$0xff]
  %v514 = vld [vmem:[%s1 + $0xc74] sm:$0xf]
  %v515 = vld [vmem:[%s1 + $0xc78] sm:$0xff]
  %v516 = vld [vmem:[%s1 + $0xc80] sm:$0xff]
  %v517 = vld [vmem:[%s1 + $0xc88] sm:$0xff]
  %v518 = vld [vmem:[%s1 + $0xc90] sm:$0xf]
  %v519 = vld [vmem:[%s1 + $0xc94] sm:$0xff]
  %v520 = vld [vmem:[%s1 + $0xc9c] sm:$0xff]
  %v521 = vld [vmem:[%s1 + $0xca4] sm:$0xff]
  %v522 = vld [vmem:[%s1 + $0xcac] sm:$0xf]
  %v523 = vld [vmem:[%s1 + $0xcb0] sm:$0xff]
  %v524 = vld [vmem:[%s1 + $0xcb8] sm:$0xff]
  %v525 = vld [vmem:[%s1 + $0xcc0] sm:$0xff]
  %v526 = vld [vmem:[%s1 + $0xcc8] sm:$0xf]
  %v527 = vld [vmem:[%s1 + $0xccc] sm:$0xff]
  %v528 = vld [vmem:[%s1 + $0xcd4] sm:$0xff]
  %v529 = vld [vmem:[%s1 + $0xcdc] sm:$0xff]
  %v530 = vld [vmem:[%s1 + $0xce4] sm:$0xf]
  %v531 = vld [vmem:[%s1 + $0xce8] sm:$0xff]
  %v532 = vld [vmem:[%s1 + $0xcf0] sm:$0xff]
  %v533 = vld [vmem:[%s1 + $0xcf8] sm:$0xff]
  %v534 = vld [vmem:[%s1 + $0xd00] sm:$0xf]
  %v535 = vld [vmem:[%s1 + $0xd04] sm:$0xff]
  %v536 = vld [vmem:[%s1 + $0xd0c] sm:$0xff]
  %v537 = vld [vmem:[%s1 + $0xd14] sm:$0xff]
  %v538 = vld [vmem:[%s1 + $0xd1c] sm:$0xf]
  %v539 = vld [vmem:[%s1 + $0xd20] sm:$0xff]
  %v540 = vld [vmem:[%s1 + $0xd28] sm:$0xff]
  %v541 = vld [vmem:[%s1 + $0xd30] sm:$0xff]
  %v542 = vld [vmem:[%s1 + $0xd38] sm:$0xf]
  %v543 = vld [vmem:[%s1 + $0xd3c] sm:$0xff]
  %v544 = vld [vmem:[%s1 + $0xd44] sm:$0xff]
  %v545 = vld [vmem:[%s1 + $0xd4c] sm:$0xff]
  %v546 = vld [vmem:[%s1 + $0xd54] sm:$0xf]
  %v547 = vld [vmem:[%s1 + $0xd58] sm:$0xff]
  %v548 = vld [vmem:[%s1 + $0xd60] sm:$0xff]
  %v549 = vld [vmem:[%s1 + $0xd68] sm:$0xff]
  %v550 = vld [vmem:[%s1 + $0xd70] sm:$0xf]
  %v551 = vld [vmem:[%s1 + $0xd74] sm:$0xff]
  %v552 = vld [vmem:[%s1 + $0xd7c] sm:$0xff]
  %v553 = vld [vmem:[%s1 + $0xd84] sm:$0xff]
  %v554 = vld [vmem:[%s1 + $0xd8c] sm:$0xf]
  %v555 = vld [vmem:[%s1 + $0xd90] sm:$0xff]
  %v556 = vld [vmem:[%s1 + $0xd98] sm:$0xff]
  %v557 = vld [vmem:[%s1 + $0xda0] sm:$0xff]
  %v558 = vld [vmem:[%s1 + $0xda8] sm:$0xf]
  %v559 = vld [vmem:[%s1 + $0xdac] sm:$0xff]
  %v560 = vld [vmem:[%s1 + $0xdb4] sm:$0xff]
  %v561 = vld [vmem:[%s1 + $0xdbc] sm:$0xff]
  %v562 = vld [vmem:[%s1 + $0xdc4] sm:$0xf]
  %v563 = vld [vmem:[%s1 + $0xdc8] sm:$0xff]
  %v564 = vld [vmem:[%s1 + $0xdd0] sm:$0xff]
  %v565 = vld [vmem:[%s1 + $0xdd8] sm:$0xff]
  %v566 = vld [vmem:[%s1 + $0xde0] sm:$0xf]
  %v567 = vld [vmem:[%s1 + $0xde4] sm:$0xff]
  %v568 = vld [vmem:[%s1 + $0xdec] sm:$0xff]
  %v569 = vld [vmem:[%s1 + $0xdf4] sm:$0xff]
  %v570 = vld [vmem:[%s1 + $0xdfc] sm:$0xf]
  %v571 = vld [vmem:[%s1 + $0xe00] sm:$0xff]
  %v572 = vld [vmem:[%s1 + $0xe08] sm:$0xff]
  %v573 = vld [vmem:[%s1 + $0xe10] sm:$0xff]
  %v574 = vld [vmem:[%s1 + $0xe18] sm:$0xf]
  %v575 = vld [vmem:[%s1 + $0xe1c] sm:$0xff]
  %v576 = vld [vmem:[%s1 + $0xe24] sm:$0xff]
  %v577 = vld [vmem:[%s1 + $0xe2c] sm:$0xff]
  %v578 = vld [vmem:[%s1 + $0xe34] sm:$0xf]
  %v579 = vld [vmem:[%s1 + $0xe38] sm:$0xff]
  %v580 = vld [vmem:[%s1 + $0xe40] sm:$0xff]
  %v581 = vld [vmem:[%s1 + $0xe48] sm:$0xff]
  %v582 = vld [vmem:[%s1 + $0xe50] sm:$0xf]
  %v583 = vld [vmem:[%s1 + $0xe54] sm:$0xff]
  %v584 = vld [vmem:[%s1 + $0xe5c] sm:$0xff]
  %v585 = vld [vmem:[%s1 + $0xe64] sm:$0xff]
  %v586 = vld [vmem:[%s1 + $0xe6c] sm:$0xf]
  %v587 = vld [vmem:[%s1 + $0xe70] sm:$0xff]
  %v588 = vld [vmem:[%s1 + $0xe78] sm:$0xff]
  %v589 = vld [vmem:[%s1 + $0xe80] sm:$0xff]
  %v590 = vld [vmem:[%s1 + $0xe88] sm:$0xf]
  %v591 = vld [vmem:[%s1 + $0xe8c] sm:$0xff]
  %v592 = vld [vmem:[%s1 + $0xe94] sm:$0xff]
  %v593 = vld [vmem:[%s1 + $0xe9c] sm:$0xff]
  %v594 = vld [vmem:[%s1 + $0xea4] sm:$0xf]
  %v595 = vld [vmem:[%s1 + $0xea8] sm:$0xff]
  %v596 = vld [vmem:[%s1 + $0xeb0] sm:$0xff]
  %v597 = vld [vmem:[%s1 + $0xeb8] sm:$0xff]
  %v598 = vld [vmem:[%s1 + $0xec0] sm:$0xf]
  %v599 = vld [vmem:[%s1 + $0xec4] sm:$0xff]
  %v600 = vld [vmem:[%s1 + $0xecc] sm:$0xff]
  %v601 = vld [vmem:[%s1 + $0xed4] sm:$0xff]
  %v602 = vld [vmem:[%s1 + $0xedc] sm:$0xf]
  %v603 = vld [vmem:[%s1 + $0xee0] sm:$0xff]
  %v604 = vld [vmem:[%s1 + $0xee8] sm:$0xff]
  %v605 = vld [vmem:[%s1 + $0xef0] sm:$0xff]
  %v606 = vld [vmem:[%s1 + $0xef8] sm:$0xf]
  %v607 = vld [vmem:[%s1 + $0xefc] sm:$0xff]
  %v608 = vld [vmem:[%s1 + $0xf04] sm:$0xff]
  %v609 = vld [vmem:[%s1 + $0xf0c] sm:$0xff]
  %v610 = vld [vmem:[%s1 + $0xf14] sm:$0xf]
  %v611 = vld [vmem:[%s1 + $0xf18] sm:$0xff]
  %v612 = vld [vmem:[%s1 + $0xf20] sm:$0xff]
  %v613 = vld [vmem:[%s1 + $0xf28] sm:$0xff]
  %v614 = vld [vmem:[%s1 + $0xf30] sm:$0xf]
  %v615 = vld [vmem:[%s1 + $0xf34] sm:$0xff]
  %v616 = vld [vmem:[%s1 + $0xf3c] sm:$0xff]
  %v617 = vld [vmem:[%s1 + $0xf44] sm:$0xff]
  %v618 = vld [vmem:[%s1 + $0xf4c] sm:$0xf]
  %v619 = vld [vmem:[%s1 + $0xf50] sm:$0xff]
  %v620 = vld [vmem:[%s1 + $0xf58] sm:$0xff]
  %v621 = vld [vmem:[%s1 + $0xf60] sm:$0xff]
  %v622 = vld [vmem:[%s1 + $0xf68] sm:$0xf]
  %v623 = vld [vmem:[%s1 + $0xf6c] sm:$0xff]
  %v624 = vld [vmem:[%s1 + $0xf74] sm:$0xff]
  %v625 = vld [vmem:[%s1 + $0xf7c] sm:$0xff]
  %v626 = vld [vmem:[%s1 + $0xf84] sm:$0xf]
  %v627 = vld [vmem:[%s1 + $0xf88] sm:$0xff]
  %v628 = vld [vmem:[%s1 + $0xf90] sm:$0xff]
  %v629 = vld [vmem:[%s1 + $0xf98] sm:$0xff]
  %v630 = vld [vmem:[%s1 + $0xfa0] sm:$0xf]
  %v631 = vld [vmem:[%s1 + $0xfa4] sm:$0xff]
  %v632 = vld [vmem:[%s1 + $0xfac] sm:$0xff]
  %v633 = vld [vmem:[%s1 + $0xfb4] sm:$0xff]
  %v634 = vld [vmem:[%s1 + $0xfbc] sm:$0xf]
  %v635 = vld [vmem:[%s1 + $0xfc0] sm:$0xff]
  %v636 = vld [vmem:[%s1 + $0xfc8] sm:$0xff]
  %v637 = vld [vmem:[%s1 + $0xfd0] sm:$0xff]
  %v638 = vld [vmem:[%s1 + $0xfd8] sm:$0xf]
  %v639 = vld [vmem:[%s1 + $0xfdc] sm:$0xff]
  %v640 = vld [vmem:[%s1 + $0xfe4] sm:$0xff]
  %v641 = vld [vmem:[%s1 + $0xfec] sm:$0xff]
  %v642 = vld [vmem:[%s1 + $0xff4] sm:$0xf]
  %v643 = vld [vmem:[%s1 + $0xff8] sm:$0xff]
  %v644 = vld [vmem:[%s1 + $0x1000] sm:$0xff]
  %v645 = vld [vmem:[%s1 + $0x1008] sm:$0xff]
  %v646 = vld [vmem:[%s1 + $0x1010] sm:$0xf]
  %v647 = vld [vmem:[%s1 + $0x1014] sm:$0xff]
  %v648 = vld [vmem:[%s1 + $0x101c] sm:$0xff]
  %v649 = vld [vmem:[%s1 + $0x1024] sm:$0xff]
  %v650 = vld [vmem:[%s1 + $0x102c] sm:$0xf]
  %v651 = vld [vmem:[%s1 + $0x1030] sm:$0xff]
  %v652 = vld [vmem:[%s1 + $0x1038] sm:$0xff]
  %v653 = vld [vmem:[%s1 + $0x1040] sm:$0xff]
  %v654 = vld [vmem:[%s1 + $0x1048] sm:$0xf]
  %v655 = vld [vmem:[%s1 + $0x104c] sm:$0xff]
  %v656 = vld [vmem:[%s1 + $0x1054] sm:$0xff]
  %v657 = vld [vmem:[%s1 + $0x105c] sm:$0xff]
  %v658 = vld [vmem:[%s1 + $0x1064] sm:$0xf]
  %v659 = vld [vmem:[%s2] sm:$0x7f]
  %v661 = vlaneseq
  %v662 = vshrl.u32 %v661, 7
  %v663 = vsub.s32 0, %v662
  %v664 = vrot.slane %v659, %v663
  %v665 = vlaneseq
  %v666 = vshrl.u32 %v665, 7
  %v667 = vsub.s32 1, %v666
  %v668 = vrot.slane %v659, %v667
  %v669 = vlaneseq
  %v670 = vshrl.u32 %v669, 7
  %v671 = vsub.s32 2, %v670
  %v672 = vrot.slane %v659, %v671
  %v673 = vlaneseq
  %v674 = vshrl.u32 %v673, 7
  %v675 = vsub.s32 3, %v674
  %v676 = vrot.slane %v659, %v675
  %v677 = vlaneseq
  %v678 = vshrl.u32 %v677, 7
  %v679 = vsub.s32 4, %v678
  %v680 = vrot.slane %v659, %v679
  %v681 = vlaneseq
  %v682 = vshrl.u32 %v681, 7
  %v683 = vsub.s32 5, %v682
  %v684 = vrot.slane %v659, %v683
  %v685 = vlaneseq
  %v686 = vshrl.u32 %v685, 7
  %v687 = vsub.s32 6, %v686
  %v688 = vrot.slane %v659, %v687
  %v1296 = vunpack.c.l.b16 %v59
  %v1297 = vunpack.c.h.b16 %v59
  %v1298 = vunpack.c.l.b16 %v60
  %v1299 = vunpack.c.h.b16 %v60
  %v1300 = vunpack.c.l.b16 %v61
  %v1301 = vunpack.c.h.b16 %v61
  %v1302 = vunpack.c.l.b16 %v62
  %v1303 = vunpack.c.l.b16 %v63
  %v1304 = vunpack.c.h.b16 %v63
  %v1305 = vunpack.c.l.b16 %v64
  %v1306 = vunpack.c.h.b16 %v64
  %v1307 = vunpack.c.l.b16 %v65
  %v1308 = vunpack.c.h.b16 %v65
  %v1309 = vunpack.c.l.b16 %v66
  %v1310 = vunpack.c.l.b16 %v67
  %v1311 = vunpack.c.h.b16 %v67
  %v1312 = vunpack.c.l.b16 %v68
  %v1313 = vunpack.c.h.b16 %v68
  %v1314 = vunpack.c.l.b16 %v69
  %v1315 = vunpack.c.h.b16 %v69
  %v1316 = vunpack.c.l.b16 %v70
  %v1317 = vunpack.c.l.b16 %v71
  %v1318 = vunpack.c.h.b16 %v71
  %v1319 = vunpack.c.l.b16 %v72
  %v1320 = vunpack.c.h.b16 %v72
  %v1321 = vunpack.c.l.b16 %v73
  %v1322 = vunpack.c.h.b16 %v73
  %v1323 = vunpack.c.l.b16 %v74
  %v1324 = vunpack.c.l.b16 %v75
  %v1325 = vunpack.c.h.b16 %v75
  %v1326 = vunpack.c.l.b16 %v76
  %v1327 = vunpack.c.h.b16 %v76
  %v1328 = vunpack.c.l.b16 %v77
  %v1329 = vunpack.c.h.b16 %v77
  %v1330 = vunpack.c.l.b16 %v78
  %v1331 = vunpack.c.l.b16 %v79
  %v1332 = vunpack.c.h.b16 %v79
  %v1333 = vunpack.c.l.b16 %v80
  %v1334 = vunpack.c.h.b16 %v80
  %v1335 = vunpack.c.l.b16 %v81
  %v1336 = vunpack.c.h.b16 %v81
  %v1337 = vunpack.c.l.b16 %v82
  %v1338 = vunpack.c.l.b16 %v83
  %v1339 = vunpack.c.h.b16 %v83
  %v1340 = vunpack.c.l.b16 %v84
  %v1341 = vunpack.c.h.b16 %v84
  %v1342 = vunpack.c.l.b16 %v85
  %v1343 = vunpack.c.h.b16 %v85
  %v1344 = vunpack.c.l.b16 %v86
  %v1345 = vunpack.c.l.b16 %v87
  %v1346 = vunpack.c.h.b16 %v87
  %v1347 = vunpack.c.l.b16 %v88
  %v1348 = vunpack.c.h.b16 %v88
  %v1349 = vunpack.c.l.b16 %v89
  %v1350 = vunpack.c.h.b16 %v89
  %v1351 = vunpack.c.l.b16 %v90
  %v1352 = vunpack.c.l.b16 %v91
  %v1353 = vunpack.c.h.b16 %v91
  %v1354 = vunpack.c.l.b16 %v92
  %v1355 = vunpack.c.h.b16 %v92
  %v1356 = vunpack.c.l.b16 %v93
  %v1357 = vunpack.c.h.b16 %v93
  %v1358 = vunpack.c.l.b16 %v94
  %v1359 = vunpack.c.l.b16 %v95
  %v1360 = vunpack.c.h.b16 %v95
  %v1361 = vunpack.c.l.b16 %v96
  %v1362 = vunpack.c.h.b16 %v96
  %v1363 = vunpack.c.l.b16 %v97
  %v1364 = vunpack.c.h.b16 %v97
  %v1365 = vunpack.c.l.b16 %v98
  %v1366 = vunpack.c.l.b16 %v99
  %v1367 = vunpack.c.h.b16 %v99
  %v1368 = vunpack.c.l.b16 %v100
  %v1369 = vunpack.c.h.b16 %v100
  %v1370 = vunpack.c.l.b16 %v101
  %v1371 = vunpack.c.h.b16 %v101
  %v1372 = vunpack.c.l.b16 %v102
  %v1373 = vunpack.c.l.b16 %v103
  %v1374 = vunpack.c.h.b16 %v103
  %v1375 = vunpack.c.l.b16 %v104
  %v1376 = vunpack.c.h.b16 %v104
  %v1377 = vunpack.c.l.b16 %v105
  %v1378 = vunpack.c.h.b16 %v105
  %v1379 = vunpack.c.l.b16 %v106
  %v1380 = vunpack.c.l.b16 %v107
  %v1381 = vunpack.c.h.b16 %v107
  %v1382 = vunpack.c.l.b16 %v108
  %v1383 = vunpack.c.h.b16 %v108
  %v1384 = vunpack.c.l.b16 %v109
  %v1385 = vunpack.c.h.b16 %v109
  %v1386 = vunpack.c.l.b16 %v110
  %v1387 = vunpack.c.l.b16 %v111
  %v1388 = vunpack.c.h.b16 %v111
  %v1389 = vunpack.c.l.b16 %v112
  %v1390 = vunpack.c.h.b16 %v112
  %v1391 = vunpack.c.l.b16 %v113
  %v1392 = vunpack.c.h.b16 %v113
  %v1393 = vunpack.c.l.b16 %v114
  %v1394 = vunpack.c.l.b16 %v115
  %v1395 = vunpack.c.h.b16 %v115
  %v1396 = vunpack.c.l.b16 %v116
  %v1397 = vunpack.c.h.b16 %v116
  %v1398 = vunpack.c.l.b16 %v117
  %v1399 = vunpack.c.h.b16 %v117
  %v1400 = vunpack.c.l.b16 %v118
  %v1401 = vunpack.c.l.b16 %v119
  %v1402 = vunpack.c.h.b16 %v119
  %v1403 = vunpack.c.l.b16 %v120
  %v1404 = vunpack.c.h.b16 %v120
  %v1405 = vunpack.c.l.b16 %v121
  %v1406 = vunpack.c.h.b16 %v121
  %v1407 = vunpack.c.l.b16 %v122
  %v1408 = vunpack.c.l.b16 %v123
  %v1409 = vunpack.c.h.b16 %v123
  %v1410 = vunpack.c.l.b16 %v124
  %v1411 = vunpack.c.h.b16 %v124
  %v1412 = vunpack.c.l.b16 %v125
  %v1413 = vunpack.c.h.b16 %v125
  %v1414 = vunpack.c.l.b16 %v126
  %v1415 = vunpack.c.l.b16 %v127
  %v1416 = vunpack.c.h.b16 %v127
  %v1417 = vunpack.c.l.b16 %v128
  %v1418 = vunpack.c.h.b16 %v128
  %v1419 = vunpack.c.l.b16 %v129
  %v1420 = vunpack.c.h.b16 %v129
  %v1421 = vunpack.c.l.b16 %v130
  %v1422 = vunpack.c.l.b16 %v131
  %v1423 = vunpack.c.h.b16 %v131
  %v1424 = vunpack.c.l.b16 %v132
  %v1425 = vunpack.c.h.b16 %v132
  %v1426 = vunpack.c.l.b16 %v133
  %v1427 = vunpack.c.h.b16 %v133
  %v1428 = vunpack.c.l.b16 %v134
  %v1429 = vunpack.c.l.b16 %v135
  %v1430 = vunpack.c.h.b16 %v135
  %v1431 = vunpack.c.l.b16 %v136
  %v1432 = vunpack.c.h.b16 %v136
  %v1433 = vunpack.c.l.b16 %v137
  %v1434 = vunpack.c.h.b16 %v137
  %v1435 = vunpack.c.l.b16 %v138
  %v1436 = vunpack.c.l.b16 %v139
  %v1437 = vunpack.c.h.b16 %v139
  %v1438 = vunpack.c.l.b16 %v140
  %v1439 = vunpack.c.h.b16 %v140
  %v1440 = vunpack.c.l.b16 %v141
  %v1441 = vunpack.c.h.b16 %v141
  %v1442 = vunpack.c.l.b16 %v142
  %v1443 = vunpack.c.l.b16 %v143
  %v1444 = vunpack.c.h.b16 %v143
  %v1445 = vunpack.c.l.b16 %v144
  %v1446 = vunpack.c.h.b16 %v144
  %v1447 = vunpack.c.l.b16 %v145
  %v1448 = vunpack.c.h.b16 %v145
  %v1449 = vunpack.c.l.b16 %v146
  %v1450 = vunpack.c.l.b16 %v147
  %v1451 = vunpack.c.h.b16 %v147
  %v1452 = vunpack.c.l.b16 %v148
  %v1453 = vunpack.c.h.b16 %v148
  %v1454 = vunpack.c.l.b16 %v149
  %v1455 = vunpack.c.h.b16 %v149
  %v1456 = vunpack.c.l.b16 %v150
  %v1457 = vunpack.c.l.b16 %v151
  %v1458 = vunpack.c.h.b16 %v151
  %v1459 = vunpack.c.l.b16 %v152
  %v1460 = vunpack.c.h.b16 %v152
  %v1461 = vunpack.c.l.b16 %v153
  %v1462 = vunpack.c.h.b16 %v153
  %v1463 = vunpack.c.l.b16 %v154
  %v1464 = vunpack.c.l.b16 %v155
  %v1465 = vunpack.c.h.b16 %v155
  %v1466 = vunpack.c.l.b16 %v156
  %v1467 = vunpack.c.h.b16 %v156
  %v1468 = vunpack.c.l.b16 %v157
  %v1469 = vunpack.c.h.b16 %v157
  %v1470 = vunpack.c.l.b16 %v158
  %v1471 = vunpack.c.l.b16 %v159
  %v1472 = vunpack.c.h.b16 %v159
  %v1473 = vunpack.c.l.b16 %v160
  %v1474 = vunpack.c.h.b16 %v160
  %v1475 = vunpack.c.l.b16 %v161
  %v1476 = vunpack.c.h.b16 %v161
  %v1477 = vunpack.c.l.b16 %v162
  %v1478 = vunpack.c.l.b16 %v163
  %v1479 = vunpack.c.h.b16 %v163
  %v1480 = vunpack.c.l.b16 %v164
  %v1481 = vunpack.c.h.b16 %v164
  %v1482 = vunpack.c.l.b16 %v165
  %v1483 = vunpack.c.h.b16 %v165
  %v1484 = vunpack.c.l.b16 %v166
  %v1485 = vunpack.c.l.b16 %v167
  %v1486 = vunpack.c.h.b16 %v167
  %v1487 = vunpack.c.l.b16 %v168
  %v1488 = vunpack.c.h.b16 %v168
  %v1489 = vunpack.c.l.b16 %v169
  %v1490 = vunpack.c.h.b16 %v169
  %v1491 = vunpack.c.l.b16 %v170
  %v1492 = vunpack.c.l.b16 %v171
  %v1493 = vunpack.c.h.b16 %v171
  %v1494 = vunpack.c.l.b16 %v172
  %v1495 = vunpack.c.h.b16 %v172
  %v1496 = vunpack.c.l.b16 %v173
  %v1497 = vunpack.c.h.b16 %v173
  %v1498 = vunpack.c.l.b16 %v174
  %v1499 = vunpack.c.l.b16 %v175
  %v1500 = vunpack.c.h.b16 %v175
  %v1501 = vunpack.c.l.b16 %v176
  %v1502 = vunpack.c.h.b16 %v176
  %v1503 = vunpack.c.l.b16 %v177
  %v1504 = vunpack.c.h.b16 %v177
  %v1505 = vunpack.c.l.b16 %v178
  %v1506 = vunpack.c.l.b16 %v179
  %v1507 = vunpack.c.h.b16 %v179
  %v1508 = vunpack.c.l.b16 %v180
  %v1509 = vunpack.c.h.b16 %v180
  %v1510 = vunpack.c.l.b16 %v181
  %v1511 = vunpack.c.h.b16 %v181
  %v1512 = vunpack.c.l.b16 %v182
  %v1513 = vunpack.c.l.b16 %v183
  %v1514 = vunpack.c.h.b16 %v183
  %v1515 = vunpack.c.l.b16 %v184
  %v1516 = vunpack.c.h.b16 %v184
  %v1517 = vunpack.c.l.b16 %v185
  %v1518 = vunpack.c.h.b16 %v185
  %v1519 = vunpack.c.l.b16 %v186
  %v1520 = vunpack.c.l.b16 %v187
  %v1521 = vunpack.c.h.b16 %v187
  %v1522 = vunpack.c.l.b16 %v188
  %v1523 = vunpack.c.h.b16 %v188
  %v1524 = vunpack.c.l.b16 %v189
  %v1525 = vunpack.c.h.b16 %v189
  %v1526 = vunpack.c.l.b16 %v190
  %v1527 = vunpack.c.l.b16 %v191
  %v1528 = vunpack.c.h.b16 %v191
  %v1529 = vunpack.c.l.b16 %v192
  %v1530 = vunpack.c.h.b16 %v192
  %v1531 = vunpack.c.l.b16 %v193
  %v1532 = vunpack.c.h.b16 %v193
  %v1533 = vunpack.c.l.b16 %v194
  %v1534 = vunpack.c.l.b16 %v195
  %v1535 = vunpack.c.h.b16 %v195
  %v1536 = vunpack.c.l.b16 %v196
  %v1537 = vunpack.c.h.b16 %v196
  %v1538 = vunpack.c.l.b16 %v197
  %v1539 = vunpack.c.h.b16 %v197
  %v1540 = vunpack.c.l.b16 %v198
  %v1541 = vunpack.c.l.b16 %v199
  %v1542 = vunpack.c.h.b16 %v199
  %v1543 = vunpack.c.l.b16 %v200
  %v1544 = vunpack.c.h.b16 %v200
  %v1545 = vunpack.c.l.b16 %v201
  %v1546 = vunpack.c.h.b16 %v201
  %v1547 = vunpack.c.l.b16 %v202
  %v1548 = vunpack.c.l.b16 %v203
  %v1549 = vunpack.c.h.b16 %v203
  %v1550 = vunpack.c.l.b16 %v204
  %v1551 = vunpack.c.h.b16 %v204
  %v1552 = vunpack.c.l.b16 %v205
  %v1553 = vunpack.c.h.b16 %v205
  %v1554 = vunpack.c.l.b16 %v206
  %v1555 = vunpack.c.l.b16 %v207
  %v1556 = vunpack.c.h.b16 %v207
  %v1557 = vunpack.c.l.b16 %v208
  %v1558 = vunpack.c.h.b16 %v208
  %v1559 = vunpack.c.l.b16 %v209
  %v1560 = vunpack.c.h.b16 %v209
  %v1561 = vunpack.c.l.b16 %v210
  %v1562 = vunpack.c.l.b16 %v211
  %v1563 = vunpack.c.h.b16 %v211
  %v1564 = vunpack.c.l.b16 %v212
  %v1565 = vunpack.c.h.b16 %v212
  %v1566 = vunpack.c.l.b16 %v213
  %v1567 = vunpack.c.h.b16 %v213
  %v1568 = vunpack.c.l.b16 %v214
  %v1569 = vunpack.c.l.b16 %v215
  %v1570 = vunpack.c.h.b16 %v215
  %v1571 = vunpack.c.l.b16 %v216
  %v1572 = vunpack.c.h.b16 %v216
  %v1573 = vunpack.c.l.b16 %v217
  %v1574 = vunpack.c.h.b16 %v217
  %v1575 = vunpack.c.l.b16 %v218
  %v1576 = vunpack.c.l.b16 %v219
  %v1577 = vunpack.c.h.b16 %v219
  %v1578 = vunpack.c.l.b16 %v220
  %v1579 = vunpack.c.h.b16 %v220
  %v1580 = vunpack.c.l.b16 %v221
  %v1581 = vunpack.c.h.b16 %v221
  %v1582 = vunpack.c.l.b16 %v222
  %v1583 = vunpack.c.l.b16 %v223
  %v1584 = vunpack.c.h.b16 %v223
  %v1585 = vunpack.c.l.b16 %v224
  %v1586 = vunpack.c.h.b16 %v224
  %v1587 = vunpack.c.l.b16 %v225
  %v1588 = vunpack.c.h.b16 %v225
  %v1589 = vunpack.c.l.b16 %v226
  %v1590 = vunpack.c.l.b16 %v227
  %v1591 = vunpack.c.h.b16 %v227
  %v1592 = vunpack.c.l.b16 %v228
  %v1593 = vunpack.c.h.b16 %v228
  %v1594 = vunpack.c.l.b16 %v229
  %v1595 = vunpack.c.h.b16 %v229
  %v1596 = vunpack.c.l.b16 %v230
  %v1597 = vunpack.c.l.b16 %v231
  %v1598 = vunpack.c.h.b16 %v231
  %v1599 = vunpack.c.l.b16 %v232
  %v1600 = vunpack.c.h.b16 %v232
  %v1601 = vunpack.c.l.b16 %v233
  %v1602 = vunpack.c.h.b16 %v233
  %v1603 = vunpack.c.l.b16 %v234
  %v1604 = vunpack.c.l.b16 %v235
  %v1605 = vunpack.c.h.b16 %v235
  %v1606 = vunpack.c.l.b16 %v236
  %v1607 = vunpack.c.h.b16 %v236
  %v1608 = vunpack.c.l.b16 %v237
  %v1609 = vunpack.c.h.b16 %v237
  %v1610 = vunpack.c.l.b16 %v238
  %v1611 = vunpack.c.l.b16 %v239
  %v1612 = vunpack.c.h.b16 %v239
  %v1613 = vunpack.c.l.b16 %v240
  %v1614 = vunpack.c.h.b16 %v240
  %v1615 = vunpack.c.l.b16 %v241
  %v1616 = vunpack.c.h.b16 %v241
  %v1617 = vunpack.c.l.b16 %v242
  %v1618 = vunpack.c.l.b16 %v243
  %v1619 = vunpack.c.h.b16 %v243
  %v1620 = vunpack.c.l.b16 %v244
  %v1621 = vunpack.c.h.b16 %v244
  %v1622 = vunpack.c.l.b16 %v245
  %v1623 = vunpack.c.h.b16 %v245
  %v1624 = vunpack.c.l.b16 %v246
  %v1625 = vunpack.c.l.b16 %v247
  %v1626 = vunpack.c.h.b16 %v247
  %v1627 = vunpack.c.l.b16 %v248
  %v1628 = vunpack.c.h.b16 %v248
  %v1629 = vunpack.c.l.b16 %v249
  %v1630 = vunpack.c.h.b16 %v249
  %v1631 = vunpack.c.l.b16 %v250
  %v1632 = vunpack.c.l.b16 %v251
  %v1633 = vunpack.c.h.b16 %v251
  %v1634 = vunpack.c.l.b16 %v252
  %v1635 = vunpack.c.h.b16 %v252
  %v1636 = vunpack.c.l.b16 %v253
  %v1637 = vunpack.c.h.b16 %v253
  %v1638 = vunpack.c.l.b16 %v254
  %v1639 = vunpack.c.l.b16 %v255
  %v1640 = vunpack.c.h.b16 %v255
  %v1641 = vunpack.c.l.b16 %v256
  %v1642 = vunpack.c.h.b16 %v256
  %v1643 = vunpack.c.l.b16 %v257
  %v1644 = vunpack.c.h.b16 %v257
  %v1645 = vunpack.c.l.b16 %v258
  %v1646 = vunpack.c.l.b16 %v259
  %v1647 = vunpack.c.h.b16 %v259
  %v1648 = vunpack.c.l.b16 %v260
  %v1649 = vunpack.c.h.b16 %v260
  %v1650 = vunpack.c.l.b16 %v261
  %v1651 = vunpack.c.h.b16 %v261
  %v1652 = vunpack.c.l.b16 %v262
  %v1653 = vunpack.c.l.b16 %v263
  %v1654 = vunpack.c.h.b16 %v263
  %v1655 = vunpack.c.l.b16 %v264
  %v1656 = vunpack.c.h.b16 %v264
  %v1657 = vunpack.c.l.b16 %v265
  %v1658 = vunpack.c.h.b16 %v265
  %v1659 = vunpack.c.l.b16 %v266
  %v1660 = vunpack.c.l.b16 %v267
  %v1661 = vunpack.c.h.b16 %v267
  %v1662 = vunpack.c.l.b16 %v268
  %v1663 = vunpack.c.h.b16 %v268
  %v1664 = vunpack.c.l.b16 %v269
  %v1665 = vunpack.c.h.b16 %v269
  %v1666 = vunpack.c.l.b16 %v270
  %v1667 = vunpack.c.l.b16 %v271
  %v1668 = vunpack.c.h.b16 %v271
  %v1669 = vunpack.c.l.b16 %v272
  %v1670 = vunpack.c.h.b16 %v272
  %v1671 = vunpack.c.l.b16 %v273
  %v1672 = vunpack.c.h.b16 %v273
  %v1673 = vunpack.c.l.b16 %v274
  %v1674 = vunpack.c.l.b16 %v275
  %v1675 = vunpack.c.h.b16 %v275
  %v1676 = vunpack.c.l.b16 %v276
  %v1677 = vunpack.c.h.b16 %v276
  %v1678 = vunpack.c.l.b16 %v277
  %v1679 = vunpack.c.h.b16 %v277
  %v1680 = vunpack.c.l.b16 %v278
  %v1681 = vunpack.c.l.b16 %v279
  %v1682 = vunpack.c.h.b16 %v279
  %v1683 = vunpack.c.l.b16 %v280
  %v1684 = vunpack.c.h.b16 %v280
  %v1685 = vunpack.c.l.b16 %v281
  %v1686 = vunpack.c.h.b16 %v281
  %v1687 = vunpack.c.l.b16 %v282
  %v1688 = vunpack.c.l.b16 %v283
  %v1689 = vunpack.c.h.b16 %v283
  %v1690 = vunpack.c.l.b16 %v284
  %v1691 = vunpack.c.h.b16 %v284
  %v1692 = vunpack.c.l.b16 %v285
  %v1693 = vunpack.c.h.b16 %v285
  %v1694 = vunpack.c.l.b16 %v286
  %v1695 = vunpack.c.l.b16 %v287
  %v1696 = vunpack.c.h.b16 %v287
  %v1697 = vunpack.c.l.b16 %v288
  %v1698 = vunpack.c.h.b16 %v288
  %v1699 = vunpack.c.l.b16 %v289
  %v1700 = vunpack.c.h.b16 %v289
  %v1701 = vunpack.c.l.b16 %v290
  %v1702 = vunpack.c.l.b16 %v291
  %v1703 = vunpack.c.h.b16 %v291
  %v1704 = vunpack.c.l.b16 %v292
  %v1705 = vunpack.c.h.b16 %v292
  %v1706 = vunpack.c.l.b16 %v293
  %v1707 = vunpack.c.h.b16 %v293
  %v1708 = vunpack.c.l.b16 %v294
  %v1709 = vunpack.c.l.b16 %v295
  %v1710 = vunpack.c.h.b16 %v295
  %v1711 = vunpack.c.l.b16 %v296
  %v1712 = vunpack.c.h.b16 %v296
  %v1713 = vunpack.c.l.b16 %v297
  %v1714 = vunpack.c.h.b16 %v297
  %v1715 = vunpack.c.l.b16 %v298
  %v1716 = vunpack.c.l.b16 %v299
  %v1717 = vunpack.c.h.b16 %v299
  %v1718 = vunpack.c.l.b16 %v300
  %v1719 = vunpack.c.h.b16 %v300
  %v1720 = vunpack.c.l.b16 %v301
  %v1721 = vunpack.c.h.b16 %v301
  %v1722 = vunpack.c.l.b16 %v302
  %v1723 = vunpack.c.l.b16 %v303
  %v1724 = vunpack.c.h.b16 %v303
  %v1725 = vunpack.c.l.b16 %v304
  %v1726 = vunpack.c.h.b16 %v304
  %v1727 = vunpack.c.l.b16 %v305
  %v1728 = vunpack.c.h.b16 %v305
  %v1729 = vunpack.c.l.b16 %v306
  %v1730 = vunpack.c.l.b16 %v307
  %v1731 = vunpack.c.h.b16 %v307
  %v1732 = vunpack.c.l.b16 %v308
  %v1733 = vunpack.c.h.b16 %v308
  %v1734 = vunpack.c.l.b16 %v309
  %v1735 = vunpack.c.h.b16 %v309
  %v1736 = vunpack.c.l.b16 %v310
  %v1737 = vunpack.c.l.b16 %v311
  %v1738 = vunpack.c.h.b16 %v311
  %v1739 = vunpack.c.l.b16 %v312
  %v1740 = vunpack.c.h.b16 %v312
  %v1741 = vunpack.c.l.b16 %v313
  %v1742 = vunpack.c.h.b16 %v313
  %v1743 = vunpack.c.l.b16 %v314
  %v1744 = vunpack.c.l.b16 %v315
  %v1745 = vunpack.c.h.b16 %v315
  %v1746 = vunpack.c.l.b16 %v316
  %v1747 = vunpack.c.h.b16 %v316
  %v1748 = vunpack.c.l.b16 %v317
  %v1749 = vunpack.c.h.b16 %v317
  %v1750 = vunpack.c.l.b16 %v318
  %v1751 = vunpack.c.l.b16 %v319
  %v1752 = vunpack.c.h.b16 %v319
  %v1753 = vunpack.c.l.b16 %v320
  %v1754 = vunpack.c.h.b16 %v320
  %v1755 = vunpack.c.l.b16 %v321
  %v1756 = vunpack.c.h.b16 %v321
  %v1757 = vunpack.c.l.b16 %v322
  %v1758 = vunpack.c.l.b16 %v323
  %v1759 = vunpack.c.h.b16 %v323
  %v1760 = vunpack.c.l.b16 %v324
  %v1761 = vunpack.c.h.b16 %v324
  %v1762 = vunpack.c.l.b16 %v325
  %v1763 = vunpack.c.h.b16 %v325
  %v1764 = vunpack.c.l.b16 %v326
  %v1765 = vunpack.c.l.b16 %v327
  %v1766 = vunpack.c.h.b16 %v327
  %v1767 = vunpack.c.l.b16 %v328
  %v1768 = vunpack.c.h.b16 %v328
  %v1769 = vunpack.c.l.b16 %v329
  %v1770 = vunpack.c.h.b16 %v329
  %v1771 = vunpack.c.l.b16 %v330
  %v1772 = vunpack.c.l.b16 %v331
  %v1773 = vunpack.c.h.b16 %v331
  %v1774 = vunpack.c.l.b16 %v332
  %v1775 = vunpack.c.h.b16 %v332
  %v1776 = vunpack.c.l.b16 %v333
  %v1777 = vunpack.c.h.b16 %v333
  %v1778 = vunpack.c.l.b16 %v334
  %v1779 = vunpack.c.l.b16 %v335
  %v1780 = vunpack.c.h.b16 %v335
  %v1781 = vunpack.c.l.b16 %v336
  %v1782 = vunpack.c.h.b16 %v336
  %v1783 = vunpack.c.l.b16 %v337
  %v1784 = vunpack.c.h.b16 %v337
  %v1785 = vunpack.c.l.b16 %v338
  %v1786 = vunpack.c.l.b16 %v339
  %v1787 = vunpack.c.h.b16 %v339
  %v1788 = vunpack.c.l.b16 %v340
  %v1789 = vunpack.c.h.b16 %v340
  %v1790 = vunpack.c.l.b16 %v341
  %v1791 = vunpack.c.h.b16 %v341
  %v1792 = vunpack.c.l.b16 %v342
  %v1793 = vunpack.c.l.b16 %v343
  %v1794 = vunpack.c.h.b16 %v343
  %v1795 = vunpack.c.l.b16 %v344
  %v1796 = vunpack.c.h.b16 %v344
  %v1797 = vunpack.c.l.b16 %v345
  %v1798 = vunpack.c.h.b16 %v345
  %v1799 = vunpack.c.l.b16 %v346
  %v1800 = vunpack.c.l.b16 %v347
  %v1801 = vunpack.c.h.b16 %v347
  %v1802 = vunpack.c.l.b16 %v348
  %v1803 = vunpack.c.h.b16 %v348
  %v1804 = vunpack.c.l.b16 %v349
  %v1805 = vunpack.c.h.b16 %v349
  %v1806 = vunpack.c.l.b16 %v350
  %v1807 = vunpack.c.l.b16 %v351
  %v1808 = vunpack.c.h.b16 %v351
  %v1809 = vunpack.c.l.b16 %v352
  %v1810 = vunpack.c.h.b16 %v352
  %v1811 = vunpack.c.l.b16 %v353
  %v1812 = vunpack.c.h.b16 %v353
  %v1813 = vunpack.c.l.b16 %v354
  %v1814 = vunpack.c.l.b16 %v355
  %v1815 = vunpack.c.h.b16 %v355
  %v1816 = vunpack.c.l.b16 %v356
  %v1817 = vunpack.c.h.b16 %v356
  %v1818 = vunpack.c.l.b16 %v357
  %v1819 = vunpack.c.h.b16 %v357
  %v1820 = vunpack.c.l.b16 %v358
  %v1821 = vunpack.c.l.b16 %v359
  %v1822 = vunpack.c.h.b16 %v359
  %v1823 = vunpack.c.l.b16 %v360
  %v1824 = vunpack.c.h.b16 %v360
  %v1825 = vunpack.c.l.b16 %v361
  %v1826 = vunpack.c.h.b16 %v361
  %v1827 = vunpack.c.l.b16 %v362
  %v1828 = vunpack.c.l.b16 %v363
  %v1829 = vunpack.c.h.b16 %v363
  %v1830 = vunpack.c.l.b16 %v364
  %v1831 = vunpack.c.h.b16 %v364
  %v1832 = vunpack.c.l.b16 %v365
  %v1833 = vunpack.c.h.b16 %v365
  %v1834 = vunpack.c.l.b16 %v366
  %v1835 = vunpack.c.l.b16 %v367
  %v1836 = vunpack.c.h.b16 %v367
  %v1837 = vunpack.c.l.b16 %v368
  %v1838 = vunpack.c.h.b16 %v368
  %v1839 = vunpack.c.l.b16 %v369
  %v1840 = vunpack.c.h.b16 %v369
  %v1841 = vunpack.c.l.b16 %v370
  %v1842 = vunpack.c.l.b16 %v371
  %v1843 = vunpack.c.h.b16 %v371
  %v1844 = vunpack.c.l.b16 %v372
  %v1845 = vunpack.c.h.b16 %v372
  %v1846 = vunpack.c.l.b16 %v373
  %v1847 = vunpack.c.h.b16 %v373
  %v1848 = vunpack.c.l.b16 %v374
  %v1849 = vunpack.c.l.b16 %v375
  %v1850 = vunpack.c.h.b16 %v375
  %v1851 = vunpack.c.l.b16 %v376
  %v1852 = vunpack.c.h.b16 %v376
  %v1853 = vunpack.c.l.b16 %v377
  %v1854 = vunpack.c.h.b16 %v377
  %v1855 = vunpack.c.l.b16 %v378
  %v1856 = vunpack.c.l.b16 %v379
  %v1857 = vunpack.c.h.b16 %v379
  %v1858 = vunpack.c.l.b16 %v380
  %v1859 = vunpack.c.h.b16 %v380
  %v1860 = vunpack.c.l.b16 %v381
  %v1861 = vunpack.c.h.b16 %v381
  %v1862 = vunpack.c.l.b16 %v382
  %v1863 = vunpack.c.l.b16 %v383
  %v1864 = vunpack.c.h.b16 %v383
  %v1865 = vunpack.c.l.b16 %v384
  %v1866 = vunpack.c.h.b16 %v384
  %v1867 = vunpack.c.l.b16 %v385
  %v1868 = vunpack.c.h.b16 %v385
  %v1869 = vunpack.c.l.b16 %v386
  %v1870 = vunpack.c.l.b16 %v387
  %v1871 = vunpack.c.h.b16 %v387
  %v1872 = vunpack.c.l.b16 %v388
  %v1873 = vunpack.c.h.b16 %v388
  %v1874 = vunpack.c.l.b16 %v389
  %v1875 = vunpack.c.h.b16 %v389
  %v1876 = vunpack.c.l.b16 %v390
  %v1877 = vunpack.c.l.b16 %v391
  %v1878 = vunpack.c.h.b16 %v391
  %v1879 = vunpack.c.l.b16 %v392
  %v1880 = vunpack.c.h.b16 %v392
  %v1881 = vunpack.c.l.b16 %v393
  %v1882 = vunpack.c.h.b16 %v393
  %v1883 = vunpack.c.l.b16 %v394
  %v1884 = vunpack.c.l.b16 %v395
  %v1885 = vunpack.c.h.b16 %v395
  %v1886 = vunpack.c.l.b16 %v396
  %v1887 = vunpack.c.h.b16 %v396
  %v1888 = vunpack.c.l.b16 %v397
  %v1889 = vunpack.c.h.b16 %v397
  %v1890 = vunpack.c.l.b16 %v398
  %v1891 = vunpack.c.l.b16 %v399
  %v1892 = vunpack.c.h.b16 %v399
  %v1893 = vunpack.c.l.b16 %v400
  %v1894 = vunpack.c.h.b16 %v400
  %v1895 = vunpack.c.l.b16 %v401
  %v1896 = vunpack.c.h.b16 %v401
  %v1897 = vunpack.c.l.b16 %v402
  %v1898 = vunpack.c.l.b16 %v403
  %v1899 = vunpack.c.h.b16 %v403
  %v1900 = vunpack.c.l.b16 %v404
  %v1901 = vunpack.c.h.b16 %v404
  %v1902 = vunpack.c.l.b16 %v405
  %v1903 = vunpack.c.h.b16 %v405
  %v1904 = vunpack.c.l.b16 %v406
  %v1905 = vunpack.c.l.b16 %v407
  %v1906 = vunpack.c.h.b16 %v407
  %v1907 = vunpack.c.l.b16 %v408
  %v1908 = vunpack.c.h.b16 %v408
  %v1909 = vunpack.c.l.b16 %v409
  %v1910 = vunpack.c.h.b16 %v409
  %v1911 = vunpack.c.l.b16 %v410
  %v1912 = vunpack.c.l.b16 %v411
  %v1913 = vunpack.c.h.b16 %v411
  %v1914 = vunpack.c.l.b16 %v412
  %v1915 = vunpack.c.h.b16 %v412
  %v1916 = vunpack.c.l.b16 %v413
  %v1917 = vunpack.c.h.b16 %v413
  %v1918 = vunpack.c.l.b16 %v414
  %v1919 = vunpack.c.l.b16 %v415
  %v1920 = vunpack.c.h.b16 %v415
  %v1921 = vunpack.c.l.b16 %v416
  %v1922 = vunpack.c.h.b16 %v416
  %v1923 = vunpack.c.l.b16 %v417
  %v1924 = vunpack.c.h.b16 %v417
  %v1925 = vunpack.c.l.b16 %v418
  %v1926 = vunpack.c.l.b16 %v419
  %v1927 = vunpack.c.h.b16 %v419
  %v1928 = vunpack.c.l.b16 %v420
  %v1929 = vunpack.c.h.b16 %v420
  %v1930 = vunpack.c.l.b16 %v421
  %v1931 = vunpack.c.h.b16 %v421
  %v1932 = vunpack.c.l.b16 %v422
  %v1933 = vunpack.c.l.b16 %v423
  %v1934 = vunpack.c.h.b16 %v423
  %v1935 = vunpack.c.l.b16 %v424
  %v1936 = vunpack.c.h.b16 %v424
  %v1937 = vunpack.c.l.b16 %v425
  %v1938 = vunpack.c.h.b16 %v425
  %v1939 = vunpack.c.l.b16 %v426
  %v1940 = vunpack.c.l.b16 %v427
  %v1941 = vunpack.c.h.b16 %v427
  %v1942 = vunpack.c.l.b16 %v428
  %v1943 = vunpack.c.h.b16 %v428
  %v1944 = vunpack.c.l.b16 %v429
  %v1945 = vunpack.c.h.b16 %v429
  %v1946 = vunpack.c.l.b16 %v430
  %v1947 = vunpack.c.l.b16 %v431
  %v1948 = vunpack.c.h.b16 %v431
  %v1949 = vunpack.c.l.b16 %v432
  %v1950 = vunpack.c.h.b16 %v432
  %v1951 = vunpack.c.l.b16 %v433
  %v1952 = vunpack.c.h.b16 %v433
  %v1953 = vunpack.c.l.b16 %v434
  %v1954 = vunpack.c.l.b16 %v435
  %v1955 = vunpack.c.h.b16 %v435
  %v1956 = vunpack.c.l.b16 %v436
  %v1957 = vunpack.c.h.b16 %v436
  %v1958 = vunpack.c.l.b16 %v437
  %v1959 = vunpack.c.h.b16 %v437
  %v1960 = vunpack.c.l.b16 %v438
  %v1961 = vunpack.c.l.b16 %v439
  %v1962 = vunpack.c.h.b16 %v439
  %v1963 = vunpack.c.l.b16 %v440
  %v1964 = vunpack.c.h.b16 %v440
  %v1965 = vunpack.c.l.b16 %v441
  %v1966 = vunpack.c.h.b16 %v441
  %v1967 = vunpack.c.l.b16 %v442
  %v1968 = vunpack.c.l.b16 %v443
  %v1969 = vunpack.c.h.b16 %v443
  %v1970 = vunpack.c.l.b16 %v444
  %v1971 = vunpack.c.h.b16 %v444
  %v1972 = vunpack.c.l.b16 %v445
  %v1973 = vunpack.c.h.b16 %v445
  %v1974 = vunpack.c.l.b16 %v446
  %v1975 = vunpack.c.l.b16 %v447
  %v1976 = vunpack.c.h.b16 %v447
  %v1977 = vunpack.c.l.b16 %v448
  %v1978 = vunpack.c.h.b16 %v448
  %v1979 = vunpack.c.l.b16 %v449
  %v1980 = vunpack.c.h.b16 %v449
  %v1981 = vunpack.c.l.b16 %v450
  %v1982 = vunpack.c.l.b16 %v451
  %v1983 = vunpack.c.h.b16 %v451
  %v1984 = vunpack.c.l.b16 %v452
  %v1985 = vunpack.c.h.b16 %v452
  %v1986 = vunpack.c.l.b16 %v453
  %v1987 = vunpack.c.h.b16 %v453
  %v1988 = vunpack.c.l.b16 %v454
  %v1989 = vunpack.c.l.b16 %v455
  %v1990 = vunpack.c.h.b16 %v455
  %v1991 = vunpack.c.l.b16 %v456
  %v1992 = vunpack.c.h.b16 %v456
  %v1993 = vunpack.c.l.b16 %v457
  %v1994 = vunpack.c.h.b16 %v457
  %v1995 = vunpack.c.l.b16 %v458
  %v1996 = vunpack.c.l.b16 %v459
  %v1997 = vunpack.c.h.b16 %v459
  %v1998 = vunpack.c.l.b16 %v460
  %v1999 = vunpack.c.h.b16 %v460
  %v2000 = vunpack.c.l.b16 %v461
  %v2001 = vunpack.c.h.b16 %v461
  %v2002 = vunpack.c.l.b16 %v462
  %v2003 = vunpack.c.l.b16 %v463
  %v2004 = vunpack.c.h.b16 %v463
  %v2005 = vunpack.c.l.b16 %v464
  %v2006 = vunpack.c.h.b16 %v464
  %v2007 = vunpack.c.l.b16 %v465
  %v2008 = vunpack.c.h.b16 %v465
  %v2009 = vunpack.c.l.b16 %v466
  %v2010 = vunpack.c.l.b16 %v467
  %v2011 = vunpack.c.h.b16 %v467
  %v2012 = vunpack.c.l.b16 %v468
  %v2013 = vunpack.c.h.b16 %v468
  %v2014 = vunpack.c.l.b16 %v469
  %v2015 = vunpack.c.h.b16 %v469
  %v2016 = vunpack.c.l.b16 %v470
  %v2017 = vunpack.c.l.b16 %v471
  %v2018 = vunpack.c.h.b16 %v471
  %v2019 = vunpack.c.l.b16 %v472
  %v2020 = vunpack.c.h.b16 %v472
  %v2021 = vunpack.c.l.b16 %v473
  %v2022 = vunpack.c.h.b16 %v473
  %v2023 = vunpack.c.l.b16 %v474
  %v2024 = vunpack.c.l.b16 %v475
  %v2025 = vunpack.c.h.b16 %v475
  %v2026 = vunpack.c.l.b16 %v476
  %v2027 = vunpack.c.h.b16 %v476
  %v2028 = vunpack.c.l.b16 %v477
  %v2029 = vunpack.c.h.b16 %v477
  %v2030 = vunpack.c.l.b16 %v478
  %v2031 = vunpack.c.l.b16 %v479
  %v2032 = vunpack.c.h.b16 %v479
  %v2033 = vunpack.c.l.b16 %v480
  %v2034 = vunpack.c.h.b16 %v480
  %v2035 = vunpack.c.l.b16 %v481
  %v2036 = vunpack.c.h.b16 %v481
  %v2037 = vunpack.c.l.b16 %v482
  %v2038 = vunpack.c.l.b16 %v483
  %v2039 = vunpack.c.h.b16 %v483
  %v2040 = vunpack.c.l.b16 %v484
  %v2041 = vunpack.c.h.b16 %v484
  %v2042 = vunpack.c.l.b16 %v485
  %v2043 = vunpack.c.h.b16 %v485
  %v2044 = vunpack.c.l.b16 %v486
  %v2045 = vunpack.c.l.b16 %v487
  %v2046 = vunpack.c.h.b16 %v487
  %v2047 = vunpack.c.l.b16 %v488
  %v2048 = vunpack.c.h.b16 %v488
  %v2049 = vunpack.c.l.b16 %v489
  %v2050 = vunpack.c.h.b16 %v489
  %v2051 = vunpack.c.l.b16 %v490
  %v2052 = vunpack.c.l.b16 %v491
  %v2053 = vunpack.c.h.b16 %v491
  %v2054 = vunpack.c.l.b16 %v492
  %v2055 = vunpack.c.h.b16 %v492
  %v2056 = vunpack.c.l.b16 %v493
  %v2057 = vunpack.c.h.b16 %v493
  %v2058 = vunpack.c.l.b16 %v494
  %v2059 = vunpack.c.l.b16 %v495
  %v2060 = vunpack.c.h.b16 %v495
  %v2061 = vunpack.c.l.b16 %v496
  %v2062 = vunpack.c.h.b16 %v496
  %v2063 = vunpack.c.l.b16 %v497
  %v2064 = vunpack.c.h.b16 %v497
  %v2065 = vunpack.c.l.b16 %v498
  %v2066 = vunpack.c.l.b16 %v499
  %v2067 = vunpack.c.h.b16 %v499
  %v2068 = vunpack.c.l.b16 %v500
  %v2069 = vunpack.c.h.b16 %v500
  %v2070 = vunpack.c.l.b16 %v501
  %v2071 = vunpack.c.h.b16 %v501
  %v2072 = vunpack.c.l.b16 %v502
  %v2073 = vunpack.c.l.b16 %v503
  %v2074 = vunpack.c.h.b16 %v503
  %v2075 = vunpack.c.l.b16 %v504
  %v2076 = vunpack.c.h.b16 %v504
  %v2077 = vunpack.c.l.b16 %v505
  %v2078 = vunpack.c.h.b16 %v505
  %v2079 = vunpack.c.l.b16 %v506
  %v2080 = vunpack.c.l.b16 %v507
  %v2081 = vunpack.c.h.b16 %v507
  %v2082 = vunpack.c.l.b16 %v508
  %v2083 = vunpack.c.h.b16 %v508
  %v2084 = vunpack.c.l.b16 %v509
  %v2085 = vunpack.c.h.b16 %v509
  %v2086 = vunpack.c.l.b16 %v510
  %v2087 = vunpack.c.l.b16 %v511
  %v2088 = vunpack.c.h.b16 %v511
  %v2089 = vunpack.c.l.b16 %v512
  %v2090 = vunpack.c.h.b16 %v512
  %v2091 = vunpack.c.l.b16 %v513
  %v2092 = vunpack.c.h.b16 %v513
  %v2093 = vunpack.c.l.b16 %v514
  %v2094 = vunpack.c.l.b16 %v515
  %v2095 = vunpack.c.h.b16 %v515
  %v2096 = vunpack.c.l.b16 %v516
  %v2097 = vunpack.c.h.b16 %v516
  %v2098 = vunpack.c.l.b16 %v517
  %v2099 = vunpack.c.h.b16 %v517
  %v2100 = vunpack.c.l.b16 %v518
  %v2101 = vunpack.c.l.b16 %v519
  %v2102 = vunpack.c.h.b16 %v519
  %v2103 = vunpack.c.l.b16 %v520
  %v2104 = vunpack.c.h.b16 %v520
  %v2105 = vunpack.c.l.b16 %v521
  %v2106 = vunpack.c.h.b16 %v521
  %v2107 = vunpack.c.l.b16 %v522
  %v2108 = vunpack.c.l.b16 %v523
  %v2109 = vunpack.c.h.b16 %v523
  %v2110 = vunpack.c.l.b16 %v524
  %v2111 = vunpack.c.h.b16 %v524
  %v2112 = vunpack.c.l.b16 %v525
  %v2113 = vunpack.c.h.b16 %v525
  %v2114 = vunpack.c.l.b16 %v526
  %v2115 = vunpack.c.l.b16 %v527
  %v2116 = vunpack.c.h.b16 %v527
  %v2117 = vunpack.c.l.b16 %v528
  %v2118 = vunpack.c.h.b16 %v528
  %v2119 = vunpack.c.l.b16 %v529
  %v2120 = vunpack.c.h.b16 %v529
  %v2121 = vunpack.c.l.b16 %v530
  %v2122 = vunpack.c.l.b16 %v531
  %v2123 = vunpack.c.h.b16 %v531
  %v2124 = vunpack.c.l.b16 %v532
  %v2125 = vunpack.c.h.b16 %v532
  %v2126 = vunpack.c.l.b16 %v533
  %v2127 = vunpack.c.h.b16 %v533
  %v2128 = vunpack.c.l.b16 %v534
  %v2129 = vunpack.c.l.b16 %v535
  %v2130 = vunpack.c.h.b16 %v535
  %v2131 = vunpack.c.l.b16 %v536
  %v2132 = vunpack.c.h.b16 %v536
  %v2133 = vunpack.c.l.b16 %v537
  %v2134 = vunpack.c.h.b16 %v537
  %v2135 = vunpack.c.l.b16 %v538
  %v2136 = vunpack.c.l.b16 %v539
  %v2137 = vunpack.c.h.b16 %v539
  %v2138 = vunpack.c.l.b16 %v540
  %v2139 = vunpack.c.h.b16 %v540
  %v2140 = vunpack.c.l.b16 %v541
  %v2141 = vunpack.c.h.b16 %v541
  %v2142 = vunpack.c.l.b16 %v542
  %v2143 = vunpack.c.l.b16 %v543
  %v2144 = vunpack.c.h.b16 %v543
  %v2145 = vunpack.c.l.b16 %v544
  %v2146 = vunpack.c.h.b16 %v544
  %v2147 = vunpack.c.l.b16 %v545
  %v2148 = vunpack.c.h.b16 %v545
  %v2149 = vunpack.c.l.b16 %v546
  %v2150 = vunpack.c.l.b16 %v547
  %v2151 = vunpack.c.h.b16 %v547
  %v2152 = vunpack.c.l.b16 %v548
  %v2153 = vunpack.c.h.b16 %v548
  %v2154 = vunpack.c.l.b16 %v549
  %v2155 = vunpack.c.h.b16 %v549
  %v2156 = vunpack.c.l.b16 %v550
  %v2157 = vunpack.c.l.b16 %v551
  %v2158 = vunpack.c.h.b16 %v551
  %v2159 = vunpack.c.l.b16 %v552
  %v2160 = vunpack.c.h.b16 %v552
  %v2161 = vunpack.c.l.b16 %v553
  %v2162 = vunpack.c.h.b16 %v553
  %v2163 = vunpack.c.l.b16 %v554
  %v2164 = vunpack.c.l.b16 %v555
  %v2165 = vunpack.c.h.b16 %v555
  %v2166 = vunpack.c.l.b16 %v556
  %v2167 = vunpack.c.h.b16 %v556
  %v2168 = vunpack.c.l.b16 %v557
  %v2169 = vunpack.c.h.b16 %v557
  %v2170 = vunpack.c.l.b16 %v558
  %v2171 = vunpack.c.l.b16 %v559
  %v2172 = vunpack.c.h.b16 %v559
  %v2173 = vunpack.c.l.b16 %v560
  %v2174 = vunpack.c.h.b16 %v560
  %v2175 = vunpack.c.l.b16 %v561
  %v2176 = vunpack.c.h.b16 %v561
  %v2177 = vunpack.c.l.b16 %v562
  %v2178 = vunpack.c.l.b16 %v563
  %v2179 = vunpack.c.h.b16 %v563
  %v2180 = vunpack.c.l.b16 %v564
  %v2181 = vunpack.c.h.b16 %v564
  %v2182 = vunpack.c.l.b16 %v565
  %v2183 = vunpack.c.h.b16 %v565
  %v2184 = vunpack.c.l.b16 %v566
  %v2185 = vunpack.c.l.b16 %v567
  %v2186 = vunpack.c.h.b16 %v567
  %v2187 = vunpack.c.l.b16 %v568
  %v2188 = vunpack.c.h.b16 %v568
  %v2189 = vunpack.c.l.b16 %v569
  %v2190 = vunpack.c.h.b16 %v569
  %v2191 = vunpack.c.l.b16 %v570
  %v2192 = vunpack.c.l.b16 %v571
  %v2193 = vunpack.c.h.b16 %v571
  %v2194 = vunpack.c.l.b16 %v572
  %v2195 = vunpack.c.h.b16 %v572
  %v2196 = vunpack.c.l.b16 %v573
  %v2197 = vunpack.c.h.b16 %v573
  %v2198 = vunpack.c.l.b16 %v574
  %v2199 = vunpack.c.l.b16 %v575
  %v2200 = vunpack.c.h.b16 %v575
  %v2201 = vunpack.c.l.b16 %v576
  %v2202 = vunpack.c.h.b16 %v576
  %v2203 = vunpack.c.l.b16 %v577
  %v2204 = vunpack.c.h.b16 %v577
  %v2205 = vunpack.c.l.b16 %v578
  %v2206 = vunpack.c.l.b16 %v579
  %v2207 = vunpack.c.h.b16 %v579
  %v2208 = vunpack.c.l.b16 %v580
  %v2209 = vunpack.c.h.b16 %v580
  %v2210 = vunpack.c.l.b16 %v581
  %v2211 = vunpack.c.h.b16 %v581
  %v2212 = vunpack.c.l.b16 %v582
  %v2213 = vunpack.c.l.b16 %v583
  %v2214 = vunpack.c.h.b16 %v583
  %v2215 = vunpack.c.l.b16 %v584
  %v2216 = vunpack.c.h.b16 %v584
  %v2217 = vunpack.c.l.b16 %v585
  %v2218 = vunpack.c.h.b16 %v585
  %v2219 = vunpack.c.l.b16 %v586
  %v2220 = vunpack.c.l.b16 %v587
  %v2221 = vunpack.c.h.b16 %v587
  %v2222 = vunpack.c.l.b16 %v588
  %v2223 = vunpack.c.h.b16 %v588
  %v2224 = vunpack.c.l.b16 %v589
  %v2225 = vunpack.c.h.b16 %v589
  %v2226 = vunpack.c.l.b16 %v590
  %v2227 = vunpack.c.l.b16 %v591
  %v2228 = vunpack.c.h.b16 %v591
  %v2229 = vunpack.c.l.b16 %v592
  %v2230 = vunpack.c.h.b16 %v592
  %v2231 = vunpack.c.l.b16 %v593
  %v2232 = vunpack.c.h.b16 %v593
  %v2233 = vunpack.c.l.b16 %v594
  %v2234 = vunpack.c.l.b16 %v595
  %v2235 = vunpack.c.h.b16 %v595
  %v2236 = vunpack.c.l.b16 %v596
  %v2237 = vunpack.c.h.b16 %v596
  %v2238 = vunpack.c.l.b16 %v597
  %v2239 = vunpack.c.h.b16 %v597
  %v2240 = vunpack.c.l.b16 %v598
  %v2241 = vunpack.c.l.b16 %v599
  %v2242 = vunpack.c.h.b16 %v599
  %v2243 = vunpack.c.l.b16 %v600
  %v2244 = vunpack.c.h.b16 %v600
  %v2245 = vunpack.c.l.b16 %v601
  %v2246 = vunpack.c.h.b16 %v601
  %v2247 = vunpack.c.l.b16 %v602
  %v2248 = vunpack.c.l.b16 %v603
  %v2249 = vunpack.c.h.b16 %v603
  %v2250 = vunpack.c.l.b16 %v604
  %v2251 = vunpack.c.h.b16 %v604
  %v2252 = vunpack.c.l.b16 %v605
  %v2253 = vunpack.c.h.b16 %v605
  %v2254 = vunpack.c.l.b16 %v606
  %v2255 = vunpack.c.l.b16 %v607
  %v2256 = vunpack.c.h.b16 %v607
  %v2257 = vunpack.c.l.b16 %v608
  %v2258 = vunpack.c.h.b16 %v608
  %v2259 = vunpack.c.l.b16 %v609
  %v2260 = vunpack.c.h.b16 %v609
  %v2261 = vunpack.c.l.b16 %v610
  %v2262 = vunpack.c.l.b16 %v611
  %v2263 = vunpack.c.h.b16 %v611
  %v2264 = vunpack.c.l.b16 %v612
  %v2265 = vunpack.c.h.b16 %v612
  %v2266 = vunpack.c.l.b16 %v613
  %v2267 = vunpack.c.h.b16 %v613
  %v2268 = vunpack.c.l.b16 %v614
  %v2269 = vunpack.c.l.b16 %v615
  %v2270 = vunpack.c.h.b16 %v615
  %v2271 = vunpack.c.l.b16 %v616
  %v2272 = vunpack.c.h.b16 %v616
  %v2273 = vunpack.c.l.b16 %v617
  %v2274 = vunpack.c.h.b16 %v617
  %v2275 = vunpack.c.l.b16 %v618
  %v2276 = vunpack.c.l.b16 %v619
  %v2277 = vunpack.c.h.b16 %v619
  %v2278 = vunpack.c.l.b16 %v620
  %v2279 = vunpack.c.h.b16 %v620
  %v2280 = vunpack.c.l.b16 %v621
  %v2281 = vunpack.c.h.b16 %v621
  %v2282 = vunpack.c.l.b16 %v622
  %v2283 = vunpack.c.l.b16 %v623
  %v2284 = vunpack.c.h.b16 %v623
  %v2285 = vunpack.c.l.b16 %v624
  %v2286 = vunpack.c.h.b16 %v624
  %v2287 = vunpack.c.l.b16 %v625
  %v2288 = vunpack.c.h.b16 %v625
  %v2289 = vunpack.c.l.b16 %v626
  %v2290 = vunpack.c.l.b16 %v627
  %v2291 = vunpack.c.h.b16 %v627
  %v2292 = vunpack.c.l.b16 %v628
  %v2293 = vunpack.c.h.b16 %v628
  %v2294 = vunpack.c.l.b16 %v629
  %v2295 = vunpack.c.h.b16 %v629
  %v2296 = vunpack.c.l.b16 %v630
  %v2297 = vunpack.c.l.b16 %v631
  %v2298 = vunpack.c.h.b16 %v631
  %v2299 = vunpack.c.l.b16 %v632
  %v2300 = vunpack.c.h.b16 %v632
  %v2301 = vunpack.c.l.b16 %v633
  %v2302 = vunpack.c.h.b16 %v633
  %v2303 = vunpack.c.l.b16 %v634
  %v2304 = vunpack.c.l.b16 %v635
  %v2305 = vunpack.c.h.b16 %v635
  %v2306 = vunpack.c.l.b16 %v636
  %v2307 = vunpack.c.h.b16 %v636
  %v2308 = vunpack.c.l.b16 %v637
  %v2309 = vunpack.c.h.b16 %v637
  %v2310 = vunpack.c.l.b16 %v638
  %v2311 = vunpack.c.l.b16 %v639
  %v2312 = vunpack.c.h.b16 %v639
  %v2313 = vunpack.c.l.b16 %v640
  %v2314 = vunpack.c.h.b16 %v640
  %v2315 = vunpack.c.l.b16 %v641
  %v2316 = vunpack.c.h.b16 %v641
  %v2317 = vunpack.c.l.b16 %v642
  %v2318 = vunpack.c.l.b16 %v643
  %v2319 = vunpack.c.h.b16 %v643
  %v2320 = vunpack.c.l.b16 %v644
  %v2321 = vunpack.c.h.b16 %v644
  %v2322 = vunpack.c.l.b16 %v645
  %v2323 = vunpack.c.h.b16 %v645
  %v2324 = vunpack.c.l.b16 %v646
  %v2325 = vunpack.c.l.b16 %v647
  %v2326 = vunpack.c.h.b16 %v647
  %v2327 = vunpack.c.l.b16 %v648
  %v2328 = vunpack.c.h.b16 %v648
  %v2329 = vunpack.c.l.b16 %v649
  %v2330 = vunpack.c.h.b16 %v649
  %v2331 = vunpack.c.l.b16 %v650
  %v2332 = vunpack.c.l.b16 %v651
  %v2333 = vunpack.c.h.b16 %v651
  %v2334 = vunpack.c.l.b16 %v652
  %v2335 = vunpack.c.h.b16 %v652
  %v2336 = vunpack.c.l.b16 %v653
  %v2337 = vunpack.c.h.b16 %v653
  %v2338 = vunpack.c.l.b16 %v654
  %v2339 = vunpack.c.l.b16 %v655
  %v2340 = vunpack.c.h.b16 %v655
  %v2341 = vunpack.c.l.b16 %v656
  %v2342 = vunpack.c.h.b16 %v656
  %v2343 = vunpack.c.l.b16 %v657
  %v2344 = vunpack.c.h.b16 %v657
  %v2345 = vunpack.c.l.b16 %v658
  %v2346 = vpack.c.b16 %v1303, %v1296
  %v2347 = vpack.c.b16 %v1304, %v1297
  %v2348 = vpack.c.b16 %v1305, %v1298
  %v2349 = vpack.c.b16 %v1306, %v1299
  %v2350 = vpack.c.b16 %v1307, %v1300
  %v2351 = vpack.c.b16 %v1308, %v1301
  %v2352 = vpack.c.b16 %v1309, %v1302
  %v2353 = vpack.c.b16 %v1317, %v1310
  %v2354 = vpack.c.b16 %v1318, %v1311
  %v2355 = vpack.c.b16 %v1319, %v1312
  %v2356 = vpack.c.b16 %v1320, %v1313
  %v2357 = vpack.c.b16 %v1321, %v1314
  %v2358 = vpack.c.b16 %v1322, %v1315
  %v2359 = vpack.c.b16 %v1323, %v1316
  %v2360 = vpack.c.b16 %v1331, %v1324
  %v2361 = vpack.c.b16 %v1332, %v1325
  %v2362 = vpack.c.b16 %v1333, %v1326
  %v2363 = vpack.c.b16 %v1334, %v1327
  %v2364 = vpack.c.b16 %v1335, %v1328
  %v2365 = vpack.c.b16 %v1336, %v1329
  %v2366 = vpack.c.b16 %v1337, %v1330
  %v2367 = vpack.c.b16 %v1345, %v1338
  %v2368 = vpack.c.b16 %v1346, %v1339
  %v2369 = vpack.c.b16 %v1347, %v1340
  %v2370 = vpack.c.b16 %v1348, %v1341
  %v2371 = vpack.c.b16 %v1349, %v1342
  %v2372 = vpack.c.b16 %v1350, %v1343
  %v2373 = vpack.c.b16 %v1351, %v1344
  %v2374 = vpack.c.b16 %v1359, %v1352
  %v2375 = vpack.c.b16 %v1360, %v1353
  %v2376 = vpack.c.b16 %v1361, %v1354
  %v2377 = vpack.c.b16 %v1362, %v1355
  %v2378 = vpack.c.b16 %v1363, %v1356
  %v2379 = vpack.c.b16 %v1364, %v1357
  %v2380 = vpack.c.b16 %v1365, %v1358
  %v2381 = vpack.c.b16 %v1373, %v1366
  %v2382 = vpack.c.b16 %v1374, %v1367
  %v2383 = vpack.c.b16 %v1375, %v1368
  %v2384 = vpack.c.b16 %v1376, %v1369
  %v2385 = vpack.c.b16 %v1377, %v1370
  %v2386 = vpack.c.b16 %v1378, %v1371
  %v2387 = vpack.c.b16 %v1379, %v1372
  %v2388 = vpack.c.b16 %v1387, %v1380
  %v2389 = vpack.c.b16 %v1388, %v1381
  %v2390 = vpack.c.b16 %v1389, %v1382
  %v2391 = vpack.c.b16 %v1390, %v1383
  %v2392 = vpack.c.b16 %v1391, %v1384
  %v2393 = vpack.c.b16 %v1392, %v1385
  %v2394 = vpack.c.b16 %v1393, %v1386
  %v2395 = vpack.c.b16 %v1401, %v1394
  %v2396 = vpack.c.b16 %v1402, %v1395
  %v2397 = vpack.c.b16 %v1403, %v1396
  %v2398 = vpack.c.b16 %v1404, %v1397
  %v2399 = vpack.c.b16 %v1405, %v1398
  %v2400 = vpack.c.b16 %v1406, %v1399
  %v2401 = vpack.c.b16 %v1407, %v1400
  %v2402 = vpack.c.b16 %v1415, %v1408
  %v2403 = vpack.c.b16 %v1416, %v1409
  %v2404 = vpack.c.b16 %v1417, %v1410
  %v2405 = vpack.c.b16 %v1418, %v1411
  %v2406 = vpack.c.b16 %v1419, %v1412
  %v2407 = vpack.c.b16 %v1420, %v1413
  %v2408 = vpack.c.b16 %v1421, %v1414
  %v2409 = vpack.c.b16 %v1429, %v1422
  %v2410 = vpack.c.b16 %v1430, %v1423
  %v2411 = vpack.c.b16 %v1431, %v1424
  %v2412 = vpack.c.b16 %v1432, %v1425
  %v2413 = vpack.c.b16 %v1433, %v1426
  %v2414 = vpack.c.b16 %v1434, %v1427
  %v2415 = vpack.c.b16 %v1435, %v1428
  %v2416 = vpack.c.b16 %v1443, %v1436
  %v2417 = vpack.c.b16 %v1444, %v1437
  %v2418 = vpack.c.b16 %v1445, %v1438
  %v2419 = vpack.c.b16 %v1446, %v1439
  %v2420 = vpack.c.b16 %v1447, %v1440
  %v2421 = vpack.c.b16 %v1448, %v1441
  %v2422 = vpack.c.b16 %v1449, %v1442
  %v2423 = vpack.c.b16 %v1457, %v1450
  %v2424 = vpack.c.b16 %v1458, %v1451
  %v2425 = vpack.c.b16 %v1459, %v1452
  %v2426 = vpack.c.b16 %v1460, %v1453
  %v2427 = vpack.c.b16 %v1461, %v1454
  %v2428 = vpack.c.b16 %v1462, %v1455
  %v2429 = vpack.c.b16 %v1463, %v1456
  %v2430 = vpack.c.b16 %v1471, %v1464
  %v2431 = vpack.c.b16 %v1472, %v1465
  %v2432 = vpack.c.b16 %v1473, %v1466
  %v2433 = vpack.c.b16 %v1474, %v1467
  %v2434 = vpack.c.b16 %v1475, %v1468
  %v2435 = vpack.c.b16 %v1476, %v1469
  %v2436 = vpack.c.b16 %v1477, %v1470
  %v2437 = vpack.c.b16 %v1485, %v1478
  %v2438 = vpack.c.b16 %v1486, %v1479
  %v2439 = vpack.c.b16 %v1487, %v1480
  %v2440 = vpack.c.b16 %v1488, %v1481
  %v2441 = vpack.c.b16 %v1489, %v1482
  %v2442 = vpack.c.b16 %v1490, %v1483
  %v2443 = vpack.c.b16 %v1491, %v1484
  %v2444 = vpack.c.b16 %v1499, %v1492
  %v2445 = vpack.c.b16 %v1500, %v1493
  %v2446 = vpack.c.b16 %v1501, %v1494
  %v2447 = vpack.c.b16 %v1502, %v1495
  %v2448 = vpack.c.b16 %v1503, %v1496
  %v2449 = vpack.c.b16 %v1504, %v1497
  %v2450 = vpack.c.b16 %v1505, %v1498
  %v2451 = vpack.c.b16 %v1513, %v1506
  %v2452 = vpack.c.b16 %v1514, %v1507
  %v2453 = vpack.c.b16 %v1515, %v1508
  %v2454 = vpack.c.b16 %v1516, %v1509
  %v2455 = vpack.c.b16 %v1517, %v1510
  %v2456 = vpack.c.b16 %v1518, %v1511
  %v2457 = vpack.c.b16 %v1519, %v1512
  %v2458 = vpack.c.b16 %v1527, %v1520
  %v2459 = vpack.c.b16 %v1528, %v1521
  %v2460 = vpack.c.b16 %v1529, %v1522
  %v2461 = vpack.c.b16 %v1530, %v1523
  %v2462 = vpack.c.b16 %v1531, %v1524
  %v2463 = vpack.c.b16 %v1532, %v1525
  %v2464 = vpack.c.b16 %v1533, %v1526
  %v2465 = vpack.c.b16 %v1541, %v1534
  %v2466 = vpack.c.b16 %v1542, %v1535
  %v2467 = vpack.c.b16 %v1543, %v1536
  %v2468 = vpack.c.b16 %v1544, %v1537
  %v2469 = vpack.c.b16 %v1545, %v1538
  %v2470 = vpack.c.b16 %v1546, %v1539
  %v2471 = vpack.c.b16 %v1547, %v1540
  %v2472 = vpack.c.b16 %v1555, %v1548
  %v2473 = vpack.c.b16 %v1556, %v1549
  %v2474 = vpack.c.b16 %v1557, %v1550
  %v2475 = vpack.c.b16 %v1558, %v1551
  %v2476 = vpack.c.b16 %v1559, %v1552
  %v2477 = vpack.c.b16 %v1560, %v1553
  %v2478 = vpack.c.b16 %v1561, %v1554
  %v2479 = vpack.c.b16 %v1569, %v1562
  %v2480 = vpack.c.b16 %v1570, %v1563
  %v2481 = vpack.c.b16 %v1571, %v1564
  %v2482 = vpack.c.b16 %v1572, %v1565
  %v2483 = vpack.c.b16 %v1573, %v1566
  %v2484 = vpack.c.b16 %v1574, %v1567
  %v2485 = vpack.c.b16 %v1575, %v1568
  %v2486 = vpack.c.b16 %v1583, %v1576
  %v2487 = vpack.c.b16 %v1584, %v1577
  %v2488 = vpack.c.b16 %v1585, %v1578
  %v2489 = vpack.c.b16 %v1586, %v1579
  %v2490 = vpack.c.b16 %v1587, %v1580
  %v2491 = vpack.c.b16 %v1588, %v1581
  %v2492 = vpack.c.b16 %v1589, %v1582
  %v2493 = vpack.c.b16 %v1597, %v1590
  %v2494 = vpack.c.b16 %v1598, %v1591
  %v2495 = vpack.c.b16 %v1599, %v1592
  %v2496 = vpack.c.b16 %v1600, %v1593
  %v2497 = vpack.c.b16 %v1601, %v1594
  %v2498 = vpack.c.b16 %v1602, %v1595
  %v2499 = vpack.c.b16 %v1603, %v1596
  %v2500 = vpack.c.b16 %v1611, %v1604
  %v2501 = vpack.c.b16 %v1612, %v1605
  %v2502 = vpack.c.b16 %v1613, %v1606
  %v2503 = vpack.c.b16 %v1614, %v1607
  %v2504 = vpack.c.b16 %v1615, %v1608
  %v2505 = vpack.c.b16 %v1616, %v1609
  %v2506 = vpack.c.b16 %v1617, %v1610
  %v2507 = vpack.c.b16 %v1625, %v1618
  %v2508 = vpack.c.b16 %v1626, %v1619
  %v2509 = vpack.c.b16 %v1627, %v1620
  %v2510 = vpack.c.b16 %v1628, %v1621
  %v2511 = vpack.c.b16 %v1629, %v1622
  %v2512 = vpack.c.b16 %v1630, %v1623
  %v2513 = vpack.c.b16 %v1631, %v1624
  %v2514 = vpack.c.b16 %v1639, %v1632
  %v2515 = vpack.c.b16 %v1640, %v1633
  %v2516 = vpack.c.b16 %v1641, %v1634
  %v2517 = vpack.c.b16 %v1642, %v1635
  %v2518 = vpack.c.b16 %v1643, %v1636
  %v2519 = vpack.c.b16 %v1644, %v1637
  %v2520 = vpack.c.b16 %v1645, %v1638
  %v2521 = vpack.c.b16 %v1653, %v1646
  %v2522 = vpack.c.b16 %v1654, %v1647
  %v2523 = vpack.c.b16 %v1655, %v1648
  %v2524 = vpack.c.b16 %v1656, %v1649
  %v2525 = vpack.c.b16 %v1657, %v1650
  %v2526 = vpack.c.b16 %v1658, %v1651
  %v2527 = vpack.c.b16 %v1659, %v1652
  %v2528 = vpack.c.b16 %v1667, %v1660
  %v2529 = vpack.c.b16 %v1668, %v1661
  %v2530 = vpack.c.b16 %v1669, %v1662
  %v2531 = vpack.c.b16 %v1670, %v1663
  %v2532 = vpack.c.b16 %v1671, %v1664
  %v2533 = vpack.c.b16 %v1672, %v1665
  %v2534 = vpack.c.b16 %v1673, %v1666
  %v2535 = vpack.c.b16 %v1681, %v1674
  %v2536 = vpack.c.b16 %v1682, %v1675
  %v2537 = vpack.c.b16 %v1683, %v1676
  %v2538 = vpack.c.b16 %v1684, %v1677
  %v2539 = vpack.c.b16 %v1685, %v1678
  %v2540 = vpack.c.b16 %v1686, %v1679
  %v2541 = vpack.c.b16 %v1687, %v1680
  %v2542 = vpack.c.b16 %v1695, %v1688
  %v2543 = vpack.c.b16 %v1696, %v1689
  %v2544 = vpack.c.b16 %v1697, %v1690
  %v2545 = vpack.c.b16 %v1698, %v1691
  %v2546 = vpack.c.b16 %v1699, %v1692
  %v2547 = vpack.c.b16 %v1700, %v1693
  %v2548 = vpack.c.b16 %v1701, %v1694
  %v2549 = vpack.c.b16 %v1709, %v1702
  %v2550 = vpack.c.b16 %v1710, %v1703
  %v2551 = vpack.c.b16 %v1711, %v1704
  %v2552 = vpack.c.b16 %v1712, %v1705
  %v2553 = vpack.c.b16 %v1713, %v1706
  %v2554 = vpack.c.b16 %v1714, %v1707
  %v2555 = vpack.c.b16 %v1715, %v1708
  %v2556 = vpack.c.b16 %v1723, %v1716
  %v2557 = vpack.c.b16 %v1724, %v1717
  %v2558 = vpack.c.b16 %v1725, %v1718
  %v2559 = vpack.c.b16 %v1726, %v1719
  %v2560 = vpack.c.b16 %v1727, %v1720
  %v2561 = vpack.c.b16 %v1728, %v1721
  %v2562 = vpack.c.b16 %v1729, %v1722
  %v2563 = vpack.c.b16 %v1737, %v1730
  %v2564 = vpack.c.b16 %v1738, %v1731
  %v2565 = vpack.c.b16 %v1739, %v1732
  %v2566 = vpack.c.b16 %v1740, %v1733
  %v2567 = vpack.c.b16 %v1741, %v1734
  %v2568 = vpack.c.b16 %v1742, %v1735
  %v2569 = vpack.c.b16 %v1743, %v1736
  %v2570 = vpack.c.b16 %v1751, %v1744
  %v2571 = vpack.c.b16 %v1752, %v1745
  %v2572 = vpack.c.b16 %v1753, %v1746
  %v2573 = vpack.c.b16 %v1754, %v1747
  %v2574 = vpack.c.b16 %v1755, %v1748
  %v2575 = vpack.c.b16 %v1756, %v1749
  %v2576 = vpack.c.b16 %v1757, %v1750
  %v2577 = vpack.c.b16 %v1765, %v1758
  %v2578 = vpack.c.b16 %v1766, %v1759
  %v2579 = vpack.c.b16 %v1767, %v1760
  %v2580 = vpack.c.b16 %v1768, %v1761
  %v2581 = vpack.c.b16 %v1769, %v1762
  %v2582 = vpack.c.b16 %v1770, %v1763
  %v2583 = vpack.c.b16 %v1771, %v1764
  %v2584 = vpack.c.b16 %v1779, %v1772
  %v2585 = vpack.c.b16 %v1780, %v1773
  %v2586 = vpack.c.b16 %v1781, %v1774
  %v2587 = vpack.c.b16 %v1782, %v1775
  %v2588 = vpack.c.b16 %v1783, %v1776
  %v2589 = vpack.c.b16 %v1784, %v1777
  %v2590 = vpack.c.b16 %v1785, %v1778
  %v2591 = vpack.c.b16 %v1793, %v1786
  %v2592 = vpack.c.b16 %v1794, %v1787
  %v2593 = vpack.c.b16 %v1795, %v1788
  %v2594 = vpack.c.b16 %v1796, %v1789
  %v2595 = vpack.c.b16 %v1797, %v1790
  %v2596 = vpack.c.b16 %v1798, %v1791
  %v2597 = vpack.c.b16 %v1799, %v1792
  %v2598 = vpack.c.b16 %v1807, %v1800
  %v2599 = vpack.c.b16 %v1808, %v1801
  %v2600 = vpack.c.b16 %v1809, %v1802
  %v2601 = vpack.c.b16 %v1810, %v1803
  %v2602 = vpack.c.b16 %v1811, %v1804
  %v2603 = vpack.c.b16 %v1812, %v1805
  %v2604 = vpack.c.b16 %v1813, %v1806
  %v2605 = vpack.c.b16 %v1821, %v1814
  %v2606 = vpack.c.b16 %v1822, %v1815
  %v2607 = vpack.c.b16 %v1823, %v1816
  %v2608 = vpack.c.b16 %v1824, %v1817
  %v2609 = vpack.c.b16 %v1825, %v1818
  %v2610 = vpack.c.b16 %v1826, %v1819
  %v2611 = vpack.c.b16 %v1827, %v1820
  %v2612 = vpack.c.b16 %v1835, %v1828
  %v2613 = vpack.c.b16 %v1836, %v1829
  %v2614 = vpack.c.b16 %v1837, %v1830
  %v2615 = vpack.c.b16 %v1838, %v1831
  %v2616 = vpack.c.b16 %v1839, %v1832
  %v2617 = vpack.c.b16 %v1840, %v1833
  %v2618 = vpack.c.b16 %v1841, %v1834
  %v2619 = vpack.c.b16 %v1849, %v1842
  %v2620 = vpack.c.b16 %v1850, %v1843
  %v2621 = vpack.c.b16 %v1851, %v1844
  %v2622 = vpack.c.b16 %v1852, %v1845
  %v2623 = vpack.c.b16 %v1853, %v1846
  %v2624 = vpack.c.b16 %v1854, %v1847
  %v2625 = vpack.c.b16 %v1855, %v1848
  %v2626 = vpack.c.b16 %v1863, %v1856
  %v2627 = vpack.c.b16 %v1864, %v1857
  %v2628 = vpack.c.b16 %v1865, %v1858
  %v2629 = vpack.c.b16 %v1866, %v1859
  %v2630 = vpack.c.b16 %v1867, %v1860
  %v2631 = vpack.c.b16 %v1868, %v1861
  %v2632 = vpack.c.b16 %v1869, %v1862
  %v2633 = vpack.c.b16 %v1877, %v1870
  %v2634 = vpack.c.b16 %v1878, %v1871
  %v2635 = vpack.c.b16 %v1879, %v1872
  %v2636 = vpack.c.b16 %v1880, %v1873
  %v2637 = vpack.c.b16 %v1881, %v1874
  %v2638 = vpack.c.b16 %v1882, %v1875
  %v2639 = vpack.c.b16 %v1883, %v1876
  %v2640 = vpack.c.b16 %v1891, %v1884
  %v2641 = vpack.c.b16 %v1892, %v1885
  %v2642 = vpack.c.b16 %v1893, %v1886
  %v2643 = vpack.c.b16 %v1894, %v1887
  %v2644 = vpack.c.b16 %v1895, %v1888
  %v2645 = vpack.c.b16 %v1896, %v1889
  %v2646 = vpack.c.b16 %v1897, %v1890
  %v2647 = vpack.c.b16 %v1905, %v1898
  %v2648 = vpack.c.b16 %v1906, %v1899
  %v2649 = vpack.c.b16 %v1907, %v1900
  %v2650 = vpack.c.b16 %v1908, %v1901
  %v2651 = vpack.c.b16 %v1909, %v1902
  %v2652 = vpack.c.b16 %v1910, %v1903
  %v2653 = vpack.c.b16 %v1911, %v1904
  %v2654 = vpack.c.b16 %v1919, %v1912
  %v2655 = vpack.c.b16 %v1920, %v1913
  %v2656 = vpack.c.b16 %v1921, %v1914
  %v2657 = vpack.c.b16 %v1922, %v1915
  %v2658 = vpack.c.b16 %v1923, %v1916
  %v2659 = vpack.c.b16 %v1924, %v1917
  %v2660 = vpack.c.b16 %v1925, %v1918
  %v2661 = vpack.c.b16 %v1933, %v1926
  %v2662 = vpack.c.b16 %v1934, %v1927
  %v2663 = vpack.c.b16 %v1935, %v1928
  %v2664 = vpack.c.b16 %v1936, %v1929
  %v2665 = vpack.c.b16 %v1937, %v1930
  %v2666 = vpack.c.b16 %v1938, %v1931
  %v2667 = vpack.c.b16 %v1939, %v1932
  %v2668 = vpack.c.b16 %v1947, %v1940
  %v2669 = vpack.c.b16 %v1948, %v1941
  %v2670 = vpack.c.b16 %v1949, %v1942
  %v2671 = vpack.c.b16 %v1950, %v1943
  %v2672 = vpack.c.b16 %v1951, %v1944
  %v2673 = vpack.c.b16 %v1952, %v1945
  %v2674 = vpack.c.b16 %v1953, %v1946
  %v2675 = vpack.c.b16 %v1961, %v1954
  %v2676 = vpack.c.b16 %v1962, %v1955
  %v2677 = vpack.c.b16 %v1963, %v1956
  %v2678 = vpack.c.b16 %v1964, %v1957
  %v2679 = vpack.c.b16 %v1965, %v1958
  %v2680 = vpack.c.b16 %v1966, %v1959
  %v2681 = vpack.c.b16 %v1967, %v1960
  %v2682 = vpack.c.b16 %v1975, %v1968
  %v2683 = vpack.c.b16 %v1976, %v1969
  %v2684 = vpack.c.b16 %v1977, %v1970
  %v2685 = vpack.c.b16 %v1978, %v1971
  %v2686 = vpack.c.b16 %v1979, %v1972
  %v2687 = vpack.c.b16 %v1980, %v1973
  %v2688 = vpack.c.b16 %v1981, %v1974
  %v2689 = vpack.c.b16 %v1989, %v1982
  %v2690 = vpack.c.b16 %v1990, %v1983
  %v2691 = vpack.c.b16 %v1991, %v1984
  %v2692 = vpack.c.b16 %v1992, %v1985
  %v2693 = vpack.c.b16 %v1993, %v1986
  %v2694 = vpack.c.b16 %v1994, %v1987
  %v2695 = vpack.c.b16 %v1995, %v1988
  %v2696 = vpack.c.b16 %v2003, %v1996
  %v2697 = vpack.c.b16 %v2004, %v1997
  %v2698 = vpack.c.b16 %v2005, %v1998
  %v2699 = vpack.c.b16 %v2006, %v1999
  %v2700 = vpack.c.b16 %v2007, %v2000
  %v2701 = vpack.c.b16 %v2008, %v2001
  %v2702 = vpack.c.b16 %v2009, %v2002
  %v2703 = vpack.c.b16 %v2017, %v2010
  %v2704 = vpack.c.b16 %v2018, %v2011
  %v2705 = vpack.c.b16 %v2019, %v2012
  %v2706 = vpack.c.b16 %v2020, %v2013
  %v2707 = vpack.c.b16 %v2021, %v2014
  %v2708 = vpack.c.b16 %v2022, %v2015
  %v2709 = vpack.c.b16 %v2023, %v2016
  %v2710 = vpack.c.b16 %v2031, %v2024
  %v2711 = vpack.c.b16 %v2032, %v2025
  %v2712 = vpack.c.b16 %v2033, %v2026
  %v2713 = vpack.c.b16 %v2034, %v2027
  %v2714 = vpack.c.b16 %v2035, %v2028
  %v2715 = vpack.c.b16 %v2036, %v2029
  %v2716 = vpack.c.b16 %v2037, %v2030
  %v2717 = vpack.c.b16 %v2045, %v2038
  %v2718 = vpack.c.b16 %v2046, %v2039
  %v2719 = vpack.c.b16 %v2047, %v2040
  %v2720 = vpack.c.b16 %v2048, %v2041
  %v2721 = vpack.c.b16 %v2049, %v2042
  %v2722 = vpack.c.b16 %v2050, %v2043
  %v2723 = vpack.c.b16 %v2051, %v2044
  %v2724 = vpack.c.b16 %v2059, %v2052
  %v2725 = vpack.c.b16 %v2060, %v2053
  %v2726 = vpack.c.b16 %v2061, %v2054
  %v2727 = vpack.c.b16 %v2062, %v2055
  %v2728 = vpack.c.b16 %v2063, %v2056
  %v2729 = vpack.c.b16 %v2064, %v2057
  %v2730 = vpack.c.b16 %v2065, %v2058
  %v2731 = vpack.c.b16 %v2073, %v2066
  %v2732 = vpack.c.b16 %v2074, %v2067
  %v2733 = vpack.c.b16 %v2075, %v2068
  %v2734 = vpack.c.b16 %v2076, %v2069
  %v2735 = vpack.c.b16 %v2077, %v2070
  %v2736 = vpack.c.b16 %v2078, %v2071
  %v2737 = vpack.c.b16 %v2079, %v2072
  %v2738 = vpack.c.b16 %v2087, %v2080
  %v2739 = vpack.c.b16 %v2088, %v2081
  %v2740 = vpack.c.b16 %v2089, %v2082
  %v2741 = vpack.c.b16 %v2090, %v2083
  %v2742 = vpack.c.b16 %v2091, %v2084
  %v2743 = vpack.c.b16 %v2092, %v2085
  %v2744 = vpack.c.b16 %v2093, %v2086
  %v2745 = vpack.c.b16 %v2101, %v2094
  %v2746 = vpack.c.b16 %v2102, %v2095
  %v2747 = vpack.c.b16 %v2103, %v2096
  %v2748 = vpack.c.b16 %v2104, %v2097
  %v2749 = vpack.c.b16 %v2105, %v2098
  %v2750 = vpack.c.b16 %v2106, %v2099
  %v2751 = vpack.c.b16 %v2107, %v2100
  %v2752 = vpack.c.b16 %v2115, %v2108
  %v2753 = vpack.c.b16 %v2116, %v2109
  %v2754 = vpack.c.b16 %v2117, %v2110
  %v2755 = vpack.c.b16 %v2118, %v2111
  %v2756 = vpack.c.b16 %v2119, %v2112
  %v2757 = vpack.c.b16 %v2120, %v2113
  %v2758 = vpack.c.b16 %v2121, %v2114
  %v2759 = vpack.c.b16 %v2129, %v2122
  %v2760 = vpack.c.b16 %v2130, %v2123
  %v2761 = vpack.c.b16 %v2131, %v2124
  %v2762 = vpack.c.b16 %v2132, %v2125
  %v2763 = vpack.c.b16 %v2133, %v2126
  %v2764 = vpack.c.b16 %v2134, %v2127
  %v2765 = vpack.c.b16 %v2135, %v2128
  %v2766 = vpack.c.b16 %v2143, %v2136
  %v2767 = vpack.c.b16 %v2144, %v2137
  %v2768 = vpack.c.b16 %v2145, %v2138
  %v2769 = vpack.c.b16 %v2146, %v2139
  %v2770 = vpack.c.b16 %v2147, %v2140
  %v2771 = vpack.c.b16 %v2148, %v2141
  %v2772 = vpack.c.b16 %v2149, %v2142
  %v2773 = vpack.c.b16 %v2157, %v2150
  %v2774 = vpack.c.b16 %v2158, %v2151
  %v2775 = vpack.c.b16 %v2159, %v2152
  %v2776 = vpack.c.b16 %v2160, %v2153
  %v2777 = vpack.c.b16 %v2161, %v2154
  %v2778 = vpack.c.b16 %v2162, %v2155
  %v2779 = vpack.c.b16 %v2163, %v2156
  %v2780 = vpack.c.b16 %v2171, %v2164
  %v2781 = vpack.c.b16 %v2172, %v2165
  %v2782 = vpack.c.b16 %v2173, %v2166
  %v2783 = vpack.c.b16 %v2174, %v2167
  %v2784 = vpack.c.b16 %v2175, %v2168
  %v2785 = vpack.c.b16 %v2176, %v2169
  %v2786 = vpack.c.b16 %v2177, %v2170
  %v2787 = vpack.c.b16 %v2185, %v2178
  %v2788 = vpack.c.b16 %v2186, %v2179
  %v2789 = vpack.c.b16 %v2187, %v2180
  %v2790 = vpack.c.b16 %v2188, %v2181
  %v2791 = vpack.c.b16 %v2189, %v2182
  %v2792 = vpack.c.b16 %v2190, %v2183
  %v2793 = vpack.c.b16 %v2191, %v2184
  %v2794 = vpack.c.b16 %v2199, %v2192
  %v2795 = vpack.c.b16 %v2200, %v2193
  %v2796 = vpack.c.b16 %v2201, %v2194
  %v2797 = vpack.c.b16 %v2202, %v2195
  %v2798 = vpack.c.b16 %v2203, %v2196
  %v2799 = vpack.c.b16 %v2204, %v2197
  %v2800 = vpack.c.b16 %v2205, %v2198
  %v2801 = vpack.c.b16 %v2213, %v2206
  %v2802 = vpack.c.b16 %v2214, %v2207
  %v2803 = vpack.c.b16 %v2215, %v2208
  %v2804 = vpack.c.b16 %v2216, %v2209
  %v2805 = vpack.c.b16 %v2217, %v2210
  %v2806 = vpack.c.b16 %v2218, %v2211
  %v2807 = vpack.c.b16 %v2219, %v2212
  %v2808 = vpack.c.b16 %v2227, %v2220
  %v2809 = vpack.c.b16 %v2228, %v2221
  %v2810 = vpack.c.b16 %v2229, %v2222
  %v2811 = vpack.c.b16 %v2230, %v2223
  %v2812 = vpack.c.b16 %v2231, %v2224
  %v2813 = vpack.c.b16 %v2232, %v2225
  %v2814 = vpack.c.b16 %v2233, %v2226
  %v2815 = vpack.c.b16 %v2241, %v2234
  %v2816 = vpack.c.b16 %v2242, %v2235
  %v2817 = vpack.c.b16 %v2243, %v2236
  %v2818 = vpack.c.b16 %v2244, %v2237
  %v2819 = vpack.c.b16 %v2245, %v2238
  %v2820 = vpack.c.b16 %v2246, %v2239
  %v2821 = vpack.c.b16 %v2247, %v2240
  %v2822 = vpack.c.b16 %v2255, %v2248
  %v2823 = vpack.c.b16 %v2256, %v2249
  %v2824 = vpack.c.b16 %v2257, %v2250
  %v2825 = vpack.c.b16 %v2258, %v2251
  %v2826 = vpack.c.b16 %v2259, %v2252
  %v2827 = vpack.c.b16 %v2260, %v2253
  %v2828 = vpack.c.b16 %v2261, %v2254
  %v2829 = vpack.c.b16 %v2269, %v2262
  %v2830 = vpack.c.b16 %v2270, %v2263
  %v2831 = vpack.c.b16 %v2271, %v2264
  %v2832 = vpack.c.b16 %v2272, %v2265
  %v2833 = vpack.c.b16 %v2273, %v2266
  %v2834 = vpack.c.b16 %v2274, %v2267
  %v2835 = vpack.c.b16 %v2275, %v2268
  %v2836 = vpack.c.b16 %v2283, %v2276
  %v2837 = vpack.c.b16 %v2284, %v2277
  %v2838 = vpack.c.b16 %v2285, %v2278
  %v2839 = vpack.c.b16 %v2286, %v2279
  %v2840 = vpack.c.b16 %v2287, %v2280
  %v2841 = vpack.c.b16 %v2288, %v2281
  %v2842 = vpack.c.b16 %v2289, %v2282
  %v2843 = vpack.c.b16 %v2297, %v2290
  %v2844 = vpack.c.b16 %v2298, %v2291
  %v2845 = vpack.c.b16 %v2299, %v2292
  %v2846 = vpack.c.b16 %v2300, %v2293
  %v2847 = vpack.c.b16 %v2301, %v2294
  %v2848 = vpack.c.b16 %v2302, %v2295
  %v2849 = vpack.c.b16 %v2303, %v2296
  %v2850 = vpack.c.b16 %v2311, %v2304
  %v2851 = vpack.c.b16 %v2312, %v2305
  %v2852 = vpack.c.b16 %v2313, %v2306
  %v2853 = vpack.c.b16 %v2314, %v2307
  %v2854 = vpack.c.b16 %v2315, %v2308
  %v2855 = vpack.c.b16 %v2316, %v2309
  %v2856 = vpack.c.b16 %v2317, %v2310
  %v2857 = vpack.c.b16 %v2325, %v2318
  %v2858 = vpack.c.b16 %v2326, %v2319
  %v2859 = vpack.c.b16 %v2327, %v2320
  %v2860 = vpack.c.b16 %v2328, %v2321
  %v2861 = vpack.c.b16 %v2329, %v2322
  %v2862 = vpack.c.b16 %v2330, %v2323
  %v2863 = vpack.c.b16 %v2331, %v2324
  %v2864 = vpack.c.b16 %v2339, %v2332
  %v2865 = vpack.c.b16 %v2340, %v2333
  %v2866 = vpack.c.b16 %v2341, %v2334
  %v2867 = vpack.c.b16 %v2342, %v2335
  %v2868 = vpack.c.b16 %v2343, %v2336
  %v2869 = vpack.c.b16 %v2344, %v2337
  %v2870 = vpack.c.b16 %v2345, %v2338
  %vm3396 = vcmask 392192
  %v3398 = vsel %vm3396, %v58, 0
  %3400 = vmatprep.subr.bf16.mxu0 %v2347
  %3401 = vmatpush1.bf16.msra.mxu0 %v2346
  %3402 = vmatprep.subr.bf16.mxu0 %v2354
  %3403 = vmatpush1.bf16.msra.mxu0 %v2353
  %3404 = vmatprep.subr.bf16.mxu0 %v2361
  %3405 = vmatpush1.bf16.msra.mxu0 %v2360
  %3406 = vmatprep.subr.bf16.mxu0 %v2368
  %3407 = vmatpush1.bf16.msra.mxu0 %v2367
  %3408 = vmatprep.subr.bf16.mxu0 %v2375
  %3409 = vmatpush1.bf16.msra.mxu0 %v2374
  %3410 = vmatprep.subr.bf16.mxu0 %v2382
  %3411 = vmatpush1.bf16.msra.mxu0 %v2381
  %3412 = vmatprep.subr.bf16.mxu0 %v2389
  %3413 = vmatpush1.bf16.msra.mxu0 %v2388
  %3414 = vmatprep.subr.bf16.mxu0 %v2396
  %3415 = vmatpush1.bf16.msra.mxu0 %v2395
  %3416 = vmatprep.subr.bf16.mxu0 %v2403
  %3417 = vmatpush1.bf16.msra.mxu0 %v2402
  %3418 = vmatprep.subr.bf16.mxu0 %v2410
  %3419 = vmatpush1.bf16.msra.mxu0 %v2409
  %3420 = vmatprep.subr.bf16.mxu0 %v2417
  %3421 = vmatpush1.bf16.msra.mxu0 %v2416
  %3422 = vmatprep.subr.bf16.mxu0 %v2424
  %3423 = vmatpush1.bf16.msra.mxu0 %v2423
  %3424 = vmatprep.subr.bf16.mxu0 %v2431
  %3425 = vmatpush1.bf16.msra.mxu0 %v2430
  %3426 = vmatprep.subr.bf16.mxu0 %v2438
  %3427 = vmatpush1.bf16.msra.mxu0 %v2437
  %3428 = vmatprep.subr.bf16.mxu0 %v2445
  %3429 = vmatpush1.bf16.msra.mxu0 %v2444
  %3430 = vmatprep.subr.bf16.mxu0 %v2452
  %3431 = vmatpush1.bf16.msra.mxu0 %v2451
  %3432 = vmatprep.mubr.bf16.mxu0 %v50
  %3433 = vmatmul.mubr.bf16.gmra.mrb[0].mxu0 %v49
  %v3434 = vpop.f32.mrb[0].mxu0
  %v3435 = vadd.f32 %v664, %v3434
  %v3436 = vpop.f32.mrb[0].mxu0
  %v3437 = vadd.f32 %v668, %v3436
  %v3438 = vpop.f32.mrb[0].mxu0
  %v3439 = vpop.f32.mrb[0].mxu0
  %3440 = vdwg.mxu0
  %3441 = vmatprep.subr.bf16.mxu0 %v2459
  %3442 = vmatpush1.bf16.msra.mxu0 %v2458
  %3443 = vmatprep.subr.bf16.mxu0 %v2466
  %3444 = vmatpush1.bf16.msra.mxu0 %v2465
  %3445 = vmatprep.subr.bf16.mxu0 %v2473
  %3446 = vmatpush1.bf16.msra.mxu0 %v2472
  %3447 = vmatprep.subr.bf16.mxu0 %v2480
  %3448 = vmatpush1.bf16.msra.mxu0 %v2479
  %3449 = vmatprep.subr.bf16.mxu0 %v2487
  %3450 = vmatpush1.bf16.msra.mxu0 %v2486
  %3451 = vmatprep.subr.bf16.mxu0 %v2494
  %3452 = vmatpush1.bf16.msra.mxu0 %v2493
  %3453 = vmatprep.subr.bf16.mxu0 %v2501
  %3454 = vmatpush1.bf16.msra.mxu0 %v2500
  %3455 = vmatprep.subr.bf16.mxu0 %v2508
  %3456 = vmatpush1.bf16.msra.mxu0 %v2507
  %3457 = vmatprep.subr.bf16.mxu0 %v2515
  %3458 = vmatpush1.bf16.msra.mxu0 %v2514
  %3459 = vmatprep.subr.bf16.mxu0 %v2522
  %3460 = vmatpush1.bf16.msra.mxu0 %v2521
  %3461 = vmatprep.subr.bf16.mxu0 %v2529
  %3462 = vmatpush1.bf16.msra.mxu0 %v2528
  %3463 = vmatprep.subr.bf16.mxu0 %v2536
  %3464 = vmatpush1.bf16.msra.mxu0 %v2535
  %3465 = vmatprep.subr.bf16.mxu0 %v2543
  %3466 = vmatpush1.bf16.msra.mxu0 %v2542
  %3467 = vmatprep.subr.bf16.mxu0 %v2550
  %3468 = vmatpush1.bf16.msra.mxu0 %v2549
  %3469 = vmatprep.subr.bf16.mxu0 %v2557
  %3470 = vmatpush1.bf16.msra.mxu0 %v2556
  %3471 = vmatprep.subr.bf16.mxu0 %v2564
  %3472 = vmatpush1.bf16.msra.mxu0 %v2563
  %3473 = vmatprep.mubr.bf16.mxu0 %v52
  %3474 = vmatmul.mubr.bf16.gmra.mrb[0].mxu0 %v51
  %v3475 = vpop.f32.mrb[0].mxu0
  %v3476 = vadd.f32 %v3435, %v3475
  %v3477 = vpop.f32.mrb[0].mxu0
  %v3478 = vadd.f32 %v3437, %v3477
  %v3479 = vpop.f32.mrb[0].mxu0
  %v3480 = vpop.f32.mrb[0].mxu0
  %3481 = vdwg.mxu0
  %3482 = vmatprep.subr.bf16.mxu0 %v2571
  %3483 = vmatpush1.bf16.msra.mxu0 %v2570
  %3484 = vmatprep.subr.bf16.mxu0 %v2578
  %3485 = vmatpush1.bf16.msra.mxu0 %v2577
  %3486 = vmatprep.subr.bf16.mxu0 %v2585
  %3487 = vmatpush1.bf16.msra.mxu0 %v2584
  %3488 = vmatprep.subr.bf16.mxu0 %v2592
  %3489 = vmatpush1.bf16.msra.mxu0 %v2591
  %3490 = vmatprep.subr.bf16.mxu0 %v2599
  %3491 = vmatpush1.bf16.msra.mxu0 %v2598
  %3492 = vmatprep.subr.bf16.mxu0 %v2606
  %3493 = vmatpush1.bf16.msra.mxu0 %v2605
  %3494 = vmatprep.subr.bf16.mxu0 %v2613
  %3495 = vmatpush1.bf16.msra.mxu0 %v2612
  %3496 = vmatprep.subr.bf16.mxu0 %v2620
  %3497 = vmatpush1.bf16.msra.mxu0 %v2619
  %3498 = vmatprep.subr.bf16.mxu0 %v2627
  %3499 = vmatpush1.bf16.msra.mxu0 %v2626
  %3500 = vmatprep.subr.bf16.mxu0 %v2634
  %3501 = vmatpush1.bf16.msra.mxu0 %v2633
  %3502 = vmatprep.subr.bf16.mxu0 %v2641
  %3503 = vmatpush1.bf16.msra.mxu0 %v2640
  %3504 = vmatprep.subr.bf16.mxu0 %v2648
  %3505 = vmatpush1.bf16.msra.mxu0 %v2647
  %3506 = vmatprep.subr.bf16.mxu0 %v2655
  %3507 = vmatpush1.bf16.msra.mxu0 %v2654
  %3508 = vmatprep.subr.bf16.mxu0 %v2662
  %3509 = vmatpush1.bf16.msra.mxu0 %v2661
  %3510 = vmatprep.subr.bf16.mxu0 %v2669
  %3511 = vmatpush1.bf16.msra.mxu0 %v2668
  %3512 = vmatprep.subr.bf16.mxu0 %v2676
  %3513 = vmatpush1.bf16.msra.mxu0 %v2675
  %3514 = vmatprep.mubr.bf16.mxu0 %v54
  %3515 = vmatmul.mubr.bf16.gmra.mrb[0].mxu0 %v53
  %v3516 = vpop.f32.mrb[0].mxu0
  %v3517 = vadd.f32 %v3476, %v3516
  %v3518 = vpop.f32.mrb[0].mxu0
  %v3519 = vadd.f32 %v3478, %v3518
  %v3520 = vpop.f32.mrb[0].mxu0
  %v3521 = vpop.f32.mrb[0].mxu0
  %3522 = vdwg.mxu0
  %3523 = vmatprep.subr.bf16.mxu0 %v2683
  %3524 = vmatpush1.bf16.msra.mxu0 %v2682
  %3525 = vmatprep.subr.bf16.mxu0 %v2690
  %3526 = vmatpush1.bf16.msra.mxu0 %v2689
  %3527 = vmatprep.subr.bf16.mxu0 %v2697
  %3528 = vmatpush1.bf16.msra.mxu0 %v2696
  %3529 = vmatprep.subr.bf16.mxu0 %v2704
  %3530 = vmatpush1.bf16.msra.mxu0 %v2703
  %3531 = vmatprep.subr.bf16.mxu0 %v2711
  %3532 = vmatpush1.bf16.msra.mxu0 %v2710
  %3533 = vmatprep.subr.bf16.mxu0 %v2718
  %3534 = vmatpush1.bf16.msra.mxu0 %v2717
  %3535 = vmatprep.subr.bf16.mxu0 %v2725
  %3536 = vmatpush1.bf16.msra.mxu0 %v2724
  %3537 = vmatprep.subr.bf16.mxu0 %v2732
  %3538 = vmatpush1.bf16.msra.mxu0 %v2731
  %3539 = vmatprep.subr.bf16.mxu0 %v2739
  %3540 = vmatpush1.bf16.msra.mxu0 %v2738
  %3541 = vmatprep.subr.bf16.mxu0 %v2746
  %3542 = vmatpush1.bf16.msra.mxu0 %v2745
  %3543 = vmatprep.subr.bf16.mxu0 %v2753
  %3544 = vmatpush1.bf16.msra.mxu0 %v2752
  %3545 = vmatprep.subr.bf16.mxu0 %v2760
  %3546 = vmatpush1.bf16.msra.mxu0 %v2759
  %3547 = vmatprep.subr.bf16.mxu0 %v2767
  %3548 = vmatpush1.bf16.msra.mxu0 %v2766
  %3549 = vmatprep.subr.bf16.mxu0 %v2774
  %3550 = vmatpush1.bf16.msra.mxu0 %v2773
  %3551 = vmatprep.subr.bf16.mxu0 %v2781
  %3552 = vmatpush1.bf16.msra.mxu0 %v2780
  %3553 = vmatprep.subr.bf16.mxu0 %v2788
  %3554 = vmatpush1.bf16.msra.mxu0 %v2787
  %3555 = vmatprep.mubr.bf16.mxu0 %v56
  %3556 = vmatmul.mubr.bf16.gmra.mrb[0].mxu0 %v55
  %v3557 = vpop.f32.mrb[0].mxu0
  %v3558 = vadd.f32 %v3517, %v3557
  %v3559 = vpop.f32.mrb[0].mxu0
  %v3560 = vadd.f32 %v3519, %v3559
  %v3561 = vpop.f32.mrb[0].mxu0
  %v3562 = vpop.f32.mrb[0].mxu0
  %3563 = vdwg.mxu0
  %3564 = vmatprep.subr.bf16.mxu0 %v2795
  %3565 = vmatpush1.bf16.msra.mxu0 %v2794
  %3566 = vmatprep.subr.bf16.mxu0 %v2802
  %3567 = vmatpush1.bf16.msra.mxu0 %v2801
  %3568 = vmatprep.subr.bf16.mxu0 %v2809
  %3569 = vmatpush1.bf16.msra.mxu0 %v2808
  %3570 = vmatprep.subr.bf16.mxu0 %v2816
  %3571 = vmatpush1.bf16.msra.mxu0 %v2815
  %3572 = vmatprep.subr.bf16.mxu0 %v2823
  %3573 = vmatpush1.bf16.msra.mxu0 %v2822
  %3574 = vmatprep.subr.bf16.mxu0 %v2830
  %3575 = vmatpush1.bf16.msra.mxu0 %v2829
  %3576 = vmatprep.subr.bf16.mxu0 %v2837
  %3577 = vmatpush1.bf16.msra.mxu0 %v2836
  %3578 = vmatprep.subr.bf16.mxu0 %v2844
  %3579 = vmatpush1.bf16.msra.mxu0 %v2843
  %3580 = vmatprep.subr.bf16.mxu0 %v2851
  %3581 = vmatpush1.bf16.msra.mxu0 %v2850
  %3582 = vmatprep.subr.bf16.mxu0 %v2858
  %3583 = vmatpush1.bf16.msra.mxu0 %v2857
  %3584 = vmatprep.subr.bf16.mxu0 %v2865
  %3585 = vmatpush1.bf16.msra.mxu0 %v2864
  %3586 = vmatprep.subr.bf16.mxu0 0
  %3587 = vmatpush1.bf16.msra.mxu0 0
  %3588 = vmatprep.subr.bf16.mxu0 0
  %3589 = vmatpush1.bf16.msra.mxu0 0
  %3590 = vmatprep.subr.bf16.mxu0 0
  %3591 = vmatpush1.bf16.msra.mxu0 0
  %3592 = vmatprep.subr.bf16.mxu0 0
  %3593 = vmatpush1.bf16.msra.mxu0 0
  %3594 = vmatprep.subr.bf16.mxu0 0
  %3595 = vmatpush1.bf16.msra.mxu0 0
  %3596 = vmatprep.mubr.bf16.mxu0 %v3398
  %3597 = vmatmul.mubr.bf16.gmra.mrb[0].mxu0 %v57
  %v3598 = vpop.f32.mrb[0].mxu0
  %v3599 = vadd.f32 %v3558, %v3598
  %v3600 = vpop.f32.mrb[0].mxu0
  %v3601 = vadd.f32 %v3560, %v3600
  %v3602 = vpop.f32.mrb[0].mxu0
  %v3603 = vpop.f32.mrb[0].mxu0
  %3604 = vdwg.mxu0
  %3605 = vmatprep.subr.bf16.mxu0 %v2349
  %3606 = vmatpush1.bf16.msra.mxu0 %v2348
  %3607 = vmatprep.subr.bf16.mxu0 %v2356
  %3608 = vmatpush1.bf16.msra.mxu0 %v2355
  %3609 = vmatprep.subr.bf16.mxu0 %v2363
  %3610 = vmatpush1.bf16.msra.mxu0 %v2362
  %3611 = vmatprep.subr.bf16.mxu0 %v2370
  %3612 = vmatpush1.bf16.msra.mxu0 %v2369
  %3613 = vmatprep.subr.bf16.mxu0 %v2377
  %3614 = vmatpush1.bf16.msra.mxu0 %v2376
  %3615 = vmatprep.subr.bf16.mxu0 %v2384
  %3616 = vmatpush1.bf16.msra.mxu0 %v2383
  %3617 = vmatprep.subr.bf16.mxu0 %v2391
  %3618 = vmatpush1.bf16.msra.mxu0 %v2390
  %3619 = vmatprep.subr.bf16.mxu0 %v2398
  %3620 = vmatpush1.bf16.msra.mxu0 %v2397
  %3621 = vmatprep.subr.bf16.mxu0 %v2405
  %3622 = vmatpush1.bf16.msra.mxu0 %v2404
  %3623 = vmatprep.subr.bf16.mxu0 %v2412
  %3624 = vmatpush1.bf16.msra.mxu0 %v2411
  %3625 = vmatprep.subr.bf16.mxu0 %v2419
  %3626 = vmatpush1.bf16.msra.mxu0 %v2418
  %3627 = vmatprep.subr.bf16.mxu0 %v2426
  %3628 = vmatpush1.bf16.msra.mxu0 %v2425
  %3629 = vmatprep.subr.bf16.mxu0 %v2433
  %3630 = vmatpush1.bf16.msra.mxu0 %v2432
  %3631 = vmatprep.subr.bf16.mxu0 %v2440
  %3632 = vmatpush1.bf16.msra.mxu0 %v2439
  %3633 = vmatprep.subr.bf16.mxu0 %v2447
  %3634 = vmatpush1.bf16.msra.mxu0 %v2446
  %3635 = vmatprep.subr.bf16.mxu0 %v2454
  %3636 = vmatpush1.bf16.msra.mxu0 %v2453
  %3637 = vmatprep.mubr.bf16.mxu0 %v50
  %3638 = vmatmul.mubr.bf16.gmra.mrb[0].mxu0 %v49
  %v3639 = vpop.f32.mrb[0].mxu0
  %v3640 = vadd.f32 %v672, %v3639
  %v3641 = vpop.f32.mrb[0].mxu0
  %v3642 = vadd.f32 %v676, %v3641
  %v3643 = vpop.f32.mrb[0].mxu0
  %v3644 = vpop.f32.mrb[0].mxu0
  %3645 = vdwg.mxu0
  %3646 = vmatprep.subr.bf16.mxu0 %v2461
  %3647 = vmatpush1.bf16.msra.mxu0 %v2460
  %3648 = vmatprep.subr.bf16.mxu0 %v2468
  %3649 = vmatpush1.bf16.msra.mxu0 %v2467
  %3650 = vmatprep.subr.bf16.mxu0 %v2475
  %3651 = vmatpush1.bf16.msra.mxu0 %v2474
  %3652 = vmatprep.subr.bf16.mxu0 %v2482
  %3653 = vmatpush1.bf16.msra.mxu0 %v2481
  %3654 = vmatprep.subr.bf16.mxu0 %v2489
  %3655 = vmatpush1.bf16.msra.mxu0 %v2488
  %3656 = vmatprep.subr.bf16.mxu0 %v2496
  %3657 = vmatpush1.bf16.msra.mxu0 %v2495
  %3658 = vmatprep.subr.bf16.mxu0 %v2503
  %3659 = vmatpush1.bf16.msra.mxu0 %v2502
  %3660 = vmatprep.subr.bf16.mxu0 %v2510
  %3661 = vmatpush1.bf16.msra.mxu0 %v2509
  %3662 = vmatprep.subr.bf16.mxu0 %v2517
  %3663 = vmatpush1.bf16.msra.mxu0 %v2516
  %3664 = vmatprep.subr.bf16.mxu0 %v2524
  %3665 = vmatpush1.bf16.msra.mxu0 %v2523
  %3666 = vmatprep.subr.bf16.mxu0 %v2531
  %3667 = vmatpush1.bf16.msra.mxu0 %v2530
  %3668 = vmatprep.subr.bf16.mxu0 %v2538
  %3669 = vmatpush1.bf16.msra.mxu0 %v2537
  %3670 = vmatprep.subr.bf16.mxu0 %v2545
  %3671 = vmatpush1.bf16.msra.mxu0 %v2544
  %3672 = vmatprep.subr.bf16.mxu0 %v2552
  %3673 = vmatpush1.bf16.msra.mxu0 %v2551
  %3674 = vmatprep.subr.bf16.mxu0 %v2559
  %3675 = vmatpush1.bf16.msra.mxu0 %v2558
  %3676 = vmatprep.subr.bf16.mxu0 %v2566
  %3677 = vmatpush1.bf16.msra.mxu0 %v2565
  %3678 = vmatprep.mubr.bf16.mxu0 %v52
  %3679 = vmatmul.mubr.bf16.gmra.mrb[0].mxu0 %v51
  %v3680 = vpop.f32.mrb[0].mxu0
  %v3681 = vadd.f32 %v3640, %v3680
  %v3682 = vpop.f32.mrb[0].mxu0
  %v3683 = vadd.f32 %v3642, %v3682
  %v3684 = vpop.f32.mrb[0].mxu0
  %v3685 = vpop.f32.mrb[0].mxu0
  %3686 = vdwg.mxu0
  %3687 = vmatprep.subr.bf16.mxu0 %v2573
  %3688 = vmatpush1.bf16.msra.mxu0 %v2572
  %3689 = vmatprep.subr.bf16.mxu0 %v2580
  %3690 = vmatpush1.bf16.msra.mxu0 %v2579
  %3691 = vmatprep.subr.bf16.mxu0 %v2587
  %3692 = vmatpush1.bf16.msra.mxu0 %v2586
  %3693 = vmatprep.subr.bf16.mxu0 %v2594
  %3694 = vmatpush1.bf16.msra.mxu0 %v2593
  %3695 = vmatprep.subr.bf16.mxu0 %v2601
  %3696 = vmatpush1.bf16.msra.mxu0 %v2600
  %3697 = vmatprep.subr.bf16.mxu0 %v2608
  %3698 = vmatpush1.bf16.msra.mxu0 %v2607
  %3699 = vmatprep.subr.bf16.mxu0 %v2615
  %3700 = vmatpush1.bf16.msra.mxu0 %v2614
  %3701 = vmatprep.subr.bf16.mxu0 %v2622
  %3702 = vmatpush1.bf16.msra.mxu0 %v2621
  %3703 = vmatprep.subr.bf16.mxu0 %v2629
  %3704 = vmatpush1.bf16.msra.mxu0 %v2628
  %3705 = vmatprep.subr.bf16.mxu0 %v2636
  %3706 = vmatpush1.bf16.msra.mxu0 %v2635
  %3707 = vmatprep.subr.bf16.mxu0 %v2643
  %3708 = vmatpush1.bf16.msra.mxu0 %v2642
  %3709 = vmatprep.subr.bf16.mxu0 %v2650
  %3710 = vmatpush1.bf16.msra.mxu0 %v2649
  %3711 = vmatprep.subr.bf16.mxu0 %v2657
  %3712 = vmatpush1.bf16.msra.mxu0 %v2656
  %3713 = vmatprep.subr.bf16.mxu0 %v2664
  %3714 = vmatpush1.bf16.msra.mxu0 %v2663
  %3715 = vmatprep.subr.bf16.mxu0 %v2671
  %3716 = vmatpush1.bf16.msra.mxu0 %v2670
  %3717 = vmatprep.subr.bf16.mxu0 %v2678
  %3718 = vmatpush1.bf16.msra.mxu0 %v2677
  %3719 = vmatprep.mubr.bf16.mxu0 %v54
  %3720 = vmatmul.mubr.bf16.gmra.mrb[0].mxu0 %v53
  %v3721 = vpop.f32.mrb[0].mxu0
  %v3722 = vadd.f32 %v3681, %v3721
  %v3723 = vpop.f32.mrb[0].mxu0
  %v3724 = vadd.f32 %v3683, %v3723
  %v3725 = vpop.f32.mrb[0].mxu0
  %v3726 = vpop.f32.mrb[0].mxu0
  %3727 = vdwg.mxu0
  %3728 = vmatprep.subr.bf16.mxu0 %v2685
  %3729 = vmatpush1.bf16.msra.mxu0 %v2684
  %3730 = vmatprep.subr.bf16.mxu0 %v2692
  %3731 = vmatpush1.bf16.msra.mxu0 %v2691
  %3732 = vmatprep.subr.bf16.mxu0 %v2699
  %3733 = vmatpush1.bf16.msra.mxu0 %v2698
  %3734 = vmatprep.subr.bf16.mxu0 %v2706
  %3735 = vmatpush1.bf16.msra.mxu0 %v2705
  %3736 = vmatprep.subr.bf16.mxu0 %v2713
  %3737 = vmatpush1.bf16.msra.mxu0 %v2712
  %3738 = vmatprep.subr.bf16.mxu0 %v2720
  %3739 = vmatpush1.bf16.msra.mxu0 %v2719
  %3740 = vmatprep.subr.bf16.mxu0 %v2727
  %3741 = vmatpush1.bf16.msra.mxu0 %v2726
  %3742 = vmatprep.subr.bf16.mxu0 %v2734
  %3743 = vmatpush1.bf16.msra.mxu0 %v2733
  %3744 = vmatprep.subr.bf16.mxu0 %v2741
  %3745 = vmatpush1.bf16.msra.mxu0 %v2740
  %3746 = vmatprep.subr.bf16.mxu0 %v2748
  %3747 = vmatpush1.bf16.msra.mxu0 %v2747
  %3748 = vmatprep.subr.bf16.mxu0 %v2755
  %3749 = vmatpush1.bf16.msra.mxu0 %v2754
  %3750 = vmatprep.subr.bf16.mxu0 %v2762
  %3751 = vmatpush1.bf16.msra.mxu0 %v2761
  %3752 = vmatprep.subr.bf16.mxu0 %v2769
  %3753 = vmatpush1.bf16.msra.mxu0 %v2768
  %3754 = vmatprep.subr.bf16.mxu0 %v2776
  %3755 = vmatpush1.bf16.msra.mxu0 %v2775
  %3756 = vmatprep.subr.bf16.mxu0 %v2783
  %3757 = vmatpush1.bf16.msra.mxu0 %v2782
  %3758 = vmatprep.subr.bf16.mxu0 %v2790
  %3759 = vmatpush1.bf16.msra.mxu0 %v2789
  %3760 = vmatprep.mubr.bf16.mxu0 %v56
  %3761 = vmatmul.mubr.bf16.gmra.mrb[0].mxu0 %v55
  %v3762 = vpop.f32.mrb[0].mxu0
  %v3763 = vadd.f32 %v3722, %v3762
  %v3764 = vpop.f32.mrb[0].mxu0
  %v3765 = vadd.f32 %v3724, %v3764
  %v3766 = vpop.f32.mrb[0].mxu0
  %v3767 = vpop.f32.mrb[0].mxu0
  %3768 = vdwg.mxu0
  %3769 = vmatprep.subr.bf16.mxu0 %v2797
  %3770 = vmatpush1.bf16.msra.mxu0 %v2796
  %3771 = vmatprep.subr.bf16.mxu0 %v2804
  %3772 = vmatpush1.bf16.msra.mxu0 %v2803
  %3773 = vmatprep.subr.bf16.mxu0 %v2811
  %3774 = vmatpush1.bf16.msra.mxu0 %v2810
  %3775 = vmatprep.subr.bf16.mxu0 %v2818
  %3776 = vmatpush1.bf16.msra.mxu0 %v2817
  %3777 = vmatprep.subr.bf16.mxu0 %v2825
  %3778 = vmatpush1.bf16.msra.mxu0 %v2824
  %3779 = vmatprep.subr.bf16.mxu0 %v2832
  %3780 = vmatpush1.bf16.msra.mxu0 %v2831
  %3781 = vmatprep.subr.bf16.mxu0 %v2839
  %3782 = vmatpush1.bf16.msra.mxu0 %v2838
  %3783 = vmatprep.subr.bf16.mxu0 %v2846
  %3784 = vmatpush1.bf16.msra.mxu0 %v2845
  %3785 = vmatprep.subr.bf16.mxu0 %v2853
  %3786 = vmatpush1.bf16.msra.mxu0 %v2852
  %3787 = vmatprep.subr.bf16.mxu0 %v2860
  %3788 = vmatpush1.bf16.msra.mxu0 %v2859
  %3789 = vmatprep.subr.bf16.mxu0 %v2867
  %3790 = vmatpush1.bf16.msra.mxu0 %v2866
  %3791 = vmatprep.subr.bf16.mxu0 0
  %3792 = vmatpush1.bf16.msra.mxu0 0
  %3793 = vmatprep.subr.bf16.mxu0 0
  %3794 = vmatpush1.bf16.msra.mxu0 0
  %3795 = vmatprep.subr.bf16.mxu0 0
  %3796 = vmatpush1.bf16.msra.mxu0 0
  %3797 = vmatprep.subr.bf16.mxu0 0
  %3798 = vmatpush1.bf16.msra.mxu0 0
  %3799 = vmatprep.subr.bf16.mxu0 0
  %3800 = vmatpush1.bf16.msra.mxu0 0
  %3801 = vmatprep.mubr.bf16.mxu0 %v3398
  %3802 = vmatmul.mubr.bf16.gmra.mrb[0].mxu0 %v57
  %v3803 = vpop.f32.mrb[0].mxu0
  %v3804 = vadd.f32 %v3763, %v3803
  %v3805 = vpop.f32.mrb[0].mxu0
  %v3806 = vadd.f32 %v3765, %v3805
  %v3807 = vpop.f32.mrb[0].mxu0
  %v3808 = vpop.f32.mrb[0].mxu0
  %3809 = vdwg.mxu0
  %3810 = vmatprep.subr.bf16.mxu0 %v2351
  %3811 = vmatpush1.bf16.msra.mxu0 %v2350
  %3812 = vmatprep.subr.bf16.mxu0 %v2358
  %3813 = vmatpush1.bf16.msra.mxu0 %v2357
  %3814 = vmatprep.subr.bf16.mxu0 %v2365
  %3815 = vmatpush1.bf16.msra.mxu0 %v2364
  %3816 = vmatprep.subr.bf16.mxu0 %v2372
  %3817 = vmatpush1.bf16.msra.mxu0 %v2371
  %3818 = vmatprep.subr.bf16.mxu0 %v2379
  %3819 = vmatpush1.bf16.msra.mxu0 %v2378
  %3820 = vmatprep.subr.bf16.mxu0 %v2386
  %3821 = vmatpush1.bf16.msra.mxu0 %v2385
  %3822 = vmatprep.subr.bf16.mxu0 %v2393
  %3823 = vmatpush1.bf16.msra.mxu0 %v2392
  %3824 = vmatprep.subr.bf16.mxu0 %v2400
  %3825 = vmatpush1.bf16.msra.mxu0 %v2399
  %3826 = vmatprep.subr.bf16.mxu0 %v2407
  %3827 = vmatpush1.bf16.msra.mxu0 %v2406
  %3828 = vmatprep.subr.bf16.mxu0 %v2414
  %3829 = vmatpush1.bf16.msra.mxu0 %v2413
  %3830 = vmatprep.subr.bf16.mxu0 %v2421
  %3831 = vmatpush1.bf16.msra.mxu0 %v2420
  %3832 = vmatprep.subr.bf16.mxu0 %v2428
  %3833 = vmatpush1.bf16.msra.mxu0 %v2427
  %3834 = vmatprep.subr.bf16.mxu0 %v2435
  %3835 = vmatpush1.bf16.msra.mxu0 %v2434
  %3836 = vmatprep.subr.bf16.mxu0 %v2442
  %3837 = vmatpush1.bf16.msra.mxu0 %v2441
  %3838 = vmatprep.subr.bf16.mxu0 %v2449
  %3839 = vmatpush1.bf16.msra.mxu0 %v2448
  %3840 = vmatprep.subr.bf16.mxu0 %v2456
  %3841 = vmatpush1.bf16.msra.mxu0 %v2455
  %3842 = vmatprep.mubr.bf16.mxu0 %v50
  %3843 = vmatmul.mubr.bf16.gmra.mrb[0].mxu0 %v49
  %v3844 = vpop.f32.mrb[0].mxu0
  %v3845 = vadd.f32 %v680, %v3844
  %v3846 = vpop.f32.mrb[0].mxu0
  %v3847 = vadd.f32 %v684, %v3846
  %v3848 = vpop.f32.mrb[0].mxu0
  %v3849 = vpop.f32.mrb[0].mxu0
  %3850 = vdwg.mxu0
  %3851 = vmatprep.subr.bf16.mxu0 %v2463
  %3852 = vmatpush1.bf16.msra.mxu0 %v2462
  %3853 = vmatprep.subr.bf16.mxu0 %v2470
  %3854 = vmatpush1.bf16.msra.mxu0 %v2469
  %3855 = vmatprep.subr.bf16.mxu0 %v2477
  %3856 = vmatpush1.bf16.msra.mxu0 %v2476
  %3857 = vmatprep.subr.bf16.mxu0 %v2484
  %3858 = vmatpush1.bf16.msra.mxu0 %v2483
  %3859 = vmatprep.subr.bf16.mxu0 %v2491
  %3860 = vmatpush1.bf16.msra.mxu0 %v2490
  %3861 = vmatprep.subr.bf16.mxu0 %v2498
  %3862 = vmatpush1.bf16.msra.mxu0 %v2497
  %3863 = vmatprep.subr.bf16.mxu0 %v2505
  %3864 = vmatpush1.bf16.msra.mxu0 %v2504
  %3865 = vmatprep.subr.bf16.mxu0 %v2512
  %3866 = vmatpush1.bf16.msra.mxu0 %v2511
  %3867 = vmatprep.subr.bf16.mxu0 %v2519
  %3868 = vmatpush1.bf16.msra.mxu0 %v2518
  %3869 = vmatprep.subr.bf16.mxu0 %v2526
  %3870 = vmatpush1.bf16.msra.mxu0 %v2525
  %3871 = vmatprep.subr.bf16.mxu0 %v2533
  %3872 = vmatpush1.bf16.msra.mxu0 %v2532
  %3873 = vmatprep.subr.bf16.mxu0 %v2540
  %3874 = vmatpush1.bf16.msra.mxu0 %v2539
  %3875 = vmatprep.subr.bf16.mxu0 %v2547
  %3876 = vmatpush1.bf16.msra.mxu0 %v2546
  %3877 = vmatprep.subr.bf16.mxu0 %v2554
  %3878 = vmatpush1.bf16.msra.mxu0 %v2553
  %3879 = vmatprep.subr.bf16.mxu0 %v2561
  %3880 = vmatpush1.bf16.msra.mxu0 %v2560
  %3881 = vmatprep.subr.bf16.mxu0 %v2568
  %3882 = vmatpush1.bf16.msra.mxu0 %v2567
  %3883 = vmatprep.mubr.bf16.mxu0 %v52
  %3884 = vmatmul.mubr.bf16.gmra.mrb[0].mxu0 %v51
  %v3885 = vpop.f32.mrb[0].mxu0
  %v3886 = vadd.f32 %v3845, %v3885
  %v3887 = vpop.f32.mrb[0].mxu0
  %v3888 = vadd.f32 %v3847, %v3887
  %v3889 = vpop.f32.mrb[0].mxu0
  %v3890 = vpop.f32.mrb[0].mxu0
  %3891 = vdwg.mxu0
  %3892 = vmatprep.subr.bf16.mxu0 %v2575
  %3893 = vmatpush1.bf16.msra.mxu0 %v2574
  %3894 = vmatprep.subr.bf16.mxu0 %v2582
  %3895 = vmatpush1.bf16.msra.mxu0 %v2581
  %3896 = vmatprep.subr.bf16.mxu0 %v2589
  %3897 = vmatpush1.bf16.msra.mxu0 %v2588
  %3898 = vmatprep.subr.bf16.mxu0 %v2596
  %3899 = vmatpush1.bf16.msra.mxu0 %v2595
  %3900 = vmatprep.subr.bf16.mxu0 %v2603
  %3901 = vmatpush1.bf16.msra.mxu0 %v2602
  %3902 = vmatprep.subr.bf16.mxu0 %v2610
  %3903 = vmatpush1.bf16.msra.mxu0 %v2609
  %3904 = vmatprep.subr.bf16.mxu0 %v2617
  %3905 = vmatpush1.bf16.msra.mxu0 %v2616
  %3906 = vmatprep.subr.bf16.mxu0 %v2624
  %3907 = vmatpush1.bf16.msra.mxu0 %v2623
  %3908 = vmatprep.subr.bf16.mxu0 %v2631
  %3909 = vmatpush1.bf16.msra.mxu0 %v2630
  %3910 = vmatprep.subr.bf16.mxu0 %v2638
  %3911 = vmatpush1.bf16.msra.mxu0 %v2637
  %3912 = vmatprep.subr.bf16.mxu0 %v2645
  %3913 = vmatpush1.bf16.msra.mxu0 %v2644
  %3914 = vmatprep.subr.bf16.mxu0 %v2652
  %3915 = vmatpush1.bf16.msra.mxu0 %v2651
  %3916 = vmatprep.subr.bf16.mxu0 %v2659
  %3917 = vmatpush1.bf16.msra.mxu0 %v2658
  %3918 = vmatprep.subr.bf16.mxu0 %v2666
  %3919 = vmatpush1.bf16.msra.mxu0 %v2665
  %3920 = vmatprep.subr.bf16.mxu0 %v2673
  %3921 = vmatpush1.bf16.msra.mxu0 %v2672
  %3922 = vmatprep.subr.bf16.mxu0 %v2680
  %3923 = vmatpush1.bf16.msra.mxu0 %v2679
  %3924 = vmatprep.mubr.bf16.mxu0 %v54
  %3925 = vmatmul.mubr.bf16.gmra.mrb[0].mxu0 %v53
  %v3926 = vpop.f32.mrb[0].mxu0
  %v3927 = vadd.f32 %v3886, %v3926
  %v3928 = vpop.f32.mrb[0].mxu0
  %v3929 = vadd.f32 %v3888, %v3928
  %v3930 = vpop.f32.mrb[0].mxu0
  %v3931 = vpop.f32.mrb[0].mxu0
  %3932 = vdwg.mxu0
  %3933 = vmatprep.subr.bf16.mxu0 %v2687
  %3934 = vmatpush1.bf16.msra.mxu0 %v2686
  %3935 = vmatprep.subr.bf16.mxu0 %v2694
  %3936 = vmatpush1.bf16.msra.mxu0 %v2693
  %3937 = vmatprep.subr.bf16.mxu0 %v2701
  %3938 = vmatpush1.bf16.msra.mxu0 %v2700
  %3939 = vmatprep.subr.bf16.mxu0 %v2708
  %3940 = vmatpush1.bf16.msra.mxu0 %v2707
  %3941 = vmatprep.subr.bf16.mxu0 %v2715
  %3942 = vmatpush1.bf16.msra.mxu0 %v2714
  %3943 = vmatprep.subr.bf16.mxu0 %v2722
  %3944 = vmatpush1.bf16.msra.mxu0 %v2721
  %3945 = vmatprep.subr.bf16.mxu0 %v2729
  %3946 = vmatpush1.bf16.msra.mxu0 %v2728
  %3947 = vmatprep.subr.bf16.mxu0 %v2736
  %3948 = vmatpush1.bf16.msra.mxu0 %v2735
  %3949 = vmatprep.subr.bf16.mxu0 %v2743
  %3950 = vmatpush1.bf16.msra.mxu0 %v2742
  %3951 = vmatprep.subr.bf16.mxu0 %v2750
  %3952 = vmatpush1.bf16.msra.mxu0 %v2749
  %3953 = vmatprep.subr.bf16.mxu0 %v2757
  %3954 = vmatpush1.bf16.msra.mxu0 %v2756
  %3955 = vmatprep.subr.bf16.mxu0 %v2764
  %3956 = vmatpush1.bf16.msra.mxu0 %v2763
  %3957 = vmatprep.subr.bf16.mxu0 %v2771
  %3958 = vmatpush1.bf16.msra.mxu0 %v2770
  %3959 = vmatprep.subr.bf16.mxu0 %v2778
  %3960 = vmatpush1.bf16.msra.mxu0 %v2777
  %3961 = vmatprep.subr.bf16.mxu0 %v2785
  %3962 = vmatpush1.bf16.msra.mxu0 %v2784
  %3963 = vmatprep.subr.bf16.mxu0 %v2792
  %3964 = vmatpush1.bf16.msra.mxu0 %v2791
  %3965 = vmatprep.mubr.bf16.mxu0 %v56
  %3966 = vmatmul.mubr.bf16.gmra.mrb[0].mxu0 %v55
  %v3967 = vpop.f32.mrb[0].mxu0
  %v3968 = vadd.f32 %v3927, %v3967
  %v3969 = vpop.f32.mrb[0].mxu0
  %v3970 = vadd.f32 %v3929, %v3969
  %v3971 = vpop.f32.mrb[0].mxu0
  %v3972 = vpop.f32.mrb[0].mxu0
  %3973 = vdwg.mxu0
  %3974 = vmatprep.subr.bf16.mxu0 %v2799
  %3975 = vmatpush1.bf16.msra.mxu0 %v2798
  %3976 = vmatprep.subr.bf16.mxu0 %v2806
  %3977 = vmatpush1.bf16.msra.mxu0 %v2805
  %3978 = vmatprep.subr.bf16.mxu0 %v2813
  %3979 = vmatpush1.bf16.msra.mxu0 %v2812
  %3980 = vmatprep.subr.bf16.mxu0 %v2820
  %3981 = vmatpush1.bf16.msra.mxu0 %v2819
  %3982 = vmatprep.subr.bf16.mxu0 %v2827
  %3983 = vmatpush1.bf16.msra.mxu0 %v2826
  %3984 = vmatprep.subr.bf16.mxu0 %v2834
  %3985 = vmatpush1.bf16.msra.mxu0 %v2833
  %3986 = vmatprep.subr.bf16.mxu0 %v2841
  %3987 = vmatpush1.bf16.msra.mxu0 %v2840
  %3988 = vmatprep.subr.bf16.mxu0 %v2848
  %3989 = vmatpush1.bf16.msra.mxu0 %v2847
  %3990 = vmatprep.subr.bf16.mxu0 %v2855
  %3991 = vmatpush1.bf16.msra.mxu0 %v2854
  %3992 = vmatprep.subr.bf16.mxu0 %v2862
  %3993 = vmatpush1.bf16.msra.mxu0 %v2861
  %3994 = vmatprep.subr.bf16.mxu0 %v2869
  %3995 = vmatpush1.bf16.msra.mxu0 %v2868
  %3996 = vmatprep.subr.bf16.mxu0 0
  %3997 = vmatpush1.bf16.msra.mxu0 0
  %3998 = vmatprep.subr.bf16.mxu0 0
  %3999 = vmatpush1.bf16.msra.mxu0 0
  %4000 = vmatprep.subr.bf16.mxu0 0
  %4001 = vmatpush1.bf16.msra.mxu0 0
  %4002 = vmatprep.subr.bf16.mxu0 0
  %4003 = vmatpush1.bf16.msra.mxu0 0
  %4004 = vmatprep.subr.bf16.mxu0 0
  %4005 = vmatpush1.bf16.msra.mxu0 0
  %4006 = vmatprep.mubr.bf16.mxu0 %v3398
  %4007 = vmatmul.mubr.bf16.gmra.mrb[0].mxu0 %v57
  %v4008 = vpop.f32.mrb[0].mxu0
  %v4009 = vadd.f32 %v3968, %v4008
  %v4010 = vpop.f32.mrb[0].mxu0
  %v4011 = vadd.f32 %v3970, %v4010
  %v4012 = vpop.f32.mrb[0].mxu0
  %v4013 = vpop.f32.mrb[0].mxu0
  %4014 = vdwg.mxu0
  %4015 = vmatprep.subr.bf16.mxu0 0
  %4016 = vmatpush1.bf16.msra.mxu0 %v2352
  %4017 = vmatprep.subr.bf16.mxu0 0
  %4018 = vmatpush1.bf16.msra.mxu0 %v2359
  %4019 = vmatprep.subr.bf16.mxu0 0
  %4020 = vmatpush1.bf16.msra.mxu0 %v2366
  %4021 = vmatprep.subr.bf16.mxu0 0
  %4022 = vmatpush1.bf16.msra.mxu0 %v2373
  %4023 = vmatprep.subr.bf16.mxu0 0
  %4024 = vmatpush1.bf16.msra.mxu0 %v2380
  %4025 = vmatprep.subr.bf16.mxu0 0
  %4026 = vmatpush1.bf16.msra.mxu0 %v2387
  %4027 = vmatprep.subr.bf16.mxu0 0
  %4028 = vmatpush1.bf16.msra.mxu0 %v2394
  %4029 = vmatprep.subr.bf16.mxu0 0
  %4030 = vmatpush1.bf16.msra.mxu0 %v2401
  %4031 = vmatprep.subr.bf16.mxu0 0
  %4032 = vmatpush1.bf16.msra.mxu0 %v2408
  %4033 = vmatprep.subr.bf16.mxu0 0
  %4034 = vmatpush1.bf16.msra.mxu0 %v2415
  %4035 = vmatprep.subr.bf16.mxu0 0
  %4036 = vmatpush1.bf16.msra.mxu0 %v2422
  %4037 = vmatprep.subr.bf16.mxu0 0
  %4038 = vmatpush1.bf16.msra.mxu0 %v2429
  %4039 = vmatprep.subr.bf16.mxu0 0
  %4040 = vmatpush1.bf16.msra.mxu0 %v2436
  %4041 = vmatprep.subr.bf16.mxu0 0
  %4042 = vmatpush1.bf16.msra.mxu0 %v2443
  %4043 = vmatprep.subr.bf16.mxu0 0
  %4044 = vmatpush1.bf16.msra.mxu0 %v2450
  %4045 = vmatprep.subr.bf16.mxu0 0
  %4046 = vmatpush1.bf16.msra.mxu0 %v2457
  %4047 = vmatprep.mubr.bf16.mxu0 %v50
  %4048 = vmatmul.mubr.bf16.gmra.mrb[0].mxu0 %v49
  %v4049 = vpop.f32.mrb[0].mxu0
  %v4050 = vadd.f32 %v688, %v4049
  %v4051 = vpop.f32.mrb[0].mxu0
  %v4052 = vpop.f32.mrb[0].mxu0
  %v4053 = vpop.f32.mrb[0].mxu0
  %4054 = vdwg.mxu0
  %4055 = vmatprep.subr.bf16.mxu0 0
  %4056 = vmatpush1.bf16.msra.mxu0 %v2464
  %4057 = vmatprep.subr.bf16.mxu0 0
  %4058 = vmatpush1.bf16.msra.mxu0 %v2471
  %4059 = vmatprep.subr.bf16.mxu0 0
  %4060 = vmatpush1.bf16.msra.mxu0 %v2478
  %4061 = vmatprep.subr.bf16.mxu0 0
  %4062 = vmatpush1.bf16.msra.mxu0 %v2485
  %4063 = vmatprep.subr.bf16.mxu0 0
  %4064 = vmatpush1.bf16.msra.mxu0 %v2492
  %4065 = vmatprep.subr.bf16.mxu0 0
  %4066 = vmatpush1.bf16.msra.mxu0 %v2499
  %4067 = vmatprep.subr.bf16.mxu0 0
  %4068 = vmatpush1.bf16.msra.mxu0 %v2506
  %4069 = vmatprep.subr.bf16.mxu0 0
  %4070 = vmatpush1.bf16.msra.mxu0 %v2513
  %4071 = vmatprep.subr.bf16.mxu0 0
  %4072 = vmatpush1.bf16.msra.mxu0 %v2520
  %4073 = vmatprep.subr.bf16.mxu0 0
  %4074 = vmatpush1.bf16.msra.mxu0 %v2527
  %4075 = vmatprep.subr.bf16.mxu0 0
  %4076 = vmatpush1.bf16.msra.mxu0 %v2534
  %4077 = vmatprep.subr.bf16.mxu0 0
  %4078 = vmatpush1.bf16.msra.mxu0 %v2541
  %4079 = vmatprep.subr.bf16.mxu0 0
  %4080 = vmatpush1.bf16.msra.mxu0 %v2548
  %4081 = vmatprep.subr.bf16.mxu0 0
  %4082 = vmatpush1.bf16.msra.mxu0 %v2555
  %4083 = vmatprep.subr.bf16.mxu0 0
  %4084 = vmatpush1.bf16.msra.mxu0 %v2562
  %4085 = vmatprep.subr.bf16.mxu0 0
  %4086 = vmatpush1.bf16.msra.mxu0 %v2569
  %4087 = vmatprep.mubr.bf16.mxu0 %v52
  %4088 = vmatmul.mubr.bf16.gmra.mrb[0].mxu0 %v51
  %v4089 = vpop.f32.mrb[0].mxu0
  %v4090 = vadd.f32 %v4050, %v4089
  %v4091 = vpop.f32.mrb[0].mxu0
  %v4092 = vpop.f32.mrb[0].mxu0
  %v4093 = vpop.f32.mrb[0].mxu0
  %4094 = vdwg.mxu0
  %4095 = vmatprep.subr.bf16.mxu0 0
  %4096 = vmatpush1.bf16.msra.mxu0 %v2576
  %4097 = vmatprep.subr.bf16.mxu0 0
  %4098 = vmatpush1.bf16.msra.mxu0 %v2583
  %4099 = vmatprep.subr.bf16.mxu0 0
  %4100 = vmatpush1.bf16.msra.mxu0 %v2590
  %4101 = vmatprep.subr.bf16.mxu0 0
  %4102 = vmatpush1.bf16.msra.mxu0 %v2597
  %4103 = vmatprep.subr.bf16.mxu0 0
  %4104 = vmatpush1.bf16.msra.mxu0 %v2604
  %4105 = vmatprep.subr.bf16.mxu0 0
  %4106 = vmatpush1.bf16.msra.mxu0 %v2611
  %4107 = vmatprep.subr.bf16.mxu0 0
  %4108 = vmatpush1.bf16.msra.mxu0 %v2618
  %4109 = vmatprep.subr.bf16.mxu0 0
  %4110 = vmatpush1.bf16.msra.mxu0 %v2625
  %4111 = vmatprep.subr.bf16.mxu0 0
  %4112 = vmatpush1.bf16.msra.mxu0 %v2632
  %4113 = vmatprep.subr.bf16.mxu0 0
  %4114 = vmatpush1.bf16.msra.mxu0 %v2639
  %4115 = vmatprep.subr.bf16.mxu0 0
  %4116 = vmatpush1.bf16.msra.mxu0 %v2646
  %4117 = vmatprep.subr.bf16.mxu0 0
  %4118 = vmatpush1.bf16.msra.mxu0 %v2653
  %4119 = vmatprep.subr.bf16.mxu0 0
  %4120 = vmatpush1.bf16.msra.mxu0 %v2660
  %4121 = vmatprep.subr.bf16.mxu0 0
  %4122 = vmatpush1.bf16.msra.mxu0 %v2667
  %4123 = vmatprep.subr.bf16.mxu0 0
  %4124 = vmatpush1.bf16.msra.mxu0 %v2674
  %4125 = vmatprep.subr.bf16.mxu0 0
  %4126 = vmatpush1.bf16.msra.mxu0 %v2681
  %4127 = vmatprep.mubr.bf16.mxu0 %v54
  %4128 = vmatmul.mubr.bf16.gmra.mrb[0].mxu0 %v53
  %v4129 = vpop.f32.mrb[0].mxu0
  %v4130 = vadd.f32 %v4090, %v4129
  %v4131 = vpop.f32.mrb[0].mxu0
  %v4132 = vpop.f32.mrb[0].mxu0
  %v4133 = vpop.f32.mrb[0].mxu0
  %4134 = vdwg.mxu0
  %4135 = vmatprep.subr.bf16.mxu0 0
  %4136 = vmatpush1.bf16.msra.mxu0 %v2688
  %4137 = vmatprep.subr.bf16.mxu0 0
  %4138 = vmatpush1.bf16.msra.mxu0 %v2695
  %4139 = vmatprep.subr.bf16.mxu0 0
  %4140 = vmatpush1.bf16.msra.mxu0 %v2702
  %4141 = vmatprep.subr.bf16.mxu0 0
  %4142 = vmatpush1.bf16.msra.mxu0 %v2709
  %4143 = vmatprep.subr.bf16.mxu0 0
  %4144 = vmatpush1.bf16.msra.mxu0 %v2716
  %4145 = vmatprep.subr.bf16.mxu0 0
  %4146 = vmatpush1.bf16.msra.mxu0 %v2723
  %4147 = vmatprep.subr.bf16.mxu0 0
  %4148 = vmatpush1.bf16.msra.mxu0 %v2730
  %4149 = vmatprep.subr.bf16.mxu0 0
  %4150 = vmatpush1.bf16.msra.mxu0 %v2737
  %4151 = vmatprep.subr.bf16.mxu0 0
  %4152 = vmatpush1.bf16.msra.mxu0 %v2744
  %4153 = vmatprep.subr.bf16.mxu0 0
  %4154 = vmatpush1.bf16.msra.mxu0 %v2751
  %4155 = vmatprep.subr.bf16.mxu0 0
  %4156 = vmatpush1.bf16.msra.mxu0 %v2758
  %4157 = vmatprep.subr.bf16.mxu0 0
  %4158 = vmatpush1.bf16.msra.mxu0 %v2765
  %4159 = vmatprep.subr.bf16.mxu0 0
  %4160 = vmatpush1.bf16.msra.mxu0 %v2772
  %4161 = vmatprep.subr.bf16.mxu0 0
  %4162 = vmatpush1.bf16.msra.mxu0 %v2779
  %4163 = vmatprep.subr.bf16.mxu0 0
  %4164 = vmatpush1.bf16.msra.mxu0 %v2786
  %4165 = vmatprep.subr.bf16.mxu0 0
  %4166 = vmatpush1.bf16.msra.mxu0 %v2793
  %4167 = vmatprep.mubr.bf16.mxu0 %v56
  %4168 = vmatmul.mubr.bf16.gmra.mrb[0].mxu0 %v55
  %v4169 = vpop.f32.mrb[0].mxu0
  %v4170 = vadd.f32 %v4130, %v4169
  %v4171 = vpop.f32.mrb[0].mxu0
  %v4172 = vpop.f32.mrb[0].mxu0
  %v4173 = vpop.f32.mrb[0].mxu0
  %4174 = vdwg.mxu0
  %4175 = vmatprep.subr.bf16.mxu0 0
  %4176 = vmatpush1.bf16.msra.mxu0 %v2800
  %4177 = vmatprep.subr.bf16.mxu0 0
  %4178 = vmatpush1.bf16.msra.mxu0 %v2807
  %4179 = vmatprep.subr.bf16.mxu0 0
  %4180 = vmatpush1.bf16.msra.mxu0 %v2814
  %4181 = vmatprep.subr.bf16.mxu0 0
  %4182 = vmatpush1.bf16.msra.mxu0 %v2821
  %4183 = vmatprep.subr.bf16.mxu0 0
  %4184 = vmatpush1.bf16.msra.mxu0 %v2828
  %4185 = vmatprep.subr.bf16.mxu0 0
  %4186 = vmatpush1.bf16.msra.mxu0 %v2835
  %4187 = vmatprep.subr.bf16.mxu0 0
  %4188 = vmatpush1.bf16.msra.mxu0 %v2842
  %4189 = vmatprep.subr.bf16.mxu0 0
  %4190 = vmatpush1.bf16.msra.mxu0 %v2849
  %4191 = vmatprep.subr.bf16.mxu0 0
  %4192 = vmatpush1.bf16.msra.mxu0 %v2856
  %4193 = vmatprep.subr.bf16.mxu0 0
  %4194 = vmatpush1.bf16.msra.mxu0 %v2863
  %4195 = vmatprep.subr.bf16.mxu0 0
  %4196 = vmatpush1.bf16.msra.mxu0 %v2870
  %4197 = vmatprep.subr.bf16.mxu0 0
  %4198 = vmatpush1.bf16.msra.mxu0 0
  %4199 = vmatprep.subr.bf16.mxu0 0
  %4200 = vmatpush1.bf16.msra.mxu0 0
  %4201 = vmatprep.subr.bf16.mxu0 0
  %4202 = vmatpush1.bf16.msra.mxu0 0
  %4203 = vmatprep.subr.bf16.mxu0 0
  %4204 = vmatpush1.bf16.msra.mxu0 0
  %4205 = vmatprep.subr.bf16.mxu0 0
  %4206 = vmatpush1.bf16.msra.mxu0 0
  %4207 = vmatprep.mubr.bf16.mxu0 %v3398
  %4208 = vmatmul.mubr.bf16.gmra.mrb[0].mxu0 %v57
  %v4209 = vpop.f32.mrb[0].mxu0
  %v4210 = vadd.f32 %v4170, %v4209
  %v4211 = vpop.f32.mrb[0].mxu0
  %v4212 = vpop.f32.mrb[0].mxu0
  %v4213 = vpop.f32.mrb[0].mxu0
  %4214 = vdwg.mxu0
  %vm4215 = vcmp.gt.f32.partialorder %v3599, 0.0
  %vm4216 = vcmp.gt.f32.partialorder %v3601, 0.0
  %vm4217 = vcmp.gt.f32.partialorder %v3804, 0.0
  %vm4218 = vcmp.gt.f32.partialorder %v3806, 0.0
  %vm4219 = vcmp.gt.f32.partialorder %v4009, 0.0
  %vm4220 = vcmp.gt.f32.partialorder %v4011, 0.0
  %vm4221 = vcmp.gt.f32.partialorder %v4210, 0.0
  %v4222 = vmul.f32 %v3599, 0.01
  %v4223 = vmul.f32 %v3601, 0.01
  %v4224 = vmul.f32 %v3804, 0.01
  %v4225 = vmul.f32 %v3806, 0.01
  %v4226 = vmul.f32 %v4009, 0.01
  %v4227 = vmul.f32 %v4011, 0.01
  %v4228 = vmul.f32 %v4210, 0.01
  %v4229 = vsel %vm4215, %v3599, %v4222
  %v4230 = vsel %vm4216, %v3601, %v4223
  %v4231 = vsel %vm4217, %v3804, %v4224
  %v4232 = vsel %vm4218, %v3806, %v4225
  %v4233 = vsel %vm4219, %v4009, %v4226
  %v4234 = vsel %vm4220, %v4011, %v4227
  %v4235 = vsel %vm4221, %v4210, %v4228
  %v4236 = vpack.c.bf16 %v4229, %v4229
  %v4237 = vpack.c.bf16 %v4230, %v4230
  %v4238 = vpack.c.bf16 %v4231, %v4231
  %v4239 = vpack.c.bf16 %v4232, %v4232
  %v4240 = vpack.c.bf16 %v4233, %v4233
  %v4241 = vpack.c.bf16 %v4234, %v4234
  %v4242 = vpack.c.bf16 %v4235, %v4235
  %v4243 = vld [vmem:[%s3] sm:$0xff]
  %v4244 = vld [vmem:[%s3 + $0x8] sm:$0xff]
  %v4245 = vld [vmem:[%s3 + $0x10] sm:$0xff]
  %v4246 = vld [vmem:[%s3 + $0x18] sm:$0xff]
  %v4247 = vld [vmem:[%s3 + $0x20] sm:$0xff]
  %v4248 = vld [vmem:[%s3 + $0x28] sm:$0xff]
  %v4249 = vld [vmem:[%s3 + $0x30] sm:$0xff]
  %v4250 = vld [vmem:[%s3 + $0x38] sm:$0xff]
  %v4251 = vld [vmem:[%s3 + $0x40] sm:$0xff]
  %v4252 = vld [vmem:[%s3 + $0x48] sm:$0xff]
  %v4253 = vld [vmem:[%s3 + $0x50] sm:$0xff]
  %v4254 = vld [vmem:[%s3 + $0x58] sm:$0xff]
  %v4255 = vld [vmem:[%s3 + $0x60] sm:$0xff]
  %v4256 = vld [vmem:[%s3 + $0x68] sm:$0xff]
  %v4257 = vld [vmem:[%s3 + $0x70] sm:$0xff]
  %v4258 = vld [vmem:[%s3 + $0x78] sm:$0xff]
  %v4259 = vld [vmem:[%s3 + $0x80] sm:$0xff]
  %v4260 = vld [vmem:[%s3 + $0x88] sm:$0xff]
  %v4261 = vld [vmem:[%s3 + $0x90] sm:$0xff]
  %v4262 = vld [vmem:[%s3 + $0x98] sm:$0xff]
  %v4263 = vld [vmem:[%s3 + $0xa0] sm:$0xff]
  %v4264 = vld [vmem:[%s3 + $0xa8] sm:$0xff]
  %v4265 = vld [vmem:[%s3 + $0xb0] sm:$0xff]
  %v4266 = vld [vmem:[%s3 + $0xb8] sm:$0xff]
  %v4267 = vld [vmem:[%s3 + $0xc0] sm:$0xff]
  %v4268 = vld [vmem:[%s3 + $0xc8] sm:$0xff]
  %v4269 = vld [vmem:[%s3 + $0xd0] sm:$0xff]
  %v4270 = vld [vmem:[%s3 + $0xd8] sm:$0xff]
  %v4271 = vld [vmem:[%s3 + $0xe0] sm:$0xff]
  %v4272 = vld [vmem:[%s3 + $0xe8] sm:$0xff]
  %v4273 = vld [vmem:[%s3 + $0xf0] sm:$0xff]
  %v4274 = vld [vmem:[%s3 + $0xf8] sm:$0xff]
  %v4275 = vld [vmem:[%s3 + $0x100] sm:$0xff]
  %v4276 = vld [vmem:[%s3 + $0x108] sm:$0xff]
  %v4277 = vld [vmem:[%s3 + $0x110] sm:$0xff]
  %v4278 = vld [vmem:[%s3 + $0x118] sm:$0xff]
  %v4279 = vld [vmem:[%s3 + $0x120] sm:$0xff]
  %v4280 = vld [vmem:[%s3 + $0x128] sm:$0xff]
  %v4281 = vld [vmem:[%s3 + $0x130] sm:$0xff]
  %v4282 = vld [vmem:[%s3 + $0x138] sm:$0xff]
  %v4283 = vld [vmem:[%s3 + $0x140] sm:$0xff]
  %v4284 = vld [vmem:[%s3 + $0x148] sm:$0xff]
  %v4285 = vld [vmem:[%s3 + $0x150] sm:$0xff]
  %v4286 = vld [vmem:[%s3 + $0x158] sm:$0xff]
  %v4287 = vld [vmem:[%s3 + $0x160] sm:$0xff]
  %v4288 = vld [vmem:[%s3 + $0x168] sm:$0xff]
  %v4289 = vld [vmem:[%s3 + $0x170] sm:$0xff]
  %v4290 = vld [vmem:[%s3 + $0x178] sm:$0xff]
  %v4291 = vld [vmem:[%s3 + $0x180] sm:$0xff]
  %v4292 = vld [vmem:[%s3 + $0x188] sm:$0xff]
  %v4293 = vld [vmem:[%s3 + $0x190] sm:$0xff]
  %v4294 = vld [vmem:[%s3 + $0x198] sm:$0xff]
  %v4295 = vld [vmem:[%s3 + $0x1a0] sm:$0xff]
  %v4296 = vld [vmem:[%s3 + $0x1a8] sm:$0xff]
  %v4297 = vld [vmem:[%s3 + $0x1b0] sm:$0xff]
  %v4298 = vld [vmem:[%s3 + $0x1b8] sm:$0xff]
  %v4299 = vld [vmem:[%s3 + $0x1c0] sm:$0xff]
  %v4300 = vld [vmem:[%s3 + $0x1c8] sm:$0xff]
  %v4301 = vld [vmem:[%s3 + $0x1d0] sm:$0xff]
  %v4302 = vld [vmem:[%s3 + $0x1d8] sm:$0xff]
  %v4303 = vld [vmem:[%s3 + $0x1e0] sm:$0xff]
  %v4304 = vld [vmem:[%s3 + $0x1e8] sm:$0xff]
  %v4305 = vld [vmem:[%s3 + $0x1f0] sm:$0xff]
  %v4306 = vld [vmem:[%s3 + $0x1f8] sm:$0xff]
  %v4307 = vld [vmem:[%s3 + $0x200] sm:$0xff]
  %v4308 = vld [vmem:[%s3 + $0x208] sm:$0xff]
  %v4309 = vld [vmem:[%s3 + $0x210] sm:$0xff]
  %v4310 = vld [vmem:[%s3 + $0x218] sm:$0xff]
  %v4311 = vld [vmem:[%s3 + $0x220] sm:$0xff]
  %v4312 = vld [vmem:[%s3 + $0x228] sm:$0xff]
  %v4313 = vld [vmem:[%s3 + $0x230] sm:$0xff]
  %v4314 = vld [vmem:[%s3 + $0x238] sm:$0xff]
  %v4315 = vld [vmem:[%s3 + $0x240] sm:$0xff]
  %v4316 = vld [vmem:[%s3 + $0x248] sm:$0xff]
  %v4317 = vld [vmem:[%s3 + $0x250] sm:$0xff]
  %v4318 = vld [vmem:[%s3 + $0x258] sm:$0xff]
  %v4319 = vld [vmem:[%s3 + $0x260] sm:$0xff]
  %v4320 = vld [vmem:[%s3 + $0x268] sm:$0xff]
  %v4321 = vld [vmem:[%s3 + $0x270] sm:$0xff]
  %v4322 = vld [vmem:[%s3 + $0x278] sm:$0xff]
  %v4323 = vld [vmem:[%s3 + $0x280] sm:$0xff]
  %v4324 = vld [vmem:[%s3 + $0x288] sm:$0xff]
  %v4325 = vld [vmem:[%s3 + $0x290] sm:$0xff]
  %v4326 = vld [vmem:[%s3 + $0x298] sm:$0xff]
  %v4327 = vld [vmem:[%s3 + $0x2a0] sm:$0xff]
  %v4328 = vld [vmem:[%s3 + $0x2a8] sm:$0xff]
  %v4329 = vld [vmem:[%s3 + $0x2b0] sm:$0xff]
  %v4330 = vld [vmem:[%s3 + $0x2b8] sm:$0xff]
  %v4331 = vld [vmem:[%s3 + $0x2c0] sm:$0xff]
  %v4332 = vld [vmem:[%s3 + $0x2c8] sm:$0xff]
  %v4333 = vld [vmem:[%s3 + $0x2d0] sm:$0xff]
  %v4334 = vld [vmem:[%s3 + $0x2d8] sm:$0xff]
  %v4335 = vld [vmem:[%s3 + $0x2e0] sm:$0xff]
  %v4336 = vld [vmem:[%s3 + $0x2e8] sm:$0xff]
  %v4337 = vld [vmem:[%s3 + $0x2f0] sm:$0xff]
  %v4338 = vld [vmem:[%s3 + $0x2f8] sm:$0xff]
  %v4339 = vld [vmem:[%s3 + $0x300] sm:$0xff]
  %v4340 = vld [vmem:[%s3 + $0x308] sm:$0xff]
  %v4341 = vld [vmem:[%s3 + $0x310] sm:$0xff]
  %v4342 = vld [vmem:[%s3 + $0x318] sm:$0xff]
  %v4343 = vld [vmem:[%s3 + $0x320] sm:$0xff]
  %v4344 = vld [vmem:[%s3 + $0x328] sm:$0xff]
  %v4345 = vld [vmem:[%s3 + $0x330] sm:$0xff]
  %v4346 = vld [vmem:[%s3 + $0x338] sm:$0xff]
  %v4347 = vld [vmem:[%s3 + $0x340] sm:$0xff]
  %v4348 = vld [vmem:[%s3 + $0x348] sm:$0xff]
  %v4349 = vld [vmem:[%s3 + $0x350] sm:$0xff]
  %v4350 = vld [vmem:[%s3 + $0x358] sm:$0xff]
  %v4351 = vld [vmem:[%s3 + $0x360] sm:$0xff]
  %v4352 = vld [vmem:[%s3 + $0x368] sm:$0xff]
  %v4353 = vld [vmem:[%s3 + $0x370] sm:$0xff]
  %v4354 = vld [vmem:[%s3 + $0x378] sm:$0xff]
  %v4355 = vld [vmem:[%s3 + $0x380] sm:$0xff]
  %v4356 = vld [vmem:[%s3 + $0x388] sm:$0xff]
  %v4357 = vld [vmem:[%s3 + $0x390] sm:$0xff]
  %v4358 = vld [vmem:[%s3 + $0x398] sm:$0xff]
  %v4359 = vld [vmem:[%s3 + $0x3a0] sm:$0xff]
  %v4360 = vld [vmem:[%s3 + $0x3a8] sm:$0xff]
  %v4361 = vld [vmem:[%s3 + $0x3b0] sm:$0xff]
  %v4362 = vld [vmem:[%s3 + $0x3b8] sm:$0xff]
  %v4363 = vld [vmem:[%s3 + $0x3c0] sm:$0xff]
  %v4364 = vld [vmem:[%s3 + $0x3c8] sm:$0xff]
  %v4365 = vld [vmem:[%s3 + $0x3d0] sm:$0xff]
  %v4366 = vld [vmem:[%s3 + $0x3d8] sm:$0xff]
  %v4367 = vld [vmem:[%s3 + $0x3e0] sm:$0xff]
  %v4368 = vld [vmem:[%s3 + $0x3e8] sm:$0xff]
  %v4369 = vld [vmem:[%s3 + $0x3f0] sm:$0xff]
  %v4370 = vld [vmem:[%s3 + $0x3f8] sm:$0xff]
  %v4371 = vld [vmem:[%s3 + $0x400] sm:$0xff]
  %v4372 = vld [vmem:[%s3 + $0x408] sm:$0xff]
  %v4373 = vld [vmem:[%s3 + $0x410] sm:$0xff]
  %v4374 = vld [vmem:[%s3 + $0x418] sm:$0xff]
  %v4375 = vld [vmem:[%s3 + $0x420] sm:$0xff]
  %v4376 = vld [vmem:[%s3 + $0x428] sm:$0xff]
  %v4377 = vld [vmem:[%s3 + $0x430] sm:$0xff]
  %v4378 = vld [vmem:[%s3 + $0x438] sm:$0xff]
  %v4379 = vld [vmem:[%s3 + $0x440] sm:$0xff]
  %v4380 = vld [vmem:[%s3 + $0x448] sm:$0xff]
  %v4381 = vld [vmem:[%s3 + $0x450] sm:$0xff]
  %v4382 = vld [vmem:[%s3 + $0x458] sm:$0xff]
  %v4383 = vld [vmem:[%s3 + $0x460] sm:$0xff]
  %v4384 = vld [vmem:[%s3 + $0x468] sm:$0xff]
  %v4385 = vld [vmem:[%s3 + $0x470] sm:$0xff]
  %v4386 = vld [vmem:[%s3 + $0x478] sm:$0xff]
  %v4387 = vld [vmem:[%s3 + $0x480] sm:$0xff]
  %v4388 = vld [vmem:[%s3 + $0x488] sm:$0xff]
  %v4389 = vld [vmem:[%s3 + $0x490] sm:$0xff]
  %v4390 = vld [vmem:[%s3 + $0x498] sm:$0xff]
  %v4391 = vld [vmem:[%s3 + $0x4a0] sm:$0xff]
  %v4392 = vld [vmem:[%s3 + $0x4a8] sm:$0xff]
  %v4393 = vld [vmem:[%s3 + $0x4b0] sm:$0xff]
  %v4394 = vld [vmem:[%s3 + $0x4b8] sm:$0xff]
  %v4395 = vld [vmem:[%s3 + $0x4c0] sm:$0xff]
  %v4396 = vld [vmem:[%s3 + $0x4c8] sm:$0xff]
  %v4397 = vld [vmem:[%s3 + $0x4d0] sm:$0xff]
  %v4398 = vld [vmem:[%s3 + $0x4d8] sm:$0xff]
  %v4399 = vld [vmem:[%s3 + $0x4e0] sm:$0xff]
  %v4400 = vld [vmem:[%s3 + $0x4e8] sm:$0xff]
  %v4401 = vld [vmem:[%s3 + $0x4f0] sm:$0xff]
  %v4402 = vld [vmem:[%s3 + $0x4f8] sm:$0xff]
  %v4403 = vld [vmem:[%s3 + $0x500] sm:$0xff]
  %v4404 = vld [vmem:[%s3 + $0x508] sm:$0xff]
  %v4405 = vld [vmem:[%s3 + $0x510] sm:$0xff]
  %v4406 = vld [vmem:[%s3 + $0x518] sm:$0xff]
  %v4407 = vld [vmem:[%s3 + $0x520] sm:$0xff]
  %v4408 = vld [vmem:[%s3 + $0x528] sm:$0xff]
  %v4409 = vld [vmem:[%s3 + $0x530] sm:$0xff]
  %v4410 = vld [vmem:[%s3 + $0x538] sm:$0xff]
  %v4411 = vld [vmem:[%s3 + $0x540] sm:$0xff]
  %v4412 = vld [vmem:[%s3 + $0x548] sm:$0xff]
  %v4413 = vld [vmem:[%s3 + $0x550] sm:$0xff]
  %v4414 = vld [vmem:[%s3 + $0x558] sm:$0xff]
  %v4415 = vld [vmem:[%s3 + $0x560] sm:$0xff]
  %v4416 = vld [vmem:[%s3 + $0x568] sm:$0xff]
  %v4417 = vld [vmem:[%s3 + $0x570] sm:$0xff]
  %v4418 = vld [vmem:[%s3 + $0x578] sm:$0xff]
  %v4419 = vld [vmem:[%s3 + $0x580] sm:$0xff]
  %v4420 = vld [vmem:[%s3 + $0x588] sm:$0xff]
  %v4421 = vld [vmem:[%s3 + $0x590] sm:$0xff]
  %v4422 = vld [vmem:[%s3 + $0x598] sm:$0xff]
  %v4423 = vld [vmem:[%s3 + $0x5a0] sm:$0xff]
  %v4424 = vld [vmem:[%s3 + $0x5a8] sm:$0xff]
  %v4425 = vld [vmem:[%s3 + $0x5b0] sm:$0xff]
  %v4426 = vld [vmem:[%s3 + $0x5b8] sm:$0xff]
  %v4427 = vld [vmem:[%s3 + $0x5c0] sm:$0xff]
  %v4428 = vld [vmem:[%s3 + $0x5c8] sm:$0xff]
  %v4429 = vld [vmem:[%s3 + $0x5d0] sm:$0xff]
  %v4430 = vld [vmem:[%s3 + $0x5d8] sm:$0xff]
  %v4431 = vld [vmem:[%s3 + $0x5e0] sm:$0xff]
  %v4432 = vld [vmem:[%s3 + $0x5e8] sm:$0xff]
  %v4433 = vld [vmem:[%s3 + $0x5f0] sm:$0xff]
  %v4434 = vld [vmem:[%s3 + $0x5f8] sm:$0xff]
  %v4435 = vld [vmem:[%s3 + $0x600] sm:$0xff]
  %v4436 = vld [vmem:[%s3 + $0x608] sm:$0xff]
  %v4437 = vld [vmem:[%s3 + $0x610] sm:$0xff]
  %v4438 = vld [vmem:[%s3 + $0x618] sm:$0xff]
  %v4439 = vld [vmem:[%s3 + $0x620] sm:$0xff]
  %v4440 = vld [vmem:[%s3 + $0x628] sm:$0xff]
  %v4441 = vld [vmem:[%s3 + $0x630] sm:$0xff]
  %v4442 = vld [vmem:[%s3 + $0x638] sm:$0xff]
  %v4443 = vld [vmem:[%s3 + $0x640] sm:$0xff]
  %v4444 = vld [vmem:[%s3 + $0x648] sm:$0xff]
  %v4445 = vld [vmem:[%s3 + $0x650] sm:$0xff]
  %v4446 = vld [vmem:[%s3 + $0x658] sm:$0xff]
  %v4447 = vld [vmem:[%s3 + $0x660] sm:$0xff]
  %v4448 = vld [vmem:[%s3 + $0x668] sm:$0xff]
  %v4449 = vld [vmem:[%s3 + $0x670] sm:$0xff]
  %v4450 = vld [vmem:[%s3 + $0x678] sm:$0xff]
  %v4451 = vld [vmem:[%s3 + $0x680] sm:$0xff]
  %v4452 = vld [vmem:[%s3 + $0x688] sm:$0xff]
  %v4453 = vld [vmem:[%s3 + $0x690] sm:$0xff]
  %v4454 = vld [vmem:[%s3 + $0x698] sm:$0xff]
  %v4455 = vld [vmem:[%s3 + $0x6a0] sm:$0xff]
  %v4456 = vld [vmem:[%s3 + $0x6a8] sm:$0xff]
  %v4457 = vld [vmem:[%s3 + $0x6b0] sm:$0xff]
  %v4458 = vld [vmem:[%s3 + $0x6b8] sm:$0xff]
  %v4459 = vld [vmem:[%s3 + $0x6c0] sm:$0xff]
  %v4460 = vld [vmem:[%s3 + $0x6c8] sm:$0xff]
  %v4461 = vld [vmem:[%s3 + $0x6d0] sm:$0xff]
  %v4462 = vld [vmem:[%s3 + $0x6d8] sm:$0xff]
  %v4463 = vld [vmem:[%s3 + $0x6e0] sm:$0xff]
  %v4464 = vld [vmem:[%s3 + $0x6e8] sm:$0xff]
  %v4465 = vld [vmem:[%s3 + $0x6f0] sm:$0xff]
  %v4466 = vld [vmem:[%s3 + $0x6f8] sm:$0xff]
  %v4467 = vld [vmem:[%s3 + $0x700] sm:$0xff]
  %v4468 = vld [vmem:[%s3 + $0x708] sm:$0xff]
  %v4469 = vld [vmem:[%s3 + $0x710] sm:$0xff]
  %v4470 = vld [vmem:[%s3 + $0x718] sm:$0xff]
  %v4471 = vld [vmem:[%s3 + $0x720] sm:$0xff]
  %v4472 = vld [vmem:[%s3 + $0x728] sm:$0xff]
  %v4473 = vld [vmem:[%s3 + $0x730] sm:$0xff]
  %v4474 = vld [vmem:[%s3 + $0x738] sm:$0xff]
  %v4475 = vld [vmem:[%s3 + $0x740] sm:$0xff]
  %v4476 = vld [vmem:[%s3 + $0x748] sm:$0xff]
  %v4477 = vld [vmem:[%s3 + $0x750] sm:$0xff]
  %v4478 = vld [vmem:[%s3 + $0x758] sm:$0xff]
  %v4479 = vld [vmem:[%s3 + $0x760] sm:$0xff]
  %v4480 = vld [vmem:[%s3 + $0x768] sm:$0xff]
  %v4481 = vld [vmem:[%s3 + $0x770] sm:$0xff]
  %v4482 = vld [vmem:[%s3 + $0x778] sm:$0xff]
  %v4483 = vld [vmem:[%s3 + $0x780] sm:$0xff]
  %v4484 = vld [vmem:[%s3 + $0x788] sm:$0xff]
  %v4485 = vld [vmem:[%s3 + $0x790] sm:$0xff]
  %v4486 = vld [vmem:[%s3 + $0x798] sm:$0xff]
  %v4487 = vld [vmem:[%s3 + $0x7a0] sm:$0xff]
  %v4488 = vld [vmem:[%s3 + $0x7a8] sm:$0xff]
  %v4489 = vld [vmem:[%s3 + $0x7b0] sm:$0xff]
  %v4490 = vld [vmem:[%s3 + $0x7b8] sm:$0xff]
  %v4491 = vld [vmem:[%s3 + $0x7c0] sm:$0xff]
  %v4492 = vld [vmem:[%s3 + $0x7c8] sm:$0xff]
  %v4493 = vld [vmem:[%s3 + $0x7d0] sm:$0xff]
  %v4494 = vld [vmem:[%s3 + $0x7d8] sm:$0xff]
  %v4495 = vld [vmem:[%s3 + $0x7e0] sm:$0xff]
  %v4496 = vld [vmem:[%s3 + $0x7e8] sm:$0xff]
  %v4497 = vld [vmem:[%s3 + $0x7f0] sm:$0xff]
  %v4498 = vld [vmem:[%s3 + $0x7f8] sm:$0xff]
  %v4499 = vld [vmem:[%s3 + $0x800] sm:$0xff]
  %v4500 = vld [vmem:[%s3 + $0x808] sm:$0xff]
  %v4501 = vld [vmem:[%s3 + $0x810] sm:$0xff]
  %v4502 = vld [vmem:[%s3 + $0x818] sm:$0xff]
  %v4503 = vld [vmem:[%s3 + $0x820] sm:$0xff]
  %v4504 = vld [vmem:[%s3 + $0x828] sm:$0xff]
  %v4505 = vld [vmem:[%s3 + $0x830] sm:$0xff]
  %v4506 = vld [vmem:[%s3 + $0x838] sm:$0xff]
  %v4507 = vld [vmem:[%s3 + $0x840] sm:$0xff]
  %v4508 = vld [vmem:[%s3 + $0x848] sm:$0xff]
  %v4509 = vld [vmem:[%s3 + $0x850] sm:$0xff]
  %v4510 = vld [vmem:[%s3 + $0x858] sm:$0xff]
  %v4511 = vld [vmem:[%s3 + $0x860] sm:$0xff]
  %v4512 = vld [vmem:[%s3 + $0x868] sm:$0xff]
  %v4513 = vld [vmem:[%s3 + $0x870] sm:$0xff]
  %v4514 = vld [vmem:[%s3 + $0x878] sm:$0xff]
  %v4515 = vld [vmem:[%s3 + $0x880] sm:$0xff]
  %v4516 = vld [vmem:[%s3 + $0x888] sm:$0xff]
  %v4517 = vld [vmem:[%s3 + $0x890] sm:$0xff]
  %v4518 = vld [vmem:[%s3 + $0x898] sm:$0xff]
  %v4519 = vld [vmem:[%s3 + $0x8a0] sm:$0xff]
  %v4520 = vld [vmem:[%s3 + $0x8a8] sm:$0xff]
  %v4521 = vld [vmem:[%s3 + $0x8b0] sm:$0xff]
  %v4522 = vld [vmem:[%s3 + $0x8b8] sm:$0xff]
  %v4523 = vld [vmem:[%s3 + $0x8c0] sm:$0xff]
  %v4524 = vld [vmem:[%s3 + $0x8c8] sm:$0xff]
  %v4525 = vld [vmem:[%s3 + $0x8d0] sm:$0xff]
  %v4526 = vld [vmem:[%s3 + $0x8d8] sm:$0xff]
  %v4527 = vld [vmem:[%s3 + $0x8e0] sm:$0xff]
  %v4528 = vld [vmem:[%s3 + $0x8e8] sm:$0xff]
  %v4529 = vld [vmem:[%s3 + $0x8f0] sm:$0xff]
  %v4530 = vld [vmem:[%s3 + $0x8f8] sm:$0xff]
  %v4531 = vld [vmem:[%s3 + $0x900] sm:$0xff]
  %v4532 = vld [vmem:[%s3 + $0x908] sm:$0xff]
  %v4533 = vld [vmem:[%s3 + $0x910] sm:$0xff]
  %v4534 = vld [vmem:[%s3 + $0x918] sm:$0xff]
  %v4535 = vld [vmem:[%s3 + $0x920] sm:$0xff]
  %v4536 = vld [vmem:[%s3 + $0x928] sm:$0xff]
  %v4537 = vld [vmem:[%s3 + $0x930] sm:$0xff]
  %v4538 = vld [vmem:[%s3 + $0x938] sm:$0xff]
  %v4539 = vld [vmem:[%s3 + $0x940] sm:$0xff]
  %v4540 = vld [vmem:[%s3 + $0x948] sm:$0xff]
  %v4541 = vld [vmem:[%s3 + $0x950] sm:$0xff]
  %v4542 = vld [vmem:[%s3 + $0x958] sm:$0xff]
  %v4543 = vld [vmem:[%s3 + $0x960] sm:$0xff]
  %v4544 = vld [vmem:[%s3 + $0x968] sm:$0xff]
  %v4545 = vld [vmem:[%s3 + $0x970] sm:$0xff]
  %v4546 = vld [vmem:[%s3 + $0x978] sm:$0xff]
  %v4547 = vld [vmem:[%s3 + $0x980] sm:$0xff]
  %v4548 = vld [vmem:[%s3 + $0x988] sm:$0xff]
  %v4549 = vld [vmem:[%s3 + $0x990] sm:$0xff]
  %v4550 = vld [vmem:[%s3 + $0x998] sm:$0xff]
  %v4551 = vld [vmem:[%s3 + $0x9a0] sm:$0xff]
  %v4552 = vld [vmem:[%s3 + $0x9a8] sm:$0x33]
  %v4553 = vld [vmem:[%s3 + $0x9b0] sm:$0x33]
  %v4554 = vld [vmem:[%s3 + $0x9b8] sm:$0x33]
  %v4555 = vld [vmem:[%s4] sm:$0x3f]
  %v4557 = vlaneseq
  %v4558 = vshrl.u32 %v4557, 7
  %v4559 = vsub.s32 0, %v4558
  %v4560 = vrot.slane %v4555, %v4559
  %v4561 = vlaneseq
  %v4562 = vshrl.u32 %v4561, 7
  %v4563 = vsub.s32 1, %v4562
  %v4564 = vrot.slane %v4555, %v4563
  %v4565 = vlaneseq
  %v4566 = vshrl.u32 %v4565, 7
  %v4567 = vsub.s32 2, %v4566
  %v4568 = vrot.slane %v4555, %v4567
  %v4569 = vlaneseq
  %v4570 = vshrl.u32 %v4569, 7
  %v4571 = vsub.s32 3, %v4570
  %v4572 = vrot.slane %v4555, %v4571
  %v4573 = vlaneseq
  %v4574 = vshrl.u32 %v4573, 7
  %v4575 = vsub.s32 4, %v4574
  %v4576 = vrot.slane %v4555, %v4575
  %v4577 = vlaneseq
  %v4578 = vshrl.u32 %v4577, 7
  %v4579 = vsub.s32 5, %v4578
  %v4580 = vrot.slane %v4555, %v4579
  %v4899 = vunpack.c.l.b16 %v4243
  %v4900 = vunpack.c.h.b16 %v4243
  %v4901 = vunpack.c.l.b16 %v4244
  %v4902 = vunpack.c.h.b16 %v4244
  %v4903 = vunpack.c.l.b16 %v4245
  %v4904 = vunpack.c.h.b16 %v4245
  %v4905 = vunpack.c.l.b16 %v4246
  %v4906 = vunpack.c.h.b16 %v4246
  %v4907 = vunpack.c.l.b16 %v4247
  %v4908 = vunpack.c.h.b16 %v4247
  %v4909 = vunpack.c.l.b16 %v4248
  %v4910 = vunpack.c.h.b16 %v4248
  %v4911 = vunpack.c.l.b16 %v4249
  %v4912 = vunpack.c.h.b16 %v4249
  %v4913 = vunpack.c.l.b16 %v4250
  %v4914 = vunpack.c.h.b16 %v4250
  %v4915 = vunpack.c.l.b16 %v4251
  %v4916 = vunpack.c.h.b16 %v4251
  %v4917 = vunpack.c.l.b16 %v4252
  %v4918 = vunpack.c.h.b16 %v4252
  %v4919 = vunpack.c.l.b16 %v4253
  %v4920 = vunpack.c.h.b16 %v4253
  %v4921 = vunpack.c.l.b16 %v4254
  %v4922 = vunpack.c.h.b16 %v4254
  %v4923 = vunpack.c.l.b16 %v4255
  %v4924 = vunpack.c.h.b16 %v4255
  %v4925 = vunpack.c.l.b16 %v4256
  %v4926 = vunpack.c.h.b16 %v4256
  %v4927 = vunpack.c.l.b16 %v4257
  %v4928 = vunpack.c.h.b16 %v4257
  %v4929 = vunpack.c.l.b16 %v4258
  %v4930 = vunpack.c.h.b16 %v4258
  %v4931 = vunpack.c.l.b16 %v4259
  %v4932 = vunpack.c.h.b16 %v4259
  %v4933 = vunpack.c.l.b16 %v4260
  %v4934 = vunpack.c.h.b16 %v4260
  %v4935 = vunpack.c.l.b16 %v4261
  %v4936 = vunpack.c.h.b16 %v4261
  %v4937 = vunpack.c.l.b16 %v4262
  %v4938 = vunpack.c.h.b16 %v4262
  %v4939 = vunpack.c.l.b16 %v4263
  %v4940 = vunpack.c.h.b16 %v4263
  %v4941 = vunpack.c.l.b16 %v4264
  %v4942 = vunpack.c.h.b16 %v4264
  %v4943 = vunpack.c.l.b16 %v4265
  %v4944 = vunpack.c.h.b16 %v4265
  %v4945 = vunpack.c.l.b16 %v4266
  %v4946 = vunpack.c.h.b16 %v4266
  %v4947 = vunpack.c.l.b16 %v4267
  %v4948 = vunpack.c.h.b16 %v4267
  %v4949 = vunpack.c.l.b16 %v4268
  %v4950 = vunpack.c.h.b16 %v4268
  %v4951 = vunpack.c.l.b16 %v4269
  %v4952 = vunpack.c.h.b16 %v4269
  %v4953 = vunpack.c.l.b16 %v4270
  %v4954 = vunpack.c.h.b16 %v4270
  %v4955 = vunpack.c.l.b16 %v4271
  %v4956 = vunpack.c.h.b16 %v4271
  %v4957 = vunpack.c.l.b16 %v4272
  %v4958 = vunpack.c.h.b16 %v4272
  %v4959 = vunpack.c.l.b16 %v4273
  %v4960 = vunpack.c.h.b16 %v4273
  %v4961 = vunpack.c.l.b16 %v4274
  %v4962 = vunpack.c.h.b16 %v4274
  %v4963 = vunpack.c.l.b16 %v4275
  %v4964 = vunpack.c.h.b16 %v4275
  %v4965 = vunpack.c.l.b16 %v4276
  %v4966 = vunpack.c.h.b16 %v4276
  %v4967 = vunpack.c.l.b16 %v4277
  %v4968 = vunpack.c.h.b16 %v4277
  %v4969 = vunpack.c.l.b16 %v4278
  %v4970 = vunpack.c.h.b16 %v4278
  %v4971 = vunpack.c.l.b16 %v4279
  %v4972 = vunpack.c.h.b16 %v4279
  %v4973 = vunpack.c.l.b16 %v4280
  %v4974 = vunpack.c.h.b16 %v4280
  %v4975 = vunpack.c.l.b16 %v4281
  %v4976 = vunpack.c.h.b16 %v4281
  %v4977 = vunpack.c.l.b16 %v4282
  %v4978 = vunpack.c.h.b16 %v4282
  %v4979 = vunpack.c.l.b16 %v4283
  %v4980 = vunpack.c.h.b16 %v4283
  %v4981 = vunpack.c.l.b16 %v4284
  %v4982 = vunpack.c.h.b16 %v4284
  %v4983 = vunpack.c.l.b16 %v4285
  %v4984 = vunpack.c.h.b16 %v4285
  %v4985 = vunpack.c.l.b16 %v4286
  %v4986 = vunpack.c.h.b16 %v4286
  %v4987 = vunpack.c.l.b16 %v4287
  %v4988 = vunpack.c.h.b16 %v4287
  %v4989 = vunpack.c.l.b16 %v4288
  %v4990 = vunpack.c.h.b16 %v4288
  %v4991 = vunpack.c.l.b16 %v4289
  %v4992 = vunpack.c.h.b16 %v4289
  %v4993 = vunpack.c.l.b16 %v4290
  %v4994 = vunpack.c.h.b16 %v4290
  %v4995 = vunpack.c.l.b16 %v4291
  %v4996 = vunpack.c.h.b16 %v4291
  %v4997 = vunpack.c.l.b16 %v4292
  %v4998 = vunpack.c.h.b16 %v4292
  %v4999 = vunpack.c.l.b16 %v4293
  %v5000 = vunpack.c.h.b16 %v4293
  %v5001 = vunpack.c.l.b16 %v4294
  %v5002 = vunpack.c.h.b16 %v4294
  %v5003 = vunpack.c.l.b16 %v4295
  %v5004 = vunpack.c.h.b16 %v4295
  %v5005 = vunpack.c.l.b16 %v4296
  %v5006 = vunpack.c.h.b16 %v4296
  %v5007 = vunpack.c.l.b16 %v4297
  %v5008 = vunpack.c.h.b16 %v4297
  %v5009 = vunpack.c.l.b16 %v4298
  %v5010 = vunpack.c.h.b16 %v4298
  %v5011 = vunpack.c.l.b16 %v4299
  %v5012 = vunpack.c.h.b16 %v4299
  %v5013 = vunpack.c.l.b16 %v4300
  %v5014 = vunpack.c.h.b16 %v4300
  %v5015 = vunpack.c.l.b16 %v4301
  %v5016 = vunpack.c.h.b16 %v4301
  %v5017 = vunpack.c.l.b16 %v4302
  %v5018 = vunpack.c.h.b16 %v4302
  %v5019 = vunpack.c.l.b16 %v4303
  %v5020 = vunpack.c.h.b16 %v4303
  %v5021 = vunpack.c.l.b16 %v4304
  %v5022 = vunpack.c.h.b16 %v4304
  %v5023 = vunpack.c.l.b16 %v4305
  %v5024 = vunpack.c.h.b16 %v4305
  %v5025 = vunpack.c.l.b16 %v4306
  %v5026 = vunpack.c.h.b16 %v4306
  %v5027 = vunpack.c.l.b16 %v4307
  %v5028 = vunpack.c.h.b16 %v4307
  %v5029 = vunpack.c.l.b16 %v4308
  %v5030 = vunpack.c.h.b16 %v4308
  %v5031 = vunpack.c.l.b16 %v4309
  %v5032 = vunpack.c.h.b16 %v4309
  %v5033 = vunpack.c.l.b16 %v4310
  %v5034 = vunpack.c.h.b16 %v4310
  %v5035 = vunpack.c.l.b16 %v4311
  %v5036 = vunpack.c.h.b16 %v4311
  %v5037 = vunpack.c.l.b16 %v4312
  %v5038 = vunpack.c.h.b16 %v4312
  %v5039 = vunpack.c.l.b16 %v4313
  %v5040 = vunpack.c.h.b16 %v4313
  %v5041 = vunpack.c.l.b16 %v4314
  %v5042 = vunpack.c.h.b16 %v4314
  %v5043 = vunpack.c.l.b16 %v4315
  %v5044 = vunpack.c.h.b16 %v4315
  %v5045 = vunpack.c.l.b16 %v4316
  %v5046 = vunpack.c.h.b16 %v4316
  %v5047 = vunpack.c.l.b16 %v4317
  %v5048 = vunpack.c.h.b16 %v4317
  %v5049 = vunpack.c.l.b16 %v4318
  %v5050 = vunpack.c.h.b16 %v4318
  %v5051 = vunpack.c.l.b16 %v4319
  %v5052 = vunpack.c.h.b16 %v4319
  %v5053 = vunpack.c.l.b16 %v4320
  %v5054 = vunpack.c.h.b16 %v4320
  %v5055 = vunpack.c.l.b16 %v4321
  %v5056 = vunpack.c.h.b16 %v4321
  %v5057 = vunpack.c.l.b16 %v4322
  %v5058 = vunpack.c.h.b16 %v4322
  %v5059 = vunpack.c.l.b16 %v4323
  %v5060 = vunpack.c.h.b16 %v4323
  %v5061 = vunpack.c.l.b16 %v4324
  %v5062 = vunpack.c.h.b16 %v4324
  %v5063 = vunpack.c.l.b16 %v4325
  %v5064 = vunpack.c.h.b16 %v4325
  %v5065 = vunpack.c.l.b16 %v4326
  %v5066 = vunpack.c.h.b16 %v4326
  %v5067 = vunpack.c.l.b16 %v4327
  %v5068 = vunpack.c.h.b16 %v4327
  %v5069 = vunpack.c.l.b16 %v4328
  %v5070 = vunpack.c.h.b16 %v4328
  %v5071 = vunpack.c.l.b16 %v4329
  %v5072 = vunpack.c.h.b16 %v4329
  %v5073 = vunpack.c.l.b16 %v4330
  %v5074 = vunpack.c.h.b16 %v4330
  %v5075 = vunpack.c.l.b16 %v4331
  %v5076 = vunpack.c.h.b16 %v4331
  %v5077 = vunpack.c.l.b16 %v4332
  %v5078 = vunpack.c.h.b16 %v4332
  %v5079 = vunpack.c.l.b16 %v4333
  %v5080 = vunpack.c.h.b16 %v4333
  %v5081 = vunpack.c.l.b16 %v4334
  %v5082 = vunpack.c.h.b16 %v4334
  %v5083 = vunpack.c.l.b16 %v4335
  %v5084 = vunpack.c.h.b16 %v4335
  %v5085 = vunpack.c.l.b16 %v4336
  %v5086 = vunpack.c.h.b16 %v4336
  %v5087 = vunpack.c.l.b16 %v4337
  %v5088 = vunpack.c.h.b16 %v4337
  %v5089 = vunpack.c.l.b16 %v4338
  %v5090 = vunpack.c.h.b16 %v4338
  %v5091 = vunpack.c.l.b16 %v4339
  %v5092 = vunpack.c.h.b16 %v4339
  %v5093 = vunpack.c.l.b16 %v4340
  %v5094 = vunpack.c.h.b16 %v4340
  %v5095 = vunpack.c.l.b16 %v4341
  %v5096 = vunpack.c.h.b16 %v4341
  %v5097 = vunpack.c.l.b16 %v4342
  %v5098 = vunpack.c.h.b16 %v4342
  %v5099 = vunpack.c.l.b16 %v4343
  %v5100 = vunpack.c.h.b16 %v4343
  %v5101 = vunpack.c.l.b16 %v4344
  %v5102 = vunpack.c.h.b16 %v4344
  %v5103 = vunpack.c.l.b16 %v4345
  %v5104 = vunpack.c.h.b16 %v4345
  %v5105 = vunpack.c.l.b16 %v4346
  %v5106 = vunpack.c.h.b16 %v4346
  %v5107 = vunpack.c.l.b16 %v4347
  %v5108 = vunpack.c.h.b16 %v4347
  %v5109 = vunpack.c.l.b16 %v4348
  %v5110 = vunpack.c.h.b16 %v4348
  %v5111 = vunpack.c.l.b16 %v4349
  %v5112 = vunpack.c.h.b16 %v4349
  %v5113 = vunpack.c.l.b16 %v4350
  %v5114 = vunpack.c.h.b16 %v4350
  %v5115 = vunpack.c.l.b16 %v4351
  %v5116 = vunpack.c.h.b16 %v4351
  %v5117 = vunpack.c.l.b16 %v4352
  %v5118 = vunpack.c.h.b16 %v4352
  %v5119 = vunpack.c.l.b16 %v4353
  %v5120 = vunpack.c.h.b16 %v4353
  %v5121 = vunpack.c.l.b16 %v4354
  %v5122 = vunpack.c.h.b16 %v4354
  %v5123 = vunpack.c.l.b16 %v4355
  %v5124 = vunpack.c.h.b16 %v4355
  %v5125 = vunpack.c.l.b16 %v4356
  %v5126 = vunpack.c.h.b16 %v4356
  %v5127 = vunpack.c.l.b16 %v4357
  %v5128 = vunpack.c.h.b16 %v4357
  %v5129 = vunpack.c.l.b16 %v4358
  %v5130 = vunpack.c.h.b16 %v4358
  %v5131 = vunpack.c.l.b16 %v4359
  %v5132 = vunpack.c.h.b16 %v4359
  %v5133 = vunpack.c.l.b16 %v4360
  %v5134 = vunpack.c.h.b16 %v4360
  %v5135 = vunpack.c.l.b16 %v4361
  %v5136 = vunpack.c.h.b16 %v4361
  %v5137 = vunpack.c.l.b16 %v4362
  %v5138 = vunpack.c.h.b16 %v4362
  %v5139 = vunpack.c.l.b16 %v4363
  %v5140 = vunpack.c.h.b16 %v4363
  %v5141 = vunpack.c.l.b16 %v4364
  %v5142 = vunpack.c.h.b16 %v4364
  %v5143 = vunpack.c.l.b16 %v4365
  %v5144 = vunpack.c.h.b16 %v4365
  %v5145 = vunpack.c.l.b16 %v4366
  %v5146 = vunpack.c.h.b16 %v4366
  %v5147 = vunpack.c.l.b16 %v4367
  %v5148 = vunpack.c.h.b16 %v4367
  %v5149 = vunpack.c.l.b16 %v4368
  %v5150 = vunpack.c.h.b16 %v4368
  %v5151 = vunpack.c.l.b16 %v4369
  %v5152 = vunpack.c.h.b16 %v4369
  %v5153 = vunpack.c.l.b16 %v4370
  %v5154 = vunpack.c.h.b16 %v4370
  %v5155 = vunpack.c.l.b16 %v4371
  %v5156 = vunpack.c.h.b16 %v4371
  %v5157 = vunpack.c.l.b16 %v4372
  %v5158 = vunpack.c.h.b16 %v4372
  %v5159 = vunpack.c.l.b16 %v4373
  %v5160 = vunpack.c.h.b16 %v4373
  %v5161 = vunpack.c.l.b16 %v4374
  %v5162 = vunpack.c.h.b16 %v4374
  %v5163 = vunpack.c.l.b16 %v4375
  %v5164 = vunpack.c.h.b16 %v4375
  %v5165 = vunpack.c.l.b16 %v4376
  %v5166 = vunpack.c.h.b16 %v4376
  %v5167 = vunpack.c.l.b16 %v4377
  %v5168 = vunpack.c.h.b16 %v4377
  %v5169 = vunpack.c.l.b16 %v4378
  %v5170 = vunpack.c.h.b16 %v4378
  %v5171 = vunpack.c.l.b16 %v4379
  %v5172 = vunpack.c.h.b16 %v4379
  %v5173 = vunpack.c.l.b16 %v4380
  %v5174 = vunpack.c.h.b16 %v4380
  %v5175 = vunpack.c.l.b16 %v4381
  %v5176 = vunpack.c.h.b16 %v4381
  %v5177 = vunpack.c.l.b16 %v4382
  %v5178 = vunpack.c.h.b16 %v4382
  %v5179 = vunpack.c.l.b16 %v4383
  %v5180 = vunpack.c.h.b16 %v4383
  %v5181 = vunpack.c.l.b16 %v4384
  %v5182 = vunpack.c.h.b16 %v4384
  %v5183 = vunpack.c.l.b16 %v4385
  %v5184 = vunpack.c.h.b16 %v4385
  %v5185 = vunpack.c.l.b16 %v4386
  %v5186 = vunpack.c.h.b16 %v4386
  %v5187 = vunpack.c.l.b16 %v4387
  %v5188 = vunpack.c.h.b16 %v4387
  %v5189 = vunpack.c.l.b16 %v4388
  %v5190 = vunpack.c.h.b16 %v4388
  %v5191 = vunpack.c.l.b16 %v4389
  %v5192 = vunpack.c.h.b16 %v4389
  %v5193 = vunpack.c.l.b16 %v4390
  %v5194 = vunpack.c.h.b16 %v4390
  %v5195 = vunpack.c.l.b16 %v4391
  %v5196 = vunpack.c.h.b16 %v4391
  %v5197 = vunpack.c.l.b16 %v4392
  %v5198 = vunpack.c.h.b16 %v4392
  %v5199 = vunpack.c.l.b16 %v4393
  %v5200 = vunpack.c.h.b16 %v4393
  %v5201 = vunpack.c.l.b16 %v4394
  %v5202 = vunpack.c.h.b16 %v4394
  %v5203 = vunpack.c.l.b16 %v4395
  %v5204 = vunpack.c.h.b16 %v4395
  %v5205 = vunpack.c.l.b16 %v4396
  %v5206 = vunpack.c.h.b16 %v4396
  %v5207 = vunpack.c.l.b16 %v4397
  %v5208 = vunpack.c.h.b16 %v4397
  %v5209 = vunpack.c.l.b16 %v4398
  %v5210 = vunpack.c.h.b16 %v4398
  %v5211 = vunpack.c.l.b16 %v4399
  %v5212 = vunpack.c.h.b16 %v4399
  %v5213 = vunpack.c.l.b16 %v4400
  %v5214 = vunpack.c.h.b16 %v4400
  %v5215 = vunpack.c.l.b16 %v4401
  %v5216 = vunpack.c.h.b16 %v4401
  %v5217 = vunpack.c.l.b16 %v4402
  %v5218 = vunpack.c.h.b16 %v4402
  %v5219 = vunpack.c.l.b16 %v4403
  %v5220 = vunpack.c.h.b16 %v4403
  %v5221 = vunpack.c.l.b16 %v4404
  %v5222 = vunpack.c.h.b16 %v4404
  %v5223 = vunpack.c.l.b16 %v4405
  %v5224 = vunpack.c.h.b16 %v4405
  %v5225 = vunpack.c.l.b16 %v4406
  %v5226 = vunpack.c.h.b16 %v4406
  %v5227 = vunpack.c.l.b16 %v4407
  %v5228 = vunpack.c.h.b16 %v4407
  %v5229 = vunpack.c.l.b16 %v4408
  %v5230 = vunpack.c.h.b16 %v4408
  %v5231 = vunpack.c.l.b16 %v4409
  %v5232 = vunpack.c.h.b16 %v4409
  %v5233 = vunpack.c.l.b16 %v4410
  %v5234 = vunpack.c.h.b16 %v4410
  %v5235 = vunpack.c.l.b16 %v4411
  %v5236 = vunpack.c.h.b16 %v4411
  %v5237 = vunpack.c.l.b16 %v4412
  %v5238 = vunpack.c.h.b16 %v4412
  %v5239 = vunpack.c.l.b16 %v4413
  %v5240 = vunpack.c.h.b16 %v4413
  %v5241 = vunpack.c.l.b16 %v4414
  %v5242 = vunpack.c.h.b16 %v4414
  %v5243 = vunpack.c.l.b16 %v4415
  %v5244 = vunpack.c.h.b16 %v4415
  %v5245 = vunpack.c.l.b16 %v4416
  %v5246 = vunpack.c.h.b16 %v4416
  %v5247 = vunpack.c.l.b16 %v4417
  %v5248 = vunpack.c.h.b16 %v4417
  %v5249 = vunpack.c.l.b16 %v4418
  %v5250 = vunpack.c.h.b16 %v4418
  %v5251 = vunpack.c.l.b16 %v4419
  %v5252 = vunpack.c.h.b16 %v4419
  %v5253 = vunpack.c.l.b16 %v4420
  %v5254 = vunpack.c.h.b16 %v4420
  %v5255 = vunpack.c.l.b16 %v4421
  %v5256 = vunpack.c.h.b16 %v4421
  %v5257 = vunpack.c.l.b16 %v4422
  %v5258 = vunpack.c.h.b16 %v4422
  %v5259 = vunpack.c.l.b16 %v4423
  %v5260 = vunpack.c.h.b16 %v4423
  %v5261 = vunpack.c.l.b16 %v4424
  %v5262 = vunpack.c.h.b16 %v4424
  %v5263 = vunpack.c.l.b16 %v4425
  %v5264 = vunpack.c.h.b16 %v4425
  %v5265 = vunpack.c.l.b16 %v4426
  %v5266 = vunpack.c.h.b16 %v4426
  %v5267 = vunpack.c.l.b16 %v4427
  %v5268 = vunpack.c.h.b16 %v4427
  %v5269 = vunpack.c.l.b16 %v4428
  %v5270 = vunpack.c.h.b16 %v4428
  %v5271 = vunpack.c.l.b16 %v4429
  %v5272 = vunpack.c.h.b16 %v4429
  %v5273 = vunpack.c.l.b16 %v4430
  %v5274 = vunpack.c.h.b16 %v4430
  %v5275 = vunpack.c.l.b16 %v4431
  %v5276 = vunpack.c.h.b16 %v4431
  %v5277 = vunpack.c.l.b16 %v4432
  %v5278 = vunpack.c.h.b16 %v4432
  %v5279 = vunpack.c.l.b16 %v4433
  %v5280 = vunpack.c.h.b16 %v4433
  %v5281 = vunpack.c.l.b16 %v4434
  %v5282 = vunpack.c.h.b16 %v4434
  %v5283 = vunpack.c.l.b16 %v4435
  %v5284 = vunpack.c.h.b16 %v4435
  %v5285 = vunpack.c.l.b16 %v4436
  %v5286 = vunpack.c.h.b16 %v4436
  %v5287 = vunpack.c.l.b16 %v4437
  %v5288 = vunpack.c.h.b16 %v4437
  %v5289 = vunpack.c.l.b16 %v4438
  %v5290 = vunpack.c.h.b16 %v4438
  %v5291 = vunpack.c.l.b16 %v4439
  %v5292 = vunpack.c.h.b16 %v4439
  %v5293 = vunpack.c.l.b16 %v4440
  %v5294 = vunpack.c.h.b16 %v4440
  %v5295 = vunpack.c.l.b16 %v4441
  %v5296 = vunpack.c.h.b16 %v4441
  %v5297 = vunpack.c.l.b16 %v4442
  %v5298 = vunpack.c.h.b16 %v4442
  %v5299 = vunpack.c.l.b16 %v4443
  %v5300 = vunpack.c.h.b16 %v4443
  %v5301 = vunpack.c.l.b16 %v4444
  %v5302 = vunpack.c.h.b16 %v4444
  %v5303 = vunpack.c.l.b16 %v4445
  %v5304 = vunpack.c.h.b16 %v4445
  %v5305 = vunpack.c.l.b16 %v4446
  %v5306 = vunpack.c.h.b16 %v4446
  %v5307 = vunpack.c.l.b16 %v4447
  %v5308 = vunpack.c.h.b16 %v4447
  %v5309 = vunpack.c.l.b16 %v4448
  %v5310 = vunpack.c.h.b16 %v4448
  %v5311 = vunpack.c.l.b16 %v4449
  %v5312 = vunpack.c.h.b16 %v4449
  %v5313 = vunpack.c.l.b16 %v4450
  %v5314 = vunpack.c.h.b16 %v4450
  %v5315 = vunpack.c.l.b16 %v4451
  %v5316 = vunpack.c.h.b16 %v4451
  %v5317 = vunpack.c.l.b16 %v4452
  %v5318 = vunpack.c.h.b16 %v4452
  %v5319 = vunpack.c.l.b16 %v4453
  %v5320 = vunpack.c.h.b16 %v4453
  %v5321 = vunpack.c.l.b16 %v4454
  %v5322 = vunpack.c.h.b16 %v4454
  %v5323 = vunpack.c.l.b16 %v4455
  %v5324 = vunpack.c.h.b16 %v4455
  %v5325 = vunpack.c.l.b16 %v4456
  %v5326 = vunpack.c.h.b16 %v4456
  %v5327 = vunpack.c.l.b16 %v4457
  %v5328 = vunpack.c.h.b16 %v4457
  %v5329 = vunpack.c.l.b16 %v4458
  %v5330 = vunpack.c.h.b16 %v4458
  %v5331 = vunpack.c.l.b16 %v4459
  %v5332 = vunpack.c.h.b16 %v4459
  %v5333 = vunpack.c.l.b16 %v4460
  %v5334 = vunpack.c.h.b16 %v4460
  %v5335 = vunpack.c.l.b16 %v4461
  %v5336 = vunpack.c.h.b16 %v4461
  %v5337 = vunpack.c.l.b16 %v4462
  %v5338 = vunpack.c.h.b16 %v4462
  %v5339 = vunpack.c.l.b16 %v4463
  %v5340 = vunpack.c.h.b16 %v4463
  %v5341 = vunpack.c.l.b16 %v4464
  %v5342 = vunpack.c.h.b16 %v4464
  %v5343 = vunpack.c.l.b16 %v4465
  %v5344 = vunpack.c.h.b16 %v4465
  %v5345 = vunpack.c.l.b16 %v4466
  %v5346 = vunpack.c.h.b16 %v4466
  %v5347 = vunpack.c.l.b16 %v4467
  %v5348 = vunpack.c.h.b16 %v4467
  %v5349 = vunpack.c.l.b16 %v4468
  %v5350 = vunpack.c.h.b16 %v4468
  %v5351 = vunpack.c.l.b16 %v4469
  %v5352 = vunpack.c.h.b16 %v4469
  %v5353 = vunpack.c.l.b16 %v4470
  %v5354 = vunpack.c.h.b16 %v4470
  %v5355 = vunpack.c.l.b16 %v4471
  %v5356 = vunpack.c.h.b16 %v4471
  %v5357 = vunpack.c.l.b16 %v4472
  %v5358 = vunpack.c.h.b16 %v4472
  %v5359 = vunpack.c.l.b16 %v4473
  %v5360 = vunpack.c.h.b16 %v4473
  %v5361 = vunpack.c.l.b16 %v4474
  %v5362 = vunpack.c.h.b16 %v4474
  %v5363 = vunpack.c.l.b16 %v4475
  %v5364 = vunpack.c.h.b16 %v4475
  %v5365 = vunpack.c.l.b16 %v4476
  %v5366 = vunpack.c.h.b16 %v4476
  %v5367 = vunpack.c.l.b16 %v4477
  %v5368 = vunpack.c.h.b16 %v4477
  %v5369 = vunpack.c.l.b16 %v4478
  %v5370 = vunpack.c.h.b16 %v4478
  %v5371 = vunpack.c.l.b16 %v4479
  %v5372 = vunpack.c.h.b16 %v4479
  %v5373 = vunpack.c.l.b16 %v4480
  %v5374 = vunpack.c.h.b16 %v4480
  %v5375 = vunpack.c.l.b16 %v4481
  %v5376 = vunpack.c.h.b16 %v4481
  %v5377 = vunpack.c.l.b16 %v4482
  %v5378 = vunpack.c.h.b16 %v4482
  %v5379 = vunpack.c.l.b16 %v4483
  %v5380 = vunpack.c.h.b16 %v4483
  %v5381 = vunpack.c.l.b16 %v4484
  %v5382 = vunpack.c.h.b16 %v4484
  %v5383 = vunpack.c.l.b16 %v4485
  %v5384 = vunpack.c.h.b16 %v4485
  %v5385 = vunpack.c.l.b16 %v4486
  %v5386 = vunpack.c.h.b16 %v4486
  %v5387 = vunpack.c.l.b16 %v4487
  %v5388 = vunpack.c.h.b16 %v4487
  %v5389 = vunpack.c.l.b16 %v4488
  %v5390 = vunpack.c.h.b16 %v4488
  %v5391 = vunpack.c.l.b16 %v4489
  %v5392 = vunpack.c.h.b16 %v4489
  %v5393 = vunpack.c.l.b16 %v4490
  %v5394 = vunpack.c.h.b16 %v4490
  %v5395 = vunpack.c.l.b16 %v4491
  %v5396 = vunpack.c.h.b16 %v4491
  %v5397 = vunpack.c.l.b16 %v4492
  %v5398 = vunpack.c.h.b16 %v4492
  %v5399 = vunpack.c.l.b16 %v4493
  %v5400 = vunpack.c.h.b16 %v4493
  %v5401 = vunpack.c.l.b16 %v4494
  %v5402 = vunpack.c.h.b16 %v4494
  %v5403 = vunpack.c.l.b16 %v4495
  %v5404 = vunpack.c.h.b16 %v4495
  %v5405 = vunpack.c.l.b16 %v4496
  %v5406 = vunpack.c.h.b16 %v4496
  %v5407 = vunpack.c.l.b16 %v4497
  %v5408 = vunpack.c.h.b16 %v4497
  %v5409 = vunpack.c.l.b16 %v4498
  %v5410 = vunpack.c.h.b16 %v4498
  %v5411 = vunpack.c.l.b16 %v4499
  %v5412 = vunpack.c.h.b16 %v4499
  %v5413 = vunpack.c.l.b16 %v4500
  %v5414 = vunpack.c.h.b16 %v4500
  %v5415 = vunpack.c.l.b16 %v4501
  %v5416 = vunpack.c.h.b16 %v4501
  %v5417 = vunpack.c.l.b16 %v4502
  %v5418 = vunpack.c.h.b16 %v4502
  %v5419 = vunpack.c.l.b16 %v4503
  %v5420 = vunpack.c.h.b16 %v4503
  %v5421 = vunpack.c.l.b16 %v4504
  %v5422 = vunpack.c.h.b16 %v4504
  %v5423 = vunpack.c.l.b16 %v4505
  %v5424 = vunpack.c.h.b16 %v4505
  %v5425 = vunpack.c.l.b16 %v4506
  %v5426 = vunpack.c.h.b16 %v4506
  %v5427 = vunpack.c.l.b16 %v4507
  %v5428 = vunpack.c.h.b16 %v4507
  %v5429 = vunpack.c.l.b16 %v4508
  %v5430 = vunpack.c.h.b16 %v4508
  %v5431 = vunpack.c.l.b16 %v4509
  %v5432 = vunpack.c.h.b16 %v4509
  %v5433 = vunpack.c.l.b16 %v4510
  %v5434 = vunpack.c.h.b16 %v4510
  %v5435 = vunpack.c.l.b16 %v4511
  %v5436 = vunpack.c.h.b16 %v4511
  %v5437 = vunpack.c.l.b16 %v4512
  %v5438 = vunpack.c.h.b16 %v4512
  %v5439 = vunpack.c.l.b16 %v4513
  %v5440 = vunpack.c.h.b16 %v4513
  %v5441 = vunpack.c.l.b16 %v4514
  %v5442 = vunpack.c.h.b16 %v4514
  %v5443 = vunpack.c.l.b16 %v4515
  %v5444 = vunpack.c.h.b16 %v4515
  %v5445 = vunpack.c.l.b16 %v4516
  %v5446 = vunpack.c.h.b16 %v4516
  %v5447 = vunpack.c.l.b16 %v4517
  %v5448 = vunpack.c.h.b16 %v4517
  %v5449 = vunpack.c.l.b16 %v4518
  %v5450 = vunpack.c.h.b16 %v4518
  %v5451 = vunpack.c.l.b16 %v4519
  %v5452 = vunpack.c.h.b16 %v4519
  %v5453 = vunpack.c.l.b16 %v4520
  %v5454 = vunpack.c.h.b16 %v4520
  %v5455 = vunpack.c.l.b16 %v4521
  %v5456 = vunpack.c.h.b16 %v4521
  %v5457 = vunpack.c.l.b16 %v4522
  %v5458 = vunpack.c.h.b16 %v4522
  %v5459 = vunpack.c.l.b16 %v4523
  %v5460 = vunpack.c.h.b16 %v4523
  %v5461 = vunpack.c.l.b16 %v4524
  %v5462 = vunpack.c.h.b16 %v4524
  %v5463 = vunpack.c.l.b16 %v4525
  %v5464 = vunpack.c.h.b16 %v4525
  %v5465 = vunpack.c.l.b16 %v4526
  %v5466 = vunpack.c.h.b16 %v4526
  %v5467 = vunpack.c.l.b16 %v4527
  %v5468 = vunpack.c.h.b16 %v4527
  %v5469 = vunpack.c.l.b16 %v4528
  %v5470 = vunpack.c.h.b16 %v4528
  %v5471 = vunpack.c.l.b16 %v4529
  %v5472 = vunpack.c.h.b16 %v4529
  %v5473 = vunpack.c.l.b16 %v4530
  %v5474 = vunpack.c.h.b16 %v4530
  %v5475 = vunpack.c.l.b16 %v4531
  %v5476 = vunpack.c.h.b16 %v4531
  %v5477 = vunpack.c.l.b16 %v4532
  %v5478 = vunpack.c.h.b16 %v4532
  %v5479 = vunpack.c.l.b16 %v4533
  %v5480 = vunpack.c.h.b16 %v4533
  %v5481 = vunpack.c.l.b16 %v4534
  %v5482 = vunpack.c.h.b16 %v4534
  %v5483 = vunpack.c.l.b16 %v4535
  %v5484 = vunpack.c.h.b16 %v4535
  %v5485 = vunpack.c.l.b16 %v4536
  %v5486 = vunpack.c.h.b16 %v4536
  %v5487 = vunpack.c.l.b16 %v4537
  %v5488 = vunpack.c.h.b16 %v4537
  %v5489 = vunpack.c.l.b16 %v4538
  %v5490 = vunpack.c.h.b16 %v4538
  %v5491 = vunpack.c.l.b16 %v4539
  %v5492 = vunpack.c.h.b16 %v4539
  %v5493 = vunpack.c.l.b16 %v4540
  %v5494 = vunpack.c.h.b16 %v4540
  %v5495 = vunpack.c.l.b16 %v4541
  %v5496 = vunpack.c.h.b16 %v4541
  %v5497 = vunpack.c.l.b16 %v4542
  %v5498 = vunpack.c.h.b16 %v4542
  %v5499 = vunpack.c.l.b16 %v4543
  %v5500 = vunpack.c.h.b16 %v4543
  %v5501 = vunpack.c.l.b16 %v4544
  %v5502 = vunpack.c.h.b16 %v4544
  %v5503 = vunpack.c.l.b16 %v4545
  %v5504 = vunpack.c.h.b16 %v4545
  %v5505 = vunpack.c.l.b16 %v4546
  %v5506 = vunpack.c.h.b16 %v4546
  %v5507 = vunpack.c.l.b16 %v4547
  %v5508 = vunpack.c.h.b16 %v4547
  %v5509 = vunpack.c.l.b16 %v4548
  %v5510 = vunpack.c.h.b16 %v4548
  %v5511 = vunpack.c.l.b16 %v4549
  %v5512 = vunpack.c.h.b16 %v4549
  %v5513 = vunpack.c.l.b16 %v4550
  %v5514 = vunpack.c.h.b16 %v4550
  %v5515 = vunpack.c.l.b16 %v4551
  %v5516 = vunpack.c.h.b16 %v4551
  %v5517 = vunpack.c.l.b16 %v4552
  %v5518 = vunpack.c.h.b16 %v4552
  %v5519 = vunpack.c.l.b16 %v4553
  %v5520 = vunpack.c.h.b16 %v4553
  %v5521 = vunpack.c.l.b16 %v4554
  %v5522 = vunpack.c.h.b16 %v4554
  %v5523 = vpack.c.b16 %v4905, %v4899
  %v5524 = vpack.c.b16 %v4906, %v4900
  %v5525 = vpack.c.b16 %v4907, %v4901
  %v5526 = vpack.c.b16 %v4908, %v4902
  %v5527 = vpack.c.b16 %v4909, %v4903
  %v5528 = vpack.c.b16 %v4910, %v4904
  %v5529 = vpack.c.b16 %v4917, %v4911
  %v5530 = vpack.c.b16 %v4918, %v4912
  %v5531 = vpack.c.b16 %v4919, %v4913
  %v5532 = vpack.c.b16 %v4920, %v4914
  %v5533 = vpack.c.b16 %v4921, %v4915
  %v5534 = vpack.c.b16 %v4922, %v4916
  %v5535 = vpack.c.b16 %v4929, %v4923
  %v5536 = vpack.c.b16 %v4930, %v4924
  %v5537 = vpack.c.b16 %v4931, %v4925
  %v5538 = vpack.c.b16 %v4932, %v4926
  %v5539 = vpack.c.b16 %v4933, %v4927
  %v5540 = vpack.c.b16 %v4934, %v4928
  %v5541 = vpack.c.b16 %v4941, %v4935
  %v5542 = vpack.c.b16 %v4942, %v4936
  %v5543 = vpack.c.b16 %v4943, %v4937
  %v5544 = vpack.c.b16 %v4944, %v4938
  %v5545 = vpack.c.b16 %v4945, %v4939
  %v5546 = vpack.c.b16 %v4946, %v4940
  %v5547 = vpack.c.b16 %v4953, %v4947
  %v5548 = vpack.c.b16 %v4954, %v4948
  %v5549 = vpack.c.b16 %v4955, %v4949
  %v5550 = vpack.c.b16 %v4956, %v4950
  %v5551 = vpack.c.b16 %v4957, %v4951
  %v5552 = vpack.c.b16 %v4958, %v4952
  %v5553 = vpack.c.b16 %v4965, %v4959
  %v5554 = vpack.c.b16 %v4966, %v4960
  %v5555 = vpack.c.b16 %v4967, %v4961
  %v5556 = vpack.c.b16 %v4968, %v4962
  %v5557 = vpack.c.b16 %v4969, %v4963
  %v5558 = vpack.c.b16 %v4970, %v4964
  %v5559 = vpack.c.b16 %v4977, %v4971
  %v5560 = vpack.c.b16 %v4978, %v4972
  %v5561 = vpack.c.b16 %v4979, %v4973
  %v5562 = vpack.c.b16 %v4980, %v4974
  %v5563 = vpack.c.b16 %v4981, %v4975
  %v5564 = vpack.c.b16 %v4982, %v4976
  %v5565 = vpack.c.b16 %v4989, %v4983
  %v5566 = vpack.c.b16 %v4990, %v4984
  %v5567 = vpack.c.b16 %v4991, %v4985
  %v5568 = vpack.c.b16 %v4992, %v4986
  %v5569 = vpack.c.b16 %v4993, %v4987
  %v5570 = vpack.c.b16 %v4994, %v4988
  %v5571 = vpack.c.b16 %v5001, %v4995
  %v5572 = vpack.c.b16 %v5002, %v4996
  %v5573 = vpack.c.b16 %v5003, %v4997
  %v5574 = vpack.c.b16 %v5004, %v4998
  %v5575 = vpack.c.b16 %v5005, %v4999
  %v5576 = vpack.c.b16 %v5006, %v5000
  %v5577 = vpack.c.b16 %v5013, %v5007
  %v5578 = vpack.c.b16 %v5014, %v5008
  %v5579 = vpack.c.b16 %v5015, %v5009
  %v5580 = vpack.c.b16 %v5016, %v5010
  %v5581 = vpack.c.b16 %v5017, %v5011
  %v5582 = vpack.c.b16 %v5018, %v5012
  %v5583 = vpack.c.b16 %v5025, %v5019
  %v5584 = vpack.c.b16 %v5026, %v5020
  %v5585 = vpack.c.b16 %v5027, %v5021
  %v5586 = vpack.c.b16 %v5028, %v5022
  %v5587 = vpack.c.b16 %v5029, %v5023
  %v5588 = vpack.c.b16 %v5030, %v5024
  %v5589 = vpack.c.b16 %v5037, %v5031
  %v5590 = vpack.c.b16 %v5038, %v5032
  %v5591 = vpack.c.b16 %v5039, %v5033
  %v5592 = vpack.c.b16 %v5040, %v5034
  %v5593 = vpack.c.b16 %v5041, %v5035
  %v5594 = vpack.c.b16 %v5042, %v5036
  %v5595 = vpack.c.b16 %v5049, %v5043
  %v5596 = vpack.c.b16 %v5050, %v5044
  %v5597 = vpack.c.b16 %v5051, %v5045
  %v5598 = vpack.c.b16 %v5052, %v5046
  %v5599 = vpack.c.b16 %v5053, %v5047
  %v5600 = vpack.c.b16 %v5054, %v5048
  %v5601 = vpack.c.b16 %v5061, %v5055
  %v5602 = vpack.c.b16 %v5062, %v5056
  %v5603 = vpack.c.b16 %v5063, %v5057
  %v5604 = vpack.c.b16 %v5064, %v5058
  %v5605 = vpack.c.b16 %v5065, %v5059
  %v5606 = vpack.c.b16 %v5066, %v5060
  %v5607 = vpack.c.b16 %v5073, %v5067
  %v5608 = vpack.c.b16 %v5074, %v5068
  %v5609 = vpack.c.b16 %v5075, %v5069
  %v5610 = vpack.c.b16 %v5076, %v5070
  %v5611 = vpack.c.b16 %v5077, %v5071
  %v5612 = vpack.c.b16 %v5078, %v5072
  %v5613 = vpack.c.b16 %v5085, %v5079
  %v5614 = vpack.c.b16 %v5086, %v5080
  %v5615 = vpack.c.b16 %v5087, %v5081
  %v5616 = vpack.c.b16 %v5088, %v5082
  %v5617 = vpack.c.b16 %v5089, %v5083
  %v5618 = vpack.c.b16 %v5090, %v5084
  %v5619 = vpack.c.b16 %v5097, %v5091
  %v5620 = vpack.c.b16 %v5098, %v5092
  %v5621 = vpack.c.b16 %v5099, %v5093
  %v5622 = vpack.c.b16 %v5100, %v5094
  %v5623 = vpack.c.b16 %v5101, %v5095
  %v5624 = vpack.c.b16 %v5102, %v5096
  %v5625 = vpack.c.b16 %v5109, %v5103
  %v5626 = vpack.c.b16 %v5110, %v5104
  %v5627 = vpack.c.b16 %v5111, %v5105
  %v5628 = vpack.c.b16 %v5112, %v5106
  %v5629 = vpack.c.b16 %v5113, %v5107
  %v5630 = vpack.c.b16 %v5114, %v5108
  %v5631 = vpack.c.b16 %v5121, %v5115
  %v5632 = vpack.c.b16 %v5122, %v5116
  %v5633 = vpack.c.b16 %v5123, %v5117
  %v5634 = vpack.c.b16 %v5124, %v5118
  %v5635 = vpack.c.b16 %v5125, %v5119
  %v5636 = vpack.c.b16 %v5126, %v5120
  %v5637 = vpack.c.b16 %v5133, %v5127
  %v5638 = vpack.c.b16 %v5134, %v5128
  %v5639 = vpack.c.b16 %v5135, %v5129
  %v5640 = vpack.c.b16 %v5136, %v5130
  %v5641 = vpack.c.b16 %v5137, %v5131
  %v5642 = vpack.c.b16 %v5138, %v5132
  %v5643 = vpack.c.b16 %v5145, %v5139
  %v5644 = vpack.c.b16 %v5146, %v5140
  %v5645 = vpack.c.b16 %v5147, %v5141
  %v5646 = vpack.c.b16 %v5148, %v5142
  %v5647 = vpack.c.b16 %v5149, %v5143
  %v5648 = vpack.c.b16 %v5150, %v5144
  %v5649 = vpack.c.b16 %v5157, %v5151
  %v5650 = vpack.c.b16 %v5158, %v5152
  %v5651 = vpack.c.b16 %v5159, %v5153
  %v5652 = vpack.c.b16 %v5160, %v5154
  %v5653 = vpack.c.b16 %v5161, %v5155
  %v5654 = vpack.c.b16 %v5162, %v5156
  %v5655 = vpack.c.b16 %v5169, %v5163
  %v5656 = vpack.c.b16 %v5170, %v5164
  %v5657 = vpack.c.b16 %v5171, %v5165
  %v5658 = vpack.c.b16 %v5172, %v5166
  %v5659 = vpack.c.b16 %v5173, %v5167
  %v5660 = vpack.c.b16 %v5174, %v5168
  %v5661 = vpack.c.b16 %v5181, %v5175
  %v5662 = vpack.c.b16 %v5182, %v5176
  %v5663 = vpack.c.b16 %v5183, %v5177
  %v5664 = vpack.c.b16 %v5184, %v5178
  %v5665 = vpack.c.b16 %v5185, %v5179
  %v5666 = vpack.c.b16 %v5186, %v5180
  %v5667 = vpack.c.b16 %v5193, %v5187
  %v5668 = vpack.c.b16 %v5194, %v5188
  %v5669 = vpack.c.b16 %v5195, %v5189
  %v5670 = vpack.c.b16 %v5196, %v5190
  %v5671 = vpack.c.b16 %v5197, %v5191
  %v5672 = vpack.c.b16 %v5198, %v5192
  %v5673 = vpack.c.b16 %v5205, %v5199
  %v5674 = vpack.c.b16 %v5206, %v5200
  %v5675 = vpack.c.b16 %v5207, %v5201
  %v5676 = vpack.c.b16 %v5208, %v5202
  %v5677 = vpack.c.b16 %v5209, %v5203
  %v5678 = vpack.c.b16 %v5210, %v5204
  %v5679 = vpack.c.b16 %v5217, %v5211
  %v5680 = vpack.c.b16 %v5218, %v5212
  %v5681 = vpack.c.b16 %v5219, %v5213
  %v5682 = vpack.c.b16 %v5220, %v5214
  %v5683 = vpack.c.b16 %v5221, %v5215
  %v5684 = vpack.c.b16 %v5222, %v5216
  %v5685 = vpack.c.b16 %v5229, %v5223
  %v5686 = vpack.c.b16 %v5230, %v5224
  %v5687 = vpack.c.b16 %v5231, %v5225
  %v5688 = vpack.c.b16 %v5232, %v5226
  %v5689 = vpack.c.b16 %v5233, %v5227
  %v5690 = vpack.c.b16 %v5234, %v5228
  %v5691 = vpack.c.b16 %v5241, %v5235
  %v5692 = vpack.c.b16 %v5242, %v5236
  %v5693 = vpack.c.b16 %v5243, %v5237
  %v5694 = vpack.c.b16 %v5244, %v5238
  %v5695 = vpack.c.b16 %v5245, %v5239
  %v5696 = vpack.c.b16 %v5246, %v5240
  %v5697 = vpack.c.b16 %v5253, %v5247
  %v5698 = vpack.c.b16 %v5254, %v5248
  %v5699 = vpack.c.b16 %v5255, %v5249
  %v5700 = vpack.c.b16 %v5256, %v5250
  %v5701 = vpack.c.b16 %v5257, %v5251
  %v5702 = vpack.c.b16 %v5258, %v5252
  %v5703 = vpack.c.b16 %v5265, %v5259
  %v5704 = vpack.c.b16 %v5266, %v5260
  %v5705 = vpack.c.b16 %v5267, %v5261
  %v5706 = vpack.c.b16 %v5268, %v5262
  %v5707 = vpack.c.b16 %v5269, %v5263
  %v5708 = vpack.c.b16 %v5270, %v5264
  %v5709 = vpack.c.b16 %v5277, %v5271
  %v5710 = vpack.c.b16 %v5278, %v5272
  %v5711 = vpack.c.b16 %v5279, %v5273
  %v5712 = vpack.c.b16 %v5280, %v5274
  %v5713 = vpack.c.b16 %v5281, %v5275
  %v5714 = vpack.c.b16 %v5282, %v5276
  %v5715 = vpack.c.b16 %v5289, %v5283
  %v5716 = vpack.c.b16 %v5290, %v5284
  %v5717 = vpack.c.b16 %v5291, %v5285
  %v5718 = vpack.c.b16 %v5292, %v5286
  %v5719 = vpack.c.b16 %v5293, %v5287
  %v5720 = vpack.c.b16 %v5294, %v5288
  %v5721 = vpack.c.b16 %v5301, %v5295
  %v5722 = vpack.c.b16 %v5302, %v5296
  %v5723 = vpack.c.b16 %v5303, %v5297
  %v5724 = vpack.c.b16 %v5304, %v5298
  %v5725 = vpack.c.b16 %v5305, %v5299
  %v5726 = vpack.c.b16 %v5306, %v5300
  %v5727 = vpack.c.b16 %v5313, %v5307
  %v5728 = vpack.c.b16 %v5314, %v5308
  %v5729 = vpack.c.b16 %v5315, %v5309
  %v5730 = vpack.c.b16 %v5316, %v5310
  %v5731 = vpack.c.b16 %v5317, %v5311
  %v5732 = vpack.c.b16 %v5318, %v5312
  %v5733 = vpack.c.b16 %v5325, %v5319
  %v5734 = vpack.c.b16 %v5326, %v5320
  %v5735 = vpack.c.b16 %v5327, %v5321
  %v5736 = vpack.c.b16 %v5328, %v5322
  %v5737 = vpack.c.b16 %v5329, %v5323
  %v5738 = vpack.c.b16 %v5330, %v5324
  %v5739 = vpack.c.b16 %v5337, %v5331
  %v5740 = vpack.c.b16 %v5338, %v5332
  %v5741 = vpack.c.b16 %v5339, %v5333
  %v5742 = vpack.c.b16 %v5340, %v5334
  %v5743 = vpack.c.b16 %v5341, %v5335
  %v5744 = vpack.c.b16 %v5342, %v5336
  %v5745 = vpack.c.b16 %v5349, %v5343
  %v5746 = vpack.c.b16 %v5350, %v5344
  %v5747 = vpack.c.b16 %v5351, %v5345
  %v5748 = vpack.c.b16 %v5352, %v5346
  %v5749 = vpack.c.b16 %v5353, %v5347
  %v5750 = vpack.c.b16 %v5354, %v5348
  %v5751 = vpack.c.b16 %v5361, %v5355
  %v5752 = vpack.c.b16 %v5362, %v5356
  %v5753 = vpack.c.b16 %v5363, %v5357
  %v5754 = vpack.c.b16 %v5364, %v5358
  %v5755 = vpack.c.b16 %v5365, %v5359
  %v5756 = vpack.c.b16 %v5366, %v5360
  %v5757 = vpack.c.b16 %v5373, %v5367
  %v5758 = vpack.c.b16 %v5374, %v5368
  %v5759 = vpack.c.b16 %v5375, %v5369
  %v5760 = vpack.c.b16 %v5376, %v5370
  %v5761 = vpack.c.b16 %v5377, %v5371
  %v5762 = vpack.c.b16 %v5378, %v5372
  %v5763 = vpack.c.b16 %v5385, %v5379
  %v5764 = vpack.c.b16 %v5386, %v5380
  %v5765 = vpack.c.b16 %v5387, %v5381
  %v5766 = vpack.c.b16 %v5388, %v5382
  %v5767 = vpack.c.b16 %v5389, %v5383
  %v5768 = vpack.c.b16 %v5390, %v5384
  %v5769 = vpack.c.b16 %v5397, %v5391
  %v5770 = vpack.c.b16 %v5398, %v5392
  %v5771 = vpack.c.b16 %v5399, %v5393
  %v5772 = vpack.c.b16 %v5400, %v5394
  %v5773 = vpack.c.b16 %v5401, %v5395
  %v5774 = vpack.c.b16 %v5402, %v5396
  %v5775 = vpack.c.b16 %v5409, %v5403
  %v5776 = vpack.c.b16 %v5410, %v5404
  %v5777 = vpack.c.b16 %v5411, %v5405
  %v5778 = vpack.c.b16 %v5412, %v5406
  %v5779 = vpack.c.b16 %v5413, %v5407
  %v5780 = vpack.c.b16 %v5414, %v5408
  %v5781 = vpack.c.b16 %v5421, %v5415
  %v5782 = vpack.c.b16 %v5422, %v5416
  %v5783 = vpack.c.b16 %v5423, %v5417
  %v5784 = vpack.c.b16 %v5424, %v5418
  %v5785 = vpack.c.b16 %v5425, %v5419
  %v5786 = vpack.c.b16 %v5426, %v5420
  %v5787 = vpack.c.b16 %v5433, %v5427
  %v5788 = vpack.c.b16 %v5434, %v5428
  %v5789 = vpack.c.b16 %v5435, %v5429
  %v5790 = vpack.c.b16 %v5436, %v5430
  %v5791 = vpack.c.b16 %v5437, %v5431
  %v5792 = vpack.c.b16 %v5438, %v5432
  %v5793 = vpack.c.b16 %v5445, %v5439
  %v5794 = vpack.c.b16 %v5446, %v5440
  %v5795 = vpack.c.b16 %v5447, %v5441
  %v5796 = vpack.c.b16 %v5448, %v5442
  %v5797 = vpack.c.b16 %v5449, %v5443
  %v5798 = vpack.c.b16 %v5450, %v5444
  %v5799 = vpack.c.b16 %v5457, %v5451
  %v5800 = vpack.c.b16 %v5458, %v5452
  %v5801 = vpack.c.b16 %v5459, %v5453
  %v5802 = vpack.c.b16 %v5460, %v5454
  %v5803 = vpack.c.b16 %v5461, %v5455
  %v5804 = vpack.c.b16 %v5462, %v5456
  %v5805 = vpack.c.b16 %v5469, %v5463
  %v5806 = vpack.c.b16 %v5470, %v5464
  %v5807 = vpack.c.b16 %v5471, %v5465
  %v5808 = vpack.c.b16 %v5472, %v5466
  %v5809 = vpack.c.b16 %v5473, %v5467
  %v5810 = vpack.c.b16 %v5474, %v5468
  %v5811 = vpack.c.b16 %v5481, %v5475
  %v5812 = vpack.c.b16 %v5482, %v5476
  %v5813 = vpack.c.b16 %v5483, %v5477
  %v5814 = vpack.c.b16 %v5484, %v5478
  %v5815 = vpack.c.b16 %v5485, %v5479
  %v5816 = vpack.c.b16 %v5486, %v5480
  %v5817 = vpack.c.b16 %v5493, %v5487
  %v5818 = vpack.c.b16 %v5494, %v5488
  %v5819 = vpack.c.b16 %v5495, %v5489
  %v5820 = vpack.c.b16 %v5496, %v5490
  %v5821 = vpack.c.b16 %v5497, %v5491
  %v5822 = vpack.c.b16 %v5498, %v5492
  %v5823 = vpack.c.b16 %v5505, %v5499
  %v5824 = vpack.c.b16 %v5506, %v5500
  %v5825 = vpack.c.b16 %v5507, %v5501
  %v5826 = vpack.c.b16 %v5508, %v5502
  %v5827 = vpack.c.b16 %v5509, %v5503
  %v5828 = vpack.c.b16 %v5510, %v5504
  %v5829 = vpack.c.b16 %v5517, %v5511
  %v5830 = vpack.c.b16 %v5518, %v5512
  %v5831 = vpack.c.b16 %v5519, %v5513
  %v5832 = vpack.c.b16 %v5520, %v5514
  %v5833 = vpack.c.b16 %v5521, %v5515
  %v5834 = vpack.c.b16 %v5522, %v5516
  %vm6141 = vcmask 490496
  %v6143 = vsel %vm6141, %v4242, 0
  %vm6145 = vcmask 1045504
  %v6147 = vsel %vm6145, %v5829, 0
  %v6150 = vsel %vm6145, %v5830, 0
  %v6153 = vsel %vm6145, %v5831, 0
  %v6156 = vsel %vm6145, %v5832, 0
  %v6159 = vsel %vm6145, %v5833, 0
  %v6162 = vsel %vm6145, %v5834, 0
  %6164 = vmatprep.subr.bf16.mxu0 %v5524
  %6165 = vmatpush1.bf16.msra.mxu0 %v5523
  %6166 = vmatprep.subr.bf16.mxu0 %v5530
  %6167 = vmatpush1.bf16.msra.mxu0 %v5529
  %6168 = vmatprep.subr.bf16.mxu0 %v5536
  %6169 = vmatpush1.bf16.msra.mxu0 %v5535
  %6170 = vmatprep.subr.bf16.mxu0 %v5542
  %6171 = vmatpush1.bf16.msra.mxu0 %v5541
  %6172 = vmatprep.subr.bf16.mxu0 %v5548
  %6173 = vmatpush1.bf16.msra.mxu0 %v5547
  %6174 = vmatprep.subr.bf16.mxu0 %v5554
  %6175 = vmatpush1.bf16.msra.mxu0 %v5553
  %6176 = vmatprep.subr.bf16.mxu0 %v5560
  %6177 = vmatpush1.bf16.msra.mxu0 %v5559
  %6178 = vmatprep.subr.bf16.mxu0 %v5566
  %6179 = vmatpush1.bf16.msra.mxu0 %v5565
  %6180 = vmatprep.subr.bf16.mxu0 %v5572
  %6181 = vmatpush1.bf16.msra.mxu0 %v5571
  %6182 = vmatprep.subr.bf16.mxu0 %v5578
  %6183 = vmatpush1.bf16.msra.mxu0 %v5577
  %6184 = vmatprep.subr.bf16.mxu0 %v5584
  %6185 = vmatpush1.bf16.msra.mxu0 %v5583
  %6186 = vmatprep.subr.bf16.mxu0 %v5590
  %6187 = vmatpush1.bf16.msra.mxu0 %v5589
  %6188 = vmatprep.subr.bf16.mxu0 %v5596
  %6189 = vmatpush1.bf16.msra.mxu0 %v5595
  %6190 = vmatprep.subr.bf16.mxu0 %v5602
  %6191 = vmatpush1.bf16.msra.mxu0 %v5601
  %6192 = vmatprep.subr.bf16.mxu0 %v5608
  %6193 = vmatpush1.bf16.msra.mxu0 %v5607
  %6194 = vmatprep.subr.bf16.mxu0 %v5614
  %6195 = vmatpush1.bf16.msra.mxu0 %v5613
  %6196 = vmatprep.mubr.bf16.mxu0 %v4237
  %6197 = vmatmul.mubr.bf16.gmra.mrb[0].mxu0 %v4236
  %v6198 = vpop.f32.mrb[0].mxu0
  %v6199 = vadd.f32 %v4560, %v6198
  %v6200 = vpop.f32.mrb[0].mxu0
  %v6201 = vadd.f32 %v4564, %v6200
  %v6202 = vpop.f32.mrb[0].mxu0
  %v6203 = vpop.f32.mrb[0].mxu0
  %6204 = vdwg.mxu0
  %6205 = vmatprep.subr.bf16.mxu0 %v5620
  %6206 = vmatpush1.bf16.msra.mxu0 %v5619
  %6207 = vmatprep.subr.bf16.mxu0 %v5626
  %6208 = vmatpush1.bf16.msra.mxu0 %v5625
  %6209 = vmatprep.subr.bf16.mxu0 %v5632
  %6210 = vmatpush1.bf16.msra.mxu0 %v5631
  %6211 = vmatprep.subr.bf16.mxu0 %v5638
  %6212 = vmatpush1.bf16.msra.mxu0 %v5637
  %6213 = vmatprep.subr.bf16.mxu0 %v5644
  %6214 = vmatpush1.bf16.msra.mxu0 %v5643
  %6215 = vmatprep.subr.bf16.mxu0 %v5650
  %6216 = vmatpush1.bf16.msra.mxu0 %v5649
  %6217 = vmatprep.subr.bf16.mxu0 %v5656
  %6218 = vmatpush1.bf16.msra.mxu0 %v5655
  %6219 = vmatprep.subr.bf16.mxu0 %v5662
  %6220 = vmatpush1.bf16.msra.mxu0 %v5661
  %6221 = vmatprep.subr.bf16.mxu0 %v5668
  %6222 = vmatpush1.bf16.msra.mxu0 %v5667
  %6223 = vmatprep.subr.bf16.mxu0 %v5674
  %6224 = vmatpush1.bf16.msra.mxu0 %v5673
  %6225 = vmatprep.subr.bf16.mxu0 %v5680
  %6226 = vmatpush1.bf16.msra.mxu0 %v5679
  %6227 = vmatprep.subr.bf16.mxu0 %v5686
  %6228 = vmatpush1.bf16.msra.mxu0 %v5685
  %6229 = vmatprep.subr.bf16.mxu0 %v5692
  %6230 = vmatpush1.bf16.msra.mxu0 %v5691
  %6231 = vmatprep.subr.bf16.mxu0 %v5698
  %6232 = vmatpush1.bf16.msra.mxu0 %v5697
  %6233 = vmatprep.subr.bf16.mxu0 %v5704
  %6234 = vmatpush1.bf16.msra.mxu0 %v5703
  %6235 = vmatprep.subr.bf16.mxu0 %v5710
  %6236 = vmatpush1.bf16.msra.mxu0 %v5709
  %6237 = vmatprep.mubr.bf16.mxu0 %v4239
  %6238 = vmatmul.mubr.bf16.gmra.mrb[0].mxu0 %v4238
  %v6239 = vpop.f32.mrb[0].mxu0
  %v6240 = vadd.f32 %v6199, %v6239
  %v6241 = vpop.f32.mrb[0].mxu0
  %v6242 = vadd.f32 %v6201, %v6241
  %v6243 = vpop.f32.mrb[0].mxu0
  %v6244 = vpop.f32.mrb[0].mxu0
  %6245 = vdwg.mxu0
  %6246 = vmatprep.subr.bf16.mxu0 %v5716
  %6247 = vmatpush1.bf16.msra.mxu0 %v5715
  %6248 = vmatprep.subr.bf16.mxu0 %v5722
  %6249 = vmatpush1.bf16.msra.mxu0 %v5721
  %6250 = vmatprep.subr.bf16.mxu0 %v5728
  %6251 = vmatpush1.bf16.msra.mxu0 %v5727
  %6252 = vmatprep.subr.bf16.mxu0 %v5734
  %6253 = vmatpush1.bf16.msra.mxu0 %v5733
  %6254 = vmatprep.subr.bf16.mxu0 %v5740
  %6255 = vmatpush1.bf16.msra.mxu0 %v5739
  %6256 = vmatprep.subr.bf16.mxu0 %v5746
  %6257 = vmatpush1.bf16.msra.mxu0 %v5745
  %6258 = vmatprep.subr.bf16.mxu0 %v5752
  %6259 = vmatpush1.bf16.msra.mxu0 %v5751
  %6260 = vmatprep.subr.bf16.mxu0 %v5758
  %6261 = vmatpush1.bf16.msra.mxu0 %v5757
  %6262 = vmatprep.subr.bf16.mxu0 %v5764
  %6263 = vmatpush1.bf16.msra.mxu0 %v5763
  %6264 = vmatprep.subr.bf16.mxu0 %v5770
  %6265 = vmatpush1.bf16.msra.mxu0 %v5769
  %6266 = vmatprep.subr.bf16.mxu0 %v5776
  %6267 = vmatpush1.bf16.msra.mxu0 %v5775
  %6268 = vmatprep.subr.bf16.mxu0 %v5782
  %6269 = vmatpush1.bf16.msra.mxu0 %v5781
  %6270 = vmatprep.subr.bf16.mxu0 %v5788
  %6271 = vmatpush1.bf16.msra.mxu0 %v5787
  %6272 = vmatprep.subr.bf16.mxu0 %v5794
  %6273 = vmatpush1.bf16.msra.mxu0 %v5793
  %6274 = vmatprep.subr.bf16.mxu0 %v5800
  %6275 = vmatpush1.bf16.msra.mxu0 %v5799
  %6276 = vmatprep.subr.bf16.mxu0 %v5806
  %6277 = vmatpush1.bf16.msra.mxu0 %v5805
  %6278 = vmatprep.mubr.bf16.mxu0 %v4241
  %6279 = vmatmul.mubr.bf16.gmra.mrb[0].mxu0 %v4240
  %v6280 = vpop.f32.mrb[0].mxu0
  %v6281 = vadd.f32 %v6240, %v6280
  %v6282 = vpop.f32.mrb[0].mxu0
  %v6283 = vadd.f32 %v6242, %v6282
  %v6284 = vpop.f32.mrb[0].mxu0
  %v6285 = vpop.f32.mrb[0].mxu0
  %6286 = vdwg.mxu0
  %6287 = vmatprep.subr.bf16.mxu0 %v5812
  %6288 = vmatpush1.bf16.msra.mxu0 %v5811
  %6289 = vmatprep.subr.bf16.mxu0 %v5818
  %6290 = vmatpush1.bf16.msra.mxu0 %v5817
  %6291 = vmatprep.subr.bf16.mxu0 %v5824
  %6292 = vmatpush1.bf16.msra.mxu0 %v5823
  %6293 = vmatprep.subr.bf16.mxu0 %v6150
  %6294 = vmatpush1.bf16.msra.mxu0 %v6147
  %6295 = vmatprep.subr.bf16.mxu0 0
  %6296 = vmatpush1.bf16.msra.mxu0 0
  %6297 = vmatprep.subr.bf16.mxu0 0
  %6298 = vmatpush1.bf16.msra.mxu0 0
  %6299 = vmatprep.subr.bf16.mxu0 0
  %6300 = vmatpush1.bf16.msra.mxu0 0
  %6301 = vmatprep.subr.bf16.mxu0 0
  %6302 = vmatpush1.bf16.msra.mxu0 0
  %6303 = vmatprep.subr.bf16.mxu0 0
  %6304 = vmatpush1.bf16.msra.mxu0 0
  %6305 = vmatprep.subr.bf16.mxu0 0
  %6306 = vmatpush1.bf16.msra.mxu0 0
  %6307 = vmatprep.subr.bf16.mxu0 0
  %6308 = vmatpush1.bf16.msra.mxu0 0
  %6309 = vmatprep.subr.bf16.mxu0 0
  %6310 = vmatpush1.bf16.msra.mxu0 0
  %6311 = vmatprep.subr.bf16.mxu0 0
  %6312 = vmatpush1.bf16.msra.mxu0 0
  %6313 = vmatprep.subr.bf16.mxu0 0
  %6314 = vmatpush1.bf16.msra.mxu0 0
  %6315 = vmatprep.subr.bf16.mxu0 0
  %6316 = vmatpush1.bf16.msra.mxu0 0
  %6317 = vmatprep.subr.bf16.mxu0 0
  %6318 = vmatpush1.bf16.msra.mxu0 0
  %6319 = vmatprep.mubr.bf16.mxu0 0
  %6320 = vmatmul.mubr.bf16.gmra.mrb[0].mxu0 %v6143
  %v6321 = vpop.f32.mrb[0].mxu0
  %v6322 = vadd.f32 %v6281, %v6321
  %v6323 = vpop.f32.mrb[0].mxu0
  %v6324 = vadd.f32 %v6283, %v6323
  %v6325 = vpop.f32.mrb[0].mxu0
  %v6326 = vpop.f32.mrb[0].mxu0
  %6327 = vdwg.mxu0
  %6328 = vmatprep.subr.bf16.mxu0 %v5526
  %6329 = vmatpush1.bf16.msra.mxu0 %v5525
  %6330 = vmatprep.subr.bf16.mxu0 %v5532
  %6331 = vmatpush1.bf16.msra.mxu0 %v5531
  %6332 = vmatprep.subr.bf16.mxu0 %v5538
  %6333 = vmatpush1.bf16.msra.mxu0 %v5537
  %6334 = vmatprep.subr.bf16.mxu0 %v5544
  %6335 = vmatpush1.bf16.msra.mxu0 %v5543
  %6336 = vmatprep.subr.bf16.mxu0 %v5550
  %6337 = vmatpush1.bf16.msra.mxu0 %v5549
  %6338 = vmatprep.subr.bf16.mxu0 %v5556
  %6339 = vmatpush1.bf16.msra.mxu0 %v5555
  %6340 = vmatprep.subr.bf16.mxu0 %v5562
  %6341 = vmatpush1.bf16.msra.mxu0 %v5561
  %6342 = vmatprep.subr.bf16.mxu0 %v5568
  %6343 = vmatpush1.bf16.msra.mxu0 %v5567
  %6344 = vmatprep.subr.bf16.mxu0 %v5574
  %6345 = vmatpush1.bf16.msra.mxu0 %v5573
  %6346 = vmatprep.subr.bf16.mxu0 %v5580
  %6347 = vmatpush1.bf16.msra.mxu0 %v5579
  %6348 = vmatprep.subr.bf16.mxu0 %v5586
  %6349 = vmatpush1.bf16.msra.mxu0 %v5585
  %6350 = vmatprep.subr.bf16.mxu0 %v5592
  %6351 = vmatpush1.bf16.msra.mxu0 %v5591
  %6352 = vmatprep.subr.bf16.mxu0 %v5598
  %6353 = vmatpush1.bf16.msra.mxu0 %v5597
  %6354 = vmatprep.subr.bf16.mxu0 %v5604
  %6355 = vmatpush1.bf16.msra.mxu0 %v5603
  %6356 = vmatprep.subr.bf16.mxu0 %v5610
  %6357 = vmatpush1.bf16.msra.mxu0 %v5609
  %6358 = vmatprep.subr.bf16.mxu0 %v5616
  %6359 = vmatpush1.bf16.msra.mxu0 %v5615
  %6360 = vmatprep.mubr.bf16.mxu0 %v4237
  %6361 = vmatmul.mubr.bf16.gmra.mrb[0].mxu0 %v4236
  %v6362 = vpop.f32.mrb[0].mxu0
  %v6363 = vadd.f32 %v4568, %v6362
  %v6364 = vpop.f32.mrb[0].mxu0
  %v6365 = vadd.f32 %v4572, %v6364
  %v6366 = vpop.f32.mrb[0].mxu0
  %v6367 = vpop.f32.mrb[0].mxu0
  %6368 = vdwg.mxu0
  %6369 = vmatprep.subr.bf16.mxu0 %v5622
  %6370 = vmatpush1.bf16.msra.mxu0 %v5621
  %6371 = vmatprep.subr.bf16.mxu0 %v5628
  %6372 = vmatpush1.bf16.msra.mxu0 %v5627
  %6373 = vmatprep.subr.bf16.mxu0 %v5634
  %6374 = vmatpush1.bf16.msra.mxu0 %v5633
  %6375 = vmatprep.subr.bf16.mxu0 %v5640
  %6376 = vmatpush1.bf16.msra.mxu0 %v5639
  %6377 = vmatprep.subr.bf16.mxu0 %v5646
  %6378 = vmatpush1.bf16.msra.mxu0 %v5645
  %6379 = vmatprep.subr.bf16.mxu0 %v5652
  %6380 = vmatpush1.bf16.msra.mxu0 %v5651
  %6381 = vmatprep.subr.bf16.mxu0 %v5658
  %6382 = vmatpush1.bf16.msra.mxu0 %v5657
  %6383 = vmatprep.subr.bf16.mxu0 %v5664
  %6384 = vmatpush1.bf16.msra.mxu0 %v5663
  %6385 = vmatprep.subr.bf16.mxu0 %v5670
  %6386 = vmatpush1.bf16.msra.mxu0 %v5669
  %6387 = vmatprep.subr.bf16.mxu0 %v5676
  %6388 = vmatpush1.bf16.msra.mxu0 %v5675
  %6389 = vmatprep.subr.bf16.mxu0 %v5682
  %6390 = vmatpush1.bf16.msra.mxu0 %v5681
  %6391 = vmatprep.subr.bf16.mxu0 %v5688
  %6392 = vmatpush1.bf16.msra.mxu0 %v5687
  %6393 = vmatprep.subr.bf16.mxu0 %v5694
  %6394 = vmatpush1.bf16.msra.mxu0 %v5693
  %6395 = vmatprep.subr.bf16.mxu0 %v5700
  %6396 = vmatpush1.bf16.msra.mxu0 %v5699
  %6397 = vmatprep.subr.bf16.mxu0 %v5706
  %6398 = vmatpush1.bf16.msra.mxu0 %v5705
  %6399 = vmatprep.subr.bf16.mxu0 %v5712
  %6400 = vmatpush1.bf16.msra.mxu0 %v5711
  %6401 = vmatprep.mubr.bf16.mxu0 %v4239
  %6402 = vmatmul.mubr.bf16.gmra.mrb[0].mxu0 %v4238
  %v6403 = vpop.f32.mrb[0].mxu0
  %v6404 = vadd.f32 %v6363, %v6403
  %v6405 = vpop.f32.mrb[0].mxu0
  %v6406 = vadd.f32 %v6365, %v6405
  %v6407 = vpop.f32.mrb[0].mxu0
  %v6408 = vpop.f32.mrb[0].mxu0
  %6409 = vdwg.mxu0
  %6410 = vmatprep.subr.bf16.mxu0 %v5718
  %6411 = vmatpush1.bf16.msra.mxu0 %v5717
  %6412 = vmatprep.subr.bf16.mxu0 %v5724
  %6413 = vmatpush1.bf16.msra.mxu0 %v5723
  %6414 = vmatprep.subr.bf16.mxu0 %v5730
  %6415 = vmatpush1.bf16.msra.mxu0 %v5729
  %6416 = vmatprep.subr.bf16.mxu0 %v5736
  %6417 = vmatpush1.bf16.msra.mxu0 %v5735
  %6418 = vmatprep.subr.bf16.mxu0 %v5742
  %6419 = vmatpush1.bf16.msra.mxu0 %v5741
  %6420 = vmatprep.subr.bf16.mxu0 %v5748
  %6421 = vmatpush1.bf16.msra.mxu0 %v5747
  %6422 = vmatprep.subr.bf16.mxu0 %v5754
  %6423 = vmatpush1.bf16.msra.mxu0 %v5753
  %6424 = vmatprep.subr.bf16.mxu0 %v5760
  %6425 = vmatpush1.bf16.msra.mxu0 %v5759
  %6426 = vmatprep.subr.bf16.mxu0 %v5766
  %6427 = vmatpush1.bf16.msra.mxu0 %v5765
  %6428 = vmatprep.subr.bf16.mxu0 %v5772
  %6429 = vmatpush1.bf16.msra.mxu0 %v5771
  %6430 = vmatprep.subr.bf16.mxu0 %v5778
  %6431 = vmatpush1.bf16.msra.mxu0 %v5777
  %6432 = vmatprep.subr.bf16.mxu0 %v5784
  %6433 = vmatpush1.bf16.msra.mxu0 %v5783
  %6434 = vmatprep.subr.bf16.mxu0 %v5790
  %6435 = vmatpush1.bf16.msra.mxu0 %v5789
  %6436 = vmatprep.subr.bf16.mxu0 %v5796
  %6437 = vmatpush1.bf16.msra.mxu0 %v5795
  %6438 = vmatprep.subr.bf16.mxu0 %v5802
  %6439 = vmatpush1.bf16.msra.mxu0 %v5801
  %6440 = vmatprep.subr.bf16.mxu0 %v5808
  %6441 = vmatpush1.bf16.msra.mxu0 %v5807
  %6442 = vmatprep.mubr.bf16.mxu0 %v4241
  %6443 = vmatmul.mubr.bf16.gmra.mrb[0].mxu0 %v4240
  %v6444 = vpop.f32.mrb[0].mxu0
  %v6445 = vadd.f32 %v6404, %v6444
  %v6446 = vpop.f32.mrb[0].mxu0
  %v6447 = vadd.f32 %v6406, %v6446
  %v6448 = vpop.f32.mrb[0].mxu0
  %v6449 = vpop.f32.mrb[0].mxu0
  %6450 = vdwg.mxu0
  %6451 = vmatprep.subr.bf16.mxu0 %v5814
  %6452 = vmatpush1.bf16.msra.mxu0 %v5813
  %6453 = vmatprep.subr.bf16.mxu0 %v5820
  %6454 = vmatpush1.bf16.msra.mxu0 %v5819
  %6455 = vmatprep.subr.bf16.mxu0 %v5826
  %6456 = vmatpush1.bf16.msra.mxu0 %v5825
  %6457 = vmatprep.subr.bf16.mxu0 %v6156
  %6458 = vmatpush1.bf16.msra.mxu0 %v6153
  %6459 = vmatprep.subr.bf16.mxu0 0
  %6460 = vmatpush1.bf16.msra.mxu0 0
  %6461 = vmatprep.subr.bf16.mxu0 0
  %6462 = vmatpush1.bf16.msra.mxu0 0
  %6463 = vmatprep.subr.bf16.mxu0 0
  %6464 = vmatpush1.bf16.msra.mxu0 0
  %6465 = vmatprep.subr.bf16.mxu0 0
  %6466 = vmatpush1.bf16.msra.mxu0 0
  %6467 = vmatprep.subr.bf16.mxu0 0
  %6468 = vmatpush1.bf16.msra.mxu0 0
  %6469 = vmatprep.subr.bf16.mxu0 0
  %6470 = vmatpush1.bf16.msra.mxu0 0
  %6471 = vmatprep.subr.bf16.mxu0 0
  %6472 = vmatpush1.bf16.msra.mxu0 0
  %6473 = vmatprep.subr.bf16.mxu0 0
  %6474 = vmatpush1.bf16.msra.mxu0 0
  %6475 = vmatprep.subr.bf16.mxu0 0
  %6476 = vmatpush1.bf16.msra.mxu0 0
  %6477 = vmatprep.subr.bf16.mxu0 0
  %6478 = vmatpush1.bf16.msra.mxu0 0
  %6479 = vmatprep.subr.bf16.mxu0 0
  %6480 = vmatpush1.bf16.msra.mxu0 0
  %6481 = vmatprep.subr.bf16.mxu0 0
  %6482 = vmatpush1.bf16.msra.mxu0 0
  %6483 = vmatprep.mubr.bf16.mxu0 0
  %6484 = vmatmul.mubr.bf16.gmra.mrb[0].mxu0 %v6143
  %v6485 = vpop.f32.mrb[0].mxu0
  %v6486 = vadd.f32 %v6445, %v6485
  %v6487 = vpop.f32.mrb[0].mxu0
  %v6488 = vadd.f32 %v6447, %v6487
  %v6489 = vpop.f32.mrb[0].mxu0
  %v6490 = vpop.f32.mrb[0].mxu0
  %6491 = vdwg.mxu0
  %6492 = vmatprep.subr.bf16.mxu0 %v5528
  %6493 = vmatpush1.bf16.msra.mxu0 %v5527
  %6494 = vmatprep.subr.bf16.mxu0 %v5534
  %6495 = vmatpush1.bf16.msra.mxu0 %v5533
  %6496 = vmatprep.subr.bf16.mxu0 %v5540
  %6497 = vmatpush1.bf16.msra.mxu0 %v5539
  %6498 = vmatprep.subr.bf16.mxu0 %v5546
  %6499 = vmatpush1.bf16.msra.mxu0 %v5545
  %6500 = vmatprep.subr.bf16.mxu0 %v5552
  %6501 = vmatpush1.bf16.msra.mxu0 %v5551
  %6502 = vmatprep.subr.bf16.mxu0 %v5558
  %6503 = vmatpush1.bf16.msra.mxu0 %v5557
  %6504 = vmatprep.subr.bf16.mxu0 %v5564
  %6505 = vmatpush1.bf16.msra.mxu0 %v5563
  %6506 = vmatprep.subr.bf16.mxu0 %v5570
  %6507 = vmatpush1.bf16.msra.mxu0 %v5569
  %6508 = vmatprep.subr.bf16.mxu0 %v5576
  %6509 = vmatpush1.bf16.msra.mxu0 %v5575
  %6510 = vmatprep.subr.bf16.mxu0 %v5582
  %6511 = vmatpush1.bf16.msra.mxu0 %v5581
  %6512 = vmatprep.subr.bf16.mxu0 %v5588
  %6513 = vmatpush1.bf16.msra.mxu0 %v5587
  %6514 = vmatprep.subr.bf16.mxu0 %v5594
  %6515 = vmatpush1.bf16.msra.mxu0 %v5593
  %6516 = vmatprep.subr.bf16.mxu0 %v5600
  %6517 = vmatpush1.bf16.msra.mxu0 %v5599
  %6518 = vmatprep.subr.bf16.mxu0 %v5606
  %6519 = vmatpush1.bf16.msra.mxu0 %v5605
  %6520 = vmatprep.subr.bf16.mxu0 %v5612
  %6521 = vmatpush1.bf16.msra.mxu0 %v5611
  %6522 = vmatprep.subr.bf16.mxu0 %v5618
  %6523 = vmatpush1.bf16.msra.mxu0 %v5617
  %6524 = vmatprep.mubr.bf16.mxu0 %v4237
  %6525 = vmatmul.mubr.bf16.gmra.mrb[0].mxu0 %v4236
  %v6526 = vpop.f32.mrb[0].mxu0
  %v6527 = vadd.f32 %v4576, %v6526
  %v6528 = vpop.f32.mrb[0].mxu0
  %v6529 = vadd.f32 %v4580, %v6528
  %v6530 = vpop.f32.mrb[0].mxu0
  %v6531 = vpop.f32.mrb[0].mxu0
  %6532 = vdwg.mxu0
  %6533 = vmatprep.subr.bf16.mxu0 %v5624
  %6534 = vmatpush1.bf16.msra.mxu0 %v5623
  %6535 = vmatprep.subr.bf16.mxu0 %v5630
  %6536 = vmatpush1.bf16.msra.mxu0 %v5629
  %6537 = vmatprep.subr.bf16.mxu0 %v5636
  %6538 = vmatpush1.bf16.msra.mxu0 %v5635
  %6539 = vmatprep.subr.bf16.mxu0 %v5642
  %6540 = vmatpush1.bf16.msra.mxu0 %v5641
  %6541 = vmatprep.subr.bf16.mxu0 %v5648
  %6542 = vmatpush1.bf16.msra.mxu0 %v5647
  %6543 = vmatprep.subr.bf16.mxu0 %v5654
  %6544 = vmatpush1.bf16.msra.mxu0 %v5653
  %6545 = vmatprep.subr.bf16.mxu0 %v5660
  %6546 = vmatpush1.bf16.msra.mxu0 %v5659
  %6547 = vmatprep.subr.bf16.mxu0 %v5666
  %6548 = vmatpush1.bf16.msra.mxu0 %v5665
  %6549 = vmatprep.subr.bf16.mxu0 %v5672
  %6550 = vmatpush1.bf16.msra.mxu0 %v5671
  %6551 = vmatprep.subr.bf16.mxu0 %v5678
  %6552 = vmatpush1.bf16.msra.mxu0 %v5677
  %6553 = vmatprep.subr.bf16.mxu0 %v5684
  %6554 = vmatpush1.bf16.msra.mxu0 %v5683
  %6555 = vmatprep.subr.bf16.mxu0 %v5690
  %6556 = vmatpush1.bf16.msra.mxu0 %v5689
  %6557 = vmatprep.subr.bf16.mxu0 %v5696
  %6558 = vmatpush1.bf16.msra.mxu0 %v5695
  %6559 = vmatprep.subr.bf16.mxu0 %v5702
  %6560 = vmatpush1.bf16.msra.mxu0 %v5701
  %6561 = vmatprep.subr.bf16.mxu0 %v5708
  %6562 = vmatpush1.bf16.msra.mxu0 %v5707
  %6563 = vmatprep.subr.bf16.mxu0 %v5714
  %6564 = vmatpush1.bf16.msra.mxu0 %v5713
  %6565 = vmatprep.mubr.bf16.mxu0 %v4239
  %6566 = vmatmul.mubr.bf16.gmra.mrb[0].mxu0 %v4238
  %v6567 = vpop.f32.mrb[0].mxu0
  %v6568 = vadd.f32 %v6527, %v6567
  %v6569 = vpop.f32.mrb[0].mxu0
  %v6570 = vadd.f32 %v6529, %v6569
  %v6571 = vpop.f32.mrb[0].mxu0
  %v6572 = vpop.f32.mrb[0].mxu0
  %6573 = vdwg.mxu0
  %6574 = vmatprep.subr.bf16.mxu0 %v5720
  %6575 = vmatpush1.bf16.msra.mxu0 %v5719
  %6576 = vmatprep.subr.bf16.mxu0 %v5726
  %6577 = vmatpush1.bf16.msra.mxu0 %v5725
  %6578 = vmatprep.subr.bf16.mxu0 %v5732
  %6579 = vmatpush1.bf16.msra.mxu0 %v5731
  %6580 = vmatprep.subr.bf16.mxu0 %v5738
  %6581 = vmatpush1.bf16.msra.mxu0 %v5737
  %6582 = vmatprep.subr.bf16.mxu0 %v5744
  %6583 = vmatpush1.bf16.msra.mxu0 %v5743
  %6584 = vmatprep.subr.bf16.mxu0 %v5750
  %6585 = vmatpush1.bf16.msra.mxu0 %v5749
  %6586 = vmatprep.subr.bf16.mxu0 %v5756
  %6587 = vmatpush1.bf16.msra.mxu0 %v5755
  %6588 = vmatprep.subr.bf16.mxu0 %v5762
  %6589 = vmatpush1.bf16.msra.mxu0 %v5761
  %6590 = vmatprep.subr.bf16.mxu0 %v5768
  %6591 = vmatpush1.bf16.msra.mxu0 %v5767
  %6592 = vmatprep.subr.bf16.mxu0 %v5774
  %6593 = vmatpush1.bf16.msra.mxu0 %v5773
  %6594 = vmatprep.subr.bf16.mxu0 %v5780
  %6595 = vmatpush1.bf16.msra.mxu0 %v5779
  %6596 = vmatprep.subr.bf16.mxu0 %v5786
  %6597 = vmatpush1.bf16.msra.mxu0 %v5785
  %6598 = vmatprep.subr.bf16.mxu0 %v5792
  %6599 = vmatpush1.bf16.msra.mxu0 %v5791
  %6600 = vmatprep.subr.bf16.mxu0 %v5798
  %6601 = vmatpush1.bf16.msra.mxu0 %v5797
  %6602 = vmatprep.subr.bf16.mxu0 %v5804
  %6603 = vmatpush1.bf16.msra.mxu0 %v5803
  %6604 = vmatprep.subr.bf16.mxu0 %v5810
  %6605 = vmatpush1.bf16.msra.mxu0 %v5809
  %6606 = vmatprep.mubr.bf16.mxu0 %v4241
  %6607 = vmatmul.mubr.bf16.gmra.mrb[0].mxu0 %v4240
  %v6608 = vpop.f32.mrb[0].mxu0
  %v6609 = vadd.f32 %v6568, %v6608
  %v6610 = vpop.f32.mrb[0].mxu0
  %v6611 = vadd.f32 %v6570, %v6610
  %v6612 = vpop.f32.mrb[0].mxu0
  %v6613 = vpop.f32.mrb[0].mxu0
  %6614 = vdwg.mxu0
  %6615 = vmatprep.subr.bf16.mxu0 %v5816
  %6616 = vmatpush1.bf16.msra.mxu0 %v5815
  %6617 = vmatprep.subr.bf16.mxu0 %v5822
  %6618 = vmatpush1.bf16.msra.mxu0 %v5821
  %6619 = vmatprep.subr.bf16.mxu0 %v5828
  %6620 = vmatpush1.bf16.msra.mxu0 %v5827
  %6621 = vmatprep.subr.bf16.mxu0 %v6162
  %6622 = vmatpush1.bf16.msra.mxu0 %v6159
  %6623 = vmatprep.subr.bf16.mxu0 0
  %6624 = vmatpush1.bf16.msra.mxu0 0
  %6625 = vmatprep.subr.bf16.mxu0 0
  %6626 = vmatpush1.bf16.msra.mxu0 0
  %6627 = vmatprep.subr.bf16.mxu0 0
  %6628 = vmatpush1.bf16.msra.mxu0 0
  %6629 = vmatprep.subr.bf16.mxu0 0
  %6630 = vmatpush1.bf16.msra.mxu0 0
  %6631 = vmatprep.subr.bf16.mxu0 0
  %6632 = vmatpush1.bf16.msra.mxu0 0
  %6633 = vmatprep.subr.bf16.mxu0 0
  %6634 = vmatpush1.bf16.msra.mxu0 0
  %6635 = vmatprep.subr.bf16.mxu0 0
  %6636 = vmatpush1.bf16.msra.mxu0 0
  %6637 = vmatprep.subr.bf16.mxu0 0
  %6638 = vmatpush1.bf16.msra.mxu0 0
  %6639 = vmatprep.subr.bf16.mxu0 0
  %6640 = vmatpush1.bf16.msra.mxu0 0
  %6641 = vmatprep.subr.bf16.mxu0 0
  %6642 = vmatpush1.bf16.msra.mxu0 0
  %6643 = vmatprep.subr.bf16.mxu0 0
  %6644 = vmatpush1.bf16.msra.mxu0 0
  %6645 = vmatprep.subr.bf16.mxu0 0
  %6646 = vmatpush1.bf16.msra.mxu0 0
  %6647 = vmatprep.mubr.bf16.mxu0 0
  %6648 = vmatmul.mubr.bf16.gmra.mrb[0].mxu0 %v6143
  %v6649 = vpop.f32.mrb[0].mxu0
  %v6650 = vadd.f32 %v6609, %v6649
  %v6651 = vpop.f32.mrb[0].mxu0
  %v6652 = vadd.f32 %v6611, %v6651
  %v6653 = vpop.f32.mrb[0].mxu0
  %v6654 = vpop.f32.mrb[0].mxu0
  %6655 = vdwg.mxu0
  %vm6656 = vcmp.gt.f32.partialorder %v6322, 0.0
  %vm6657 = vcmp.gt.f32.partialorder %v6324, 0.0
  %vm6658 = vcmp.gt.f32.partialorder %v6486, 0.0
  %vm6659 = vcmp.gt.f32.partialorder %v6488, 0.0
  %vm6660 = vcmp.gt.f32.partialorder %v6650, 0.0
  %vm6661 = vcmp.gt.f32.partialorder %v6652, 0.0
  %v6662 = vmul.f32 %v6322, 0.01
  %v6663 = vmul.f32 %v6324, 0.01
  %v6664 = vmul.f32 %v6486, 0.01
  %v6665 = vmul.f32 %v6488, 0.01
  %v6666 = vmul.f32 %v6650, 0.01
  %v6667 = vmul.f32 %v6652, 0.01
  %v6668 = vsel %vm6656, %v6322, %v6662
  %v6669 = vsel %vm6657, %v6324, %v6663
  %v6670 = vsel %vm6658, %v6486, %v6664
  %v6671 = vsel %vm6659, %v6488, %v6665
  %v6672 = vsel %vm6660, %v6650, %v6666
  %v6673 = vsel %vm6661, %v6652, %v6667
  %v6674 = vpack.c.bf16 %v6668, %v6668
  %v6675 = vpack.c.bf16 %v6669, %v6669
  %v6676 = vpack.c.bf16 %v6670, %v6670
  %v6677 = vpack.c.bf16 %v6671, %v6671
  %v6678 = vpack.c.bf16 %v6672, %v6672
  %v6679 = vpack.c.bf16 %v6673, %v6673
  %v6680 = vld [vmem:[%s5] sm:$0xff]
  %v6681 = vld [vmem:[%s5 + $0x8] sm:$0xff]
  %v6682 = vld [vmem:[%s5 + $0x10] sm:$0xff]
  %v6683 = vld [vmem:[%s5 + $0x18] sm:$0xff]
  %v6684 = vld [vmem:[%s5 + $0x20] sm:$0xff]
  %v6685 = vld [vmem:[%s5 + $0x28] sm:$0xff]
  %v6686 = vld [vmem:[%s5 + $0x30] sm:$0xff]
  %v6687 = vld [vmem:[%s5 + $0x38] sm:$0xff]
  %v6688 = vld [vmem:[%s5 + $0x40] sm:$0xff]
  %v6689 = vld [vmem:[%s5 + $0x48] sm:$0xff]
  %v6690 = vld [vmem:[%s5 + $0x50] sm:$0xff]
  %v6691 = vld [vmem:[%s5 + $0x58] sm:$0xff]
  %v6692 = vld [vmem:[%s5 + $0x60] sm:$0xff]
  %v6693 = vld [vmem:[%s5 + $0x68] sm:$0xff]
  %v6694 = vld [vmem:[%s5 + $0x70] sm:$0xff]
  %v6695 = vld [vmem:[%s5 + $0x78] sm:$0xff]
  %v6696 = vld [vmem:[%s5 + $0x80] sm:$0xff]
  %v6697 = vld [vmem:[%s5 + $0x88] sm:$0xff]
  %v6698 = vld [vmem:[%s5 + $0x90] sm:$0xff]
  %v6699 = vld [vmem:[%s5 + $0x98] sm:$0xff]
  %v6700 = vld [vmem:[%s5 + $0xa0] sm:$0xff]
  %v6701 = vld [vmem:[%s5 + $0xa8] sm:$0xff]
  %v6702 = vld [vmem:[%s5 + $0xb0] sm:$0xff]
  %v6703 = vld [vmem:[%s5 + $0xb8] sm:$0xff]
  %v6704 = vld [vmem:[%s5 + $0xc0] sm:$0xff]
  %v6705 = vld [vmem:[%s5 + $0xc8] sm:$0xff]
  %v6706 = vld [vmem:[%s5 + $0xd0] sm:$0xff]
  %v6707 = vld [vmem:[%s5 + $0xd8] sm:$0xff]
  %v6708 = vld [vmem:[%s5 + $0xe0] sm:$0xff]
  %v6709 = vld [vmem:[%s5 + $0xe8] sm:$0xff]
  %v6710 = vld [vmem:[%s5 + $0xf0] sm:$0xff]
  %v6711 = vld [vmem:[%s5 + $0xf8] sm:$0xff]
  %v6712 = vld [vmem:[%s5 + $0x100] sm:$0xff]
  %v6713 = vld [vmem:[%s5 + $0x108] sm:$0xff]
  %v6714 = vld [vmem:[%s5 + $0x110] sm:$0xff]
  %v6715 = vld [vmem:[%s5 + $0x118] sm:$0xff]
  %v6716 = vld [vmem:[%s5 + $0x120] sm:$0xff]
  %v6717 = vld [vmem:[%s5 + $0x128] sm:$0xff]
  %v6718 = vld [vmem:[%s5 + $0x130] sm:$0xff]
  %v6719 = vld [vmem:[%s5 + $0x138] sm:$0xff]
  %v6720 = vld [vmem:[%s5 + $0x140] sm:$0xff]
  %v6721 = vld [vmem:[%s5 + $0x148] sm:$0xff]
  %v6722 = vld [vmem:[%s5 + $0x150] sm:$0xff]
  %v6723 = vld [vmem:[%s5 + $0x158] sm:$0xff]
  %v6724 = vld [vmem:[%s5 + $0x160] sm:$0xff]
  %v6725 = vld [vmem:[%s5 + $0x168] sm:$0xff]
  %v6726 = vld [vmem:[%s5 + $0x170] sm:$0xff]
  %v6727 = vld [vmem:[%s5 + $0x178] sm:$0xff]
  %v6728 = vld [vmem:[%s5 + $0x180] sm:$0xff]
  %v6729 = vld [vmem:[%s5 + $0x188] sm:$0xff]
  %v6730 = vld [vmem:[%s5 + $0x190] sm:$0xff]
  %v6731 = vld [vmem:[%s5 + $0x198] sm:$0xff]
  %v6732 = vld [vmem:[%s5 + $0x1a0] sm:$0xff]
  %v6733 = vld [vmem:[%s5 + $0x1a8] sm:$0xff]
  %v6734 = vld [vmem:[%s5 + $0x1b0] sm:$0xff]
  %v6735 = vld [vmem:[%s5 + $0x1b8] sm:$0xff]
  %v6736 = vld [vmem:[%s5 + $0x1c0] sm:$0xff]
  %v6737 = vld [vmem:[%s5 + $0x1c8] sm:$0xff]
  %v6738 = vld [vmem:[%s5 + $0x1d0] sm:$0xff]
  %v6739 = vld [vmem:[%s5 + $0x1d8] sm:$0xff]
  %v6740 = vld [vmem:[%s5 + $0x1e0] sm:$0xff]
  %v6741 = vld [vmem:[%s5 + $0x1e8] sm:$0xff]
  %v6742 = vld [vmem:[%s5 + $0x1f0] sm:$0xff]
  %v6743 = vld [vmem:[%s5 + $0x1f8] sm:$0xff]
  %v6744 = vld [vmem:[%s5 + $0x200] sm:$0xff]
  %v6745 = vld [vmem:[%s5 + $0x208] sm:$0xff]
  %v6746 = vld [vmem:[%s5 + $0x210] sm:$0xff]
  %v6747 = vld [vmem:[%s5 + $0x218] sm:$0xff]
  %v6748 = vld [vmem:[%s5 + $0x220] sm:$0xff]
  %v6749 = vld [vmem:[%s5 + $0x228] sm:$0xff]
  %v6750 = vld [vmem:[%s5 + $0x230] sm:$0xff]
  %v6751 = vld [vmem:[%s5 + $0x238] sm:$0xff]
  %v6752 = vld [vmem:[%s5 + $0x240] sm:$0xff]
  %v6753 = vld [vmem:[%s5 + $0x248] sm:$0xff]
  %v6754 = vld [vmem:[%s5 + $0x250] sm:$0xff]
  %v6755 = vld [vmem:[%s5 + $0x258] sm:$0xff]
  %v6756 = vld [vmem:[%s5 + $0x260] sm:$0xff]
  %v6757 = vld [vmem:[%s5 + $0x268] sm:$0xff]
  %v6758 = vld [vmem:[%s5 + $0x270] sm:$0xff]
  %v6759 = vld [vmem:[%s5 + $0x278] sm:$0xff]
  %v6760 = vld [vmem:[%s5 + $0x280] sm:$0xff]
  %v6761 = vld [vmem:[%s5 + $0x288] sm:$0xff]
  %v6762 = vld [vmem:[%s5 + $0x290] sm:$0xff]
  %v6763 = vld [vmem:[%s5 + $0x298] sm:$0xff]
  %v6764 = vld [vmem:[%s5 + $0x2a0] sm:$0xff]
  %v6765 = vld [vmem:[%s5 + $0x2a8] sm:$0xff]
  %v6766 = vld [vmem:[%s5 + $0x2b0] sm:$0xff]
  %v6767 = vld [vmem:[%s5 + $0x2b8] sm:$0xff]
  %v6768 = vld [vmem:[%s5 + $0x2c0] sm:$0xff]
  %v6769 = vld [vmem:[%s5 + $0x2c8] sm:$0xff]
  %v6770 = vld [vmem:[%s5 + $0x2d0] sm:$0xff]
  %v6771 = vld [vmem:[%s5 + $0x2d8] sm:$0xff]
  %v6772 = vld [vmem:[%s5 + $0x2e0] sm:$0xff]
  %v6773 = vld [vmem:[%s5 + $0x2e8] sm:$0xff]
  %v6774 = vld [vmem:[%s5 + $0x2f0] sm:$0xff]
  %v6775 = vld [vmem:[%s5 + $0x2f8] sm:$0xff]
  %v6776 = vld [vmem:[%s5 + $0x300] sm:$0xff]
  %v6777 = vld [vmem:[%s5 + $0x308] sm:$0xff]
  %v6778 = vld [vmem:[%s5 + $0x310] sm:$0xff]
  %v6779 = vld [vmem:[%s5 + $0x318] sm:$0xff]
  %v6780 = vld [vmem:[%s5 + $0x320] sm:$0xff]
  %v6781 = vld [vmem:[%s5 + $0x328] sm:$0xff]
  %v6782 = vld [vmem:[%s5 + $0x330] sm:$0xff]
  %v6783 = vld [vmem:[%s5 + $0x338] sm:$0xff]
  %v6784 = vld [vmem:[%s5 + $0x340] sm:$0xff]
  %v6785 = vld [vmem:[%s5 + $0x348] sm:$0xff]
  %v6786 = vld [vmem:[%s5 + $0x350] sm:$0xff]
  %v6787 = vld [vmem:[%s5 + $0x358] sm:$0xff]
  %v6788 = vld [vmem:[%s5 + $0x360] sm:$0xff]
  %v6789 = vld [vmem:[%s5 + $0x368] sm:$0xff]
  %v6790 = vld [vmem:[%s5 + $0x370] sm:$0xff]
  %v6791 = vld [vmem:[%s5 + $0x378] sm:$0xff]
  %v6792 = vld [vmem:[%s5 + $0x380] sm:$0xff]
  %v6793 = vld [vmem:[%s5 + $0x388] sm:$0xff]
  %v6794 = vld [vmem:[%s5 + $0x390] sm:$0xff]
  %v6795 = vld [vmem:[%s5 + $0x398] sm:$0xff]
  %v6796 = vld [vmem:[%s5 + $0x3a0] sm:$0xff]
  %v6797 = vld [vmem:[%s5 + $0x3a8] sm:$0xff]
  %v6798 = vld [vmem:[%s5 + $0x3b0] sm:$0xff]
  %v6799 = vld [vmem:[%s5 + $0x3b8] sm:$0xff]
  %v6800 = vld [vmem:[%s5 + $0x3c0] sm:$0xff]
  %v6801 = vld [vmem:[%s5 + $0x3c8] sm:$0xff]
  %v6802 = vld [vmem:[%s5 + $0x3d0] sm:$0xff]
  %v6803 = vld [vmem:[%s5 + $0x3d8] sm:$0xff]
  %v6804 = vld [vmem:[%s5 + $0x3e0] sm:$0xff]
  %v6805 = vld [vmem:[%s5 + $0x3e8] sm:$0xff]
  %v6806 = vld [vmem:[%s5 + $0x3f0] sm:$0xff]
  %v6807 = vld [vmem:[%s5 + $0x3f8] sm:$0xff]
  %v6808 = vld [vmem:[%s5 + $0x400] sm:$0xff]
  %v6809 = vld [vmem:[%s5 + $0x408] sm:$0xff]
  %v6810 = vld [vmem:[%s5 + $0x410] sm:$0xff]
  %v6811 = vld [vmem:[%s5 + $0x418] sm:$0xff]
  %v6812 = vld [vmem:[%s5 + $0x420] sm:$0xff]
  %v6813 = vld [vmem:[%s5 + $0x428] sm:$0xff]
  %v6814 = vld [vmem:[%s5 + $0x430] sm:$0xff]
  %v6815 = vld [vmem:[%s5 + $0x438] sm:$0xff]
  %v6816 = vld [vmem:[%s5 + $0x440] sm:$0xff]
  %v6817 = vld [vmem:[%s5 + $0x448] sm:$0xff]
  %v6818 = vld [vmem:[%s5 + $0x450] sm:$0xff]
  %v6819 = vld [vmem:[%s5 + $0x458] sm:$0xff]
  %v6820 = vld [vmem:[%s5 + $0x460] sm:$0xff]
  %v6821 = vld [vmem:[%s5 + $0x468] sm:$0xff]
  %v6822 = vld [vmem:[%s5 + $0x470] sm:$0xff]
  %v6823 = vld [vmem:[%s5 + $0x478] sm:$0xff]
  %v6824 = vld [vmem:[%s5 + $0x480] sm:$0xff]
  %v6825 = vld [vmem:[%s5 + $0x488] sm:$0xff]
  %v6826 = vld [vmem:[%s5 + $0x490] sm:$0xff]
  %v6827 = vld [vmem:[%s5 + $0x498] sm:$0xff]
  %v6828 = vld [vmem:[%s5 + $0x4a0] sm:$0xff]
  %v6829 = vld [vmem:[%s5 + $0x4a8] sm:$0xff]
  %v6830 = vld [vmem:[%s5 + $0x4b0] sm:$0xff]
  %v6831 = vld [vmem:[%s5 + $0x4b8] sm:$0xff]
  %v6832 = vld [vmem:[%s5 + $0x4c0] sm:$0xff]
  %v6833 = vld [vmem:[%s5 + $0x4c8] sm:$0xff]
  %v6834 = vld [vmem:[%s5 + $0x4d0] sm:$0xff]
  %v6835 = vld [vmem:[%s5 + $0x4d8] sm:$0xff]
  %v6836 = vld [vmem:[%s5 + $0x4e0] sm:$0xff]
  %v6837 = vld [vmem:[%s5 + $0x4e8] sm:$0xff]
  %v6838 = vld [vmem:[%s5 + $0x4f0] sm:$0xff]
  %v6839 = vld [vmem:[%s5 + $0x4f8] sm:$0xff]
  %v6840 = vld [vmem:[%s5 + $0x500] sm:$0xff]
  %v6841 = vld [vmem:[%s5 + $0x508] sm:$0xff]
  %v6842 = vld [vmem:[%s5 + $0x510] sm:$0xff]
  %v6843 = vld [vmem:[%s5 + $0x518] sm:$0xff]
  %v6844 = vld [vmem:[%s5 + $0x520] sm:$0xff]
  %v6845 = vld [vmem:[%s5 + $0x528] sm:$0xff]
  %v6846 = vld [vmem:[%s5 + $0x530] sm:$0xff]
  %v6847 = vld [vmem:[%s5 + $0x538] sm:$0xff]
  %v6848 = vld [vmem:[%s5 + $0x540] sm:$0xff]
  %v6849 = vld [vmem:[%s5 + $0x548] sm:$0xff]
  %v6850 = vld [vmem:[%s5 + $0x550] sm:$0xff]
  %v6851 = vld [vmem:[%s5 + $0x558] sm:$0xff]
  %v6852 = vld [vmem:[%s5 + $0x560] sm:$0xff]
  %v6853 = vld [vmem:[%s5 + $0x568] sm:$0xff]
  %v6854 = vld [vmem:[%s5 + $0x570] sm:$0xff]
  %v6855 = vld [vmem:[%s5 + $0x578] sm:$0xff]
  %v6856 = vld [vmem:[%s5 + $0x580] sm:$0xff]
  %v6857 = vld [vmem:[%s5 + $0x588] sm:$0xff]
  %v6858 = vld [vmem:[%s5 + $0x590] sm:$0xff]
  %v6859 = vld [vmem:[%s5 + $0x598] sm:$0xff]
  %v6860 = vld [vmem:[%s5 + $0x5a0] sm:$0xff]
  %v6861 = vld [vmem:[%s5 + $0x5a8] sm:$0xff]
  %v6862 = vld [vmem:[%s5 + $0x5b0] sm:$0xff]
  %v6863 = vld [vmem:[%s5 + $0x5b8] sm:$0xff]
  %v6864 = vld [vmem:[%s5 + $0x5c0] sm:$0xff]
  %v6865 = vld [vmem:[%s5 + $0x5c8] sm:$0xff]
  %v6866 = vld [vmem:[%s5 + $0x5d0] sm:$0xff]
  %v6867 = vld [vmem:[%s5 + $0x5d8] sm:$0xff]
  %v6868 = vld [vmem:[%s5 + $0x5e0] sm:$0xff]
  %v6869 = vld [vmem:[%s5 + $0x5e8] sm:$0xff]
  %v6870 = vld [vmem:[%s5 + $0x5f0] sm:$0xff]
  %v6871 = vld [vmem:[%s5 + $0x5f8] sm:$0xff]
  %v6872 = vld [vmem:[%s5 + $0x600] sm:$0xff]
  %v6873 = vld [vmem:[%s5 + $0x608] sm:$0xff]
  %v6874 = vld [vmem:[%s5 + $0x610] sm:$0xff]
  %v6875 = vld [vmem:[%s5 + $0x618] sm:$0xff]
  %v6876 = vld [vmem:[%s5 + $0x620] sm:$0xff]
  %v6877 = vld [vmem:[%s5 + $0x628] sm:$0xff]
  %v6878 = vld [vmem:[%s5 + $0x630] sm:$0xff]
  %v6879 = vld [vmem:[%s5 + $0x638] sm:$0xff]
  %v6880 = vld [vmem:[%s5 + $0x640] sm:$0xff]
  %v6881 = vld [vmem:[%s5 + $0x648] sm:$0xff]
  %v6882 = vld [vmem:[%s5 + $0x650] sm:$0xff]
  %v6883 = vld [vmem:[%s5 + $0x658] sm:$0xff]
  %v6884 = vld [vmem:[%s5 + $0x660] sm:$0xff]
  %v6885 = vld [vmem:[%s5 + $0x668] sm:$0xff]
  %v6886 = vld [vmem:[%s5 + $0x670] sm:$0xff]
  %v6887 = vld [vmem:[%s5 + $0x678] sm:$0xff]
  %v6888 = vld [vmem:[%s5 + $0x680] sm:$0xff]
  %v6889 = vld [vmem:[%s5 + $0x688] sm:$0xff]
  %v6890 = vld [vmem:[%s5 + $0x690] sm:$0xff]
  %v6891 = vld [vmem:[%s5 + $0x698] sm:$0xff]
  %v6892 = vld [vmem:[%s5 + $0x6a0] sm:$0xff]
  %v6893 = vld [vmem:[%s5 + $0x6a8] sm:$0xff]
  %v6894 = vld [vmem:[%s5 + $0x6b0] sm:$0xff]
  %v6895 = vld [vmem:[%s5 + $0x6b8] sm:$0xff]
  %v6896 = vld [vmem:[%s5 + $0x6c0] sm:$0xff]
  %v6897 = vld [vmem:[%s5 + $0x6c8] sm:$0xff]
  %v6898 = vld [vmem:[%s5 + $0x6d0] sm:$0xff]
  %v6899 = vld [vmem:[%s5 + $0x6d8] sm:$0xff]
  %v6900 = vld [vmem:[%s5 + $0x6e0] sm:$0xff]
  %v6901 = vld [vmem:[%s5 + $0x6e8] sm:$0xff]
  %v6902 = vld [vmem:[%s5 + $0x6f0] sm:$0xff]
  %v6903 = vld [vmem:[%s5 + $0x6f8] sm:$0xff]
  %v6904 = vld [vmem:[%s5 + $0x700] sm:$0xff]
  %v6905 = vld [vmem:[%s5 + $0x708] sm:$0xff]
  %v6906 = vld [vmem:[%s5 + $0x710] sm:$0xff]
  %v6907 = vld [vmem:[%s5 + $0x718] sm:$0xff]
  %v6908 = vld [vmem:[%s5 + $0x720] sm:$0xff]
  %v6909 = vld [vmem:[%s5 + $0x728] sm:$0xff]
  %v6910 = vld [vmem:[%s5 + $0x730] sm:$0xff]
  %v6911 = vld [vmem:[%s5 + $0x738] sm:$0xff]
  %v6912 = vld [vmem:[%s5 + $0x740] sm:$0xff]
  %v6913 = vld [vmem:[%s5 + $0x748] sm:$0xff]
  %v6914 = vld [vmem:[%s5 + $0x750] sm:$0xff]
  %v6915 = vld [vmem:[%s5 + $0x758] sm:$0xff]
  %v6916 = vld [vmem:[%s5 + $0x760] sm:$0xff]
  %v6917 = vld [vmem:[%s5 + $0x768] sm:$0xff]
  %v6918 = vld [vmem:[%s5 + $0x770] sm:$0xff]
  %v6919 = vld [vmem:[%s5 + $0x778] sm:$0xff]
  %v6920 = vld [vmem:[%s5 + $0x780] sm:$0xff]
  %v6921 = vld [vmem:[%s5 + $0x788] sm:$0xff]
  %v6922 = vld [vmem:[%s5 + $0x790] sm:$0xff]
  %v6923 = vld [vmem:[%s5 + $0x798] sm:$0xff]
  %v6924 = vld [vmem:[%s5 + $0x7a0] sm:$0xff]
  %v6925 = vld [vmem:[%s5 + $0x7a8] sm:$0xff]
  %v6926 = vld [vmem:[%s5 + $0x7b0] sm:$0xff]
  %v6927 = vld [vmem:[%s5 + $0x7b8] sm:$0xff]
  %v6928 = vld [vmem:[%s5 + $0x7c0] sm:$0xff]
  %v6929 = vld [vmem:[%s5 + $0x7c8] sm:$0xff]
  %v6930 = vld [vmem:[%s5 + $0x7d0] sm:$0xff]
  %v6931 = vld [vmem:[%s5 + $0x7d8] sm:$0xff]
  %v6932 = vld [vmem:[%s5 + $0x7e0] sm:$0xff]
  %v6933 = vld [vmem:[%s5 + $0x7e8] sm:$0xff]
  %v6934 = vld [vmem:[%s5 + $0x7f0] sm:$0xff]
  %v6935 = vld [vmem:[%s5 + $0x7f8] sm:$0xff]
  %v6936 = vld [vmem:[%s5 + $0x800] sm:$0xff]
  %v6937 = vld [vmem:[%s5 + $0x808] sm:$0xff]
  %v6938 = vld [vmem:[%s5 + $0x810] sm:$0xff]
  %v6939 = vld [vmem:[%s5 + $0x818] sm:$0xff]
  %v6940 = vld [vmem:[%s5 + $0x820] sm:$0xff]
  %v6941 = vld [vmem:[%s5 + $0x828] sm:$0xff]
  %v6942 = vld [vmem:[%s5 + $0x830] sm:$0xff]
  %v6943 = vld [vmem:[%s5 + $0x838] sm:$0xff]
  %v6944 = vld [vmem:[%s5 + $0x840] sm:$0xff]
  %v6945 = vld [vmem:[%s5 + $0x848] sm:$0xff]
  %v6946 = vld [vmem:[%s5 + $0x850] sm:$0xff]
  %v6947 = vld [vmem:[%s5 + $0x858] sm:$0xff]
  %v6948 = vld [vmem:[%s5 + $0x860] sm:$0xff]
  %v6949 = vld [vmem:[%s5 + $0x868] sm:$0xff]
  %v6950 = vld [vmem:[%s5 + $0x870] sm:$0xff]
  %v6951 = vld [vmem:[%s5 + $0x878] sm:$0xff]
  %v6952 = vld [vmem:[%s5 + $0x880] sm:$0xff]
  %v6953 = vld [vmem:[%s5 + $0x888] sm:$0xff]
  %v6954 = vld [vmem:[%s5 + $0x890] sm:$0xff]
  %v6955 = vld [vmem:[%s5 + $0x898] sm:$0xff]
  %v6956 = vld [vmem:[%s5 + $0x8a0] sm:$0xff]
  %v6957 = vld [vmem:[%s5 + $0x8a8] sm:$0xff]
  %v6958 = vld [vmem:[%s5 + $0x8b0] sm:$0xff]
  %v6959 = vld [vmem:[%s5 + $0x8b8] sm:$0xff]
  %v6960 = vld [vmem:[%s5 + $0x8c0] sm:$0xff]
  %v6961 = vld [vmem:[%s5 + $0x8c8] sm:$0xff]
  %v6962 = vld [vmem:[%s5 + $0x8d0] sm:$0x33]
  %v6963 = vld [vmem:[%s5 + $0x8d8] sm:$0x33]
  %v6964 = vld [vmem:[%s5 + $0x8e0] sm:$0x33]
  %v6965 = vld [vmem:[%s6] sm:$0x3f]
  %v6967 = vlaneseq
  %v6968 = vshrl.u32 %v6967, 7
  %v6969 = vsub.s32 0, %v6968
  %v6970 = vrot.slane %v6965, %v6969
  %v6971 = vlaneseq
  %v6972 = vshrl.u32 %v6971, 7
  %v6973 = vsub.s32 1, %v6972
  %v6974 = vrot.slane %v6965, %v6973
  %v6975 = vlaneseq
  %v6976 = vshrl.u32 %v6975, 7
  %v6977 = vsub.s32 2, %v6976
  %v6978 = vrot.slane %v6965, %v6977
  %v6979 = vlaneseq
  %v6980 = vshrl.u32 %v6979, 7
  %v6981 = vsub.s32 3, %v6980
  %v6982 = vrot.slane %v6965, %v6981
  %v6983 = vlaneseq
  %v6984 = vshrl.u32 %v6983, 7
  %v6985 = vsub.s32 4, %v6984
  %v6986 = vrot.slane %v6965, %v6985
  %v6987 = vlaneseq
  %v6988 = vshrl.u32 %v6987, 7
  %v6989 = vsub.s32 5, %v6988
  %v6990 = vrot.slane %v6965, %v6989
  %v7282 = vunpack.c.l.b16 %v6680
  %v7283 = vunpack.c.h.b16 %v6680
  %v7284 = vunpack.c.l.b16 %v6681
  %v7285 = vunpack.c.h.b16 %v6681
  %v7286 = vunpack.c.l.b16 %v6682
  %v7287 = vunpack.c.h.b16 %v6682
  %v7288 = vunpack.c.l.b16 %v6683
  %v7289 = vunpack.c.h.b16 %v6683
  %v7290 = vunpack.c.l.b16 %v6684
  %v7291 = vunpack.c.h.b16 %v6684
  %v7292 = vunpack.c.l.b16 %v6685
  %v7293 = vunpack.c.h.b16 %v6685
  %v7294 = vunpack.c.l.b16 %v6686
  %v7295 = vunpack.c.h.b16 %v6686
  %v7296 = vunpack.c.l.b16 %v6687
  %v7297 = vunpack.c.h.b16 %v6687
  %v7298 = vunpack.c.l.b16 %v6688
  %v7299 = vunpack.c.h.b16 %v6688
  %v7300 = vunpack.c.l.b16 %v6689
  %v7301 = vunpack.c.h.b16 %v6689
  %v7302 = vunpack.c.l.b16 %v6690
  %v7303 = vunpack.c.h.b16 %v6690
  %v7304 = vunpack.c.l.b16 %v6691
  %v7305 = vunpack.c.h.b16 %v6691
  %v7306 = vunpack.c.l.b16 %v6692
  %v7307 = vunpack.c.h.b16 %v6692
  %v7308 = vunpack.c.l.b16 %v6693
  %v7309 = vunpack.c.h.b16 %v6693
  %v7310 = vunpack.c.l.b16 %v6694
  %v7311 = vunpack.c.h.b16 %v6694
  %v7312 = vunpack.c.l.b16 %v6695
  %v7313 = vunpack.c.h.b16 %v6695
  %v7314 = vunpack.c.l.b16 %v6696
  %v7315 = vunpack.c.h.b16 %v6696
  %v7316 = vunpack.c.l.b16 %v6697
  %v7317 = vunpack.c.h.b16 %v6697
  %v7318 = vunpack.c.l.b16 %v6698
  %v7319 = vunpack.c.h.b16 %v6698
  %v7320 = vunpack.c.l.b16 %v6699
  %v7321 = vunpack.c.h.b16 %v6699
  %v7322 = vunpack.c.l.b16 %v6700
  %v7323 = vunpack.c.h.b16 %v6700
  %v7324 = vunpack.c.l.b16 %v6701
  %v7325 = vunpack.c.h.b16 %v6701
  %v7326 = vunpack.c.l.b16 %v6702
  %v7327 = vunpack.c.h.b16 %v6702
  %v7328 = vunpack.c.l.b16 %v6703
  %v7329 = vunpack.c.h.b16 %v6703
  %v7330 = vunpack.c.l.b16 %v6704
  %v7331 = vunpack.c.h.b16 %v6704
  %v7332 = vunpack.c.l.b16 %v6705
  %v7333 = vunpack.c.h.b16 %v6705
  %v7334 = vunpack.c.l.b16 %v6706
  %v7335 = vunpack.c.h.b16 %v6706
  %v7336 = vunpack.c.l.b16 %v6707
  %v7337 = vunpack.c.h.b16 %v6707
  %v7338 = vunpack.c.l.b16 %v6708
  %v7339 = vunpack.c.h.b16 %v6708
  %v7340 = vunpack.c.l.b16 %v6709
  %v7341 = vunpack.c.h.b16 %v6709
  %v7342 = vunpack.c.l.b16 %v6710
  %v7343 = vunpack.c.h.b16 %v6710
  %v7344 = vunpack.c.l.b16 %v6711
  %v7345 = vunpack.c.h.b16 %v6711
  %v7346 = vunpack.c.l.b16 %v6712
  %v7347 = vunpack.c.h.b16 %v6712
  %v7348 = vunpack.c.l.b16 %v6713
  %v7349 = vunpack.c.h.b16 %v6713
  %v7350 = vunpack.c.l.b16 %v6714
  %v7351 = vunpack.c.h.b16 %v6714
  %v7352 = vunpack.c.l.b16 %v6715
  %v7353 = vunpack.c.h.b16 %v6715
  %v7354 = vunpack.c.l.b16 %v6716
  %v7355 = vunpack.c.h.b16 %v6716
  %v7356 = vunpack.c.l.b16 %v6717
  %v7357 = vunpack.c.h.b16 %v6717
  %v7358 = vunpack.c.l.b16 %v6718
  %v7359 = vunpack.c.h.b16 %v6718
  %v7360 = vunpack.c.l.b16 %v6719
  %v7361 = vunpack.c.h.b16 %v6719
  %v7362 = vunpack.c.l.b16 %v6720
  %v7363 = vunpack.c.h.b16 %v6720
  %v7364 = vunpack.c.l.b16 %v6721
  %v7365 = vunpack.c.h.b16 %v6721
  %v7366 = vunpack.c.l.b16 %v6722
  %v7367 = vunpack.c.h.b16 %v6722
  %v7368 = vunpack.c.l.b16 %v6723
  %v7369 = vunpack.c.h.b16 %v6723
  %v7370 = vunpack.c.l.b16 %v6724
  %v7371 = vunpack.c.h.b16 %v6724
  %v7372 = vunpack.c.l.b16 %v6725
  %v7373 = vunpack.c.h.b16 %v6725
  %v7374 = vunpack.c.l.b16 %v6726
  %v7375 = vunpack.c.h.b16 %v6726
  %v7376 = vunpack.c.l.b16 %v6727
  %v7377 = vunpack.c.h.b16 %v6727
  %v7378 = vunpack.c.l.b16 %v6728
  %v7379 = vunpack.c.h.b16 %v6728
  %v7380 = vunpack.c.l.b16 %v6729
  %v7381 = vunpack.c.h.b16 %v6729
  %v7382 = vunpack.c.l.b16 %v6730
  %v7383 = vunpack.c.h.b16 %v6730
  %v7384 = vunpack.c.l.b16 %v6731
  %v7385 = vunpack.c.h.b16 %v6731
  %v7386 = vunpack.c.l.b16 %v6732
  %v7387 = vunpack.c.h.b16 %v6732
  %v7388 = vunpack.c.l.b16 %v6733
  %v7389 = vunpack.c.h.b16 %v6733
  %v7390 = vunpack.c.l.b16 %v6734
  %v7391 = vunpack.c.h.b16 %v6734
  %v7392 = vunpack.c.l.b16 %v6735
  %v7393 = vunpack.c.h.b16 %v6735
  %v7394 = vunpack.c.l.b16 %v6736
  %v7395 = vunpack.c.h.b16 %v6736
  %v7396 = vunpack.c.l.b16 %v6737
  %v7397 = vunpack.c.h.b16 %v6737
  %v7398 = vunpack.c.l.b16 %v6738
  %v7399 = vunpack.c.h.b16 %v6738
  %v7400 = vunpack.c.l.b16 %v6739
  %v7401 = vunpack.c.h.b16 %v6739
  %v7402 = vunpack.c.l.b16 %v6740
  %v7403 = vunpack.c.h.b16 %v6740
  %v7404 = vunpack.c.l.b16 %v6741
  %v7405 = vunpack.c.h.b16 %v6741
  %v7406 = vunpack.c.l.b16 %v6742
  %v7407 = vunpack.c.h.b16 %v6742
  %v7408 = vunpack.c.l.b16 %v6743
  %v7409 = vunpack.c.h.b16 %v6743
  %v7410 = vunpack.c.l.b16 %v6744
  %v7411 = vunpack.c.h.b16 %v6744
  %v7412 = vunpack.c.l.b16 %v6745
  %v7413 = vunpack.c.h.b16 %v6745
  %v7414 = vunpack.c.l.b16 %v6746
  %v7415 = vunpack.c.h.b16 %v6746
  %v7416 = vunpack.c.l.b16 %v6747
  %v7417 = vunpack.c.h.b16 %v6747
  %v7418 = vunpack.c.l.b16 %v6748
  %v7419 = vunpack.c.h.b16 %v6748
  %v7420 = vunpack.c.l.b16 %v6749
  %v7421 = vunpack.c.h.b16 %v6749
  %v7422 = vunpack.c.l.b16 %v6750
  %v7423 = vunpack.c.h.b16 %v6750
  %v7424 = vunpack.c.l.b16 %v6751
  %v7425 = vunpack.c.h.b16 %v6751
  %v7426 = vunpack.c.l.b16 %v6752
  %v7427 = vunpack.c.h.b16 %v6752
  %v7428 = vunpack.c.l.b16 %v6753
  %v7429 = vunpack.c.h.b16 %v6753
  %v7430 = vunpack.c.l.b16 %v6754
  %v7431 = vunpack.c.h.b16 %v6754
  %v7432 = vunpack.c.l.b16 %v6755
  %v7433 = vunpack.c.h.b16 %v6755
  %v7434 = vunpack.c.l.b16 %v6756
  %v7435 = vunpack.c.h.b16 %v6756
  %v7436 = vunpack.c.l.b16 %v6757
  %v7437 = vunpack.c.h.b16 %v6757
  %v7438 = vunpack.c.l.b16 %v6758
  %v7439 = vunpack.c.h.b16 %v6758
  %v7440 = vunpack.c.l.b16 %v6759
  %v7441 = vunpack.c.h.b16 %v6759
  %v7442 = vunpack.c.l.b16 %v6760
  %v7443 = vunpack.c.h.b16 %v6760
  %v7444 = vunpack.c.l.b16 %v6761
  %v7445 = vunpack.c.h.b16 %v6761
  %v7446 = vunpack.c.l.b16 %v6762
  %v7447 = vunpack.c.h.b16 %v6762
  %v7448 = vunpack.c.l.b16 %v6763
  %v7449 = vunpack.c.h.b16 %v6763
  %v7450 = vunpack.c.l.b16 %v6764
  %v7451 = vunpack.c.h.b16 %v6764
  %v7452 = vunpack.c.l.b16 %v6765
  %v7453 = vunpack.c.h.b16 %v6765
  %v7454 = vunpack.c.l.b16 %v6766
  %v7455 = vunpack.c.h.b16 %v6766
  %v7456 = vunpack.c.l.b16 %v6767
  %v7457 = vunpack.c.h.b16 %v6767
  %v7458 = vunpack.c.l.b16 %v6768
  %v7459 = vunpack.c.h.b16 %v6768
  %v7460 = vunpack.c.l.b16 %v6769
  %v7461 = vunpack.c.h.b16 %v6769
  %v7462 = vunpack.c.l.b16 %v6770
  %v7463 = vunpack.c.h.b16 %v6770
  %v7464 = vunpack.c.l.b16 %v6771
  %v7465 = vunpack.c.h.b16 %v6771
  %v7466 = vunpack.c.l.b16 %v6772
  %v7467 = vunpack.c.h.b16 %v6772
  %v7468 = vunpack.c.l.b16 %v6773
  %v7469 = vunpack.c.h.b16 %v6773
  %v7470 = vunpack.c.l.b16 %v6774
  %v7471 = vunpack.c.h.b16 %v6774
  %v7472 = vunpack.c.l.b16 %v6775
  %v7473 = vunpack.c.h.b16 %v6775
  %v7474 = vunpack.c.l.b16 %v6776
  %v7475 = vunpack.c.h.b16 %v6776
  %v7476 = vunpack.c.l.b16 %v6777
  %v7477 = vunpack.c.h.b16 %v6777
  %v7478 = vunpack.c.l.b16 %v6778
  %v7479 = vunpack.c.h.b16 %v6778
  %v7480 = vunpack.c.l.b16 %v6779
  %v7481 = vunpack.c.h.b16 %v6779
  %v7482 = vunpack.c.l.b16 %v6780
  %v7483 = vunpack.c.h.b16 %v6780
  %v7484 = vunpack.c.l.b16 %v6781
  %v7485 = vunpack.c.h.b16 %v6781
  %v7486 = vunpack.c.l.b16 %v6782
  %v7487 = vunpack.c.h.b16 %v6782
  %v7488 = vunpack.c.l.b16 %v6783
  %v7489 = vunpack.c.h.b16 %v6783
  %v7490 = vunpack.c.l.b16 %v6784
  %v7491 = vunpack.c.h.b16 %v6784
  %v7492 = vunpack.c.l.b16 %v6785
  %v7493 = vunpack.c.h.b16 %v6785
  %v7494 = vunpack.c.l.b16 %v6786
  %v7495 = vunpack.c.h.b16 %v6786
  %v7496 = vunpack.c.l.b16 %v6787
  %v7497 = vunpack.c.h.b16 %v6787
  %v7498 = vunpack.c.l.b16 %v6788
  %v7499 = vunpack.c.h.b16 %v6788
  %v7500 = vunpack.c.l.b16 %v6789
  %v7501 = vunpack.c.h.b16 %v6789
  %v7502 = vunpack.c.l.b16 %v6790
  %v7503 = vunpack.c.h.b16 %v6790
  %v7504 = vunpack.c.l.b16 %v6791
  %v7505 = vunpack.c.h.b16 %v6791
  %v7506 = vunpack.c.l.b16 %v6792
  %v7507 = vunpack.c.h.b16 %v6792
  %v7508 = vunpack.c.l.b16 %v6793
  %v7509 = vunpack.c.h.b16 %v6793
  %v7510 = vunpack.c.l.b16 %v6794
  %v7511 = vunpack.c.h.b16 %v6794
  %v7512 = vunpack.c.l.b16 %v6795
  %v7513 = vunpack.c.h.b16 %v6795
  %v7514 = vunpack.c.l.b16 %v6796
  %v7515 = vunpack.c.h.b16 %v6796
  %v7516 = vunpack.c.l.b16 %v6797
  %v7517 = vunpack.c.h.b16 %v6797
  %v7518 = vunpack.c.l.b16 %v6798
  %v7519 = vunpack.c.h.b16 %v6798
  %v7520 = vunpack.c.l.b16 %v6799
  %v7521 = vunpack.c.h.b16 %v6799
  %v7522 = vunpack.c.l.b16 %v6800
  %v7523 = vunpack.c.h.b16 %v6800
  %v7524 = vunpack.c.l.b16 %v6801
  %v7525 = vunpack.c.h.b16 %v6801
  %v7526 = vunpack.c.l.b16 %v6802
  %v7527 = vunpack.c.h.b16 %v6802
  %v7528 = vunpack.c.l.b16 %v6803
  %v7529 = vunpack.c.h.b16 %v6803
  %v7530 = vunpack.c.l.b16 %v6804
  %v7531 = vunpack.c.h.b16 %v6804
  %v7532 = vunpack.c.l.b16 %v6805
  %v7533 = vunpack.c.h.b16 %v6805
  %v7534 = vunpack.c.l.b16 %v6806
  %v7535 = vunpack.c.h.b16 %v6806
  %v7536 = vunpack.c.l.b16 %v6807
  %v7537 = vunpack.c.h.b16 %v6807
  %v7538 = vunpack.c.l.b16 %v6808
  %v7539 = vunpack.c.h.b16 %v6808
  %v7540 = vunpack.c.l.b16 %v6809
  %v7541 = vunpack.c.h.b16 %v6809
  %v7542 = vunpack.c.l.b16 %v6810
  %v7543 = vunpack.c.h.b16 %v6810
  %v7544 = vunpack.c.l.b16 %v6811
  %v7545 = vunpack.c.h.b16 %v6811
  %v7546 = vunpack.c.l.b16 %v6812
  %v7547 = vunpack.c.h.b16 %v6812
  %v7548 = vunpack.c.l.b16 %v6813
  %v7549 = vunpack.c.h.b16 %v6813
  %v7550 = vunpack.c.l.b16 %v6814
  %v7551 = vunpack.c.h.b16 %v6814
  %v7552 = vunpack.c.l.b16 %v6815
  %v7553 = vunpack.c.h.b16 %v6815
  %v7554 = vunpack.c.l.b16 %v6816
  %v7555 = vunpack.c.h.b16 %v6816
  %v7556 = vunpack.c.l.b16 %v6817
  %v7557 = vunpack.c.h.b16 %v6817
  %v7558 = vunpack.c.l.b16 %v6818
  %v7559 = vunpack.c.h.b16 %v6818
  %v7560 = vunpack.c.l.b16 %v6819
  %v7561 = vunpack.c.h.b16 %v6819
  %v7562 = vunpack.c.l.b16 %v6820
  %v7563 = vunpack.c.h.b16 %v6820
  %v7564 = vunpack.c.l.b16 %v6821
  %v7565 = vunpack.c.h.b16 %v6821
  %v7566 = vunpack.c.l.b16 %v6822
  %v7567 = vunpack.c.h.b16 %v6822
  %v7568 = vunpack.c.l.b16 %v6823
  %v7569 = vunpack.c.h.b16 %v6823
  %v7570 = vunpack.c.l.b16 %v6824
  %v7571 = vunpack.c.h.b16 %v6824
  %v7572 = vunpack.c.l.b16 %v6825
  %v7573 = vunpack.c.h.b16 %v6825
  %v7574 = vunpack.c.l.b16 %v6826
  %v7575 = vunpack.c.h.b16 %v6826
  %v7576 = vunpack.c.l.b16 %v6827
  %v7577 = vunpack.c.h.b16 %v6827
  %v7578 = vunpack.c.l.b16 %v6828
  %v7579 = vunpack.c.h.b16 %v6828
  %v7580 = vunpack.c.l.b16 %v6829
  %v7581 = vunpack.c.h.b16 %v6829
  %v7582 = vunpack.c.l.b16 %v6830
  %v7583 = vunpack.c.h.b16 %v6830
  %v7584 = vunpack.c.l.b16 %v6831
  %v7585 = vunpack.c.h.b16 %v6831
  %v7586 = vunpack.c.l.b16 %v6832
  %v7587 = vunpack.c.h.b16 %v6832
  %v7588 = vunpack.c.l.b16 %v6833
  %v7589 = vunpack.c.h.b16 %v6833
  %v7590 = vunpack.c.l.b16 %v6834
  %v7591 = vunpack.c.h.b16 %v6834
  %v7592 = vunpack.c.l.b16 %v6835
  %v7593 = vunpack.c.h.b16 %v6835
  %v7594 = vunpack.c.l.b16 %v6836
  %v7595 = vunpack.c.h.b16 %v6836
  %v7596 = vunpack.c.l.b16 %v6837
  %v7597 = vunpack.c.h.b16 %v6837
  %v7598 = vunpack.c.l.b16 %v6838
  %v7599 = vunpack.c.h.b16 %v6838
  %v7600 = vunpack.c.l.b16 %v6839
  %v7601 = vunpack.c.h.b16 %v6839
  %v7602 = vunpack.c.l.b16 %v6840
  %v7603 = vunpack.c.h.b16 %v6840
  %v7604 = vunpack.c.l.b16 %v6841
  %v7605 = vunpack.c.h.b16 %v6841
  %v7606 = vunpack.c.l.b16 %v6842
  %v7607 = vunpack.c.h.b16 %v6842
  %v7608 = vunpack.c.l.b16 %v6843
  %v7609 = vunpack.c.h.b16 %v6843
  %v7610 = vunpack.c.l.b16 %v6844
  %v7611 = vunpack.c.h.b16 %v6844
  %v7612 = vunpack.c.l.b16 %v6845
  %v7613 = vunpack.c.h.b16 %v6845
  %v7614 = vunpack.c.l.b16 %v6846
  %v7615 = vunpack.c.h.b16 %v6846
  %v7616 = vunpack.c.l.b16 %v6847
  %v7617 = vunpack.c.h.b16 %v6847
  %v7618 = vunpack.c.l.b16 %v6848
  %v7619 = vunpack.c.h.b16 %v6848
  %v7620 = vunpack.c.l.b16 %v6849
  %v7621 = vunpack.c.h.b16 %v6849
  %v7622 = vunpack.c.l.b16 %v6850
  %v7623 = vunpack.c.h.b16 %v6850
  %v7624 = vunpack.c.l.b16 %v6851
  %v7625 = vunpack.c.h.b16 %v6851
  %v7626 = vunpack.c.l.b16 %v6852
  %v7627 = vunpack.c.h.b16 %v6852
  %v7628 = vunpack.c.l.b16 %v6853
  %v7629 = vunpack.c.h.b16 %v6853
  %v7630 = vunpack.c.l.b16 %v6854
  %v7631 = vunpack.c.h.b16 %v6854
  %v7632 = vunpack.c.l.b16 %v6855
  %v7633 = vunpack.c.h.b16 %v6855
  %v7634 = vunpack.c.l.b16 %v6856
  %v7635 = vunpack.c.h.b16 %v6856
  %v7636 = vunpack.c.l.b16 %v6857
  %v7637 = vunpack.c.h.b16 %v6857
  %v7638 = vunpack.c.l.b16 %v6858
  %v7639 = vunpack.c.h.b16 %v6858
  %v7640 = vunpack.c.l.b16 %v6859
  %v7641 = vunpack.c.h.b16 %v6859
  %v7642 = vunpack.c.l.b16 %v6860
  %v7643 = vunpack.c.h.b16 %v6860
  %v7644 = vunpack.c.l.b16 %v6861
  %v7645 = vunpack.c.h.b16 %v6861
  %v7646 = vunpack.c.l.b16 %v6862
  %v7647 = vunpack.c.h.b16 %v6862
  %v7648 = vunpack.c.l.b16 %v6863
  %v7649 = vunpack.c.h.b16 %v6863
  %v7650 = vunpack.c.l.b16 %v6864
  %v7651 = vunpack.c.h.b16 %v6864
  %v7652 = vunpack.c.l.b16 %v6865
  %v7653 = vunpack.c.h.b16 %v6865
  %v7654 = vunpack.c.l.b16 %v6866
  %v7655 = vunpack.c.h.b16 %v6866
  %v7656 = vunpack.c.l.b16 %v6867
  %v7657 = vunpack.c.h.b16 %v6867
  %v7658 = vunpack.c.l.b16 %v6868
  %v7659 = vunpack.c.h.b16 %v6868
  %v7660 = vunpack.c.l.b16 %v6869
  %v7661 = vunpack.c.h.b16 %v6869
  %v7662 = vunpack.c.l.b16 %v6870
  %v7663 = vunpack.c.h.b16 %v6870
  %v7664 = vunpack.c.l.b16 %v6871
  %v7665 = vunpack.c.h.b16 %v6871
  %v7666 = vunpack.c.l.b16 %v6872
  %v7667 = vunpack.c.h.b16 %v6872
  %v7668 = vunpack.c.l.b16 %v6873
  %v7669 = vunpack.c.h.b16 %v6873
  %v7670 = vunpack.c.l.b16 %v6874
  %v7671 = vunpack.c.h.b16 %v6874
  %v7672 = vunpack.c.l.b16 %v6875
  %v7673 = vunpack.c.h.b16 %v6875
  %v7674 = vunpack.c.l.b16 %v6876
  %v7675 = vunpack.c.h.b16 %v6876
  %v7676 = vunpack.c.l.b16 %v6877
  %v7677 = vunpack.c.h.b16 %v6877
  %v7678 = vunpack.c.l.b16 %v6878
  %v7679 = vunpack.c.h.b16 %v6878
  %v7680 = vunpack.c.l.b16 %v6879
  %v7681 = vunpack.c.h.b16 %v6879
  %v7682 = vunpack.c.l.b16 %v6880
  %v7683 = vunpack.c.h.b16 %v6880
  %v7684 = vunpack.c.l.b16 %v6881
  %v7685 = vunpack.c.h.b16 %v6881
  %v7686 = vunpack.c.l.b16 %v6882
  %v7687 = vunpack.c.h.b16 %v6882
  %v7688 = vunpack.c.l.b16 %v6883
  %v7689 = vunpack.c.h.b16 %v6883
  %v7690 = vunpack.c.l.b16 %v6884
  %v7691 = vunpack.c.h.b16 %v6884
  %v7692 = vunpack.c.l.b16 %v6885
  %v7693 = vunpack.c.h.b16 %v6885
  %v7694 = vunpack.c.l.b16 %v6886
  %v7695 = vunpack.c.h.b16 %v6886
  %v7696 = vunpack.c.l.b16 %v6887
  %v7697 = vunpack.c.h.b16 %v6887
  %v7698 = vunpack.c.l.b16 %v6888
  %v7699 = vunpack.c.h.b16 %v6888
  %v7700 = vunpack.c.l.b16 %v6889
  %v7701 = vunpack.c.h.b16 %v6889
  %v7702 = vunpack.c.l.b16 %v6890
  %v7703 = vunpack.c.h.b16 %v6890
  %v7704 = vunpack.c.l.b16 %v6891
  %v7705 = vunpack.c.h.b16 %v6891
  %v7706 = vunpack.c.l.b16 %v6892
  %v7707 = vunpack.c.h.b16 %v6892
  %v7708 = vunpack.c.l.b16 %v6893
  %v7709 = vunpack.c.h.b16 %v6893
  %v7710 = vunpack.c.l.b16 %v6894
  %v7711 = vunpack.c.h.b16 %v6894
  %v7712 = vunpack.c.l.b16 %v6895
  %v7713 = vunpack.c.h.b16 %v6895
  %v7714 = vunpack.c.l.b16 %v6896
  %v7715 = vunpack.c.h.b16 %v6896
  %v7716 = vunpack.c.l.b16 %v6897
  %v7717 = vunpack.c.h.b16 %v6897
  %v7718 = vunpack.c.l.b16 %v6898
  %v7719 = vunpack.c.h.b16 %v6898
  %v7720 = vunpack.c.l.b16 %v6899
  %v7721 = vunpack.c.h.b16 %v6899
  %v7722 = vunpack.c.l.b16 %v6900
  %v7723 = vunpack.c.h.b16 %v6900
  %v7724 = vunpack.c.l.b16 %v6901
  %v7725 = vunpack.c.h.b16 %v6901
  %v7726 = vunpack.c.l.b16 %v6902
  %v7727 = vunpack.c.h.b16 %v6902
  %v7728 = vunpack.c.l.b16 %v6903
  %v7729 = vunpack.c.h.b16 %v6903
  %v7730 = vunpack.c.l.b16 %v6904
  %v7731 = vunpack.c.h.b16 %v6904
  %v7732 = vunpack.c.l.b16 %v6905
  %v7733 = vunpack.c.h.b16 %v6905
  %v7734 = vunpack.c.l.b16 %v6906
  %v7735 = vunpack.c.h.b16 %v6906
  %v7736 = vunpack.c.l.b16 %v6907
  %v7737 = vunpack.c.h.b16 %v6907
  %v7738 = vunpack.c.l.b16 %v6908
  %v7739 = vunpack.c.h.b16 %v6908
  %v7740 = vunpack.c.l.b16 %v6909
  %v7741 = vunpack.c.h.b16 %v6909
  %v7742 = vunpack.c.l.b16 %v6910
  %v7743 = vunpack.c.h.b16 %v6910
  %v7744 = vunpack.c.l.b16 %v6911
  %v7745 = vunpack.c.h.b16 %v6911
  %v7746 = vunpack.c.l.b16 %v6912
  %v7747 = vunpack.c.h.b16 %v6912
  %v7748 = vunpack.c.l.b16 %v6913
  %v7749 = vunpack.c.h.b16 %v6913
  %v7750 = vunpack.c.l.b16 %v6914
  %v7751 = vunpack.c.h.b16 %v6914
  %v7752 = vunpack.c.l.b16 %v6915
  %v7753 = vunpack.c.h.b16 %v6915
  %v7754 = vunpack.c.l.b16 %v6916
  %v7755 = vunpack.c.h.b16 %v6916
  %v7756 = vunpack.c.l.b16 %v6917
  %v7757 = vunpack.c.h.b16 %v6917
  %v7758 = vunpack.c.l.b16 %v6918
  %v7759 = vunpack.c.h.b16 %v6918
  %v7760 = vunpack.c.l.b16 %v6919
  %v7761 = vunpack.c.h.b16 %v6919
  %v7762 = vunpack.c.l.b16 %v6920
  %v7763 = vunpack.c.h.b16 %v6920
  %v7764 = vunpack.c.l.b16 %v6921
  %v7765 = vunpack.c.h.b16 %v6921
  %v7766 = vunpack.c.l.b16 %v6922
  %v7767 = vunpack.c.h.b16 %v6922
  %v7768 = vunpack.c.l.b16 %v6923
  %v7769 = vunpack.c.h.b16 %v6923
  %v7770 = vunpack.c.l.b16 %v6924
  %v7771 = vunpack.c.h.b16 %v6924
  %v7772 = vunpack.c.l.b16 %v6925
  %v7773 = vunpack.c.h.b16 %v6925
  %v7774 = vunpack.c.l.b16 %v6926
  %v7775 = vunpack.c.h.b16 %v6926
  %v7776 = vunpack.c.l.b16 %v6927
  %v7777 = vunpack.c.h.b16 %v6927
  %v7778 = vunpack.c.l.b16 %v6928
  %v7779 = vunpack.c.h.b16 %v6928
  %v7780 = vunpack.c.l.b16 %v6929
  %v7781 = vunpack.c.h.b16 %v6929
  %v7782 = vunpack.c.l.b16 %v6930
  %v7783 = vunpack.c.h.b16 %v6930
  %v7784 = vunpack.c.l.b16 %v6931
  %v7785 = vunpack.c.h.b16 %v6931
  %v7786 = vunpack.c.l.b16 %v6932
  %v7787 = vunpack.c.h.b16 %v6932
  %v7788 = vunpack.c.l.b16 %v6933
  %v7789 = vunpack.c.h.b16 %v6933
  %v7790 = vunpack.c.l.b16 %v6934
  %v7791 = vunpack.c.h.b16 %v6934
  %v7792 = vunpack.c.l.b16 %v6935
  %v7793 = vunpack.c.h.b16 %v6935
  %v7794 = vunpack.c.l.b16 %v6936
  %v7795 = vunpack.c.h.b16 %v6936
  %v7796 = vunpack.c.l.b16 %v6937
  %v7797 = vunpack.c.h.b16 %v6937
  %v7798 = vunpack.c.l.b16 %v6938
  %v7799 = vunpack.c.h.b16 %v6938
  %v7800 = vunpack.c.l.b16 %v6939
  %v7801 = vunpack.c.h.b16 %v6939
  %v7802 = vunpack.c.l.b16 %v6940
  %v7803 = vunpack.c.h.b16 %v6940
  %v7804 = vunpack.c.l.b16 %v6941
  %v7805 = vunpack.c.h.b16 %v6941
  %v7806 = vunpack.c.l.b16 %v6942
  %v7807 = vunpack.c.h.b16 %v6942
  %v7808 = vunpack.c.l.b16 %v6943
  %v7809 = vunpack.c.h.b16 %v6943
  %v7810 = vunpack.c.l.b16 %v6944
  %v7811 = vunpack.c.h.b16 %v6944
  %v7812 = vunpack.c.l.b16 %v6945
  %v7813 = vunpack.c.h.b16 %v6945
  %v7814 = vunpack.c.l.b16 %v6946
  %v7815 = vunpack.c.h.b16 %v6946
  %v7816 = vunpack.c.l.b16 %v6947
  %v7817 = vunpack.c.h.b16 %v6947
  %v7818 = vunpack.c.l.b16 %v6948
  %v7819 = vunpack.c.h.b16 %v6948
  %v7820 = vunpack.c.l.b16 %v6949
  %v7821 = vunpack.c.h.b16 %v6949
  %v7822 = vunpack.c.l.b16 %v6950
  %v7823 = vunpack.c.h.b16 %v6950
  %v7824 = vunpack.c.l.b16 %v6951
  %v7825 = vunpack.c.h.b16 %v6951
  %v7826 = vunpack.c.l.b16 %v6952
  %v7827 = vunpack.c.h.b16 %v6952
  %v7828 = vunpack.c.l.b16 %v6953
  %v7829 = vunpack.c.h.b16 %v6953
  %v7830 = vunpack.c.l.b16 %v6954
  %v7831 = vunpack.c.h.b16 %v6954
  %v7832 = vunpack.c.l.b16 %v6955
  %v7833 = vunpack.c.h.b16 %v6955
  %v7834 = vunpack.c.l.b16 %v6956
  %v7835 = vunpack.c.h.b16 %v6956
  %v7836 = vunpack.c.l.b16 %v6957
  %v7837 = vunpack.c.h.b16 %v6957
  %v7838 = vunpack.c.l.b16 %v6958
  %v7839 = vunpack.c.h.b16 %v6958
  %v7840 = vunpack.c.l.b16 %v6959
  %v7841 = vunpack.c.h.b16 %v6959
  %v7842 = vunpack.c.l.b16 %v6960
  %v7843 = vunpack.c.h.b16 %v6960
  %v7844 = vunpack.c.l.b16 %v6961
  %v7845 = vunpack.c.h.b16 %v6961
  %v7846 = vunpack.c.l.b16 %v6962
  %v7847 = vunpack.c.h.b16 %v6962
  %v7848 = vunpack.c.l.b16 %v6963
  %v7849 = vunpack.c.h.b16 %v6963
  %v7850 = vunpack.c.l.b16 %v6964
  %v7851 = vunpack.c.h.b16 %v6964
  %v7852 = vpack.c.b16 %v7288, %v7282
  %v7853 = vpack.c.b16 %v7289, %v7283
  %v7854 = vpack.c.b16 %v7290, %v7284
  %v7855 = vpack.c.b16 %v7291, %v7285
  %v7856 = vpack.c.b16 %v7292, %v7286
  %v7857 = vpack.c.b16 %v7293, %v7287
  %v7858 = vpack.c.b16 %v7300, %v7294
  %v7859 = vpack.c.b16 %v7301, %v7295
  %v7860 = vpack.c.b16 %v7302, %v7296
  %v7861 = vpack.c.b16 %v7303, %v7297
  %v7862 = vpack.c.b16 %v7304, %v7298
  %v7863 = vpack.c.b16 %v7305, %v7299
  %v7864 = vpack.c.b16 %v7312, %v7306
  %v7865 = vpack.c.b16 %v7313, %v7307
  %v7866 = vpack.c.b16 %v7314, %v7308
  %v7867 = vpack.c.b16 %v7315, %v7309
  %v7868 = vpack.c.b16 %v7316, %v7310
  %v7869 = vpack.c.b16 %v7317, %v7311
  %v7870 = vpack.c.b16 %v7324, %v7318
  %v7871 = vpack.c.b16 %v7325, %v7319
  %v7872 = vpack.c.b16 %v7326, %v7320
  %v7873 = vpack.c.b16 %v7327, %v7321
  %v7874 = vpack.c.b16 %v7328, %v7322
  %v7875 = vpack.c.b16 %v7329, %v7323
  %v7876 = vpack.c.b16 %v7336, %v7330
  %v7877 = vpack.c.b16 %v7337, %v7331
  %v7878 = vpack.c.b16 %v7338, %v7332
  %v7879 = vpack.c.b16 %v7339, %v7333
  %v7880 = vpack.c.b16 %v7340, %v7334
  %v7881 = vpack.c.b16 %v7341, %v7335
  %v7882 = vpack.c.b16 %v7348, %v7342
  %v7883 = vpack.c.b16 %v7349, %v7343
  %v7884 = vpack.c.b16 %v7350, %v7344
  %v7885 = vpack.c.b16 %v7351, %v7345
  %v7886 = vpack.c.b16 %v7352, %v7346
  %v7887 = vpack.c.b16 %v7353, %v7347
  %v7888 = vpack.c.b16 %v7360, %v7354
  %v7889 = vpack.c.b16 %v7361, %v7355
  %v7890 = vpack.c.b16 %v7362, %v7356
  %v7891 = vpack.c.b16 %v7363, %v7357
  %v7892 = vpack.c.b16 %v7364, %v7358
  %v7893 = vpack.c.b16 %v7365, %v7359
  %v7894 = vpack.c.b16 %v7372, %v7366
  %v7895 = vpack.c.b16 %v7373, %v7367
  %v7896 = vpack.c.b16 %v7374, %v7368
  %v7897 = vpack.c.b16 %v7375, %v7369
  %v7898 = vpack.c.b16 %v7376, %v7370
  %v7899 = vpack.c.b16 %v7377, %v7371
  %v7900 = vpack.c.b16 %v7384, %v7378
  %v7901 = vpack.c.b16 %v7385, %v7379
  %v7902 = vpack.c.b16 %v7386, %v7380
  %v7903 = vpack.c.b16 %v7387, %v7381
  %v7904 = vpack.c.b16 %v7388, %v7382
  %v7905 = vpack.c.b16 %v7389, %v7383
  %v7906 = vpack.c.b16 %v7396, %v7390
  %v7907 = vpack.c.b16 %v7397, %v7391
  %v7908 = vpack.c.b16 %v7398, %v7392
  %v7909 = vpack.c.b16 %v7399, %v7393
  %v7910 = vpack.c.b16 %v7400, %v7394
  %v7911 = vpack.c.b16 %v7401, %v7395
  %v7912 = vpack.c.b16 %v7408, %v7402
  %v7913 = vpack.c.b16 %v7409, %v7403
  %v7914 = vpack.c.b16 %v7410, %v7404
  %v7915 = vpack.c.b16 %v7411, %v7405
  %v7916 = vpack.c.b16 %v7412, %v7406
  %v7917 = vpack.c.b16 %v7413, %v7407
  %v7918 = vpack.c.b16 %v7420, %v7414
  %v7919 = vpack.c.b16 %v7421, %v7415
  %v7920 = vpack.c.b16 %v7422, %v7416
  %v7921 = vpack.c.b16 %v7423, %v7417
  %v7922 = vpack.c.b16 %v7424, %v7418
  %v7923 = vpack.c.b16 %v7425, %v7419
  %v7924 = vpack.c.b16 %v7432, %v7426
  %v7925 = vpack.c.b16 %v7433, %v7427
  %v7926 = vpack.c.b16 %v7434, %v7428
  %v7927 = vpack.c.b16 %v7435, %v7429
  %v7928 = vpack.c.b16 %v7436, %v7430
  %v7929 = vpack.c.b16 %v7437, %v7431
  %v7930 = vpack.c.b16 %v7444, %v7438
  %v7931 = vpack.c.b16 %v7445, %v7439
  %v7932 = vpack.c.b16 %v7446, %v7440
  %v7933 = vpack.c.b16 %v7447, %v7441
  %v7934 = vpack.c.b16 %v7448, %v7442
  %v7935 = vpack.c.b16 %v7449, %v7443
  %v7936 = vpack.c.b16 %v7456, %v7450
  %v7937 = vpack.c.b16 %v7457, %v7451
  %v7938 = vpack.c.b16 %v7458, %v7452
  %v7939 = vpack.c.b16 %v7459, %v7453
  %v7940 = vpack.c.b16 %v7460, %v7454
  %v7941 = vpack.c.b16 %v7461, %v7455
  %v7942 = vpack.c.b16 %v7468, %v7462
  %v7943 = vpack.c.b16 %v7469, %v7463
  %v7944 = vpack.c.b16 %v7470, %v7464
  %v7945 = vpack.c.b16 %v7471, %v7465
  %v7946 = vpack.c.b16 %v7472, %v7466
  %v7947 = vpack.c.b16 %v7473, %v7467
  %v7948 = vpack.c.b16 %v7480, %v7474
  %v7949 = vpack.c.b16 %v7481, %v7475
  %v7950 = vpack.c.b16 %v7482, %v7476
  %v7951 = vpack.c.b16 %v7483, %v7477
  %v7952 = vpack.c.b16 %v7484, %v7478
  %v7953 = vpack.c.b16 %v7485, %v7479
  %v7954 = vpack.c.b16 %v7492, %v7486
  %v7955 = vpack.c.b16 %v7493, %v7487
  %v7956 = vpack.c.b16 %v7494, %v7488
  %v7957 = vpack.c.b16 %v7495, %v7489
  %v7958 = vpack.c.b16 %v7496, %v7490
  %v7959 = vpack.c.b16 %v7497, %v7491
  %v7960 = vpack.c.b16 %v7504, %v7498
  %v7961 = vpack.c.b16 %v7505, %v7499
  %v7962 = vpack.c.b16 %v7506, %v7500
  %v7963 = vpack.c.b16 %v7507, %v7501
  %v7964 = vpack.c.b16 %v7508, %v7502
  %v7965 = vpack.c.b16 %v7509, %v7503
  %v7966 = vpack.c.b16 %v7516, %v7510
  %v7967 = vpack.c.b16 %v7517, %v7511
  %v7968 = vpack.c.b16 %v7518, %v7512
  %v7969 = vpack.c.b16 %v7519, %v7513
  %v7970 = vpack.c.b16 %v7520, %v7514
  %v7971 = vpack.c.b16 %v7521, %v7515
  %v7972 = vpack.c.b16 %v7528, %v7522
  %v7973 = vpack.c.b16 %v7529, %v7523
  %v7974 = vpack.c.b16 %v7530, %v7524
  %v7975 = vpack.c.b16 %v7531, %v7525
  %v7976 = vpack.c.b16 %v7532, %v7526
  %v7977 = vpack.c.b16 %v7533, %v7527
  %v7978 = vpack.c.b16 %v7540, %v7534
  %v7979 = vpack.c.b16 %v7541, %v7535
  %v7980 = vpack.c.b16 %v7542, %v7536
  %v7981 = vpack.c.b16 %v7543, %v7537
  %v7982 = vpack.c.b16 %v7544, %v7538
  %v7983 = vpack.c.b16 %v7545, %v7539
  %v7984 = vpack.c.b16 %v7552, %v7546
  %v7985 = vpack.c.b16 %v7553, %v7547
  %v7986 = vpack.c.b16 %v7554, %v7548
  %v7987 = vpack.c.b16 %v7555, %v7549
  %v7988 = vpack.c.b16 %v7556, %v7550
  %v7989 = vpack.c.b16 %v7557, %v7551
  %v7990 = vpack.c.b16 %v7564, %v7558
  %v7991 = vpack.c.b16 %v7565, %v7559
  %v7992 = vpack.c.b16 %v7566, %v7560
  %v7993 = vpack.c.b16 %v7567, %v7561
  %v7994 = vpack.c.b16 %v7568, %v7562
  %v7995 = vpack.c.b16 %v7569, %v7563
  %v7996 = vpack.c.b16 %v7576, %v7570
  %v7997 = vpack.c.b16 %v7577, %v7571
  %v7998 = vpack.c.b16 %v7578, %v7572
  %v7999 = vpack.c.b16 %v7579, %v7573
  %v8000 = vpack.c.b16 %v7580, %v7574
  %v8001 = vpack.c.b16 %v7581, %v7575
  %v8002 = vpack.c.b16 %v7588, %v7582
  %v8003 = vpack.c.b16 %v7589, %v7583
  %v8004 = vpack.c.b16 %v7590, %v7584
  %v8005 = vpack.c.b16 %v7591, %v7585
  %v8006 = vpack.c.b16 %v7592, %v7586
  %v8007 = vpack.c.b16 %v7593, %v7587
  %v8008 = vpack.c.b16 %v7600, %v7594
  %v8009 = vpack.c.b16 %v7601, %v7595
  %v8010 = vpack.c.b16 %v7602, %v7596
  %v8011 = vpack.c.b16 %v7603, %v7597
  %v8012 = vpack.c.b16 %v7604, %v7598
  %v8013 = vpack.c.b16 %v7605, %v7599
  %v8014 = vpack.c.b16 %v7612, %v7606
  %v8015 = vpack.c.b16 %v7613, %v7607
  %v8016 = vpack.c.b16 %v7614, %v7608
  %v8017 = vpack.c.b16 %v7615, %v7609
  %v8018 = vpack.c.b16 %v7616, %v7610
  %v8019 = vpack.c.b16 %v7617, %v7611
  %v8020 = vpack.c.b16 %v7624, %v7618
  %v8021 = vpack.c.b16 %v7625, %v7619
  %v8022 = vpack.c.b16 %v7626, %v7620
  %v8023 = vpack.c.b16 %v7627, %v7621
  %v8024 = vpack.c.b16 %v7628, %v7622
  %v8025 = vpack.c.b16 %v7629, %v7623
  %v8026 = vpack.c.b16 %v7636, %v7630
  %v8027 = vpack.c.b16 %v7637, %v7631
  %v8028 = vpack.c.b16 %v7638, %v7632
  %v8029 = vpack.c.b16 %v7639, %v7633
  %v8030 = vpack.c.b16 %v7640, %v7634
  %v8031 = vpack.c.b16 %v7641, %v7635
  %v8032 = vpack.c.b16 %v7648, %v7642
  %v8033 = vpack.c.b16 %v7649, %v7643
  %v8034 = vpack.c.b16 %v7650, %v7644
  %v8035 = vpack.c.b16 %v7651, %v7645
  %v8036 = vpack.c.b16 %v7652, %v7646
  %v8037 = vpack.c.b16 %v7653, %v7647
  %v8038 = vpack.c.b16 %v7660, %v7654
  %v8039 = vpack.c.b16 %v7661, %v7655
  %v8040 = vpack.c.b16 %v7662, %v7656
  %v8041 = vpack.c.b16 %v7663, %v7657
  %v8042 = vpack.c.b16 %v7664, %v7658
  %v8043 = vpack.c.b16 %v7665, %v7659
  %v8044 = vpack.c.b16 %v7672, %v7666
  %v8045 = vpack.c.b16 %v7673, %v7667
  %v8046 = vpack.c.b16 %v7674, %v7668
  %v8047 = vpack.c.b16 %v7675, %v7669
  %v8048 = vpack.c.b16 %v7676, %v7670
  %v8049 = vpack.c.b16 %v7677, %v7671
  %v8050 = vpack.c.b16 %v7684, %v7678
  %v8051 = vpack.c.b16 %v7685, %v7679
  %v8052 = vpack.c.b16 %v7686, %v7680
  %v8053 = vpack.c.b16 %v7687, %v7681
  %v8054 = vpack.c.b16 %v7688, %v7682
  %v8055 = vpack.c.b16 %v7689, %v7683
  %v8056 = vpack.c.b16 %v7696, %v7690
  %v8057 = vpack.c.b16 %v7697, %v7691
  %v8058 = vpack.c.b16 %v7698, %v7692
  %v8059 = vpack.c.b16 %v7699, %v7693
  %v8060 = vpack.c.b16 %v7700, %v7694
  %v8061 = vpack.c.b16 %v7701, %v7695
  %v8062 = vpack.c.b16 %v7708, %v7702
  %v8063 = vpack.c.b16 %v7709, %v7703
  %v8064 = vpack.c.b16 %v7710, %v7704
  %v8065 = vpack.c.b16 %v7711, %v7705
  %v8066 = vpack.c.b16 %v7712, %v7706
  %v8067 = vpack.c.b16 %v7713, %v7707
  %v8068 = vpack.c.b16 %v7720, %v7714
  %v8069 = vpack.c.b16 %v7721, %v7715
  %v8070 = vpack.c.b16 %v7722, %v7716
  %v8071 = vpack.c.b16 %v7723, %v7717
  %v8072 = vpack.c.b16 %v7724, %v7718
  %v8073 = vpack.c.b16 %v7725, %v7719
  %v8074 = vpack.c.b16 %v7732, %v7726
  %v8075 = vpack.c.b16 %v7733, %v7727
  %v8076 = vpack.c.b16 %v7734, %v7728
  %v8077 = vpack.c.b16 %v7735, %v7729
  %v8078 = vpack.c.b16 %v7736, %v7730
  %v8079 = vpack.c.b16 %v7737, %v7731
  %v8080 = vpack.c.b16 %v7744, %v7738
  %v8081 = vpack.c.b16 %v7745, %v7739
  %v8082 = vpack.c.b16 %v7746, %v7740
  %v8083 = vpack.c.b16 %v7747, %v7741
  %v8084 = vpack.c.b16 %v7748, %v7742
  %v8085 = vpack.c.b16 %v7749, %v7743
  %v8086 = vpack.c.b16 %v7756, %v7750
  %v8087 = vpack.c.b16 %v7757, %v7751
  %v8088 = vpack.c.b16 %v7758, %v7752
  %v8089 = vpack.c.b16 %v7759, %v7753
  %v8090 = vpack.c.b16 %v7760, %v7754
  %v8091 = vpack.c.b16 %v7761, %v7755
  %v8092 = vpack.c.b16 %v7768, %v7762
  %v8093 = vpack.c.b16 %v7769, %v7763
  %v8094 = vpack.c.b16 %v7770, %v7764
  %v8095 = vpack.c.b16 %v7771, %v7765
  %v8096 = vpack.c.b16 %v7772, %v7766
  %v8097 = vpack.c.b16 %v7773, %v7767
  %v8098 = vpack.c.b16 %v7780, %v7774
  %v8099 = vpack.c.b16 %v7781, %v7775
  %v8100 = vpack.c.b16 %v7782, %v7776
  %v8101 = vpack.c.b16 %v7783, %v7777
  %v8102 = vpack.c.b16 %v7784, %v7778
  %v8103 = vpack.c.b16 %v7785, %v7779
  %v8104 = vpack.c.b16 %v7792, %v7786
  %v8105 = vpack.c.b16 %v7793, %v7787
  %v8106 = vpack.c.b16 %v7794, %v7788
  %v8107 = vpack.c.b16 %v7795, %v7789
  %v8108 = vpack.c.b16 %v7796, %v7790
  %v8109 = vpack.c.b16 %v7797, %v7791
  %v8110 = vpack.c.b16 %v7804, %v7798
  %v8111 = vpack.c.b16 %v7805, %v7799
  %v8112 = vpack.c.b16 %v7806, %v7800
  %v8113 = vpack.c.b16 %v7807, %v7801
  %v8114 = vpack.c.b16 %v7808, %v7802
  %v8115 = vpack.c.b16 %v7809, %v7803
  %v8116 = vpack.c.b16 %v7816, %v7810
  %v8117 = vpack.c.b16 %v7817, %v7811
  %v8118 = vpack.c.b16 %v7818, %v7812
  %v8119 = vpack.c.b16 %v7819, %v7813
  %v8120 = vpack.c.b16 %v7820, %v7814
  %v8121 = vpack.c.b16 %v7821, %v7815
  %v8122 = vpack.c.b16 %v7828, %v7822
  %v8123 = vpack.c.b16 %v7829, %v7823
  %v8124 = vpack.c.b16 %v7830, %v7824
  %v8125 = vpack.c.b16 %v7831, %v7825
  %v8126 = vpack.c.b16 %v7832, %v7826
  %v8127 = vpack.c.b16 %v7833, %v7827
  %v8128 = vpack.c.b16 %v7840, %v7834
  %v8129 = vpack.c.b16 %v7841, %v7835
  %v8130 = vpack.c.b16 %v7842, %v7836
  %v8131 = vpack.c.b16 %v7843, %v7837
  %v8132 = vpack.c.b16 %v7844, %v7838
  %v8133 = vpack.c.b16 %v7845, %v7839
  %v8134 = vpack.c.b16 %v7846, %v7846
  %v8135 = vpack.c.b16 %v7847, %v7847
  %v8136 = vpack.c.b16 %v7848, %v7848
  %v8137 = vpack.c.b16 %v7849, %v7849
  %v8138 = vpack.c.b16 %v7850, %v7850
  %v8139 = vpack.c.b16 %v7851, %v7851
  %vm8422 = vcmask 949248
  %v8424 = vsel %vm8422, %v6679, 0
  %vm8426 = vcmask 1041408
  %v8428 = vsel %vm8426, %v8134, 0
  %v8431 = vsel %vm8426, %v8135, 0
  %v8434 = vsel %vm8426, %v8136, 0
  %v8437 = vsel %vm8426, %v8137, 0
  %v8440 = vsel %vm8426, %v8138, 0
  %v8443 = vsel %vm8426, %v8139, 0
  %8445 = vmatprep.subr.bf16.mxu0 %v7853
  %8446 = vmatpush1.bf16.msra.mxu0 %v7852
  %8447 = vmatprep.subr.bf16.mxu0 %v7859
  %8448 = vmatpush1.bf16.msra.mxu0 %v7858
  %8449 = vmatprep.subr.bf16.mxu0 %v7865
  %8450 = vmatpush1.bf16.msra.mxu0 %v7864
  %8451 = vmatprep.subr.bf16.mxu0 %v7871
  %8452 = vmatpush1.bf16.msra.mxu0 %v7870
  %8453 = vmatprep.subr.bf16.mxu0 %v7877
  %8454 = vmatpush1.bf16.msra.mxu0 %v7876
  %8455 = vmatprep.subr.bf16.mxu0 %v7883
  %8456 = vmatpush1.bf16.msra.mxu0 %v7882
  %8457 = vmatprep.subr.bf16.mxu0 %v7889
  %8458 = vmatpush1.bf16.msra.mxu0 %v7888
  %8459 = vmatprep.subr.bf16.mxu0 %v7895
  %8460 = vmatpush1.bf16.msra.mxu0 %v7894
  %8461 = vmatprep.subr.bf16.mxu0 %v7901
  %8462 = vmatpush1.bf16.msra.mxu0 %v7900
  %8463 = vmatprep.subr.bf16.mxu0 %v7907
  %8464 = vmatpush1.bf16.msra.mxu0 %v7906
  %8465 = vmatprep.subr.bf16.mxu0 %v7913
  %8466 = vmatpush1.bf16.msra.mxu0 %v7912
  %8467 = vmatprep.subr.bf16.mxu0 %v7919
  %8468 = vmatpush1.bf16.msra.mxu0 %v7918
  %8469 = vmatprep.subr.bf16.mxu0 %v7925
  %8470 = vmatpush1.bf16.msra.mxu0 %v7924
  %8471 = vmatprep.subr.bf16.mxu0 %v7931
  %8472 = vmatpush1.bf16.msra.mxu0 %v7930
  %8473 = vmatprep.subr.bf16.mxu0 %v7937
  %8474 = vmatpush1.bf16.msra.mxu0 %v7936
  %8475 = vmatprep.subr.bf16.mxu0 %v7943
  %8476 = vmatpush1.bf16.msra.mxu0 %v7942
  %8477 = vmatprep.mubr.bf16.mxu0 %v6675
  %8478 = vmatmul.mubr.bf16.gmra.mrb[0].mxu0 %v6674
  %v8479 = vpop.f32.mrb[0].mxu0
  %v8480 = vadd.f32 %v6970, %v8479
  %v8481 = vpop.f32.mrb[0].mxu0
  %v8482 = vadd.f32 %v6974, %v8481
  %v8483 = vpop.f32.mrb[0].mxu0
  %v8484 = vpop.f32.mrb[0].mxu0
  %8485 = vdwg.mxu0
  %8486 = vmatprep.subr.bf16.mxu0 %v7949
  %8487 = vmatpush1.bf16.msra.mxu0 %v7948
  %8488 = vmatprep.subr.bf16.mxu0 %v7955
  %8489 = vmatpush1.bf16.msra.mxu0 %v7954
  %8490 = vmatprep.subr.bf16.mxu0 %v7961
  %8491 = vmatpush1.bf16.msra.mxu0 %v7960
  %8492 = vmatprep.subr.bf16.mxu0 %v7967
  %8493 = vmatpush1.bf16.msra.mxu0 %v7966
  %8494 = vmatprep.subr.bf16.mxu0 %v7973
  %8495 = vmatpush1.bf16.msra.mxu0 %v7972
  %8496 = vmatprep.subr.bf16.mxu0 %v7979
  %8497 = vmatpush1.bf16.msra.mxu0 %v7978
  %8498 = vmatprep.subr.bf16.mxu0 %v7985
  %8499 = vmatpush1.bf16.msra.mxu0 %v7984
  %8500 = vmatprep.subr.bf16.mxu0 %v7991
  %8501 = vmatpush1.bf16.msra.mxu0 %v7990
  %8502 = vmatprep.subr.bf16.mxu0 %v7997
  %8503 = vmatpush1.bf16.msra.mxu0 %v7996
  %8504 = vmatprep.subr.bf16.mxu0 %v8003
  %8505 = vmatpush1.bf16.msra.mxu0 %v8002
  %8506 = vmatprep.subr.bf16.mxu0 %v8009
  %8507 = vmatpush1.bf16.msra.mxu0 %v8008
  %8508 = vmatprep.subr.bf16.mxu0 %v8015
  %8509 = vmatpush1.bf16.msra.mxu0 %v8014
  %8510 = vmatprep.subr.bf16.mxu0 %v8021
  %8511 = vmatpush1.bf16.msra.mxu0 %v8020
  %8512 = vmatprep.subr.bf16.mxu0 %v8027
  %8513 = vmatpush1.bf16.msra.mxu0 %v8026
  %8514 = vmatprep.subr.bf16.mxu0 %v8033
  %8515 = vmatpush1.bf16.msra.mxu0 %v8032
  %8516 = vmatprep.subr.bf16.mxu0 %v8039
  %8517 = vmatpush1.bf16.msra.mxu0 %v8038
  %8518 = vmatprep.mubr.bf16.mxu0 %v6677
  %8519 = vmatmul.mubr.bf16.gmra.mrb[0].mxu0 %v6676
  %v8520 = vpop.f32.mrb[0].mxu0
  %v8521 = vadd.f32 %v8480, %v8520
  %v8522 = vpop.f32.mrb[0].mxu0
  %v8523 = vadd.f32 %v8482, %v8522
  %v8524 = vpop.f32.mrb[0].mxu0
  %v8525 = vpop.f32.mrb[0].mxu0
  %8526 = vdwg.mxu0
  %8527 = vmatprep.subr.bf16.mxu0 %v8045
  %8528 = vmatpush1.bf16.msra.mxu0 %v8044
  %8529 = vmatprep.subr.bf16.mxu0 %v8051
  %8530 = vmatpush1.bf16.msra.mxu0 %v8050
  %8531 = vmatprep.subr.bf16.mxu0 %v8057
  %8532 = vmatpush1.bf16.msra.mxu0 %v8056
  %8533 = vmatprep.subr.bf16.mxu0 %v8063
  %8534 = vmatpush1.bf16.msra.mxu0 %v8062
  %8535 = vmatprep.subr.bf16.mxu0 %v8069
  %8536 = vmatpush1.bf16.msra.mxu0 %v8068
  %8537 = vmatprep.subr.bf16.mxu0 %v8075
  %8538 = vmatpush1.bf16.msra.mxu0 %v8074
  %8539 = vmatprep.subr.bf16.mxu0 %v8081
  %8540 = vmatpush1.bf16.msra.mxu0 %v8080
  %8541 = vmatprep.subr.bf16.mxu0 %v8087
  %8542 = vmatpush1.bf16.msra.mxu0 %v8086
  %8543 = vmatprep.subr.bf16.mxu0 %v8093
  %8544 = vmatpush1.bf16.msra.mxu0 %v8092
  %8545 = vmatprep.subr.bf16.mxu0 %v8099
  %8546 = vmatpush1.bf16.msra.mxu0 %v8098
  %8547 = vmatprep.subr.bf16.mxu0 %v8105
  %8548 = vmatpush1.bf16.msra.mxu0 %v8104
  %8549 = vmatprep.subr.bf16.mxu0 %v8111
  %8550 = vmatpush1.bf16.msra.mxu0 %v8110
  %8551 = vmatprep.subr.bf16.mxu0 %v8117
  %8552 = vmatpush1.bf16.msra.mxu0 %v8116
  %8553 = vmatprep.subr.bf16.mxu0 %v8123
  %8554 = vmatpush1.bf16.msra.mxu0 %v8122
  %8555 = vmatprep.subr.bf16.mxu0 %v8129
  %8556 = vmatpush1.bf16.msra.mxu0 %v8128
  %8557 = vmatprep.subr.bf16.mxu0 %v8431
  %8558 = vmatpush1.bf16.msra.mxu0 %v8428
  %8559 = vmatprep.mubr.bf16.mxu0 %v8424
  %8560 = vmatmul.mubr.bf16.gmra.mrb[0].mxu0 %v6678
  %v8561 = vpop.f32.mrb[0].mxu0
  %v8562 = vadd.f32 %v8521, %v8561
  %v8563 = vpop.f32.mrb[0].mxu0
  %v8564 = vadd.f32 %v8523, %v8563
  %v8565 = vpop.f32.mrb[0].mxu0
  %v8566 = vpop.f32.mrb[0].mxu0
  %8567 = vdwg.mxu0
  %8568 = vmatprep.subr.bf16.mxu0 %v7855
  %8569 = vmatpush1.bf16.msra.mxu0 %v7854
  %8570 = vmatprep.subr.bf16.mxu0 %v7861
  %8571 = vmatpush1.bf16.msra.mxu0 %v7860
  %8572 = vmatprep.subr.bf16.mxu0 %v7867
  %8573 = vmatpush1.bf16.msra.mxu0 %v7866
  %8574 = vmatprep.subr.bf16.mxu0 %v7873
  %8575 = vmatpush1.bf16.msra.mxu0 %v7872
  %8576 = vmatprep.subr.bf16.mxu0 %v7879
  %8577 = vmatpush1.bf16.msra.mxu0 %v7878
  %8578 = vmatprep.subr.bf16.mxu0 %v7885
  %8579 = vmatpush1.bf16.msra.mxu0 %v7884
  %8580 = vmatprep.subr.bf16.mxu0 %v7891
  %8581 = vmatpush1.bf16.msra.mxu0 %v7890
  %8582 = vmatprep.subr.bf16.mxu0 %v7897
  %8583 = vmatpush1.bf16.msra.mxu0 %v7896
  %8584 = vmatprep.subr.bf16.mxu0 %v7903
  %8585 = vmatpush1.bf16.msra.mxu0 %v7902
  %8586 = vmatprep.subr.bf16.mxu0 %v7909
  %8587 = vmatpush1.bf16.msra.mxu0 %v7908
  %8588 = vmatprep.subr.bf16.mxu0 %v7915
  %8589 = vmatpush1.bf16.msra.mxu0 %v7914
  %8590 = vmatprep.subr.bf16.mxu0 %v7921
  %8591 = vmatpush1.bf16.msra.mxu0 %v7920
  %8592 = vmatprep.subr.bf16.mxu0 %v7927
  %8593 = vmatpush1.bf16.msra.mxu0 %v7926
  %8594 = vmatprep.subr.bf16.mxu0 %v7933
  %8595 = vmatpush1.bf16.msra.mxu0 %v7932
  %8596 = vmatprep.subr.bf16.mxu0 %v7939
  %8597 = vmatpush1.bf16.msra.mxu0 %v7938
  %8598 = vmatprep.subr.bf16.mxu0 %v7945
  %8599 = vmatpush1.bf16.msra.mxu0 %v7944
  %8600 = vmatprep.mubr.bf16.mxu0 %v6675
  %8601 = vmatmul.mubr.bf16.gmra.mrb[0].mxu0 %v6674
  %v8602 = vpop.f32.mrb[0].mxu0
  %v8603 = vadd.f32 %v6978, %v8602
  %v8604 = vpop.f32.mrb[0].mxu0
  %v8605 = vadd.f32 %v6982, %v8604
  %v8606 = vpop.f32.mrb[0].mxu0
  %v8607 = vpop.f32.mrb[0].mxu0
  %8608 = vdwg.mxu0
  %8609 = vmatprep.subr.bf16.mxu0 %v7951
  %8610 = vmatpush1.bf16.msra.mxu0 %v7950
  %8611 = vmatprep.subr.bf16.mxu0 %v7957
  %8612 = vmatpush1.bf16.msra.mxu0 %v7956
  %8613 = vmatprep.subr.bf16.mxu0 %v7963
  %8614 = vmatpush1.bf16.msra.mxu0 %v7962
  %8615 = vmatprep.subr.bf16.mxu0 %v7969
  %8616 = vmatpush1.bf16.msra.mxu0 %v7968
  %8617 = vmatprep.subr.bf16.mxu0 %v7975
  %8618 = vmatpush1.bf16.msra.mxu0 %v7974
  %8619 = vmatprep.subr.bf16.mxu0 %v7981
  %8620 = vmatpush1.bf16.msra.mxu0 %v7980
  %8621 = vmatprep.subr.bf16.mxu0 %v7987
  %8622 = vmatpush1.bf16.msra.mxu0 %v7986
  %8623 = vmatprep.subr.bf16.mxu0 %v7993
  %8624 = vmatpush1.bf16.msra.mxu0 %v7992
  %8625 = vmatprep.subr.bf16.mxu0 %v7999
  %8626 = vmatpush1.bf16.msra.mxu0 %v7998
  %8627 = vmatprep.subr.bf16.mxu0 %v8005
  %8628 = vmatpush1.bf16.msra.mxu0 %v8004
  %8629 = vmatprep.subr.bf16.mxu0 %v8011
  %8630 = vmatpush1.bf16.msra.mxu0 %v8010
  %8631 = vmatprep.subr.bf16.mxu0 %v8017
  %8632 = vmatpush1.bf16.msra.mxu0 %v8016
  %8633 = vmatprep.subr.bf16.mxu0 %v8023
  %8634 = vmatpush1.bf16.msra.mxu0 %v8022
  %8635 = vmatprep.subr.bf16.mxu0 %v8029
  %8636 = vmatpush1.bf16.msra.mxu0 %v8028
  %8637 = vmatprep.subr.bf16.mxu0 %v8035
  %8638 = vmatpush1.bf16.msra.mxu0 %v8034
  %8639 = vmatprep.subr.bf16.mxu0 %v8041
  %8640 = vmatpush1.bf16.msra.mxu0 %v8040
  %8641 = vmatprep.mubr.bf16.mxu0 %v6677
  %8642 = vmatmul.mubr.bf16.gmra.mrb[0].mxu0 %v6676
  %v8643 = vpop.f32.mrb[0].mxu0
  %v8644 = vadd.f32 %v8603, %v8643
  %v8645 = vpop.f32.mrb[0].mxu0
  %v8646 = vadd.f32 %v8605, %v8645
  %v8647 = vpop.f32.mrb[0].mxu0
  %v8648 = vpop.f32.mrb[0].mxu0
  %8649 = vdwg.mxu0
  %8650 = vmatprep.subr.bf16.mxu0 %v8047
  %8651 = vmatpush1.bf16.msra.mxu0 %v8046
  %8652 = vmatprep.subr.bf16.mxu0 %v8053
  %8653 = vmatpush1.bf16.msra.mxu0 %v8052
  %8654 = vmatprep.subr.bf16.mxu0 %v8059
  %8655 = vmatpush1.bf16.msra.mxu0 %v8058
  %8656 = vmatprep.subr.bf16.mxu0 %v8065
  %8657 = vmatpush1.bf16.msra.mxu0 %v8064
  %8658 = vmatprep.subr.bf16.mxu0 %v8071
  %8659 = vmatpush1.bf16.msra.mxu0 %v8070
  %8660 = vmatprep.subr.bf16.mxu0 %v8077
  %8661 = vmatpush1.bf16.msra.mxu0 %v8076
  %8662 = vmatprep.subr.bf16.mxu0 %v8083
  %8663 = vmatpush1.bf16.msra.mxu0 %v8082
  %8664 = vmatprep.subr.bf16.mxu0 %v8089
  %8665 = vmatpush1.bf16.msra.mxu0 %v8088
  %8666 = vmatprep.subr.bf16.mxu0 %v8095
  %8667 = vmatpush1.bf16.msra.mxu0 %v8094
  %8668 = vmatprep.subr.bf16.mxu0 %v8101
  %8669 = vmatpush1.bf16.msra.mxu0 %v8100
  %8670 = vmatprep.subr.bf16.mxu0 %v8107
  %8671 = vmatpush1.bf16.msra.mxu0 %v8106
  %8672 = vmatprep.subr.bf16.mxu0 %v8113
  %8673 = vmatpush1.bf16.msra.mxu0 %v8112
  %8674 = vmatprep.subr.bf16.mxu0 %v8119
  %8675 = vmatpush1.bf16.msra.mxu0 %v8118
  %8676 = vmatprep.subr.bf16.mxu0 %v8125
  %8677 = vmatpush1.bf16.msra.mxu0 %v8124
  %8678 = vmatprep.subr.bf16.mxu0 %v8131
  %8679 = vmatpush1.bf16.msra.mxu0 %v8130
  %8680 = vmatprep.subr.bf16.mxu0 %v8437
  %8681 = vmatpush1.bf16.msra.mxu0 %v8434
  %8682 = vmatprep.mubr.bf16.mxu0 %v8424
  %8683 = vmatmul.mubr.bf16.gmra.mrb[0].mxu0 %v6678
  %v8684 = vpop.f32.mrb[0].mxu0
  %v8685 = vadd.f32 %v8644, %v8684
  %v8686 = vpop.f32.mrb[0].mxu0
  %v8687 = vadd.f32 %v8646, %v8686
  %v8688 = vpop.f32.mrb[0].mxu0
  %v8689 = vpop.f32.mrb[0].mxu0
  %8690 = vdwg.mxu0
  %8691 = vmatprep.subr.bf16.mxu0 %v7857
  %8692 = vmatpush1.bf16.msra.mxu0 %v7856
  %8693 = vmatprep.subr.bf16.mxu0 %v7863
  %8694 = vmatpush1.bf16.msra.mxu0 %v7862
  %8695 = vmatprep.subr.bf16.mxu0 %v7869
  %8696 = vmatpush1.bf16.msra.mxu0 %v7868
  %8697 = vmatprep.subr.bf16.mxu0 %v7875
  %8698 = vmatpush1.bf16.msra.mxu0 %v7874
  %8699 = vmatprep.subr.bf16.mxu0 %v7881
  %8700 = vmatpush1.bf16.msra.mxu0 %v7880
  %8701 = vmatprep.subr.bf16.mxu0 %v7887
  %8702 = vmatpush1.bf16.msra.mxu0 %v7886
  %8703 = vmatprep.subr.bf16.mxu0 %v7893
  %8704 = vmatpush1.bf16.msra.mxu0 %v7892
  %8705 = vmatprep.subr.bf16.mxu0 %v7899
  %8706 = vmatpush1.bf16.msra.mxu0 %v7898
  %8707 = vmatprep.subr.bf16.mxu0 %v7905
  %8708 = vmatpush1.bf16.msra.mxu0 %v7904
  %8709 = vmatprep.subr.bf16.mxu0 %v7911
  %8710 = vmatpush1.bf16.msra.mxu0 %v7910
  %8711 = vmatprep.subr.bf16.mxu0 %v7917
  %8712 = vmatpush1.bf16.msra.mxu0 %v7916
  %8713 = vmatprep.subr.bf16.mxu0 %v7923
  %8714 = vmatpush1.bf16.msra.mxu0 %v7922
  %8715 = vmatprep.subr.bf16.mxu0 %v7929
  %8716 = vmatpush1.bf16.msra.mxu0 %v7928
  %8717 = vmatprep.subr.bf16.mxu0 %v7935
  %8718 = vmatpush1.bf16.msra.mxu0 %v7934
  %8719 = vmatprep.subr.bf16.mxu0 %v7941
  %8720 = vmatpush1.bf16.msra.mxu0 %v7940
  %8721 = vmatprep.subr.bf16.mxu0 %v7947
  %8722 = vmatpush1.bf16.msra.mxu0 %v7946
  %8723 = vmatprep.mubr.bf16.mxu0 %v6675
  %8724 = vmatmul.mubr.bf16.gmra.mrb[0].mxu0 %v6674
  %v8725 = vpop.f32.mrb[0].mxu0
  %v8726 = vadd.f32 %v6986, %v8725
  %v8727 = vpop.f32.mrb[0].mxu0
  %v8728 = vadd.f32 %v6990, %v8727
  %v8729 = vpop.f32.mrb[0].mxu0
  %v8730 = vpop.f32.mrb[0].mxu0
  %8731 = vdwg.mxu0
  %8732 = vmatprep.subr.bf16.mxu0 %v7953
  %8733 = vmatpush1.bf16.msra.mxu0 %v7952
  %8734 = vmatprep.subr.bf16.mxu0 %v7959
  %8735 = vmatpush1.bf16.msra.mxu0 %v7958
  %8736 = vmatprep.subr.bf16.mxu0 %v7965
  %8737 = vmatpush1.bf16.msra.mxu0 %v7964
  %8738 = vmatprep.subr.bf16.mxu0 %v7971
  %8739 = vmatpush1.bf16.msra.mxu0 %v7970
  %8740 = vmatprep.subr.bf16.mxu0 %v7977
  %8741 = vmatpush1.bf16.msra.mxu0 %v7976
  %8742 = vmatprep.subr.bf16.mxu0 %v7983
  %8743 = vmatpush1.bf16.msra.mxu0 %v7982
  %8744 = vmatprep.subr.bf16.mxu0 %v7989
  %8745 = vmatpush1.bf16.msra.mxu0 %v7988
  %8746 = vmatprep.subr.bf16.mxu0 %v7995
  %8747 = vmatpush1.bf16.msra.mxu0 %v7994
  %8748 = vmatprep.subr.bf16.mxu0 %v8001
  %8749 = vmatpush1.bf16.msra.mxu0 %v8000
  %8750 = vmatprep.subr.bf16.mxu0 %v8007
  %8751 = vmatpush1.bf16.msra.mxu0 %v8006
  %8752 = vmatprep.subr.bf16.mxu0 %v8013
  %8753 = vmatpush1.bf16.msra.mxu0 %v8012
  %8754 = vmatprep.subr.bf16.mxu0 %v8019
  %8755 = vmatpush1.bf16.msra.mxu0 %v8018
  %8756 = vmatprep.subr.bf16.mxu0 %v8025
  %8757 = vmatpush1.bf16.msra.mxu0 %v8024
  %8758 = vmatprep.subr.bf16.mxu0 %v8031
  %8759 = vmatpush1.bf16.msra.mxu0 %v8030
  %8760 = vmatprep.subr.bf16.mxu0 %v8037
  %8761 = vmatpush1.bf16.msra.mxu0 %v8036
  %8762 = vmatprep.subr.bf16.mxu0 %v8043
  %8763 = vmatpush1.bf16.msra.mxu0 %v8042
  %8764 = vmatprep.mubr.bf16.mxu0 %v6677
  %8765 = vmatmul.mubr.bf16.gmra.mrb[0].mxu0 %v6676
  %v8766 = vpop.f32.mrb[0].mxu0
  %v8767 = vadd.f32 %v8726, %v8766
  %v8768 = vpop.f32.mrb[0].mxu0
  %v8769 = vadd.f32 %v8728, %v8768
  %v8770 = vpop.f32.mrb[0].mxu0
  %v8771 = vpop.f32.mrb[0].mxu0
  %8772 = vdwg.mxu0
  %8773 = vmatprep.subr.bf16.mxu0 %v8049
  %8774 = vmatpush1.bf16.msra.mxu0 %v8048
  %8775 = vmatprep.subr.bf16.mxu0 %v8055
  %8776 = vmatpush1.bf16.msra.mxu0 %v8054
  %8777 = vmatprep.subr.bf16.mxu0 %v8061
  %8778 = vmatpush1.bf16.msra.mxu0 %v8060
  %8779 = vmatprep.subr.bf16.mxu0 %v8067
  %8780 = vmatpush1.bf16.msra.mxu0 %v8066
  %8781 = vmatprep.subr.bf16.mxu0 %v8073
  %8782 = vmatpush1.bf16.msra.mxu0 %v8072
  %8783 = vmatprep.subr.bf16.mxu0 %v8079
  %8784 = vmatpush1.bf16.msra.mxu0 %v8078
  %8785 = vmatprep.subr.bf16.mxu0 %v8085
  %8786 = vmatpush1.bf16.msra.mxu0 %v8084
  %8787 = vmatprep.subr.bf16.mxu0 %v8091
  %8788 = vmatpush1.bf16.msra.mxu0 %v8090
  %8789 = vmatprep.subr.bf16.mxu0 %v8097
  %8790 = vmatpush1.bf16.msra.mxu0 %v8096
  %8791 = vmatprep.subr.bf16.mxu0 %v8103
  %8792 = vmatpush1.bf16.msra.mxu0 %v8102
  %8793 = vmatprep.subr.bf16.mxu0 %v8109
  %8794 = vmatpush1.bf16.msra.mxu0 %v8108
  %8795 = vmatprep.subr.bf16.mxu0 %v8115
  %8796 = vmatpush1.bf16.msra.mxu0 %v8114
  %8797 = vmatprep.subr.bf16.mxu0 %v8121
  %8798 = vmatpush1.bf16.msra.mxu0 %v8120
  %8799 = vmatprep.subr.bf16.mxu0 %v8127
  %8800 = vmatpush1.bf16.msra.mxu0 %v8126
  %8801 = vmatprep.subr.bf16.mxu0 %v8133
  %8802 = vmatpush1.bf16.msra.mxu0 %v8132
  %8803 = vmatprep.subr.bf16.mxu0 %v8443
  %8804 = vmatpush1.bf16.msra.mxu0 %v8440
  %8805 = vmatprep.mubr.bf16.mxu0 %v8424
  %8806 = vmatmul.mubr.bf16.gmra.mrb[0].mxu0 %v6678
  %v8807 = vpop.f32.mrb[0].mxu0
  %v8808 = vadd.f32 %v8767, %v8807
  %v8809 = vpop.f32.mrb[0].mxu0
  %v8810 = vadd.f32 %v8769, %v8809
  %v8811 = vpop.f32.mrb[0].mxu0
  %v8812 = vpop.f32.mrb[0].mxu0
  %8813 = vdwg.mxu0
  %vm8814 = vcmp.gt.f32.partialorder %v8562, 0.0
  %vm8815 = vcmp.gt.f32.partialorder %v8564, 0.0
  %vm8816 = vcmp.gt.f32.partialorder %v8685, 0.0
  %vm8817 = vcmp.gt.f32.partialorder %v8687, 0.0
  %vm8818 = vcmp.gt.f32.partialorder %v8808, 0.0
  %vm8819 = vcmp.gt.f32.partialorder %v8810, 0.0
  %v8820 = vmul.f32 %v8562, 0.01
  %v8821 = vmul.f32 %v8564, 0.01
  %v8822 = vmul.f32 %v8685, 0.01
  %v8823 = vmul.f32 %v8687, 0.01
  %v8824 = vmul.f32 %v8808, 0.01
  %v8825 = vmul.f32 %v8810, 0.01
  %v8826 = vsel %vm8814, %v8562, %v8820
  %v8827 = vsel %vm8815, %v8564, %v8821
  %v8828 = vsel %vm8816, %v8685, %v8822
  %v8829 = vsel %vm8817, %v8687, %v8823
  %v8830 = vsel %vm8818, %v8808, %v8824
  %v8831 = vsel %vm8819, %v8810, %v8825
  %v8832 = vpack.c.bf16 %v8826, %v8826
  %v8833 = vpack.c.bf16 %v8827, %v8827
  %v8834 = vpack.c.bf16 %v8828, %v8828
  %v8835 = vpack.c.bf16 %v8829, %v8829
  %v8836 = vpack.c.bf16 %v8830, %v8830
  %v8837 = vpack.c.bf16 %v8831, %v8831
  %v8838 = vld [vmem:[%s7] sm:$0xff]
  %v8839 = vld [vmem:[%s7 + $0x8] sm:$0xff]
  %v8840 = vld [vmem:[%s7 + $0x10] sm:$0xff]
  %v8841 = vld [vmem:[%s7 + $0x18] sm:$0xff]
  %v8842 = vld [vmem:[%s7 + $0x20] sm:$0xff]
  %v8843 = vld [vmem:[%s7 + $0x28] sm:$0xff]
  %v8844 = vld [vmem:[%s7 + $0x30] sm:$0xff]
  %v8845 = vld [vmem:[%s7 + $0x38] sm:$0xff]
  %v8846 = vld [vmem:[%s7 + $0x40] sm:$0xff]
  %v8847 = vld [vmem:[%s7 + $0x48] sm:$0xff]
  %v8848 = vld [vmem:[%s7 + $0x50] sm:$0xff]
  %v8849 = vld [vmem:[%s7 + $0x58] sm:$0xff]
  %v8850 = vld [vmem:[%s7 + $0x60] sm:$0xff]
  %v8851 = vld [vmem:[%s7 + $0x68] sm:$0xff]
  %v8852 = vld [vmem:[%s7 + $0x70] sm:$0xff]
  %v8853 = vld [vmem:[%s7 + $0x78] sm:$0xff]
  %v8854 = vld [vmem:[%s7 + $0x80] sm:$0xff]
  %v8855 = vld [vmem:[%s7 + $0x88] sm:$0xff]
  %v8856 = vld [vmem:[%s7 + $0x90] sm:$0xff]
  %v8857 = vld [vmem:[%s7 + $0x98] sm:$0xff]
  %v8858 = vld [vmem:[%s7 + $0xa0] sm:$0xff]
  %v8859 = vld [vmem:[%s7 + $0xa8] sm:$0xff]
  %v8860 = vld [vmem:[%s7 + $0xb0] sm:$0xff]
  %v8861 = vld [vmem:[%s7 + $0xb8] sm:$0xff]
  %v8862 = vld [vmem:[%s7 + $0xc0] sm:$0xff]
  %v8863 = vld [vmem:[%s7 + $0xc8] sm:$0xff]
  %v8864 = vld [vmem:[%s7 + $0xd0] sm:$0xff]
  %v8865 = vld [vmem:[%s7 + $0xd8] sm:$0xff]
  %v8866 = vld [vmem:[%s7 + $0xe0] sm:$0xff]
  %v8867 = vld [vmem:[%s7 + $0xe8] sm:$0xff]
  %v8868 = vld [vmem:[%s7 + $0xf0] sm:$0xff]
  %v8869 = vld [vmem:[%s7 + $0xf8] sm:$0xff]
  %v8870 = vld [vmem:[%s7 + $0x100] sm:$0xff]
  %v8871 = vld [vmem:[%s7 + $0x108] sm:$0xff]
  %v8872 = vld [vmem:[%s7 + $0x110] sm:$0xff]
  %v8873 = vld [vmem:[%s7 + $0x118] sm:$0xff]
  %v8874 = vld [vmem:[%s7 + $0x120] sm:$0xff]
  %v8875 = vld [vmem:[%s7 + $0x128] sm:$0xff]
  %v8876 = vld [vmem:[%s7 + $0x130] sm:$0xff]
  %v8877 = vld [vmem:[%s7 + $0x138] sm:$0xff]
  %v8878 = vld [vmem:[%s7 + $0x140] sm:$0xff]
  %v8879 = vld [vmem:[%s7 + $0x148] sm:$0xff]
  %v8880 = vld [vmem:[%s7 + $0x150] sm:$0xff]
  %v8881 = vld [vmem:[%s7 + $0x158] sm:$0xff]
  %v8882 = vld [vmem:[%s7 + $0x160] sm:$0xff]
  %v8883 = vld [vmem:[%s7 + $0x168] sm:$0xff]
  %v8884 = vld [vmem:[%s7 + $0x170] sm:$0xff]
  %v8885 = vld [vmem:[%s7 + $0x178] sm:$0xff]
  %v8886 = vld [vmem:[%s7 + $0x180] sm:$0xff]
  %v8887 = vld [vmem:[%s7 + $0x188] sm:$0xff]
  %v8888 = vld [vmem:[%s7 + $0x190] sm:$0xff]
  %v8889 = vld [vmem:[%s7 + $0x198] sm:$0xff]
  %v8890 = vld [vmem:[%s7 + $0x1a0] sm:$0xff]
  %v8891 = vld [vmem:[%s7 + $0x1a8] sm:$0xff]
  %v8892 = vld [vmem:[%s7 + $0x1b0] sm:$0xff]
  %v8893 = vld [vmem:[%s7 + $0x1b8] sm:$0xff]
  %v8894 = vld [vmem:[%s7 + $0x1c0] sm:$0xff]
  %v8895 = vld [vmem:[%s7 + $0x1c8] sm:$0xff]
  %v8896 = vld [vmem:[%s7 + $0x1d0] sm:$0xff]
  %v8897 = vld [vmem:[%s7 + $0x1d8] sm:$0xff]
  %v8898 = vld [vmem:[%s7 + $0x1e0] sm:$0xff]
  %v8899 = vld [vmem:[%s7 + $0x1e8] sm:$0xff]
  %v8900 = vld [vmem:[%s7 + $0x1f0] sm:$0xff]
  %v8901 = vld [vmem:[%s7 + $0x1f8] sm:$0xff]
  %v8902 = vld [vmem:[%s7 + $0x200] sm:$0xff]
  %v8903 = vld [vmem:[%s7 + $0x208] sm:$0xff]
  %v8904 = vld [vmem:[%s7 + $0x210] sm:$0xff]
  %v8905 = vld [vmem:[%s7 + $0x218] sm:$0xff]
  %v8906 = vld [vmem:[%s7 + $0x220] sm:$0xff]
  %v8907 = vld [vmem:[%s7 + $0x228] sm:$0xff]
  %v8908 = vld [vmem:[%s7 + $0x230] sm:$0xff]
  %v8909 = vld [vmem:[%s7 + $0x238] sm:$0xff]
  %v8910 = vld [vmem:[%s7 + $0x240] sm:$0xff]
  %v8911 = vld [vmem:[%s7 + $0x248] sm:$0xff]
  %v8912 = vld [vmem:[%s7 + $0x250] sm:$0xff]
  %v8913 = vld [vmem:[%s7 + $0x258] sm:$0xff]
  %v8914 = vld [vmem:[%s7 + $0x260] sm:$0xff]
  %v8915 = vld [vmem:[%s7 + $0x268] sm:$0xff]
  %v8916 = vld [vmem:[%s7 + $0x270] sm:$0xff]
  %v8917 = vld [vmem:[%s7 + $0x278] sm:$0xff]
  %v8918 = vld [vmem:[%s7 + $0x280] sm:$0xff]
  %v8919 = vld [vmem:[%s7 + $0x288] sm:$0xff]
  %v8920 = vld [vmem:[%s7 + $0x290] sm:$0xff]
  %v8921 = vld [vmem:[%s7 + $0x298] sm:$0xff]
  %v8922 = vld [vmem:[%s7 + $0x2a0] sm:$0xff]
  %v8923 = vld [vmem:[%s7 + $0x2a8] sm:$0xff]
  %v8924 = vld [vmem:[%s7 + $0x2b0] sm:$0xff]
  %v8925 = vld [vmem:[%s7 + $0x2b8] sm:$0xff]
  %v8926 = vld [vmem:[%s7 + $0x2c0] sm:$0xff]
  %v8927 = vld [vmem:[%s7 + $0x2c8] sm:$0xff]
  %v8928 = vld [vmem:[%s7 + $0x2d0] sm:$0xff]
  %v8929 = vld [vmem:[%s7 + $0x2d8] sm:$0xff]
  %v8930 = vld [vmem:[%s7 + $0x2e0] sm:$0xff]
  %v8931 = vld [vmem:[%s7 + $0x2e8] sm:$0xff]
  %v8932 = vld [vmem:[%s7 + $0x2f0] sm:$0xff]
  %v8933 = vld [vmem:[%s7 + $0x2f8] sm:$0xff]
  %v8934 = vld [vmem:[%s7 + $0x300] sm:$0xff]
  %v8935 = vld [vmem:[%s7 + $0x308] sm:$0xff]
  %v8936 = vld [vmem:[%s7 + $0x310] sm:$0xff]
  %v8937 = vld [vmem:[%s7 + $0x318] sm:$0xff]
  %v8938 = vld [vmem:[%s7 + $0x320] sm:$0xff]
  %v8939 = vld [vmem:[%s7 + $0x328] sm:$0xff]
  %v8940 = vld [vmem:[%s7 + $0x330] sm:$0xff]
  %v8941 = vld [vmem:[%s7 + $0x338] sm:$0xff]
  %v8942 = vld [vmem:[%s7 + $0x340] sm:$0xff]
  %v8943 = vld [vmem:[%s7 + $0x348] sm:$0xff]
  %v8944 = vld [vmem:[%s7 + $0x350] sm:$0xff]
  %v8945 = vld [vmem:[%s7 + $0x358] sm:$0xff]
  %v8946 = vld [vmem:[%s7 + $0x360] sm:$0xff]
  %v8947 = vld [vmem:[%s7 + $0x368] sm:$0xff]
  %v8948 = vld [vmem:[%s7 + $0x370] sm:$0xff]
  %v8949 = vld [vmem:[%s7 + $0x378] sm:$0xff]
  %v8950 = vld [vmem:[%s7 + $0x380] sm:$0xff]
  %v8951 = vld [vmem:[%s7 + $0x388] sm:$0xff]
  %v8952 = vld [vmem:[%s7 + $0x390] sm:$0xff]
  %v8953 = vld [vmem:[%s7 + $0x398] sm:$0xff]
  %v8954 = vld [vmem:[%s7 + $0x3a0] sm:$0xff]
  %v8955 = vld [vmem:[%s7 + $0x3a8] sm:$0xff]
  %v8956 = vld [vmem:[%s7 + $0x3b0] sm:$0xff]
  %v8957 = vld [vmem:[%s7 + $0x3b8] sm:$0xff]
  %v8958 = vld [vmem:[%s7 + $0x3c0] sm:$0xff]
  %v8959 = vld [vmem:[%s7 + $0x3c8] sm:$0xff]
  %v8960 = vld [vmem:[%s7 + $0x3d0] sm:$0xff]
  %v8961 = vld [vmem:[%s7 + $0x3d8] sm:$0xff]
  %v8962 = vld [vmem:[%s7 + $0x3e0] sm:$0xff]
  %v8963 = vld [vmem:[%s7 + $0x3e8] sm:$0xff]
  %v8964 = vld [vmem:[%s7 + $0x3f0] sm:$0xff]
  %v8965 = vld [vmem:[%s7 + $0x3f8] sm:$0xff]
  %v8966 = vld [vmem:[%s7 + $0x400] sm:$0xff]
  %v8967 = vld [vmem:[%s7 + $0x408] sm:$0xff]
  %v8968 = vld [vmem:[%s7 + $0x410] sm:$0xff]
  %v8969 = vld [vmem:[%s7 + $0x418] sm:$0xff]
  %v8970 = vld [vmem:[%s7 + $0x420] sm:$0xff]
  %v8971 = vld [vmem:[%s7 + $0x428] sm:$0xff]
  %v8972 = vld [vmem:[%s7 + $0x430] sm:$0xff]
  %v8973 = vld [vmem:[%s7 + $0x438] sm:$0xff]
  %v8974 = vld [vmem:[%s7 + $0x440] sm:$0xff]
  %v8975 = vld [vmem:[%s7 + $0x448] sm:$0xff]
  %v8976 = vld [vmem:[%s7 + $0x450] sm:$0xff]
  %v8977 = vld [vmem:[%s7 + $0x458] sm:$0xff]
  %v8978 = vld [vmem:[%s7 + $0x460] sm:$0xff]
  %v8979 = vld [vmem:[%s7 + $0x468] sm:$0xff]
  %v8980 = vld [vmem:[%s7 + $0x470] sm:$0xff]
  %v8981 = vld [vmem:[%s7 + $0x478] sm:$0xff]
  %v8982 = vld [vmem:[%s7 + $0x480] sm:$0xff]
  %v8983 = vld [vmem:[%s7 + $0x488] sm:$0xff]
  %v8984 = vld [vmem:[%s7 + $0x490] sm:$0xff]
  %v8985 = vld [vmem:[%s7 + $0x498] sm:$0xff]
  %v8986 = vld [vmem:[%s7 + $0x4a0] sm:$0xff]
  %v8987 = vld [vmem:[%s7 + $0x4a8] sm:$0xff]
  %v8988 = vld [vmem:[%s7 + $0x4b0] sm:$0xff]
  %v8989 = vld [vmem:[%s7 + $0x4b8] sm:$0xff]
  %v8990 = vld [vmem:[%s7 + $0x4c0] sm:$0xff]
  %v8991 = vld [vmem:[%s7 + $0x4c8] sm:$0xff]
  %v8992 = vld [vmem:[%s7 + $0x4d0] sm:$0xff]
  %v8993 = vld [vmem:[%s7 + $0x4d8] sm:$0xff]
  %v8994 = vld [vmem:[%s7 + $0x4e0] sm:$0xff]
  %v8995 = vld [vmem:[%s7 + $0x4e8] sm:$0xff]
  %v8996 = vld [vmem:[%s7 + $0x4f0] sm:$0xff]
  %v8997 = vld [vmem:[%s7 + $0x4f8] sm:$0xff]
  %v8998 = vld [vmem:[%s7 + $0x500] sm:$0xff]
  %v8999 = vld [vmem:[%s7 + $0x508] sm:$0xff]
  %v9000 = vld [vmem:[%s7 + $0x510] sm:$0xff]
  %v9001 = vld [vmem:[%s7 + $0x518] sm:$0xff]
  %v9002 = vld [vmem:[%s7 + $0x520] sm:$0xff]
  %v9003 = vld [vmem:[%s7 + $0x528] sm:$0xff]
  %v9004 = vld [vmem:[%s7 + $0x530] sm:$0xff]
  %v9005 = vld [vmem:[%s7 + $0x538] sm:$0xff]
  %v9006 = vld [vmem:[%s7 + $0x540] sm:$0xff]
  %v9007 = vld [vmem:[%s7 + $0x548] sm:$0xff]
  %v9008 = vld [vmem:[%s7 + $0x550] sm:$0xff]
  %v9009 = vld [vmem:[%s7 + $0x558] sm:$0xff]
  %v9010 = vld [vmem:[%s7 + $0x560] sm:$0xff]
  %v9011 = vld [vmem:[%s7 + $0x568] sm:$0xff]
  %v9012 = vld [vmem:[%s7 + $0x570] sm:$0xff]
  %v9013 = vld [vmem:[%s7 + $0x578] sm:$0xff]
  %v9014 = vld [vmem:[%s7 + $0x580] sm:$0xff]
  %v9015 = vld [vmem:[%s7 + $0x588] sm:$0xff]
  %v9016 = vld [vmem:[%s7 + $0x590] sm:$0xff]
  %v9017 = vld [vmem:[%s7 + $0x598] sm:$0xff]
  %v9018 = vld [vmem:[%s7 + $0x5a0] sm:$0xff]
  %v9019 = vld [vmem:[%s7 + $0x5a8] sm:$0xff]
  %v9020 = vld [vmem:[%s7 + $0x5b0] sm:$0xff]
  %v9021 = vld [vmem:[%s7 + $0x5b8] sm:$0xff]
  %v9022 = vld [vmem:[%s7 + $0x5c0] sm:$0x33]
  %v9023 = vld [vmem:[%s7 + $0x5c8] sm:$0x33]
  %v9024 = vld [vmem:[%s8] sm:$0xf]
  %v9026 = vlaneseq
  %v9027 = vshrl.u32 %v9026, 7
  %v9028 = vsub.s32 0, %v9027
  %v9029 = vrot.slane %v9024, %v9028
  %v9030 = vlaneseq
  %v9031 = vshrl.u32 %v9030, 7
  %v9032 = vsub.s32 1, %v9031
  %v9033 = vrot.slane %v9024, %v9032
  %v9034 = vlaneseq
  %v9035 = vshrl.u32 %v9034, 7
  %v9036 = vsub.s32 2, %v9035
  %v9037 = vrot.slane %v9024, %v9036
  %v9038 = vlaneseq
  %v9039 = vshrl.u32 %v9038, 7
  %v9040 = vsub.s32 3, %v9039
  %v9041 = vrot.slane %v9024, %v9040
  %v9232 = vunpack.c.l.b16 %v8838
  %v9233 = vunpack.c.h.b16 %v8838
  %v9234 = vunpack.c.l.b16 %v8839
  %v9235 = vunpack.c.h.b16 %v8839
  %v9236 = vunpack.c.l.b16 %v8840
  %v9237 = vunpack.c.h.b16 %v8840
  %v9238 = vunpack.c.l.b16 %v8841
  %v9239 = vunpack.c.h.b16 %v8841
  %v9240 = vunpack.c.l.b16 %v8842
  %v9241 = vunpack.c.h.b16 %v8842
  %v9242 = vunpack.c.l.b16 %v8843
  %v9243 = vunpack.c.h.b16 %v8843
  %v9244 = vunpack.c.l.b16 %v8844
  %v9245 = vunpack.c.h.b16 %v8844
  %v9246 = vunpack.c.l.b16 %v8845
  %v9247 = vunpack.c.h.b16 %v8845
  %v9248 = vunpack.c.l.b16 %v8846
  %v9249 = vunpack.c.h.b16 %v8846
  %v9250 = vunpack.c.l.b16 %v8847
  %v9251 = vunpack.c.h.b16 %v8847
  %v9252 = vunpack.c.l.b16 %v8848
  %v9253 = vunpack.c.h.b16 %v8848
  %v9254 = vunpack.c.l.b16 %v8849
  %v9255 = vunpack.c.h.b16 %v8849
  %v9256 = vunpack.c.l.b16 %v8850
  %v9257 = vunpack.c.h.b16 %v8850
  %v9258 = vunpack.c.l.b16 %v8851
  %v9259 = vunpack.c.h.b16 %v8851
  %v9260 = vunpack.c.l.b16 %v8852
  %v9261 = vunpack.c.h.b16 %v8852
  %v9262 = vunpack.c.l.b16 %v8853
  %v9263 = vunpack.c.h.b16 %v8853
  %v9264 = vunpack.c.l.b16 %v8854
  %v9265 = vunpack.c.h.b16 %v8854
  %v9266 = vunpack.c.l.b16 %v8855
  %v9267 = vunpack.c.h.b16 %v8855
  %v9268 = vunpack.c.l.b16 %v8856
  %v9269 = vunpack.c.h.b16 %v8856
  %v9270 = vunpack.c.l.b16 %v8857
  %v9271 = vunpack.c.h.b16 %v8857
  %v9272 = vunpack.c.l.b16 %v8858
  %v9273 = vunpack.c.h.b16 %v8858
  %v9274 = vunpack.c.l.b16 %v8859
  %v9275 = vunpack.c.h.b16 %v8859
  %v9276 = vunpack.c.l.b16 %v8860
  %v9277 = vunpack.c.h.b16 %v8860
  %v9278 = vunpack.c.l.b16 %v8861
  %v9279 = vunpack.c.h.b16 %v8861
  %v9280 = vunpack.c.l.b16 %v8862
  %v9281 = vunpack.c.h.b16 %v8862
  %v9282 = vunpack.c.l.b16 %v8863
  %v9283 = vunpack.c.h.b16 %v8863
  %v9284 = vunpack.c.l.b16 %v8864
  %v9285 = vunpack.c.h.b16 %v8864
  %v9286 = vunpack.c.l.b16 %v8865
  %v9287 = vunpack.c.h.b16 %v8865
  %v9288 = vunpack.c.l.b16 %v8866
  %v9289 = vunpack.c.h.b16 %v8866
  %v9290 = vunpack.c.l.b16 %v8867
  %v9291 = vunpack.c.h.b16 %v8867
  %v9292 = vunpack.c.l.b16 %v8868
  %v9293 = vunpack.c.h.b16 %v8868
  %v9294 = vunpack.c.l.b16 %v8869
  %v9295 = vunpack.c.h.b16 %v8869
  %v9296 = vunpack.c.l.b16 %v8870
  %v9297 = vunpack.c.h.b16 %v8870
  %v9298 = vunpack.c.l.b16 %v8871
  %v9299 = vunpack.c.h.b16 %v8871
  %v9300 = vunpack.c.l.b16 %v8872
  %v9301 = vunpack.c.h.b16 %v8872
  %v9302 = vunpack.c.l.b16 %v8873
  %v9303 = vunpack.c.h.b16 %v8873
  %v9304 = vunpack.c.l.b16 %v8874
  %v9305 = vunpack.c.h.b16 %v8874
  %v9306 = vunpack.c.l.b16 %v8875
  %v9307 = vunpack.c.h.b16 %v8875
  %v9308 = vunpack.c.l.b16 %v8876
  %v9309 = vunpack.c.h.b16 %v8876
  %v9310 = vunpack.c.l.b16 %v8877
  %v9311 = vunpack.c.h.b16 %v8877
  %v9312 = vunpack.c.l.b16 %v8878
  %v9313 = vunpack.c.h.b16 %v8878
  %v9314 = vunpack.c.l.b16 %v8879
  %v9315 = vunpack.c.h.b16 %v8879
  %v9316 = vunpack.c.l.b16 %v8880
  %v9317 = vunpack.c.h.b16 %v8880
  %v9318 = vunpack.c.l.b16 %v8881
  %v9319 = vunpack.c.h.b16 %v8881
  %v9320 = vunpack.c.l.b16 %v8882
  %v9321 = vunpack.c.h.b16 %v8882
  %v9322 = vunpack.c.l.b16 %v8883
  %v9323 = vunpack.c.h.b16 %v8883
  %v9324 = vunpack.c.l.b16 %v8884
  %v9325 = vunpack.c.h.b16 %v8884
  %v9326 = vunpack.c.l.b16 %v8885
  %v9327 = vunpack.c.h.b16 %v8885
  %v9328 = vunpack.c.l.b16 %v8886
  %v9329 = vunpack.c.h.b16 %v8886
  %v9330 = vunpack.c.l.b16 %v8887
  %v9331 = vunpack.c.h.b16 %v8887
  %v9332 = vunpack.c.l.b16 %v8888
  %v9333 = vunpack.c.h.b16 %v8888
  %v9334 = vunpack.c.l.b16 %v8889
  %v9335 = vunpack.c.h.b16 %v8889
  %v9336 = vunpack.c.l.b16 %v8890
  %v9337 = vunpack.c.h.b16 %v8890
  %v9338 = vunpack.c.l.b16 %v8891
  %v9339 = vunpack.c.h.b16 %v8891
  %v9340 = vunpack.c.l.b16 %v8892
  %v9341 = vunpack.c.h.b16 %v8892
  %v9342 = vunpack.c.l.b16 %v8893
  %v9343 = vunpack.c.h.b16 %v8893
  %v9344 = vunpack.c.l.b16 %v8894
  %v9345 = vunpack.c.h.b16 %v8894
  %v9346 = vunpack.c.l.b16 %v8895
  %v9347 = vunpack.c.h.b16 %v8895
  %v9348 = vunpack.c.l.b16 %v8896
  %v9349 = vunpack.c.h.b16 %v8896
  %v9350 = vunpack.c.l.b16 %v8897
  %v9351 = vunpack.c.h.b16 %v8897
  %v9352 = vunpack.c.l.b16 %v8898
  %v9353 = vunpack.c.h.b16 %v8898
  %v9354 = vunpack.c.l.b16 %v8899
  %v9355 = vunpack.c.h.b16 %v8899
  %v9356 = vunpack.c.l.b16 %v8900
  %v9357 = vunpack.c.h.b16 %v8900
  %v9358 = vunpack.c.l.b16 %v8901
  %v9359 = vunpack.c.h.b16 %v8901
  %v9360 = vunpack.c.l.b16 %v8902
  %v9361 = vunpack.c.h.b16 %v8902
  %v9362 = vunpack.c.l.b16 %v8903
  %v9363 = vunpack.c.h.b16 %v8903
  %v9364 = vunpack.c.l.b16 %v8904
  %v9365 = vunpack.c.h.b16 %v8904
  %v9366 = vunpack.c.l.b16 %v8905
  %v9367 = vunpack.c.h.b16 %v8905
  %v9368 = vunpack.c.l.b16 %v8906
  %v9369 = vunpack.c.h.b16 %v8906
  %v9370 = vunpack.c.l.b16 %v8907
  %v9371 = vunpack.c.h.b16 %v8907
  %v9372 = vunpack.c.l.b16 %v8908
  %v9373 = vunpack.c.h.b16 %v8908
  %v9374 = vunpack.c.l.b16 %v8909
  %v9375 = vunpack.c.h.b16 %v8909
  %v9376 = vunpack.c.l.b16 %v8910
  %v9377 = vunpack.c.h.b16 %v8910
  %v9378 = vunpack.c.l.b16 %v8911
  %v9379 = vunpack.c.h.b16 %v8911
  %v9380 = vunpack.c.l.b16 %v8912
  %v9381 = vunpack.c.h.b16 %v8912
  %v9382 = vunpack.c.l.b16 %v8913
  %v9383 = vunpack.c.h.b16 %v8913
  %v9384 = vunpack.c.l.b16 %v8914
  %v9385 = vunpack.c.h.b16 %v8914
  %v9386 = vunpack.c.l.b16 %v8915
  %v9387 = vunpack.c.h.b16 %v8915
  %v9388 = vunpack.c.l.b16 %v8916
  %v9389 = vunpack.c.h.b16 %v8916
  %v9390 = vunpack.c.l.b16 %v8917
  %v9391 = vunpack.c.h.b16 %v8917
  %v9392 = vunpack.c.l.b16 %v8918
  %v9393 = vunpack.c.h.b16 %v8918
  %v9394 = vunpack.c.l.b16 %v8919
  %v9395 = vunpack.c.h.b16 %v8919
  %v9396 = vunpack.c.l.b16 %v8920
  %v9397 = vunpack.c.h.b16 %v8920
  %v9398 = vunpack.c.l.b16 %v8921
  %v9399 = vunpack.c.h.b16 %v8921
  %v9400 = vunpack.c.l.b16 %v8922
  %v9401 = vunpack.c.h.b16 %v8922
  %v9402 = vunpack.c.l.b16 %v8923
  %v9403 = vunpack.c.h.b16 %v8923
  %v9404 = vunpack.c.l.b16 %v8924
  %v9405 = vunpack.c.h.b16 %v8924
  %v9406 = vunpack.c.l.b16 %v8925
  %v9407 = vunpack.c.h.b16 %v8925
  %v9408 = vunpack.c.l.b16 %v8926
  %v9409 = vunpack.c.h.b16 %v8926
  %v9410 = vunpack.c.l.b16 %v8927
  %v9411 = vunpack.c.h.b16 %v8927
  %v9412 = vunpack.c.l.b16 %v8928
  %v9413 = vunpack.c.h.b16 %v8928
  %v9414 = vunpack.c.l.b16 %v8929
  %v9415 = vunpack.c.h.b16 %v8929
  %v9416 = vunpack.c.l.b16 %v8930
  %v9417 = vunpack.c.h.b16 %v8930
  %v9418 = vunpack.c.l.b16 %v8931
  %v9419 = vunpack.c.h.b16 %v8931
  %v9420 = vunpack.c.l.b16 %v8932
  %v9421 = vunpack.c.h.b16 %v8932
  %v9422 = vunpack.c.l.b16 %v8933
  %v9423 = vunpack.c.h.b16 %v8933
  %v9424 = vunpack.c.l.b16 %v8934
  %v9425 = vunpack.c.h.b16 %v8934
  %v9426 = vunpack.c.l.b16 %v8935
  %v9427 = vunpack.c.h.b16 %v8935
  %v9428 = vunpack.c.l.b16 %v8936
  %v9429 = vunpack.c.h.b16 %v8936
  %v9430 = vunpack.c.l.b16 %v8937
  %v9431 = vunpack.c.h.b16 %v8937
  %v9432 = vunpack.c.l.b16 %v8938
  %v9433 = vunpack.c.h.b16 %v8938
  %v9434 = vunpack.c.l.b16 %v8939
  %v9435 = vunpack.c.h.b16 %v8939
  %v9436 = vunpack.c.l.b16 %v8940
  %v9437 = vunpack.c.h.b16 %v8940
  %v9438 = vunpack.c.l.b16 %v8941
  %v9439 = vunpack.c.h.b16 %v8941
  %v9440 = vunpack.c.l.b16 %v8942
  %v9441 = vunpack.c.h.b16 %v8942
  %v9442 = vunpack.c.l.b16 %v8943
  %v9443 = vunpack.c.h.b16 %v8943
  %v9444 = vunpack.c.l.b16 %v8944
  %v9445 = vunpack.c.h.b16 %v8944
  %v9446 = vunpack.c.l.b16 %v8945
  %v9447 = vunpack.c.h.b16 %v8945
  %v9448 = vunpack.c.l.b16 %v8946
  %v9449 = vunpack.c.h.b16 %v8946
  %v9450 = vunpack.c.l.b16 %v8947
  %v9451 = vunpack.c.h.b16 %v8947
  %v9452 = vunpack.c.l.b16 %v8948
  %v9453 = vunpack.c.h.b16 %v8948
  %v9454 = vunpack.c.l.b16 %v8949
  %v9455 = vunpack.c.h.b16 %v8949
  %v9456 = vunpack.c.l.b16 %v8950
  %v9457 = vunpack.c.h.b16 %v8950
  %v9458 = vunpack.c.l.b16 %v8951
  %v9459 = vunpack.c.h.b16 %v8951
  %v9460 = vunpack.c.l.b16 %v8952
  %v9461 = vunpack.c.h.b16 %v8952
  %v9462 = vunpack.c.l.b16 %v8953
  %v9463 = vunpack.c.h.b16 %v8953
  %v9464 = vunpack.c.l.b16 %v8954
  %v9465 = vunpack.c.h.b16 %v8954
  %v9466 = vunpack.c.l.b16 %v8955
  %v9467 = vunpack.c.h.b16 %v8955
  %v9468 = vunpack.c.l.b16 %v8956
  %v9469 = vunpack.c.h.b16 %v8956
  %v9470 = vunpack.c.l.b16 %v8957
  %v9471 = vunpack.c.h.b16 %v8957
  %v9472 = vunpack.c.l.b16 %v8958
  %v9473 = vunpack.c.h.b16 %v8958
  %v9474 = vunpack.c.l.b16 %v8959
  %v9475 = vunpack.c.h.b16 %v8959
  %v9476 = vunpack.c.l.b16 %v8960
  %v9477 = vunpack.c.h.b16 %v8960
  %v9478 = vunpack.c.l.b16 %v8961
  %v9479 = vunpack.c.h.b16 %v8961
  %v9480 = vunpack.c.l.b16 %v8962
  %v9481 = vunpack.c.h.b16 %v8962
  %v9482 = vunpack.c.l.b16 %v8963
  %v9483 = vunpack.c.h.b16 %v8963
  %v9484 = vunpack.c.l.b16 %v8964
  %v9485 = vunpack.c.h.b16 %v8964
  %v9486 = vunpack.c.l.b16 %v8965
  %v9487 = vunpack.c.h.b16 %v8965
  %v9488 = vunpack.c.l.b16 %v8966
  %v9489 = vunpack.c.h.b16 %v8966
  %v9490 = vunpack.c.l.b16 %v8967
  %v9491 = vunpack.c.h.b16 %v8967
  %v9492 = vunpack.c.l.b16 %v8968
  %v9493 = vunpack.c.h.b16 %v8968
  %v9494 = vunpack.c.l.b16 %v8969
  %v9495 = vunpack.c.h.b16 %v8969
  %v9496 = vunpack.c.l.b16 %v8970
  %v9497 = vunpack.c.h.b16 %v8970
  %v9498 = vunpack.c.l.b16 %v8971
  %v9499 = vunpack.c.h.b16 %v8971
  %v9500 = vunpack.c.l.b16 %v8972
  %v9501 = vunpack.c.h.b16 %v8972
  %v9502 = vunpack.c.l.b16 %v8973
  %v9503 = vunpack.c.h.b16 %v8973
  %v9504 = vunpack.c.l.b16 %v8974
  %v9505 = vunpack.c.h.b16 %v8974
  %v9506 = vunpack.c.l.b16 %v8975
  %v9507 = vunpack.c.h.b16 %v8975
  %v9508 = vunpack.c.l.b16 %v8976
  %v9509 = vunpack.c.h.b16 %v8976
  %v9510 = vunpack.c.l.b16 %v8977
  %v9511 = vunpack.c.h.b16 %v8977
  %v9512 = vunpack.c.l.b16 %v8978
  %v9513 = vunpack.c.h.b16 %v8978
  %v9514 = vunpack.c.l.b16 %v8979
  %v9515 = vunpack.c.h.b16 %v8979
  %v9516 = vunpack.c.l.b16 %v8980
  %v9517 = vunpack.c.h.b16 %v8980
  %v9518 = vunpack.c.l.b16 %v8981
  %v9519 = vunpack.c.h.b16 %v8981
  %v9520 = vunpack.c.l.b16 %v8982
  %v9521 = vunpack.c.h.b16 %v8982
  %v9522 = vunpack.c.l.b16 %v8983
  %v9523 = vunpack.c.h.b16 %v8983
  %v9524 = vunpack.c.l.b16 %v8984
  %v9525 = vunpack.c.h.b16 %v8984
  %v9526 = vunpack.c.l.b16 %v8985
  %v9527 = vunpack.c.h.b16 %v8985
  %v9528 = vunpack.c.l.b16 %v8986
  %v9529 = vunpack.c.h.b16 %v8986
  %v9530 = vunpack.c.l.b16 %v8987
  %v9531 = vunpack.c.h.b16 %v8987
  %v9532 = vunpack.c.l.b16 %v8988
  %v9533 = vunpack.c.h.b16 %v8988
  %v9534 = vunpack.c.l.b16 %v8989
  %v9535 = vunpack.c.h.b16 %v8989
  %v9536 = vunpack.c.l.b16 %v8990
  %v9537 = vunpack.c.h.b16 %v8990
  %v9538 = vunpack.c.l.b16 %v8991
  %v9539 = vunpack.c.h.b16 %v8991
  %v9540 = vunpack.c.l.b16 %v8992
  %v9541 = vunpack.c.h.b16 %v8992
  %v9542 = vunpack.c.l.b16 %v8993
  %v9543 = vunpack.c.h.b16 %v8993
  %v9544 = vunpack.c.l.b16 %v8994
  %v9545 = vunpack.c.h.b16 %v8994
  %v9546 = vunpack.c.l.b16 %v8995
  %v9547 = vunpack.c.h.b16 %v8995
  %v9548 = vunpack.c.l.b16 %v8996
  %v9549 = vunpack.c.h.b16 %v8996
  %v9550 = vunpack.c.l.b16 %v8997
  %v9551 = vunpack.c.h.b16 %v8997
  %v9552 = vunpack.c.l.b16 %v8998
  %v9553 = vunpack.c.h.b16 %v8998
  %v9554 = vunpack.c.l.b16 %v8999
  %v9555 = vunpack.c.h.b16 %v8999
  %v9556 = vunpack.c.l.b16 %v9000
  %v9557 = vunpack.c.h.b16 %v9000
  %v9558 = vunpack.c.l.b16 %v9001
  %v9559 = vunpack.c.h.b16 %v9001
  %v9560 = vunpack.c.l.b16 %v9002
  %v9561 = vunpack.c.h.b16 %v9002
  %v9562 = vunpack.c.l.b16 %v9003
  %v9563 = vunpack.c.h.b16 %v9003
  %v9564 = vunpack.c.l.b16 %v9004
  %v9565 = vunpack.c.h.b16 %v9004
  %v9566 = vunpack.c.l.b16 %v9005
  %v9567 = vunpack.c.h.b16 %v9005
  %v9568 = vunpack.c.l.b16 %v9006
  %v9569 = vunpack.c.h.b16 %v9006
  %v9570 = vunpack.c.l.b16 %v9007
  %v9571 = vunpack.c.h.b16 %v9007
  %v9572 = vunpack.c.l.b16 %v9008
  %v9573 = vunpack.c.h.b16 %v9008
  %v9574 = vunpack.c.l.b16 %v9009
  %v9575 = vunpack.c.h.b16 %v9009
  %v9576 = vunpack.c.l.b16 %v9010
  %v9577 = vunpack.c.h.b16 %v9010
  %v9578 = vunpack.c.l.b16 %v9011
  %v9579 = vunpack.c.h.b16 %v9011
  %v9580 = vunpack.c.l.b16 %v9012
  %v9581 = vunpack.c.h.b16 %v9012
  %v9582 = vunpack.c.l.b16 %v9013
  %v9583 = vunpack.c.h.b16 %v9013
  %v9584 = vunpack.c.l.b16 %v9014
  %v9585 = vunpack.c.h.b16 %v9014
  %v9586 = vunpack.c.l.b16 %v9015
  %v9587 = vunpack.c.h.b16 %v9015
  %v9588 = vunpack.c.l.b16 %v9016
  %v9589 = vunpack.c.h.b16 %v9016
  %v9590 = vunpack.c.l.b16 %v9017
  %v9591 = vunpack.c.h.b16 %v9017
  %v9592 = vunpack.c.l.b16 %v9018
  %v9593 = vunpack.c.h.b16 %v9018
  %v9594 = vunpack.c.l.b16 %v9019
  %v9595 = vunpack.c.h.b16 %v9019
  %v9596 = vunpack.c.l.b16 %v9020
  %v9597 = vunpack.c.h.b16 %v9020
  %v9598 = vunpack.c.l.b16 %v9021
  %v9599 = vunpack.c.h.b16 %v9021
  %v9600 = vunpack.c.l.b16 %v9022
  %v9601 = vunpack.c.h.b16 %v9022
  %v9602 = vunpack.c.l.b16 %v9023
  %v9603 = vunpack.c.h.b16 %v9023
  %v9604 = vpack.c.b16 %v9236, %v9232
  %v9605 = vpack.c.b16 %v9237, %v9233
  %v9606 = vpack.c.b16 %v9238, %v9234
  %v9607 = vpack.c.b16 %v9239, %v9235
  %v9608 = vpack.c.b16 %v9244, %v9240
  %v9609 = vpack.c.b16 %v9245, %v9241
  %v9610 = vpack.c.b16 %v9246, %v9242
  %v9611 = vpack.c.b16 %v9247, %v9243
  %v9612 = vpack.c.b16 %v9252, %v9248
  %v9613 = vpack.c.b16 %v9253, %v9249
  %v9614 = vpack.c.b16 %v9254, %v9250
  %v9615 = vpack.c.b16 %v9255, %v9251
  %v9616 = vpack.c.b16 %v9260, %v9256
  %v9617 = vpack.c.b16 %v9261, %v9257
  %v9618 = vpack.c.b16 %v9262, %v9258
  %v9619 = vpack.c.b16 %v9263, %v9259
  %v9620 = vpack.c.b16 %v9268, %v9264
  %v9621 = vpack.c.b16 %v9269, %v9265
  %v9622 = vpack.c.b16 %v9270, %v9266
  %v9623 = vpack.c.b16 %v9271, %v9267
  %v9624 = vpack.c.b16 %v9276, %v9272
  %v9625 = vpack.c.b16 %v9277, %v9273
  %v9626 = vpack.c.b16 %v9278, %v9274
  %v9627 = vpack.c.b16 %v9279, %v9275
  %v9628 = vpack.c.b16 %v9284, %v9280
  %v9629 = vpack.c.b16 %v9285, %v9281
  %v9630 = vpack.c.b16 %v9286, %v9282
  %v9631 = vpack.c.b16 %v9287, %v9283
  %v9632 = vpack.c.b16 %v9292, %v9288
  %v9633 = vpack.c.b16 %v9293, %v9289
  %v9634 = vpack.c.b16 %v9294, %v9290
  %v9635 = vpack.c.b16 %v9295, %v9291
  %v9636 = vpack.c.b16 %v9300, %v9296
  %v9637 = vpack.c.b16 %v9301, %v9297
  %v9638 = vpack.c.b16 %v9302, %v9298
  %v9639 = vpack.c.b16 %v9303, %v9299
  %v9640 = vpack.c.b16 %v9308, %v9304
  %v9641 = vpack.c.b16 %v9309, %v9305
  %v9642 = vpack.c.b16 %v9310, %v9306
  %v9643 = vpack.c.b16 %v9311, %v9307
  %v9644 = vpack.c.b16 %v9316, %v9312
  %v9645 = vpack.c.b16 %v9317, %v9313
  %v9646 = vpack.c.b16 %v9318, %v9314
  %v9647 = vpack.c.b16 %v9319, %v9315
  %v9648 = vpack.c.b16 %v9324, %v9320
  %v9649 = vpack.c.b16 %v9325, %v9321
  %v9650 = vpack.c.b16 %v9326, %v9322
  %v9651 = vpack.c.b16 %v9327, %v9323
  %v9652 = vpack.c.b16 %v9332, %v9328
  %v9653 = vpack.c.b16 %v9333, %v9329
  %v9654 = vpack.c.b16 %v9334, %v9330
  %v9655 = vpack.c.b16 %v9335, %v9331
  %v9656 = vpack.c.b16 %v9340, %v9336
  %v9657 = vpack.c.b16 %v9341, %v9337
  %v9658 = vpack.c.b16 %v9342, %v9338
  %v9659 = vpack.c.b16 %v9343, %v9339
  %v9660 = vpack.c.b16 %v9348, %v9344
  %v9661 = vpack.c.b16 %v9349, %v9345
  %v9662 = vpack.c.b16 %v9350, %v9346
  %v9663 = vpack.c.b16 %v9351, %v9347
  %v9664 = vpack.c.b16 %v9356, %v9352
  %v9665 = vpack.c.b16 %v9357, %v9353
  %v9666 = vpack.c.b16 %v9358, %v9354
  %v9667 = vpack.c.b16 %v9359, %v9355
  %v9668 = vpack.c.b16 %v9364, %v9360
  %v9669 = vpack.c.b16 %v9365, %v9361
  %v9670 = vpack.c.b16 %v9366, %v9362
  %v9671 = vpack.c.b16 %v9367, %v9363
  %v9672 = vpack.c.b16 %v9372, %v9368
  %v9673 = vpack.c.b16 %v9373, %v9369
  %v9674 = vpack.c.b16 %v9374, %v9370
  %v9675 = vpack.c.b16 %v9375, %v9371
  %v9676 = vpack.c.b16 %v9380, %v9376
  %v9677 = vpack.c.b16 %v9381, %v9377
  %v9678 = vpack.c.b16 %v9382, %v9378
  %v9679 = vpack.c.b16 %v9383, %v9379
  %v9680 = vpack.c.b16 %v9388, %v9384
  %v9681 = vpack.c.b16 %v9389, %v9385
  %v9682 = vpack.c.b16 %v9390, %v9386
  %v9683 = vpack.c.b16 %v9391, %v9387
  %v9684 = vpack.c.b16 %v9396, %v9392
  %v9685 = vpack.c.b16 %v9397, %v9393
  %v9686 = vpack.c.b16 %v9398, %v9394
  %v9687 = vpack.c.b16 %v9399, %v9395
  %v9688 = vpack.c.b16 %v9404, %v9400
  %v9689 = vpack.c.b16 %v9405, %v9401
  %v9690 = vpack.c.b16 %v9406, %v9402
  %v9691 = vpack.c.b16 %v9407, %v9403
  %v9692 = vpack.c.b16 %v9412, %v9408
  %v9693 = vpack.c.b16 %v9413, %v9409
  %v9694 = vpack.c.b16 %v9414, %v9410
  %v9695 = vpack.c.b16 %v9415, %v9411
  %v9696 = vpack.c.b16 %v9420, %v9416
  %v9697 = vpack.c.b16 %v9421, %v9417
  %v9698 = vpack.c.b16 %v9422, %v9418
  %v9699 = vpack.c.b16 %v9423, %v9419
  %v9700 = vpack.c.b16 %v9428, %v9424
  %v9701 = vpack.c.b16 %v9429, %v9425
  %v9702 = vpack.c.b16 %v9430, %v9426
  %v9703 = vpack.c.b16 %v9431, %v9427
  %v9704 = vpack.c.b16 %v9436, %v9432
  %v9705 = vpack.c.b16 %v9437, %v9433
  %v9706 = vpack.c.b16 %v9438, %v9434
  %v9707 = vpack.c.b16 %v9439, %v9435
  %v9708 = vpack.c.b16 %v9444, %v9440
  %v9709 = vpack.c.b16 %v9445, %v9441
  %v9710 = vpack.c.b16 %v9446, %v9442
  %v9711 = vpack.c.b16 %v9447, %v9443
  %v9712 = vpack.c.b16 %v9452, %v9448
  %v9713 = vpack.c.b16 %v9453, %v9449
  %v9714 = vpack.c.b16 %v9454, %v9450
  %v9715 = vpack.c.b16 %v9455, %v9451
  %v9716 = vpack.c.b16 %v9460, %v9456
  %v9717 = vpack.c.b16 %v9461, %v9457
  %v9718 = vpack.c.b16 %v9462, %v9458
  %v9719 = vpack.c.b16 %v9463, %v9459
  %v9720 = vpack.c.b16 %v9468, %v9464
  %v9721 = vpack.c.b16 %v9469, %v9465
  %v9722 = vpack.c.b16 %v9470, %v9466
  %v9723 = vpack.c.b16 %v9471, %v9467
  %v9724 = vpack.c.b16 %v9476, %v9472
  %v9725 = vpack.c.b16 %v9477, %v9473
  %v9726 = vpack.c.b16 %v9478, %v9474
  %v9727 = vpack.c.b16 %v9479, %v9475
  %v9728 = vpack.c.b16 %v9484, %v9480
  %v9729 = vpack.c.b16 %v9485, %v9481
  %v9730 = vpack.c.b16 %v9486, %v9482
  %v9731 = vpack.c.b16 %v9487, %v9483
  %v9732 = vpack.c.b16 %v9492, %v9488
  %v9733 = vpack.c.b16 %v9493, %v9489
  %v9734 = vpack.c.b16 %v9494, %v9490
  %v9735 = vpack.c.b16 %v9495, %v9491
  %v9736 = vpack.c.b16 %v9500, %v9496
  %v9737 = vpack.c.b16 %v9501, %v9497
  %v9738 = vpack.c.b16 %v9502, %v9498
  %v9739 = vpack.c.b16 %v9503, %v9499
  %v9740 = vpack.c.b16 %v9508, %v9504
  %v9741 = vpack.c.b16 %v9509, %v9505
  %v9742 = vpack.c.b16 %v9510, %v9506
  %v9743 = vpack.c.b16 %v9511, %v9507
  %v9744 = vpack.c.b16 %v9516, %v9512
  %v9745 = vpack.c.b16 %v9517, %v9513
  %v9746 = vpack.c.b16 %v9518, %v9514
  %v9747 = vpack.c.b16 %v9519, %v9515
  %v9748 = vpack.c.b16 %v9524, %v9520
  %v9749 = vpack.c.b16 %v9525, %v9521
  %v9750 = vpack.c.b16 %v9526, %v9522
  %v9751 = vpack.c.b16 %v9527, %v9523
  %v9752 = vpack.c.b16 %v9532, %v9528
  %v9753 = vpack.c.b16 %v9533, %v9529
  %v9754 = vpack.c.b16 %v9534, %v9530
  %v9755 = vpack.c.b16 %v9535, %v9531
  %v9756 = vpack.c.b16 %v9540, %v9536
  %v9757 = vpack.c.b16 %v9541, %v9537
  %v9758 = vpack.c.b16 %v9542, %v9538
  %v9759 = vpack.c.b16 %v9543, %v9539
  %v9760 = vpack.c.b16 %v9548, %v9544
  %v9761 = vpack.c.b16 %v9549, %v9545
  %v9762 = vpack.c.b16 %v9550, %v9546
  %v9763 = vpack.c.b16 %v9551, %v9547
  %v9764 = vpack.c.b16 %v9556, %v9552
  %v9765 = vpack.c.b16 %v9557, %v9553
  %v9766 = vpack.c.b16 %v9558, %v9554
  %v9767 = vpack.c.b16 %v9559, %v9555
  %v9768 = vpack.c.b16 %v9564, %v9560
  %v9769 = vpack.c.b16 %v9565, %v9561
  %v9770 = vpack.c.b16 %v9566, %v9562
  %v9771 = vpack.c.b16 %v9567, %v9563
  %v9772 = vpack.c.b16 %v9572, %v9568
  %v9773 = vpack.c.b16 %v9573, %v9569
  %v9774 = vpack.c.b16 %v9574, %v9570
  %v9775 = vpack.c.b16 %v9575, %v9571
  %v9776 = vpack.c.b16 %v9580, %v9576
  %v9777 = vpack.c.b16 %v9581, %v9577
  %v9778 = vpack.c.b16 %v9582, %v9578
  %v9779 = vpack.c.b16 %v9583, %v9579
  %v9780 = vpack.c.b16 %v9588, %v9584
  %v9781 = vpack.c.b16 %v9589, %v9585
  %v9782 = vpack.c.b16 %v9590, %v9586
  %v9783 = vpack.c.b16 %v9591, %v9587
  %v9784 = vpack.c.b16 %v9596, %v9592
  %v9785 = vpack.c.b16 %v9597, %v9593
  %v9786 = vpack.c.b16 %v9598, %v9594
  %v9787 = vpack.c.b16 %v9599, %v9595
  %v9788 = vpack.c.b16 %v9600, %v9600
  %v9789 = vpack.c.b16 %v9601, %v9601
  %v9790 = vpack.c.b16 %v9602, %v9602
  %v9791 = vpack.c.b16 %v9603, %v9603
  %vm9976 = vcmask 818176
  %v9978 = vsel %vm9976, %v8837, 0
  %v9981 = vsel %vm8426, %v9788, 0
  %v9984 = vsel %vm8426, %v9789, 0
  %v9987 = vsel %vm8426, %v9790, 0
  %v9990 = vsel %vm8426, %v9791, 0
  %9992 = vmatprep.subr.bf16.mxu0 %v9605
  %9993 = vmatpush1.bf16.msra.mxu0 %v9604
  %9994 = vmatprep.subr.bf16.mxu0 %v9609
  %9995 = vmatpush1.bf16.msra.mxu0 %v9608
  %9996 = vmatprep.subr.bf16.mxu0 %v9613
  %9997 = vmatpush1.bf16.msra.mxu0 %v9612
  %9998 = vmatprep.subr.bf16.mxu0 %v9617
  %9999 = vmatpush1.bf16.msra.mxu0 %v9616
  %10000 = vmatprep.subr.bf16.mxu0 %v9621
  %10001 = vmatpush1.bf16.msra.mxu0 %v9620
  %10002 = vmatprep.subr.bf16.mxu0 %v9625
  %10003 = vmatpush1.bf16.msra.mxu0 %v9624
  %10004 = vmatprep.subr.bf16.mxu0 %v9629
  %10005 = vmatpush1.bf16.msra.mxu0 %v9628
  %10006 = vmatprep.subr.bf16.mxu0 %v9633
  %10007 = vmatpush1.bf16.msra.mxu0 %v9632
  %10008 = vmatprep.subr.bf16.mxu0 %v9637
  %10009 = vmatpush1.bf16.msra.mxu0 %v9636
  %10010 = vmatprep.subr.bf16.mxu0 %v9641
  %10011 = vmatpush1.bf16.msra.mxu0 %v9640
  %10012 = vmatprep.subr.bf16.mxu0 %v9645
  %10013 = vmatpush1.bf16.msra.mxu0 %v9644
  %10014 = vmatprep.subr.bf16.mxu0 %v9649
  %10015 = vmatpush1.bf16.msra.mxu0 %v9648
  %10016 = vmatprep.subr.bf16.mxu0 %v9653
  %10017 = vmatpush1.bf16.msra.mxu0 %v9652
  %10018 = vmatprep.subr.bf16.mxu0 %v9657
  %10019 = vmatpush1.bf16.msra.mxu0 %v9656
  %10020 = vmatprep.subr.bf16.mxu0 %v9661
  %10021 = vmatpush1.bf16.msra.mxu0 %v9660
  %10022 = vmatprep.subr.bf16.mxu0 %v9665
  %10023 = vmatpush1.bf16.msra.mxu0 %v9664
  %10024 = vmatprep.mubr.bf16.mxu0 %v8833
  %10025 = vmatmul.mubr.bf16.gmra.mrb[0].mxu0 %v8832
  %v10026 = vpop.f32.mrb[0].mxu0
  %v10027 = vadd.f32 %v9029, %v10026
  %v10028 = vpop.f32.mrb[0].mxu0
  %v10029 = vadd.f32 %v9033, %v10028
  %v10030 = vpop.f32.mrb[0].mxu0
  %v10031 = vpop.f32.mrb[0].mxu0
  %10032 = vdwg.mxu0
  %10033 = vmatprep.subr.bf16.mxu0 %v9669
  %10034 = vmatpush1.bf16.msra.mxu0 %v9668
  %10035 = vmatprep.subr.bf16.mxu0 %v9673
  %10036 = vmatpush1.bf16.msra.mxu0 %v9672
  %10037 = vmatprep.subr.bf16.mxu0 %v9677
  %10038 = vmatpush1.bf16.msra.mxu0 %v9676
  %10039 = vmatprep.subr.bf16.mxu0 %v9681
  %10040 = vmatpush1.bf16.msra.mxu0 %v9680
  %10041 = vmatprep.subr.bf16.mxu0 %v9685
  %10042 = vmatpush1.bf16.msra.mxu0 %v9684
  %10043 = vmatprep.subr.bf16.mxu0 %v9689
  %10044 = vmatpush1.bf16.msra.mxu0 %v9688
  %10045 = vmatprep.subr.bf16.mxu0 %v9693
  %10046 = vmatpush1.bf16.msra.mxu0 %v9692
  %10047 = vmatprep.subr.bf16.mxu0 %v9697
  %10048 = vmatpush1.bf16.msra.mxu0 %v9696
  %10049 = vmatprep.subr.bf16.mxu0 %v9701
  %10050 = vmatpush1.bf16.msra.mxu0 %v9700
  %10051 = vmatprep.subr.bf16.mxu0 %v9705
  %10052 = vmatpush1.bf16.msra.mxu0 %v9704
  %10053 = vmatprep.subr.bf16.mxu0 %v9709
  %10054 = vmatpush1.bf16.msra.mxu0 %v9708
  %10055 = vmatprep.subr.bf16.mxu0 %v9713
  %10056 = vmatpush1.bf16.msra.mxu0 %v9712
  %10057 = vmatprep.subr.bf16.mxu0 %v9717
  %10058 = vmatpush1.bf16.msra.mxu0 %v9716
  %10059 = vmatprep.subr.bf16.mxu0 %v9721
  %10060 = vmatpush1.bf16.msra.mxu0 %v9720
  %10061 = vmatprep.subr.bf16.mxu0 %v9725
  %10062 = vmatpush1.bf16.msra.mxu0 %v9724
  %10063 = vmatprep.subr.bf16.mxu0 %v9729
  %10064 = vmatpush1.bf16.msra.mxu0 %v9728
  %10065 = vmatprep.mubr.bf16.mxu0 %v8835
  %10066 = vmatmul.mubr.bf16.gmra.mrb[0].mxu0 %v8834
  %v10067 = vpop.f32.mrb[0].mxu0
  %v10068 = vadd.f32 %v10027, %v10067
  %v10069 = vpop.f32.mrb[0].mxu0
  %v10070 = vadd.f32 %v10029, %v10069
  %v10071 = vpop.f32.mrb[0].mxu0
  %v10072 = vpop.f32.mrb[0].mxu0
  %10073 = vdwg.mxu0
  %10074 = vmatprep.subr.bf16.mxu0 %v9733
  %10075 = vmatpush1.bf16.msra.mxu0 %v9732
  %10076 = vmatprep.subr.bf16.mxu0 %v9737
  %10077 = vmatpush1.bf16.msra.mxu0 %v9736
  %10078 = vmatprep.subr.bf16.mxu0 %v9741
  %10079 = vmatpush1.bf16.msra.mxu0 %v9740
  %10080 = vmatprep.subr.bf16.mxu0 %v9745
  %10081 = vmatpush1.bf16.msra.mxu0 %v9744
  %10082 = vmatprep.subr.bf16.mxu0 %v9749
  %10083 = vmatpush1.bf16.msra.mxu0 %v9748
  %10084 = vmatprep.subr.bf16.mxu0 %v9753
  %10085 = vmatpush1.bf16.msra.mxu0 %v9752
  %10086 = vmatprep.subr.bf16.mxu0 %v9757
  %10087 = vmatpush1.bf16.msra.mxu0 %v9756
  %10088 = vmatprep.subr.bf16.mxu0 %v9761
  %10089 = vmatpush1.bf16.msra.mxu0 %v9760
  %10090 = vmatprep.subr.bf16.mxu0 %v9765
  %10091 = vmatpush1.bf16.msra.mxu0 %v9764
  %10092 = vmatprep.subr.bf16.mxu0 %v9769
  %10093 = vmatpush1.bf16.msra.mxu0 %v9768
  %10094 = vmatprep.subr.bf16.mxu0 %v9773
  %10095 = vmatpush1.bf16.msra.mxu0 %v9772
  %10096 = vmatprep.subr.bf16.mxu0 %v9777
  %10097 = vmatpush1.bf16.msra.mxu0 %v9776
  %10098 = vmatprep.subr.bf16.mxu0 %v9781
  %10099 = vmatpush1.bf16.msra.mxu0 %v9780
  %10100 = vmatprep.subr.bf16.mxu0 %v9785
  %10101 = vmatpush1.bf16.msra.mxu0 %v9784
  %10102 = vmatprep.subr.bf16.mxu0 %v9984
  %10103 = vmatpush1.bf16.msra.mxu0 %v9981
  %10104 = vmatprep.subr.bf16.mxu0 0
  %10105 = vmatpush1.bf16.msra.mxu0 0
  %10106 = vmatprep.mubr.bf16.mxu0 %v9978
  %10107 = vmatmul.mubr.bf16.gmra.mrb[0].mxu0 %v8836
  %v10108 = vpop.f32.mrb[0].mxu0
  %v10109 = vadd.f32 %v10068, %v10108
  %v10110 = vpop.f32.mrb[0].mxu0
  %v10111 = vadd.f32 %v10070, %v10110
  %v10112 = vpop.f32.mrb[0].mxu0
  %v10113 = vpop.f32.mrb[0].mxu0
  %10114 = vdwg.mxu0
  %10115 = vmatprep.subr.bf16.mxu0 %v9607
  %10116 = vmatpush1.bf16.msra.mxu0 %v9606
  %10117 = vmatprep.subr.bf16.mxu0 %v9611
  %10118 = vmatpush1.bf16.msra.mxu0 %v9610
  %10119 = vmatprep.subr.bf16.mxu0 %v9615
  %10120 = vmatpush1.bf16.msra.mxu0 %v9614
  %10121 = vmatprep.subr.bf16.mxu0 %v9619
  %10122 = vmatpush1.bf16.msra.mxu0 %v9618
  %10123 = vmatprep.subr.bf16.mxu0 %v9623
  %10124 = vmatpush1.bf16.msra.mxu0 %v9622
  %10125 = vmatprep.subr.bf16.mxu0 %v9627
  %10126 = vmatpush1.bf16.msra.mxu0 %v9626
  %10127 = vmatprep.subr.bf16.mxu0 %v9631
  %10128 = vmatpush1.bf16.msra.mxu0 %v9630
  %10129 = vmatprep.subr.bf16.mxu0 %v9635
  %10130 = vmatpush1.bf16.msra.mxu0 %v9634
  %10131 = vmatprep.subr.bf16.mxu0 %v9639
  %10132 = vmatpush1.bf16.msra.mxu0 %v9638
  %10133 = vmatprep.subr.bf16.mxu0 %v9643
  %10134 = vmatpush1.bf16.msra.mxu0 %v9642
  %10135 = vmatprep.subr.bf16.mxu0 %v9647
  %10136 = vmatpush1.bf16.msra.mxu0 %v9646
  %10137 = vmatprep.subr.bf16.mxu0 %v9651
  %10138 = vmatpush1.bf16.msra.mxu0 %v9650
  %10139 = vmatprep.subr.bf16.mxu0 %v9655
  %10140 = vmatpush1.bf16.msra.mxu0 %v9654
  %10141 = vmatprep.subr.bf16.mxu0 %v9659
  %10142 = vmatpush1.bf16.msra.mxu0 %v9658
  %10143 = vmatprep.subr.bf16.mxu0 %v9663
  %10144 = vmatpush1.bf16.msra.mxu0 %v9662
  %10145 = vmatprep.subr.bf16.mxu0 %v9667
  %10146 = vmatpush1.bf16.msra.mxu0 %v9666
  %10147 = vmatprep.mubr.bf16.mxu0 %v8833
  %10148 = vmatmul.mubr.bf16.gmra.mrb[0].mxu0 %v8832
  %v10149 = vpop.f32.mrb[0].mxu0
  %v10150 = vadd.f32 %v9037, %v10149
  %v10151 = vpop.f32.mrb[0].mxu0
  %v10152 = vadd.f32 %v9041, %v10151
  %v10153 = vpop.f32.mrb[0].mxu0
  %v10154 = vpop.f32.mrb[0].mxu0
  %10155 = vdwg.mxu0
  %10156 = vmatprep.subr.bf16.mxu0 %v9671
  %10157 = vmatpush1.bf16.msra.mxu0 %v9670
  %10158 = vmatprep.subr.bf16.mxu0 %v9675
  %10159 = vmatpush1.bf16.msra.mxu0 %v9674
  %10160 = vmatprep.subr.bf16.mxu0 %v9679
  %10161 = vmatpush1.bf16.msra.mxu0 %v9678
  %10162 = vmatprep.subr.bf16.mxu0 %v9683
  %10163 = vmatpush1.bf16.msra.mxu0 %v9682
  %10164 = vmatprep.subr.bf16.mxu0 %v9687
  %10165 = vmatpush1.bf16.msra.mxu0 %v9686
  %10166 = vmatprep.subr.bf16.mxu0 %v9691
  %10167 = vmatpush1.bf16.msra.mxu0 %v9690
  %10168 = vmatprep.subr.bf16.mxu0 %v9695
  %10169 = vmatpush1.bf16.msra.mxu0 %v9694
  %10170 = vmatprep.subr.bf16.mxu0 %v9699
  %10171 = vmatpush1.bf16.msra.mxu0 %v9698
  %10172 = vmatprep.subr.bf16.mxu0 %v9703
  %10173 = vmatpush1.bf16.msra.mxu0 %v9702
  %10174 = vmatprep.subr.bf16.mxu0 %v9707
  %10175 = vmatpush1.bf16.msra.mxu0 %v9706
  %10176 = vmatprep.subr.bf16.mxu0 %v9711
  %10177 = vmatpush1.bf16.msra.mxu0 %v9710
  %10178 = vmatprep.subr.bf16.mxu0 %v9715
  %10179 = vmatpush1.bf16.msra.mxu0 %v9714
  %10180 = vmatprep.subr.bf16.mxu0 %v9719
  %10181 = vmatpush1.bf16.msra.mxu0 %v9718
  %10182 = vmatprep.subr.bf16.mxu0 %v9723
  %10183 = vmatpush1.bf16.msra.mxu0 %v9722
  %10184 = vmatprep.subr.bf16.mxu0 %v9727
  %10185 = vmatpush1.bf16.msra.mxu0 %v9726
  %10186 = vmatprep.subr.bf16.mxu0 %v9731
  %10187 = vmatpush1.bf16.msra.mxu0 %v9730
  %10188 = vmatprep.mubr.bf16.mxu0 %v8835
  %10189 = vmatmul.mubr.bf16.gmra.mrb[0].mxu0 %v8834
  %v10190 = vpop.f32.mrb[0].mxu0
  %v10191 = vadd.f32 %v10150, %v10190
  %v10192 = vpop.f32.mrb[0].mxu0
  %v10193 = vadd.f32 %v10152, %v10192
  %v10194 = vpop.f32.mrb[0].mxu0
  %v10195 = vpop.f32.mrb[0].mxu0
  %10196 = vdwg.mxu0
  %10197 = vmatprep.subr.bf16.mxu0 %v9735
  %10198 = vmatpush1.bf16.msra.mxu0 %v9734
  %10199 = vmatprep.subr.bf16.mxu0 %v9739
  %10200 = vmatpush1.bf16.msra.mxu0 %v9738
  %10201 = vmatprep.subr.bf16.mxu0 %v9743
  %10202 = vmatpush1.bf16.msra.mxu0 %v9742
  %10203 = vmatprep.subr.bf16.mxu0 %v9747
  %10204 = vmatpush1.bf16.msra.mxu0 %v9746
  %10205 = vmatprep.subr.bf16.mxu0 %v9751
  %10206 = vmatpush1.bf16.msra.mxu0 %v9750
  %10207 = vmatprep.subr.bf16.mxu0 %v9755
  %10208 = vmatpush1.bf16.msra.mxu0 %v9754
  %10209 = vmatprep.subr.bf16.mxu0 %v9759
  %10210 = vmatpush1.bf16.msra.mxu0 %v9758
  %10211 = vmatprep.subr.bf16.mxu0 %v9763
  %10212 = vmatpush1.bf16.msra.mxu0 %v9762
  %10213 = vmatprep.subr.bf16.mxu0 %v9767
  %10214 = vmatpush1.bf16.msra.mxu0 %v9766
  %10215 = vmatprep.subr.bf16.mxu0 %v9771
  %10216 = vmatpush1.bf16.msra.mxu0 %v9770
  %10217 = vmatprep.subr.bf16.mxu0 %v9775
  %10218 = vmatpush1.bf16.msra.mxu0 %v9774
  %10219 = vmatprep.subr.bf16.mxu0 %v9779
  %10220 = vmatpush1.bf16.msra.mxu0 %v9778
  %10221 = vmatprep.subr.bf16.mxu0 %v9783
  %10222 = vmatpush1.bf16.msra.mxu0 %v9782
  %10223 = vmatprep.subr.bf16.mxu0 %v9787
  %10224 = vmatpush1.bf16.msra.mxu0 %v9786
  %10225 = vmatprep.subr.bf16.mxu0 %v9990
  %10226 = vmatpush1.bf16.msra.mxu0 %v9987
  %10227 = vmatprep.subr.bf16.mxu0 0
  %10228 = vmatpush1.bf16.msra.mxu0 0
  %10229 = vmatprep.mubr.bf16.mxu0 %v9978
  %10230 = vmatmul.mubr.bf16.gmra.mrb[0].mxu0 %v8836
  %v10231 = vpop.f32.mrb[0].mxu0
  %v10232 = vadd.f32 %v10191, %v10231
  %v10233 = vpop.f32.mrb[0].mxu0
  %v10234 = vadd.f32 %v10193, %v10233
  %v10235 = vpop.f32.mrb[0].mxu0
  %v10236 = vpop.f32.mrb[0].mxu0
  %10237 = vdwg.mxu0
  %vm10238 = vcmp.gt.f32.partialorder %v10109, 0.0
  %vm10239 = vcmp.gt.f32.partialorder %v10111, 0.0
  %vm10240 = vcmp.gt.f32.partialorder %v10232, 0.0
  %vm10241 = vcmp.gt.f32.partialorder %v10234, 0.0
  %v10242 = vmul.f32 %v10109, 0.01
  %v10243 = vmul.f32 %v10111, 0.01
  %v10244 = vmul.f32 %v10232, 0.01
  %v10245 = vmul.f32 %v10234, 0.01
  %v10246 = vsel %vm10238, %v10109, %v10242
  %v10247 = vsel %vm10239, %v10111, %v10243
  %v10248 = vsel %vm10240, %v10232, %v10244
  %v10249 = vsel %vm10241, %v10234, %v10245
  %v10250 = vpack.c.bf16 %v10246, %v10246
  %v10251 = vpack.c.bf16 %v10247, %v10247
  %v10252 = vpack.c.bf16 %v10248, %v10248
  %v10253 = vpack.c.bf16 %v10249, %v10249
  %v10254 = vld [vmem:[%s9] sm:$0xf]
  %v10255 = vld [vmem:[%s9 + $0x4] sm:$0xf]
  %v10256 = vld [vmem:[%s9 + $0x8] sm:$0xf]
  %v10257 = vld [vmem:[%s9 + $0xc] sm:$0xf]
  %v10258 = vld [vmem:[%s9 + $0x10] sm:$0xf]
  %v10259 = vld [vmem:[%s9 + $0x14] sm:$0xf]
  %v10260 = vld [vmem:[%s9 + $0x18] sm:$0xf]
  %v10261 = vld [vmem:[%s9 + $0x1c] sm:$0xf]
  %v10262 = vld [vmem:[%s9 + $0x20] sm:$0xf]
  %v10263 = vld [vmem:[%s9 + $0x24] sm:$0xf]
  %v10264 = vld [vmem:[%s9 + $0x28] sm:$0xf]
  %v10265 = vld [vmem:[%s9 + $0x2c] sm:$0xf]
  %v10266 = vld [vmem:[%s9 + $0x30] sm:$0xf]
  %v10267 = vld [vmem:[%s9 + $0x34] sm:$0xf]
  %v10268 = vld [vmem:[%s9 + $0x38] sm:$0xf]
  %v10269 = vld [vmem:[%s9 + $0x3c] sm:$0xf]
  %v10270 = vld [vmem:[%s9 + $0x40] sm:$0xf]
  %v10271 = vld [vmem:[%s9 + $0x44] sm:$0xf]
  %v10272 = vld [vmem:[%s9 + $0x48] sm:$0xf]
  %v10273 = vld [vmem:[%s9 + $0x4c] sm:$0xf]
  %v10274 = vld [vmem:[%s9 + $0x50] sm:$0xf]
  %v10275 = vld [vmem:[%s9 + $0x54] sm:$0xf]
  %v10276 = vld [vmem:[%s9 + $0x58] sm:$0xf]
  %v10277 = vld [vmem:[%s9 + $0x5c] sm:$0xf]
  %v10278 = vld [vmem:[%s9 + $0x60] sm:$0xf]
  %v10279 = vld [vmem:[%s9 + $0x64] sm:$0xf]
  %v10280 = vld [vmem:[%s9 + $0x68] sm:$0xf]
  %v10281 = vld [vmem:[%s9 + $0x6c] sm:$0xf]
  %v10282 = vld [vmem:[%s9 + $0x70] sm:$0xf]
  %v10283 = vld [vmem:[%s9 + $0x74] sm:$0xf]
  %v10284 = vld [vmem:[%s9 + $0x78] sm:$0xf]
  %v10285 = vld [vmem:[%s9 + $0x7c] sm:$0xf]
  %v10286 = vld [vmem:[%s9 + $0x80] sm:$0xf]
  %v10287 = vld [vmem:[%s9 + $0x84] sm:$0xf]
  %v10288 = vld [vmem:[%s9 + $0x88] sm:$0xf]
  %v10289 = vld [vmem:[%s9 + $0x8c] sm:$0xf]
  %v10290 = vld [vmem:[%s9 + $0x90] sm:$0xf]
  %v10291 = vld [vmem:[%s9 + $0x94] sm:$0xf]
  %v10292 = vld [vmem:[%s9 + $0x98] sm:$0xf]
  %v10293 = vld [vmem:[%s9 + $0x9c] sm:$0xf]
  %v10294 = vld [vmem:[%s9 + $0xa0] sm:$0xf]
  %v10295 = vld [vmem:[%s9 + $0xa4] sm:$0xf]
  %v10296 = vld [vmem:[%s9 + $0xa8] sm:$0xf]
  %v10297 = vld [vmem:[%s9 + $0xac] sm:$0xf]
  %v10298 = vld [vmem:[%s9 + $0xb0] sm:$0xf]
  %v10299 = vld [vmem:[%s9 + $0xb4] sm:$0xf]
  %v10300 = vld [vmem:[%s9 + $0xb8] sm:$0xf]
  %v10301 = vld [vmem:[%s9 + $0xbc] sm:$0xf]
  %v10302 = vld [vmem:[%s9 + $0xc0] sm:$0xf]
  %v10303 = vld [vmem:[%s9 + $0xc4] sm:$0xf]
  %v10304 = vld [vmem:[%s9 + $0xc8] sm:$0xf]
  %v10305 = vld [vmem:[%s9 + $0xcc] sm:$0xf]
  %v10306 = vld [vmem:[%s9 + $0xd0] sm:$0xf]
  %v10307 = vld [vmem:[%s9 + $0xd4] sm:$0xf]
  %v10308 = vld [vmem:[%s9 + $0xd8] sm:$0x3]
  %v10309 = vld [vmem:[%s10] sm:$0x1]
  %v10311 = vlaneseq
  %v10312 = vshrl.u32 %v10311, 7
  %v10313 = vsub.s32 0, %v10312
  %v10314 = vrot.slane %v10309, %v10313
  %v10371 = vunpack.c.l.b16 %v10254
  %v10372 = vunpack.c.l.b16 %v10255
  %v10373 = vunpack.c.l.b16 %v10256
  %v10374 = vunpack.c.l.b16 %v10257
  %v10375 = vunpack.c.l.b16 %v10258
  %v10376 = vunpack.c.l.b16 %v10259
  %v10377 = vunpack.c.l.b16 %v10260
  %v10378 = vunpack.c.l.b16 %v10261
  %v10379 = vunpack.c.l.b16 %v10262
  %v10380 = vunpack.c.l.b16 %v10263
  %v10381 = vunpack.c.l.b16 %v10264
  %v10382 = vunpack.c.l.b16 %v10265
  %v10383 = vunpack.c.l.b16 %v10266
  %v10384 = vunpack.c.l.b16 %v10267
  %v10385 = vunpack.c.l.b16 %v10268
  %v10386 = vunpack.c.l.b16 %v10269
  %v10387 = vunpack.c.l.b16 %v10270
  %v10388 = vunpack.c.l.b16 %v10271
  %v10389 = vunpack.c.l.b16 %v10272
  %v10390 = vunpack.c.l.b16 %v10273
  %v10391 = vunpack.c.l.b16 %v10274
  %v10392 = vunpack.c.l.b16 %v10275
  %v10393 = vunpack.c.l.b16 %v10276
  %v10394 = vunpack.c.l.b16 %v10277
  %v10395 = vunpack.c.l.b16 %v10278
  %v10396 = vunpack.c.l.b16 %v10279
  %v10397 = vunpack.c.l.b16 %v10280
  %v10398 = vunpack.c.l.b16 %v10281
  %v10399 = vunpack.c.l.b16 %v10282
  %v10400 = vunpack.c.l.b16 %v10283
  %v10401 = vunpack.c.l.b16 %v10284
  %v10402 = vunpack.c.l.b16 %v10285
  %v10403 = vunpack.c.l.b16 %v10286
  %v10404 = vunpack.c.l.b16 %v10287
  %v10405 = vunpack.c.l.b16 %v10288
  %v10406 = vunpack.c.l.b16 %v10289
  %v10407 = vunpack.c.l.b16 %v10290
  %v10408 = vunpack.c.l.b16 %v10291
  %v10409 = vunpack.c.l.b16 %v10292
  %v10410 = vunpack.c.l.b16 %v10293
  %v10411 = vunpack.c.l.b16 %v10294
  %v10412 = vunpack.c.l.b16 %v10295
  %v10413 = vunpack.c.l.b16 %v10296
  %v10414 = vunpack.c.l.b16 %v10297
  %v10415 = vunpack.c.l.b16 %v10298
  %v10416 = vunpack.c.l.b16 %v10299
  %v10417 = vunpack.c.l.b16 %v10300
  %v10418 = vunpack.c.l.b16 %v10301
  %v10419 = vunpack.c.l.b16 %v10302
  %v10420 = vunpack.c.l.b16 %v10303
  %v10421 = vunpack.c.l.b16 %v10304
  %v10422 = vunpack.c.l.b16 %v10305
  %v10423 = vunpack.c.l.b16 %v10306
  %v10424 = vunpack.c.l.b16 %v10307
  %v10425 = vunpack.c.l.b16 %v10308
  %v10426 = vpack.c.b16 %v10372, %v10371
  %v10427 = vpack.c.b16 %v10374, %v10373
  %v10428 = vpack.c.b16 %v10376, %v10375
  %v10429 = vpack.c.b16 %v10378, %v10377
  %v10430 = vpack.c.b16 %v10380, %v10379
  %v10431 = vpack.c.b16 %v10382, %v10381
  %v10432 = vpack.c.b16 %v10384, %v10383
  %v10433 = vpack.c.b16 %v10386, %v10385
  %v10434 = vpack.c.b16 %v10388, %v10387
  %v10435 = vpack.c.b16 %v10390, %v10389
  %v10436 = vpack.c.b16 %v10392, %v10391
  %v10437 = vpack.c.b16 %v10394, %v10393
  %v10438 = vpack.c.b16 %v10396, %v10395
  %v10439 = vpack.c.b16 %v10398, %v10397
  %v10440 = vpack.c.b16 %v10400, %v10399
  %v10441 = vpack.c.b16 %v10402, %v10401
  %v10442 = vpack.c.b16 %v10404, %v10403
  %v10443 = vpack.c.b16 %v10406, %v10405
  %v10444 = vpack.c.b16 %v10408, %v10407
  %v10445 = vpack.c.b16 %v10410, %v10409
  %v10446 = vpack.c.b16 %v10412, %v10411
  %v10447 = vpack.c.b16 %v10414, %v10413
  %v10448 = vpack.c.b16 %v10416, %v10415
  %v10449 = vpack.c.b16 %v10418, %v10417
  %v10450 = vpack.c.b16 %v10420, %v10419
  %v10451 = vpack.c.b16 %v10422, %v10421
  %v10452 = vpack.c.b16 %v10424, %v10423
  %v10453 = vpack.c.b16 %v10425, %v10425
  %vm10481 = vcmask 416768
  %v10483 = vsel %vm10481, %v10253, 0
  %vm10485 = vcmask 1040384
  %v10486 = vsel %vm10485, 4294967295, 65535
  %v10487 = vsel %vm8426, %v10486, 0
  %v10489 = vand.u32 %v10453, %v10487
  %10491 = vmatprep.subr.bf16.mxu0 0
  %10492 = vmatpush1.bf16.msra.mxu0 %v10426
  %10493 = vmatprep.subr.bf16.mxu0 0
  %10494 = vmatpush1.bf16.msra.mxu0 %v10427
  %10495 = vmatprep.subr.bf16.mxu0 0
  %10496 = vmatpush1.bf16.msra.mxu0 %v10428
  %10497 = vmatprep.subr.bf16.mxu0 0
  %10498 = vmatpush1.bf16.msra.mxu0 %v10429
  %10499 = vmatprep.subr.bf16.mxu0 0
  %10500 = vmatpush1.bf16.msra.mxu0 %v10430
  %10501 = vmatprep.subr.bf16.mxu0 0
  %10502 = vmatpush1.bf16.msra.mxu0 %v10431
  %10503 = vmatprep.subr.bf16.mxu0 0
  %10504 = vmatpush1.bf16.msra.mxu0 %v10432
  %10505 = vmatprep.subr.bf16.mxu0 0
  %10506 = vmatpush1.bf16.msra.mxu0 %v10433
  %10507 = vmatprep.subr.bf16.mxu0 0
  %10508 = vmatpush1.bf16.msra.mxu0 %v10434
  %10509 = vmatprep.subr.bf16.mxu0 0
  %10510 = vmatpush1.bf16.msra.mxu0 %v10435
  %10511 = vmatprep.subr.bf16.mxu0 0
  %10512 = vmatpush1.bf16.msra.mxu0 %v10436
  %10513 = vmatprep.subr.bf16.mxu0 0
  %10514 = vmatpush1.bf16.msra.mxu0 %v10437
  %10515 = vmatprep.subr.bf16.mxu0 0
  %10516 = vmatpush1.bf16.msra.mxu0 %v10438
  %10517 = vmatprep.subr.bf16.mxu0 0
  %10518 = vmatpush1.bf16.msra.mxu0 %v10439
  %10519 = vmatprep.subr.bf16.mxu0 0
  %10520 = vmatpush1.bf16.msra.mxu0 %v10440
  %10521 = vmatprep.subr.bf16.mxu0 0
  %10522 = vmatpush1.bf16.msra.mxu0 %v10441
  %10523 = vmatprep.mubr.bf16.mxu0 %v10251
  %10524 = vmatmul.mubr.bf16.gmra.mrb[0].mxu0 %v10250
  %v10525 = vpop.f32.mrb[0].mxu0
  %v10526 = vadd.f32 %v10314, %v10525
  %v10527 = vpop.f32.mrb[0].mxu0
  %v10528 = vpop.f32.mrb[0].mxu0
  %v10529 = vpop.f32.mrb[0].mxu0
  %10530 = vdwg.mxu0
  %10531 = vmatprep.subr.bf16.mxu0 0
  %10532 = vmatpush1.bf16.msra.mxu0 %v10442
  %10533 = vmatprep.subr.bf16.mxu0 0
  %10534 = vmatpush1.bf16.msra.mxu0 %v10443
  %10535 = vmatprep.subr.bf16.mxu0 0
  %10536 = vmatpush1.bf16.msra.mxu0 %v10444
  %10537 = vmatprep.subr.bf16.mxu0 0
  %10538 = vmatpush1.bf16.msra.mxu0 %v10445
  %10539 = vmatprep.subr.bf16.mxu0 0
  %10540 = vmatpush1.bf16.msra.mxu0 %v10446
  %10541 = vmatprep.subr.bf16.mxu0 0
  %10542 = vmatpush1.bf16.msra.mxu0 %v10447
  %10543 = vmatprep.subr.bf16.mxu0 0
  %10544 = vmatpush1.bf16.msra.mxu0 %v10448
  %10545 = vmatprep.subr.bf16.mxu0 0
  %10546 = vmatpush1.bf16.msra.mxu0 %v10449
  %10547 = vmatprep.subr.bf16.mxu0 0
  %10548 = vmatpush1.bf16.msra.mxu0 %v10450
  %10549 = vmatprep.subr.bf16.mxu0 0
  %10550 = vmatpush1.bf16.msra.mxu0 %v10451
  %10551 = vmatprep.subr.bf16.mxu0 0
  %10552 = vmatpush1.bf16.msra.mxu0 %v10452
  %10553 = vmatprep.subr.bf16.mxu0 0
  %10554 = vmatpush1.bf16.msra.mxu0 %v10489
  %10555 = vmatprep.subr.bf16.mxu0 0
  %10556 = vmatpush1.bf16.msra.mxu0 0
  %10557 = vmatprep.subr.bf16.mxu0 0
  %10558 = vmatpush1.bf16.msra.mxu0 0
  %10559 = vmatprep.subr.bf16.mxu0 0
  %10560 = vmatpush1.bf16.msra.mxu0 0
  %10561 = vmatprep.subr.bf16.mxu0 0
  %10562 = vmatpush1.bf16.msra.mxu0 0
  %10563 = vmatprep.mubr.bf16.mxu0 %v10483
  %10564 = vmatmul.mubr.bf16.gmra.mrb[0].mxu0 %v10252
  %v10565 = vpop.f32.mrb[0].mxu0
  %v10566 = vadd.f32 %v10526, %v10565
  %v10567 = vpop.f32.mrb[0].mxu0
  %v10568 = vpop.f32.mrb[0].mxu0
  %v10569 = vpop.f32.mrb[0].mxu0
  %10570 = vdwg.mxu0
  %vm10571 = vcmask 261120
  %10572 = vst.msk [vmem:[%s11] sm:$0xff] %vm10571, %v10566
  // Predicated region
  $region46: #{encoder_forward.1} parent=0 // pred_check
    _
  $region47: #{encoder_forward.1} parent=0 // pred_check_branch
    %10574 = sbr.rel (0) target = $region49
  $region48: #{encoder_forward.1} parent=0 // pred_region
    _
  $region49: #{encoder_forward.1} parent=0 // pred_fallthru
    _
  // Predicated region
  $region50: #{encoder_forward.1} parent=0 // pred_check
    _
  $region51: #{encoder_forward.1} parent=0 // pred_check_branch
    %10576 = sbr.rel (0) target = $region53
  $region52: #{encoder_forward.1} parent=0 // pred_region
    _
  $region53: #{encoder_forward.1} parent=0 // pred_fallthru
    _

</llo_original>
